<compile_context>
chip_gen: v6e
topology: v6e:2x2x1
jax: 0.10.0
libtpu: 0.0.40
codegen_flags: <defaults>
</compile_context>

<pallas_src>
import functools

import jax
import jax.numpy as jnp
from jax.experimental import pallas as pl
from jax.experimental.pallas import tpu as pltpu


# -----------------------------------------------------------------------------
# Pallas kernel: tiled GEMM + per-output-channel scale/bias (+ residual) + activation
# -----------------------------------------------------------------------------
def _make_gemm_kernel(act: str, has_residual: bool):
    def kernel(x_ref, w_ref, s_ref, b_ref, *rest):
        if has_residual:
            r_ref, o_ref, acc_ref = rest
        else:
            o_ref, acc_ref = rest

        @pl.when(pl.program_id(2) == 0)
        def _():
            acc_ref[...] = jnp.zeros_like(acc_ref)

        # (TM, TK) @ (TK, TN) on the MXU, f32 accumulation in VMEM scratch.
        acc_ref[...] += jnp.dot(x_ref[...], w_ref[...],
                                preferred_element_type=jnp.float32)

        @pl.when(pl.program_id(2) == pl.num_programs(2) - 1)
        def _():
            # Fused BatchNorm (eval) affine: y = conv * scale + bias  (per out-channel)
            acc = acc_ref[...] * s_ref[...] + b_ref[...]
            if has_residual:
                acc = acc + r_ref[...].astype(jnp.float32)
            if act == "relu":
                acc = jnp.maximum(acc, 0.0)
            elif act == "tanh":
                acc = jnp.tanh(acc)
            o_ref[...] = acc.astype(o_ref.dtype)

    return kernel


def _round_up(x, m):
    return ((x + m - 1) // m) * m


def _pick_tile(dim, target, align):
    """Pick (tile, padded_dim) with padded_dim % tile == 0 and tile (8,128)-friendly."""
    dpad = _round_up(dim, align)
    if dpad >= target:
        return target, _round_up(dim, target)
    return dpad, dpad


def _pad2d(a, rows, cols, dtype):
    a = a.astype(dtype)
    pr, pc = rows - a.shape[0], cols - a.shape[1]
    if pr or pc:
        a = jnp.pad(a, ((0, pr), (0, pc)))
    return a


# Tile targets: 512x256x256 bf16 tiles keep double-buffered VMEM use in the
# low-MiB range (safe on v7x's 64 MiB VMEM) while staying near the measured
# tile-size sweet spot on v5e/v6e.
_TM, _TN, _TK = 512, 256, 256


def gemm_bn_act(x_cols, w_mat, scale, bias, residual=None, act="none",
                out_dtype=jnp.bfloat16):
    M, K = x_cols.shape
    K2, cout = w_mat.shape
    assert K == K2

    tm, m_pad = _pick_tile(M, _TM, 16)
    tk, k_pad = _pick_tile(K, _TK, 128)
    tn, n_pad = _pick_tile(cout, _TN, 128)

    xb = _pad2d(x_cols, m_pad, k_pad, jnp.bfloat16)
    wb = _pad2d(w_mat, k_pad, n_pad, jnp.bfloat16)
    sb = _pad2d(scale.reshape(1, cout), 1, n_pad, jnp.float32)
    bb = _pad2d(bias.reshape(1, cout), 1, n_pad, jnp.float32)

    inputs = [xb, wb, sb, bb]
    in_specs = [
        pl.BlockSpec((tm, tk), lambda i, j, k: (i, k)),
        pl.BlockSpec((tk, tn), lambda i, j, k: (k, j)),
        pl.BlockSpec((1, tn), lambda i, j, k: (0, j)),
        pl.BlockSpec((1, tn), lambda i, j, k: (0, j)),
    ]
    has_res = residual is not None
    if has_res:
        inputs.append(_pad2d(residual, m_pad, n_pad, jnp.bfloat16))
        in_specs.append(pl.BlockSpec((tm, tn), lambda i, j, k: (i, j)))

    grid = (m_pad // tm, n_pad // tn, k_pad // tk)
    kernel = _make_gemm_kernel(act, has_res)

    out_bytes = m_pad * n_pad * jnp.dtype(out_dtype).itemsize
    bytes_accessed = int(2 * (m_pad * k_pad + k_pad * n_pad) + out_bytes
                         + (2 * m_pad * n_pad if has_res else 0))
    cost = pl.CostEstimate(
        flops=2 * m_pad * k_pad * n_pad,
        transcendentals=(m_pad * n_pad if act == "tanh" else 0),
        bytes_accessed=bytes_accessed,
    )

    out = pl.pallas_call(
        kernel,
        out_shape=jax.ShapeDtypeStruct((m_pad, n_pad), out_dtype),
        grid_spec=pltpu.PrefetchScalarGridSpec(
            num_scalar_prefetch=0,
            grid=grid,
            in_specs=in_specs,
            out_specs=pl.BlockSpec((tm, tn), lambda i, j, k: (i, j)),
            scratch_shapes=[pltpu.VMEM((tm, tn), jnp.float32)],
        ),
        compiler_params=pltpu.CompilerParams(
            dimension_semantics=("parallel", "parallel", "arbitrary"),
            vmem_limit_bytes=32 * 1024 * 1024,
        ),
        cost_estimate=cost,
    )(*inputs)
    return out[:M, :cout]


# -----------------------------------------------------------------------------
# Conv wrappers (glue: padding / im2col / sub-pixel interleave)
# -----------------------------------------------------------------------------
def _im2col(x_nhwc, kh, kw, stride):
    N, Hp, Wp, C = x_nhwc.shape
    Ho = (Hp - kh) // stride + 1
    Wo = (Wp - kw) // stride + 1
    cols = []
    for i in range(kh):
        for j in range(kw):
            cols.append(
                x_nhwc[:, i:i + stride * (Ho - 1) + 1:stride,
                       j:j + stride * (Wo - 1) + 1:stride, :]
            )
    patches = jnp.concatenate(cols, axis=-1)  # (N, Ho, Wo, kh*kw*C)
    return patches.reshape(N * Ho * Wo, kh * kw * C), (N, Ho, Wo)


def conv2d_bn_act(x, w_mat, kh, kw, scale, bias, *, stride=1, padding=0,
                  pad_mode="zero", act="none", residual=None,
                  out_dtype=jnp.bfloat16):
    """x: NHWC (bf16), w_mat: GEMM-ready (kh*kw*Cin, Cout)."""
    cout = w_mat.shape[1]
    if padding > 0:
        mode = "reflect" if pad_mode == "reflect" else "constant"
        x = jnp.pad(x, ((0, 0), (padding, padding), (padding, padding), (0, 0)),
                    mode=mode)
    x_cols, (N, Ho, Wo) = _im2col(x, kh, kw, stride)
    res_flat = residual.reshape(N * Ho * Wo, cout) if residual is not None else None
    out = gemm_bn_act(x_cols, w_mat, scale, bias, residual=res_flat, act=act,
                      out_dtype=out_dtype)
    return out.reshape(N, Ho, Wo, cout)


def _convT_subpixel_weight(w_t):
    """ConvTranspose2d(k=3,s=2,p=1,op=1) -> single sub-pixel GEMM weight.

    w_t: (Cin, Cout, 3, 3) PyTorch ConvTranspose2d layout.
    Returns (4*Cin, 4*Cout): input taps [x(a,b), x(a,b+1), x(a+1,b), x(a+1,b+1)]
    against output parities [(0,0),(0,1),(1,0),(1,1)].
    """
    cin, cout = w_t.shape[:2]
    z = jnp.zeros((cin, cout), w_t.dtype)
    W = w_t
    rows = [
        # cols: parity (0,0)   (0,1)          (1,0)          (1,1)
        [W[:, :, 1, 1], W[:, :, 1, 2], W[:, :, 2, 1], W[:, :, 2, 2]],  # tap x(a,   b)
        [z,             W[:, :, 1, 0], z,             W[:, :, 2, 0]],  # tap x(a,   b+1)
        [z,             z,             W[:, :, 0, 1], W[:, :, 0, 2]],  # tap x(a+1, b)
        [z,             z,             z,             W[:, :, 0, 0]],  # tap x(a+1, b+1)
    ]
    return jnp.concatenate([jnp.concatenate(r, axis=1) for r in rows], axis=0)


def conv_transpose2d_bn_act(x, w_mat4, cout, scale, bias, *, act="relu",
                            out_dtype=jnp.bfloat16):
    """Sub-pixel ConvTranspose2d(k=3,s=2,p=1,op=1) + BN + act. x: NHWC."""
    N, H, W, cin = x.shape
    xp = jnp.pad(x, ((0, 0), (0, 1), (0, 1), (0, 0)))  # high-side taps read zeros
    taps = jnp.concatenate([
        xp[:, 0:H, 0:W, :],          # x(a,   b)
        xp[:, 0:H, 1:W + 1, :],      # x(a,   b+1)
        xp[:, 1:H + 1, 0:W, :],      # x(a+1, b)
        xp[:, 1:H + 1, 1:W + 1, :],  # x(a+1, b+1)
    ], axis=-1).reshape(N * H * W, 4 * cin)
    out = gemm_bn_act(taps, w_mat4, jnp.tile(scale, 4), jnp.tile(bias, 4),
                      act=act, out_dtype=out_dtype)
    out = out.reshape(N, H, W, 2, 2, cout)
    out = out.transpose(0, 1, 3, 2, 4, 5).reshape(N, 2 * H, 2 * W, cout)
    return out


# -----------------------------------------------------------------------------
# Parameter init (deterministic, matches nn.Module shapes; no checkpoint load)
# -----------------------------------------------------------------------------
_BN_EPS = 1e-5


def _bn_scale(c):
    # gamma=1, running_var=1  ->  scale = 1/sqrt(1+eps)
    return jnp.full((c,), 1.0 / jnp.sqrt(1.0 + _BN_EPS), jnp.float32)


def _bn_bias(c):
    # beta=0, running_mean=0
    return jnp.zeros((c,), jnp.float32)


def _init_conv(key, cout, cin, kh, kw):
    std = 1.0 / (cin * kh * kw) ** 0.5
    return jax.random.normal(key, (cout, cin, kh, kw), jnp.float32) * std


def _init_convT(key, cin, cout, kh, kw):
    std = 1.0 / (cin * kh * kw) ** 0.5
    return jax.random.normal(key, (cin, cout, kh, kw), jnp.float32) * std


def init_res_cnn_params(key, input_dim=1, output_dim=1, ngf=64):
    keys = jax.random.split(key, 32)
    p = {}
    p["enc1_w"] = _init_conv(keys[0], ngf, input_dim, 7, 7)
    p["enc2_w"] = _init_conv(keys[1], ngf * 2, ngf, 3, 3)
    p["enc3_w"] = _init_conv(keys[2], ngf * 4, ngf * 2, 3, 3)
    for i in range(9):
        p[f"art{i}_w1"] = _init_conv(keys[3 + 2 * i], ngf * 4, ngf * 4, 3, 3)
        p[f"art{i}_w2"] = _init_conv(keys[4 + 2 * i], ngf * 4, ngf * 4, 3, 3)
    p["dec1_w"] = _init_convT(keys[21], ngf * 4, ngf * 2, 3, 3)
    p["dec2_w"] = _init_convT(keys[22], ngf * 2, ngf, 3, 3)
    p["dec3_w"] = _init_conv(keys[23], output_dim, ngf, 7, 7)
    p["dec3_b"] = jnp.zeros((output_dim,), jnp.float32)  # Conv2d bias init (deterministic)
    return p


def prepare_params(p):
    """One-time prep: transpose/reshape weights to GEMM layout and cast to bf16."""
    def conv_mat(w):  # (Cout, Cin, KH, KW) -> (KH*KW*Cin, Cout), matches im2col K-order
        cout, cin, kh, kw = w.shape
        return jnp.transpose(w, (2, 3, 1, 0)).reshape(kh * kw * cin, cout).astype(jnp.bfloat16)

    q = {}
    q["enc1_wm"] = conv_mat(p["enc1_w"])
    q["enc2_wm"] = conv_mat(p["enc2_w"])
    q["enc3_wm"] = conv_mat(p["enc3_w"])
    for i in range(9):
        q[f"art{i}_wm1"] = conv_mat(p[f"art{i}_w1"])
        q[f"art{i}_wm2"] = conv_mat(p[f"art{i}_w2"])
    q["dec1_wm"] = _convT_subpixel_weight(p["dec1_w"]).astype(jnp.bfloat16)
    q["dec2_wm"] = _convT_subpixel_weight(p["dec2_w"]).astype(jnp.bfloat16)
    q["dec3_wm"] = conv_mat(p["dec3_w"])
    q["dec3_b"] = p["dec3_b"]
    return q


# -----------------------------------------------------------------------------
# Res_CNN forward (transformer=None in every ART block, per the module __init__)
# -----------------------------------------------------------------------------
@functools.partial(jax.jit, static_argnames=("ngf", "output_dim"))
def res_cnn_forward(prepped, x_nchw, *, ngf=64, output_dim=1):
    x = jnp.transpose(x_nchw, (0, 2, 3, 1)).astype(jnp.bfloat16)  # NCHW -> NHWC

    # encoder_1: ReflectionPad2d(3) + Conv7x7 + BN + ReLU
    x = conv2d_bn_act(x, prepped["enc1_wm"], 7, 7, _bn_scale(ngf), _bn_bias(ngf),
                      stride=1, padding=3, pad_mode="reflect", act="relu")
    # encoder_2 / encoder_3: Conv3x3 s2 p1 + BN + ReLU
    x = conv2d_bn_act(x, prepped["enc2_wm"], 3, 3, _bn_scale(ngf * 2), _bn_bias(ngf * 2),
                      stride=2, padding=1, act="relu")
    x = conv2d_bn_act(x, prepped["enc3_wm"], 3, 3, _bn_scale(ngf * 4), _bn_bias(ngf * 4),
                      stride=2, padding=1, act="relu")

    # art_1 .. art_9 : ResnetBlock(256), padding_type='reflect', use_bias=False
    c = ngf * 4
    for i in range(9):
        y = conv2d_bn_act(x, prepped[f"art{i}_wm1"], 3, 3, _bn_scale(c), _bn_bias(c),
                          stride=1, padding=1, pad_mode="reflect", act="relu")
        x = conv2d_bn_act(y, prepped[f"art{i}_wm2"], 3, 3, _bn_scale(c), _bn_bias(c),
                          stride=1, padding=1, pad_mode="reflect", act="none",
                          residual=x)  # out = x + conv_block(x), fused in kernel

    # decoder_1 / decoder_2: ConvTranspose2d(k=3, s=2, p=1, op=1) + BN + ReLU
    x = conv_transpose2d_bn_act(x, prepped["dec1_wm"], ngf * 2,
                                _bn_scale(ngf * 2), _bn_bias(ngf * 2), act="relu")
    x = conv_transpose2d_bn_act(x, prepped["dec2_wm"], ngf,
                                _bn_scale(ngf), _bn_bias(ngf), act="relu")

    # decoder_3: ReflectionPad2d(3) + Conv7x7 (with bias, no BN) + Tanh
    x = conv2d_bn_act(x, prepped["dec3_wm"], 7, 7,
                      jnp.ones((output_dim,), jnp.float32), prepped["dec3_b"],
                      stride=1, padding=3, pad_mode="reflect", act="tanh",
                      out_dtype=jnp.float32)

    return jnp.transpose(x, (0, 3, 1, 2))  # NHWC -> NCHW


# -----------------------------------------------------------------------------
if __name__ == "__main__":
    key = jax.random.PRNGKey(0)
    pkey, xkey = jax.random.split(key)

    input_dim, output_dim = 1, 1
    params = init_res_cnn_params(pkey, input_dim=input_dim, output_dim=output_dim)
    prepped = prepare_params(params)  # one-time weight layout prep (hoisted out of forward)

    # small NCHW input consistent with the module (img divisible by 4 for the 2 downsamples)
    x = jax.random.normal(xkey, (2, input_dim, 16, 16), jnp.float32)

    out = res_cnn_forward(prepped, x, ngf=64, output_dim=output_dim)
    out = jax.block_until_ready(out)

    assert out.shape == (2, output_dim, 16, 16), out.shape
    assert bool(jnp.all(jnp.isfinite(out)))
    assert bool(jnp.all(jnp.abs(out) <= 1.0 + 1e-6))  # Tanh output range
    print("KERNEL_OK")
</pallas_src>

<mosaic_0001>
module attributes {stable_mosaic.version = 11 : i64} {
  func.func @kernel(%arg0: i32, %arg1: i32, %arg2: i32, %arg3: memref<512x128xbf16, #tpu.memory_space<vmem>>, %arg4: memref<128x128xbf16, #tpu.memory_space<vmem>>, %arg5: memref<1x128xf32, #tpu.memory_space<vmem>>, %arg6: memref<1x128xf32, #tpu.memory_space<vmem>>, %arg7: memref<512x128xbf16, #tpu.memory_space<vmem>>, %arg8: memref<512x128xf32, #tpu.memory_space<vmem>>) attributes {dimension_semantics = [#tpu.dimension_semantics<parallel>, #tpu.dimension_semantics<parallel>, #tpu.dimension_semantics<arbitrary>], iteration_bounds = array<i64: 1, 1, 1>, scalar_prefetch = 0 : i64, scratch_operands = 1 : i64, tpu.core_type = #tpu.core_type<tc>, window_params = [{transform_indices = @transform_0, window_bounds = array<i64: 512, 128>}, {transform_indices = @transform_1, window_bounds = array<i64: 128, 128>}, {transform_indices = @transform_2, window_bounds = array<i64: 1, 128>}, {transform_indices = @transform_3, window_bounds = array<i64: 1, 128>}, {transform_indices = @transform_4, window_bounds = array<i64: 512, 128>}]} {
    %c0_i32 = arith.constant 0 : i32
    %0 = arith.cmpi eq, %arg2, %c0_i32 : i32
    %1 = arith.extui %0 : i1 to i32
    %c0_i32_0 = arith.constant 0 : i32
    %2 = arith.cmpi ne, %1, %c0_i32_0 : i32
    scf.if %2 {
      %cst_10 = arith.constant 0.000000e+00 : f32
      %12 = vector.broadcast %cst_10 : f32 to vector<512x128xf32>
      %c0_11 = arith.constant 0 : index
      %c0_12 = arith.constant 0 : index
      %13 = vector.load %arg8[%c0_11, %c0_12] : memref<512x128xf32, #tpu.memory_space<vmem>>, vector<512x128xf32>
      tpu.vector_store %arg8[%c0_11, %c0_12], %12 {strides = array<i32>} : memref<512x128xf32, #tpu.memory_space<vmem>>, vector<512x128xf32>,
    } else {
    }
    %c0 = arith.constant 0 : index
    %c0_1 = arith.constant 0 : index
    %3 = vector.load %arg8[%c0, %c0_1] : memref<512x128xf32, #tpu.memory_space<vmem>>, vector<512x128xf32>
    %c0_2 = arith.constant 0 : index
    %c0_3 = arith.constant 0 : index
    %4 = vector.load %arg3[%c0_2, %c0_3] : memref<512x128xbf16, #tpu.memory_space<vmem>>, vector<512x128xbf16>
    %c0_4 = arith.constant 0 : index
    %c0_5 = arith.constant 0 : index
    %5 = vector.load %arg4[%c0_4, %c0_5] : memref<128x128xbf16, #tpu.memory_space<vmem>>, vector<128x128xbf16>
    %cst = arith.constant dense<0.000000e+00> : vector<512x128xf32>
    %6 = tpu.matmul %4, %5, %cst {dimension_numbers = #tpu.dot_dimension_numbers<[1], [0], [0], [1], [0, 0, 1, 1], [], []>} : vector<512x128xbf16>, vector<128x128xbf16>, vector<512x128xf32> -> vector<512x128xf32>
    %7 = arith.addf %3, %6 : vector<512x128xf32>
    %c0_6 = arith.constant 0 : index
    %c0_7 = arith.constant 0 : index
    %8 = vector.load %arg8[%c0_6, %c0_7] : memref<512x128xf32, #tpu.memory_space<vmem>>, vector<512x128xf32>
    tpu.vector_store %arg8[%c0_6, %c0_7], %7 {strides = array<i32>} : memref<512x128xf32, #tpu.memory_space<vmem>>, vector<512x128xf32>,
    %c0_i32_8 = arith.constant 0 : i32
    %9 = arith.cmpi eq, %arg2, %c0_i32_8 : i32
    %10 = arith.extui %9 : i1 to i32
    %c0_i32_9 = arith.constant 0 : i32
    %11 = arith.cmpi ne, %10, %c0_i32_9 : i32
    scf.if %11 {
      %c0_10 = arith.constant 0 : index
      %c0_11 = arith.constant 0 : index
      %12 = vector.load %arg8[%c0_10, %c0_11] : memref<512x128xf32, #tpu.memory_space<vmem>>, vector<512x128xf32>
      %c0_12 = arith.constant 0 : index
      %c0_13 = arith.constant 0 : index
      %13 = vector.load %arg5[%c0_12, %c0_13] : memref<1x128xf32, #tpu.memory_space<vmem>>, vector<1x128xf32>
      %14 = vector.broadcast %13 : vector<1x128xf32> to vector<512x128xf32>
      %15 = arith.mulf %12, %14 : vector<512x128xf32>
      %c0_14 = arith.constant 0 : index
      %c0_15 = arith.constant 0 : index
      %16 = vector.load %arg6[%c0_14, %c0_15] : memref<1x128xf32, #tpu.memory_space<vmem>>, vector<1x128xf32>
      %17 = vector.broadcast %16 : vector<1x128xf32> to vector<512x128xf32>
      %18 = arith.addf %15, %17 : vector<512x128xf32>
      %cst_16 = arith.constant 0.000000e+00 : f32
      %19 = vector.broadcast %cst_16 : f32 to vector<512x128xf32>
      %20 = arith.maximumf %18, %19 : vector<512x128xf32>
      %21 = arith.truncf %20 : vector<512x128xf32> to vector<512x128xbf16>
      %c0_17 = arith.constant 0 : index
      %c0_18 = arith.constant 0 : index
      %22 = vector.load %arg7[%c0_17, %c0_18] : memref<512x128xbf16, #tpu.memory_space<vmem>>, vector<512x128xbf16>
      tpu.vector_store %arg7[%c0_17, %c0_18], %21 {strides = array<i32>} : memref<512x128xbf16, #tpu.memory_space<vmem>>, vector<512x128xbf16>,
    } else {
    }
    return
  }
  func.func @transform_0(%arg0: i32, %arg1: i32, %arg2: i32) -> (i32, i32) {
    %c0_i32 = arith.constant 0 : i32
    return %arg0, %arg2 : i32, i32
  }
  func.func @transform_1(%arg0: i32, %arg1: i32, %arg2: i32) -> (i32, i32) {
    %c0_i32 = arith.constant 0 : i32
    return %arg2, %arg1 : i32, i32
  }
  func.func @transform_2(%arg0: i32, %arg1: i32, %arg2: i32) -> (i32, i32) {
    %c0_i32 = arith.constant 0 : i32
    %c0_i32_0 = arith.constant 0 : i32
    return %c0_i32, %arg1 : i32, i32
  }
  func.func @transform_3(%arg0: i32, %arg1: i32, %arg2: i32) -> (i32, i32) {
    %c0_i32 = arith.constant 0 : i32
    %c0_i32_0 = arith.constant 0 : i32
    return %c0_i32, %arg1 : i32, i32
  }
  func.func @transform_4(%arg0: i32, %arg1: i32, %arg2: i32) -> (i32, i32) {
    %c0_i32 = arith.constant 0 : i32
    return %arg0, %arg1 : i32, i32
  }
}

module attributes {stable_mosaic.version = 11 : i64} {
  func.func @kernel(%arg0: i32, %arg1: i32, %arg2: i32, %arg3: memref<128x256xbf16, #tpu.memory_space<vmem>>, %arg4: memref<256x128xbf16, #tpu.memory_space<vmem>>, %arg5: memref<1x128xf32, #tpu.memory_space<vmem>>, %arg6: memref<1x128xf32, #tpu.memory_space<vmem>>, %arg7: memref<128x128xbf16, #tpu.memory_space<vmem>>, %arg8: memref<128x128xf32, #tpu.memory_space<vmem>>) attributes {dimension_semantics = [#tpu.dimension_semantics<parallel>, #tpu.dimension_semantics<parallel>, #tpu.dimension_semantics<arbitrary>], iteration_bounds = array<i64: 1, 1, 3>, scalar_prefetch = 0 : i64, scratch_operands = 1 : i64, tpu.core_type = #tpu.core_type<tc>, window_params = [{transform_indices = @transform_0, window_bounds = array<i64: 128, 256>}, {transform_indices = @transform_1, window_bounds = array<i64: 256, 128>}, {transform_indices = @transform_2, window_bounds = array<i64: 1, 128>}, {transform_indices = @transform_3, window_bounds = array<i64: 1, 128>}, {transform_indices = @transform_4, window_bounds = array<i64: 128, 128>}]} {
    %c0_i32 = arith.constant 0 : i32
    %0 = arith.cmpi eq, %arg2, %c0_i32 : i32
    %1 = arith.extui %0 : i1 to i32
    %c0_i32_0 = arith.constant 0 : i32
    %2 = arith.cmpi ne, %1, %c0_i32_0 : i32
    scf.if %2 {
      %cst_9 = arith.constant 0.000000e+00 : f32
      %12 = vector.broadcast %cst_9 : f32 to vector<128x128xf32>
      %c0_10 = arith.constant 0 : index
      %c0_11 = arith.constant 0 : index
      %13 = vector.load %arg8[%c0_10, %c0_11] : memref<128x128xf32, #tpu.memory_space<vmem>>, vector<128x128xf32>
      tpu.vector_store %arg8[%c0_10, %c0_11], %12 {strides = array<i32>} : memref<128x128xf32, #tpu.memory_space<vmem>>, vector<128x128xf32>,
    } else {
    }
    %c0 = arith.constant 0 : index
    %c0_1 = arith.constant 0 : index
    %3 = vector.load %arg8[%c0, %c0_1] : memref<128x128xf32, #tpu.memory_space<vmem>>, vector<128x128xf32>
    %c0_2 = arith.constant 0 : index
    %c0_3 = arith.constant 0 : index
    %4 = vector.load %arg3[%c0_2, %c0_3] : memref<128x256xbf16, #tpu.memory_space<vmem>>, vector<128x256xbf16>
    %c0_4 = arith.constant 0 : index
    %c0_5 = arith.constant 0 : index
    %5 = vector.load %arg4[%c0_4, %c0_5] : memref<256x128xbf16, #tpu.memory_space<vmem>>, vector<256x128xbf16>
    %cst = arith.constant dense<0.000000e+00> : vector<128x128xf32>
    %6 = tpu.matmul %4, %5, %cst {dimension_numbers = #tpu.dot_dimension_numbers<[1], [0], [0], [1], [0, 0, 1, 1], [], []>} : vector<128x256xbf16>, vector<256x128xbf16>, vector<128x128xf32> -> vector<128x128xf32>
    %7 = arith.addf %3, %6 : vector<128x128xf32>
    %c0_6 = arith.constant 0 : index
    %c0_7 = arith.constant 0 : index
    %8 = vector.load %arg8[%c0_6, %c0_7] : memref<128x128xf32, #tpu.memory_space<vmem>>, vector<128x128xf32>
    tpu.vector_store %arg8[%c0_6, %c0_7], %7 {strides = array<i32>} : memref<128x128xf32, #tpu.memory_space<vmem>>, vector<128x128xf32>,
    %c2_i32 = arith.constant 2 : i32
    %9 = arith.cmpi eq, %arg2, %c2_i32 : i32
    %10 = arith.extui %9 : i1 to i32
    %c0_i32_8 = arith.constant 0 : i32
    %11 = arith.cmpi ne, %10, %c0_i32_8 : i32
    scf.if %11 {
      %c0_9 = arith.constant 0 : index
      %c0_10 = arith.constant 0 : index
      %12 = vector.load %arg8[%c0_9, %c0_10] : memref<128x128xf32, #tpu.memory_space<vmem>>, vector<128x128xf32>
      %c0_11 = arith.constant 0 : index
      %c0_12 = arith.constant 0 : index
      %13 = vector.load %arg5[%c0_11, %c0_12] : memref<1x128xf32, #tpu.memory_space<vmem>>, vector<1x128xf32>
      %14 = vector.broadcast %13 : vector<1x128xf32> to vector<128x128xf32>
      %15 = arith.mulf %12, %14 : vector<128x128xf32>
      %c0_13 = arith.constant 0 : index
      %c0_14 = arith.constant 0 : index
      %16 = vector.load %arg6[%c0_13, %c0_14] : memref<1x128xf32, #tpu.memory_space<vmem>>, vector<1x128xf32>
      %17 = vector.broadcast %16 : vector<1x128xf32> to vector<128x128xf32>
      %18 = arith.addf %15, %17 : vector<128x128xf32>
      %cst_15 = arith.constant 0.000000e+00 : f32
      %19 = vector.broadcast %cst_15 : f32 to vector<128x128xf32>
      %20 = arith.maximumf %18, %19 : vector<128x128xf32>
      %21 = arith.truncf %20 : vector<128x128xf32> to vector<128x128xbf16>
      %c0_16 = arith.constant 0 : index
      %c0_17 = arith.constant 0 : index
      %22 = vector.load %arg7[%c0_16, %c0_17] : memref<128x128xbf16, #tpu.memory_space<vmem>>, vector<128x128xbf16>
      tpu.vector_store %arg7[%c0_16, %c0_17], %21 {strides = array<i32>} : memref<128x128xbf16, #tpu.memory_space<vmem>>, vector<128x128xbf16>,
    } else {
    }
    return
  }
  func.func @transform_0(%arg0: i32, %arg1: i32, %arg2: i32) -> (i32, i32) {
    %c0_i32 = arith.constant 0 : i32
    return %arg0, %arg2 : i32, i32
  }
  func.func @transform_1(%arg0: i32, %arg1: i32, %arg2: i32) -> (i32, i32) {
    %c0_i32 = arith.constant 0 : i32
    return %arg2, %arg1 : i32, i32
  }
  func.func @transform_2(%arg0: i32, %arg1: i32, %arg2: i32) -> (i32, i32) {
    %c0_i32 = arith.constant 0 : i32
    %c0_i32_0 = arith.constant 0 : i32
    return %c0_i32, %arg1 : i32, i32
  }
  func.func @transform_3(%arg0: i32, %arg1: i32, %arg2: i32) -> (i32, i32) {
    %c0_i32 = arith.constant 0 : i32
    %c0_i32_0 = arith.constant 0 : i32
    return %c0_i32, %arg1 : i32, i32
  }
  func.func @transform_4(%arg0: i32, %arg1: i32, %arg2: i32) -> (i32, i32) {
    %c0_i32 = arith.constant 0 : i32
    return %arg0, %arg1 : i32, i32
  }
}

module attributes {stable_mosaic.version = 11 : i64} {
  func.func @kernel(%arg0: i32, %arg1: i32, %arg2: i32, %arg3: memref<32x256xbf16, #tpu.memory_space<vmem>>, %arg4: memref<256x256xbf16, #tpu.memory_space<vmem>>, %arg5: memref<1x256xf32, #tpu.memory_space<vmem>>, %arg6: memref<1x256xf32, #tpu.memory_space<vmem>>, %arg7: memref<32x256xbf16, #tpu.memory_space<vmem>>, %arg8: memref<32x256xf32, #tpu.memory_space<vmem>>) attributes {dimension_semantics = [#tpu.dimension_semantics<parallel>, #tpu.dimension_semantics<parallel>, #tpu.dimension_semantics<arbitrary>], iteration_bounds = array<i64: 1, 1, 5>, scalar_prefetch = 0 : i64, scratch_operands = 1 : i64, tpu.core_type = #tpu.core_type<tc>, window_params = [{transform_indices = @transform_0, window_bounds = array<i64: 32, 256>}, {transform_indices = @transform_1, window_bounds = array<i64: 256, 256>}, {transform_indices = @transform_2, window_bounds = array<i64: 1, 256>}, {transform_indices = @transform_3, window_bounds = array<i64: 1, 256>}, {transform_indices = @transform_4, window_bounds = array<i64: 32, 256>}]} {
    %c0_i32 = arith.constant 0 : i32
    %0 = arith.cmpi eq, %arg2, %c0_i32 : i32
    %1 = arith.extui %0 : i1 to i32
    %c0_i32_0 = arith.constant 0 : i32
    %2 = arith.cmpi ne, %1, %c0_i32_0 : i32
    scf.if %2 {
      %cst_9 = arith.constant 0.000000e+00 : f32
      %12 = vector.broadcast %cst_9 : f32 to vector<32x256xf32>
      %c0_10 = arith.constant 0 : index
      %c0_11 = arith.constant 0 : index
      %13 = vector.load %arg8[%c0_10, %c0_11] : memref<32x256xf32, #tpu.memory_space<vmem>>, vector<32x256xf32>
      tpu.vector_store %arg8[%c0_10, %c0_11], %12 {strides = array<i32>} : memref<32x256xf32, #tpu.memory_space<vmem>>, vector<32x256xf32>,
    } else {
    }
    %c0 = arith.constant 0 : index
    %c0_1 = arith.constant 0 : index
    %3 = vector.load %arg8[%c0, %c0_1] : memref<32x256xf32, #tpu.memory_space<vmem>>, vector<32x256xf32>
    %c0_2 = arith.constant 0 : index
    %c0_3 = arith.constant 0 : index
    %4 = vector.load %arg3[%c0_2, %c0_3] : memref<32x256xbf16, #tpu.memory_space<vmem>>, vector<32x256xbf16>
    %c0_4 = arith.constant 0 : index
    %c0_5 = arith.constant 0 : index
    %5 = vector.load %arg4[%c0_4, %c0_5] : memref<256x256xbf16, #tpu.memory_space<vmem>>, vector<256x256xbf16>
    %cst = arith.constant dense<0.000000e+00> : vector<32x256xf32>
    %6 = tpu.matmul %4, %5, %cst {dimension_numbers = #tpu.dot_dimension_numbers<[1], [0], [0], [1], [0, 0, 1, 1], [], []>} : vector<32x256xbf16>, vector<256x256xbf16>, vector<32x256xf32> -> vector<32x256xf32>
    %7 = arith.addf %3, %6 : vector<32x256xf32>
    %c0_6 = arith.constant 0 : index
    %c0_7 = arith.constant 0 : index
    %8 = vector.load %arg8[%c0_6, %c0_7] : memref<32x256xf32, #tpu.memory_space<vmem>>, vector<32x256xf32>
    tpu.vector_store %arg8[%c0_6, %c0_7], %7 {strides = array<i32>} : memref<32x256xf32, #tpu.memory_space<vmem>>, vector<32x256xf32>,
    %c4_i32 = arith.constant 4 : i32
    %9 = arith.cmpi eq, %arg2, %c4_i32 : i32
    %10 = arith.extui %9 : i1 to i32
    %c0_i32_8 = arith.constant 0 : i32
    %11 = arith.cmpi ne, %10, %c0_i32_8 : i32
    scf.if %11 {
      %c0_9 = arith.constant 0 : index
      %c0_10 = arith.constant 0 : index
      %12 = vector.load %arg8[%c0_9, %c0_10] : memref<32x256xf32, #tpu.memory_space<vmem>>, vector<32x256xf32>
      %c0_11 = arith.constant 0 : index
      %c0_12 = arith.constant 0 : index
      %13 = vector.load %arg5[%c0_11, %c0_12] : memref<1x256xf32, #tpu.memory_space<vmem>>, vector<1x256xf32>
      %14 = vector.broadcast %13 : vector<1x256xf32> to vector<32x256xf32>
      %15 = arith.mulf %12, %14 : vector<32x256xf32>
      %c0_13 = arith.constant 0 : index
      %c0_14 = arith.constant 0 : index
      %16 = vector.load %arg6[%c0_13, %c0_14] : memref<1x256xf32, #tpu.memory_space<vmem>>, vector<1x256xf32>
      %17 = vector.broadcast %16 : vector<1x256xf32> to vector<32x256xf32>
      %18 = arith.addf %15, %17 : vector<32x256xf32>
      %cst_15 = arith.constant 0.000000e+00 : f32
      %19 = vector.broadcast %cst_15 : f32 to vector<32x256xf32>
      %20 = arith.maximumf %18, %19 : vector<32x256xf32>
      %21 = arith.truncf %20 : vector<32x256xf32> to vector<32x256xbf16>
      %c0_16 = arith.constant 0 : index
      %c0_17 = arith.constant 0 : index
      %22 = vector.load %arg7[%c0_16, %c0_17] : memref<32x256xbf16, #tpu.memory_space<vmem>>, vector<32x256xbf16>
      tpu.vector_store %arg7[%c0_16, %c0_17], %21 {strides = array<i32>} : memref<32x256xbf16, #tpu.memory_space<vmem>>, vector<32x256xbf16>,
    } else {
    }
    return
  }
  func.func @transform_0(%arg0: i32, %arg1: i32, %arg2: i32) -> (i32, i32) {
    %c0_i32 = arith.constant 0 : i32
    return %arg0, %arg2 : i32, i32
  }
  func.func @transform_1(%arg0: i32, %arg1: i32, %arg2: i32) -> (i32, i32) {
    %c0_i32 = arith.constant 0 : i32
    return %arg2, %arg1 : i32, i32
  }
  func.func @transform_2(%arg0: i32, %arg1: i32, %arg2: i32) -> (i32, i32) {
    %c0_i32 = arith.constant 0 : i32
    %c0_i32_0 = arith.constant 0 : i32
    return %c0_i32, %arg1 : i32, i32
  }
  func.func @transform_3(%arg0: i32, %arg1: i32, %arg2: i32) -> (i32, i32) {
    %c0_i32 = arith.constant 0 : i32
    %c0_i32_0 = arith.constant 0 : i32
    return %c0_i32, %arg1 : i32, i32
  }
  func.func @transform_4(%arg0: i32, %arg1: i32, %arg2: i32) -> (i32, i32) {
    %c0_i32 = arith.constant 0 : i32
    return %arg0, %arg1 : i32, i32
  }
}

module attributes {stable_mosaic.version = 11 : i64} {
  func.func @kernel(%arg0: i32, %arg1: i32, %arg2: i32, %arg3: memref<32x256xbf16, #tpu.memory_space<vmem>>, %arg4: memref<256x256xbf16, #tpu.memory_space<vmem>>, %arg5: memref<1x256xf32, #tpu.memory_space<vmem>>, %arg6: memref<1x256xf32, #tpu.memory_space<vmem>>, %arg7: memref<32x256xbf16, #tpu.memory_space<vmem>>, %arg8: memref<32x256xf32, #tpu.memory_space<vmem>>) attributes {dimension_semantics = [#tpu.dimension_semantics<parallel>, #tpu.dimension_semantics<parallel>, #tpu.dimension_semantics<arbitrary>], iteration_bounds = array<i64: 1, 1, 9>, scalar_prefetch = 0 : i64, scratch_operands = 1 : i64, tpu.core_type = #tpu.core_type<tc>, window_params = [{transform_indices = @transform_0, window_bounds = array<i64: 32, 256>}, {transform_indices = @transform_1, window_bounds = array<i64: 256, 256>}, {transform_indices = @transform_2, window_bounds = array<i64: 1, 256>}, {transform_indices = @transform_3, window_bounds = array<i64: 1, 256>}, {transform_indices = @transform_4, window_bounds = array<i64: 32, 256>}]} {
    %c0_i32 = arith.constant 0 : i32
    %0 = arith.cmpi eq, %arg2, %c0_i32 : i32
    %1 = arith.extui %0 : i1 to i32
    %c0_i32_0 = arith.constant 0 : i32
    %2 = arith.cmpi ne, %1, %c0_i32_0 : i32
    scf.if %2 {
      %cst_9 = arith.constant 0.000000e+00 : f32
      %12 = vector.broadcast %cst_9 : f32 to vector<32x256xf32>
      %c0_10 = arith.constant 0 : index
      %c0_11 = arith.constant 0 : index
      %13 = vector.load %arg8[%c0_10, %c0_11] : memref<32x256xf32, #tpu.memory_space<vmem>>, vector<32x256xf32>
      tpu.vector_store %arg8[%c0_10, %c0_11], %12 {strides = array<i32>} : memref<32x256xf32, #tpu.memory_space<vmem>>, vector<32x256xf32>,
    } else {
    }
    %c0 = arith.constant 0 : index
    %c0_1 = arith.constant 0 : index
    %3 = vector.load %arg8[%c0, %c0_1] : memref<32x256xf32, #tpu.memory_space<vmem>>, vector<32x256xf32>
    %c0_2 = arith.constant 0 : index
    %c0_3 = arith.constant 0 : index
    %4 = vector.load %arg3[%c0_2, %c0_3] : memref<32x256xbf16, #tpu.memory_space<vmem>>, vector<32x256xbf16>
    %c0_4 = arith.constant 0 : index
    %c0_5 = arith.constant 0 : index
    %5 = vector.load %arg4[%c0_4, %c0_5] : memref<256x256xbf16, #tpu.memory_space<vmem>>, vector<256x256xbf16>
    %cst = arith.constant dense<0.000000e+00> : vector<32x256xf32>
    %6 = tpu.matmul %4, %5, %cst {dimension_numbers = #tpu.dot_dimension_numbers<[1], [0], [0], [1], [0, 0, 1, 1], [], []>} : vector<32x256xbf16>, vector<256x256xbf16>, vector<32x256xf32> -> vector<32x256xf32>
    %7 = arith.addf %3, %6 : vector<32x256xf32>
    %c0_6 = arith.constant 0 : index
    %c0_7 = arith.constant 0 : index
    %8 = vector.load %arg8[%c0_6, %c0_7] : memref<32x256xf32, #tpu.memory_space<vmem>>, vector<32x256xf32>
    tpu.vector_store %arg8[%c0_6, %c0_7], %7 {strides = array<i32>} : memref<32x256xf32, #tpu.memory_space<vmem>>, vector<32x256xf32>,
    %c8_i32 = arith.constant 8 : i32
    %9 = arith.cmpi eq, %arg2, %c8_i32 : i32
    %10 = arith.extui %9 : i1 to i32
    %c0_i32_8 = arith.constant 0 : i32
    %11 = arith.cmpi ne, %10, %c0_i32_8 : i32
    scf.if %11 {
      %c0_9 = arith.constant 0 : index
      %c0_10 = arith.constant 0 : index
      %12 = vector.load %arg8[%c0_9, %c0_10] : memref<32x256xf32, #tpu.memory_space<vmem>>, vector<32x256xf32>
      %c0_11 = arith.constant 0 : index
      %c0_12 = arith.constant 0 : index
      %13 = vector.load %arg5[%c0_11, %c0_12] : memref<1x256xf32, #tpu.memory_space<vmem>>, vector<1x256xf32>
      %14 = vector.broadcast %13 : vector<1x256xf32> to vector<32x256xf32>
      %15 = arith.mulf %12, %14 : vector<32x256xf32>
      %c0_13 = arith.constant 0 : index
      %c0_14 = arith.constant 0 : index
      %16 = vector.load %arg6[%c0_13, %c0_14] : memref<1x256xf32, #tpu.memory_space<vmem>>, vector<1x256xf32>
      %17 = vector.broadcast %16 : vector<1x256xf32> to vector<32x256xf32>
      %18 = arith.addf %15, %17 : vector<32x256xf32>
      %cst_15 = arith.constant 0.000000e+00 : f32
      %19 = vector.broadcast %cst_15 : f32 to vector<32x256xf32>
      %20 = arith.maximumf %18, %19 : vector<32x256xf32>
      %21 = arith.truncf %20 : vector<32x256xf32> to vector<32x256xbf16>
      %c0_16 = arith.constant 0 : index
      %c0_17 = arith.constant 0 : index
      %22 = vector.load %arg7[%c0_16, %c0_17] : memref<32x256xbf16, #tpu.memory_space<vmem>>, vector<32x256xbf16>
      tpu.vector_store %arg7[%c0_16, %c0_17], %21 {strides = array<i32>} : memref<32x256xbf16, #tpu.memory_space<vmem>>, vector<32x256xbf16>,
    } else {
    }
    return
  }
  func.func @transform_0(%arg0: i32, %arg1: i32, %arg2: i32) -> (i32, i32) {
    %c0_i32 = arith.constant 0 : i32
    return %arg0, %arg2 : i32, i32
  }
  func.func @transform_1(%arg0: i32, %arg1: i32, %arg2: i32) -> (i32, i32) {
    %c0_i32 = arith.constant 0 : i32
    return %arg2, %arg1 : i32, i32
  }
  func.func @transform_2(%arg0: i32, %arg1: i32, %arg2: i32) -> (i32, i32) {
    %c0_i32 = arith.constant 0 : i32
    %c0_i32_0 = arith.constant 0 : i32
    return %c0_i32, %arg1 : i32, i32
  }
  func.func @transform_3(%arg0: i32, %arg1: i32, %arg2: i32) -> (i32, i32) {
    %c0_i32 = arith.constant 0 : i32
    %c0_i32_0 = arith.constant 0 : i32
    return %c0_i32, %arg1 : i32, i32
  }
  func.func @transform_4(%arg0: i32, %arg1: i32, %arg2: i32) -> (i32, i32) {
    %c0_i32 = arith.constant 0 : i32
    return %arg0, %arg1 : i32, i32
  }
}

module attributes {stable_mosaic.version = 11 : i64} {
  func.func @kernel(%arg0: i32, %arg1: i32, %arg2: i32, %arg3: memref<32x256xbf16, #tpu.memory_space<vmem>>, %arg4: memref<256x256xbf16, #tpu.memory_space<vmem>>, %arg5: memref<1x256xf32, #tpu.memory_space<vmem>>, %arg6: memref<1x256xf32, #tpu.memory_space<vmem>>, %arg7: memref<32x256xbf16, #tpu.memory_space<vmem>>, %arg8: memref<32x256xbf16, #tpu.memory_space<vmem>>, %arg9: memref<32x256xf32, #tpu.memory_space<vmem>>) attributes {dimension_semantics = [#tpu.dimension_semantics<parallel>, #tpu.dimension_semantics<parallel>, #tpu.dimension_semantics<arbitrary>], iteration_bounds = array<i64: 1, 1, 9>, scalar_prefetch = 0 : i64, scratch_operands = 1 : i64, tpu.core_type = #tpu.core_type<tc>, window_params = [{transform_indices = @transform_0, window_bounds = array<i64: 32, 256>}, {transform_indices = @transform_1, window_bounds = array<i64: 256, 256>}, {transform_indices = @transform_2, window_bounds = array<i64: 1, 256>}, {transform_indices = @transform_3, window_bounds = array<i64: 1, 256>}, {transform_indices = @transform_4, window_bounds = array<i64: 32, 256>}, {transform_indices = @transform_5, window_bounds = array<i64: 32, 256>}]} {
    %c0_i32 = arith.constant 0 : i32
    %0 = arith.cmpi eq, %arg2, %c0_i32 : i32
    %1 = arith.extui %0 : i1 to i32
    %c0_i32_0 = arith.constant 0 : i32
    %2 = arith.cmpi ne, %1, %c0_i32_0 : i32
    scf.if %2 {
      %cst_9 = arith.constant 0.000000e+00 : f32
      %12 = vector.broadcast %cst_9 : f32 to vector<32x256xf32>
      %c0_10 = arith.constant 0 : index
      %c0_11 = arith.constant 0 : index
      %13 = vector.load %arg9[%c0_10, %c0_11] : memref<32x256xf32, #tpu.memory_space<vmem>>, vector<32x256xf32>
      tpu.vector_store %arg9[%c0_10, %c0_11], %12 {strides = array<i32>} : memref<32x256xf32, #tpu.memory_space<vmem>>, vector<32x256xf32>,
    } else {
    }
    %c0 = arith.constant 0 : index
    %c0_1 = arith.constant 0 : index
    %3 = vector.load %arg9[%c0, %c0_1] : memref<32x256xf32, #tpu.memory_space<vmem>>, vector<32x256xf32>
    %c0_2 = arith.constant 0 : index
    %c0_3 = arith.constant 0 : index
    %4 = vector.load %arg3[%c0_2, %c0_3] : memref<32x256xbf16, #tpu.memory_space<vmem>>, vector<32x256xbf16>
    %c0_4 = arith.constant 0 : index
    %c0_5 = arith.constant 0 : index
    %5 = vector.load %arg4[%c0_4, %c0_5] : memref<256x256xbf16, #tpu.memory_space<vmem>>, vector<256x256xbf16>
    %cst = arith.constant dense<0.000000e+00> : vector<32x256xf32>
    %6 = tpu.matmul %4, %5, %cst {dimension_numbers = #tpu.dot_dimension_numbers<[1], [0], [0], [1], [0, 0, 1, 1], [], []>} : vector<32x256xbf16>, vector<256x256xbf16>, vector<32x256xf32> -> vector<32x256xf32>
    %7 = arith.addf %3, %6 : vector<32x256xf32>
    %c0_6 = arith.constant 0 : index
    %c0_7 = arith.constant 0 : index
    %8 = vector.load %arg9[%c0_6, %c0_7] : memref<32x256xf32, #tpu.memory_space<vmem>>, vector<32x256xf32>
    tpu.vector_store %arg9[%c0_6, %c0_7], %7 {strides = array<i32>} : memref<32x256xf32, #tpu.memory_space<vmem>>, vector<32x256xf32>,
    %c8_i32 = arith.constant 8 : i32
    %9 = arith.cmpi eq, %arg2, %c8_i32 : i32
    %10 = arith.extui %9 : i1 to i32
    %c0_i32_8 = arith.constant 0 : i32
    %11 = arith.cmpi ne, %10, %c0_i32_8 : i32
    scf.if %11 {
      %c0_9 = arith.constant 0 : index
      %c0_10 = arith.constant 0 : index
      %12 = vector.load %arg9[%c0_9, %c0_10] : memref<32x256xf32, #tpu.memory_space<vmem>>, vector<32x256xf32>
      %c0_11 = arith.constant 0 : index
      %c0_12 = arith.constant 0 : index
      %13 = vector.load %arg5[%c0_11, %c0_12] : memref<1x256xf32, #tpu.memory_space<vmem>>, vector<1x256xf32>
      %14 = vector.broadcast %13 : vector<1x256xf32> to vector<32x256xf32>
      %15 = arith.mulf %12, %14 : vector<32x256xf32>
      %c0_13 = arith.constant 0 : index
      %c0_14 = arith.constant 0 : index
      %16 = vector.load %arg6[%c0_13, %c0_14] : memref<1x256xf32, #tpu.memory_space<vmem>>, vector<1x256xf32>
      %17 = vector.broadcast %16 : vector<1x256xf32> to vector<32x256xf32>
      %18 = arith.addf %15, %17 : vector<32x256xf32>
      %c0_15 = arith.constant 0 : index
      %c0_16 = arith.constant 0 : index
      %19 = vector.load %arg7[%c0_15, %c0_16] : memref<32x256xbf16, #tpu.memory_space<vmem>>, vector<32x256xbf16>
      %20 = arith.extf %19 : vector<32x256xbf16> to vector<32x256xf32>
      %21 = arith.addf %18, %20 : vector<32x256xf32>
      %22 = arith.truncf %21 : vector<32x256xf32> to vector<32x256xbf16>
      %c0_17 = arith.constant 0 : index
      %c0_18 = arith.constant 0 : index
      %23 = vector.load %arg8[%c0_17, %c0_18] : memref<32x256xbf16, #tpu.memory_space<vmem>>, vector<32x256xbf16>
      tpu.vector_store %arg8[%c0_17, %c0_18], %22 {strides = array<i32>} : memref<32x256xbf16, #tpu.memory_space<vmem>>, vector<32x256xbf16>,
    } else {
    }
    return
  }
  func.func @transform_0(%arg0: i32, %arg1: i32, %arg2: i32) -> (i32, i32) {
    %c0_i32 = arith.constant 0 : i32
    return %arg0, %arg2 : i32, i32
  }
  func.func @transform_1(%arg0: i32, %arg1: i32, %arg2: i32) -> (i32, i32) {
    %c0_i32 = arith.constant 0 : i32
    return %arg2, %arg1 : i32, i32
  }
  func.func @transform_2(%arg0: i32, %arg1: i32, %arg2: i32) -> (i32, i32) {
    %c0_i32 = arith.constant 0 : i32
    %c0_i32_0 = arith.constant 0 : i32
    return %c0_i32, %arg1 : i32, i32
  }
  func.func @transform_3(%arg0: i32, %arg1: i32, %arg2: i32) -> (i32, i32) {
    %c0_i32 = arith.constant 0 : i32
    %c0_i32_0 = arith.constant 0 : i32
    return %c0_i32, %arg1 : i32, i32
  }
  func.func @transform_4(%arg0: i32, %arg1: i32, %arg2: i32) -> (i32, i32) {
    %c0_i32 = arith.constant 0 : i32
    return %arg0, %arg1 : i32, i32
  }
  func.func @transform_5(%arg0: i32, %arg1: i32, %arg2: i32) -> (i32, i32) {
    %c0_i32 = arith.constant 0 : i32
    return %arg0, %arg1 : i32, i32
  }
}

module attributes {stable_mosaic.version = 11 : i64} {
  func.func @kernel(%arg0: i32, %arg1: i32, %arg2: i32, %arg3: memref<32x256xbf16, #tpu.memory_space<vmem>>, %arg4: memref<256x256xbf16, #tpu.memory_space<vmem>>, %arg5: memref<1x256xf32, #tpu.memory_space<vmem>>, %arg6: memref<1x256xf32, #tpu.memory_space<vmem>>, %arg7: memref<32x256xbf16, #tpu.memory_space<vmem>>, %arg8: memref<32x256xf32, #tpu.memory_space<vmem>>) attributes {dimension_semantics = [#tpu.dimension_semantics<parallel>, #tpu.dimension_semantics<parallel>, #tpu.dimension_semantics<arbitrary>], iteration_bounds = array<i64: 1, 2, 4>, scalar_prefetch = 0 : i64, scratch_operands = 1 : i64, tpu.core_type = #tpu.core_type<tc>, window_params = [{transform_indices = @transform_0, window_bounds = array<i64: 32, 256>}, {transform_indices = @transform_1, window_bounds = array<i64: 256, 256>}, {transform_indices = @transform_2, window_bounds = array<i64: 1, 256>}, {transform_indices = @transform_3, window_bounds = array<i64: 1, 256>}, {transform_indices = @transform_4, window_bounds = array<i64: 32, 256>}]} {
    %c0_i32 = arith.constant 0 : i32
    %0 = arith.cmpi eq, %arg2, %c0_i32 : i32
    %1 = arith.extui %0 : i1 to i32
    %c0_i32_0 = arith.constant 0 : i32
    %2 = arith.cmpi ne, %1, %c0_i32_0 : i32
    scf.if %2 {
      %cst_9 = arith.constant 0.000000e+00 : f32
      %12 = vector.broadcast %cst_9 : f32 to vector<32x256xf32>
      %c0_10 = arith.constant 0 : index
      %c0_11 = arith.constant 0 : index
      %13 = vector.load %arg8[%c0_10, %c0_11] : memref<32x256xf32, #tpu.memory_space<vmem>>, vector<32x256xf32>
      tpu.vector_store %arg8[%c0_10, %c0_11], %12 {strides = array<i32>} : memref<32x256xf32, #tpu.memory_space<vmem>>, vector<32x256xf32>,
    } else {
    }
    %c0 = arith.constant 0 : index
    %c0_1 = arith.constant 0 : index
    %3 = vector.load %arg8[%c0, %c0_1] : memref<32x256xf32, #tpu.memory_space<vmem>>, vector<32x256xf32>
    %c0_2 = arith.constant 0 : index
    %c0_3 = arith.constant 0 : index
    %4 = vector.load %arg3[%c0_2, %c0_3] : memref<32x256xbf16, #tpu.memory_space<vmem>>, vector<32x256xbf16>
    %c0_4 = arith.constant 0 : index
    %c0_5 = arith.constant 0 : index
    %5 = vector.load %arg4[%c0_4, %c0_5] : memref<256x256xbf16, #tpu.memory_space<vmem>>, vector<256x256xbf16>
    %cst = arith.constant dense<0.000000e+00> : vector<32x256xf32>
    %6 = tpu.matmul %4, %5, %cst {dimension_numbers = #tpu.dot_dimension_numbers<[1], [0], [0], [1], [0, 0, 1, 1], [], []>} : vector<32x256xbf16>, vector<256x256xbf16>, vector<32x256xf32> -> vector<32x256xf32>
    %7 = arith.addf %3, %6 : vector<32x256xf32>
    %c0_6 = arith.constant 0 : index
    %c0_7 = arith.constant 0 : index
    %8 = vector.load %arg8[%c0_6, %c0_7] : memref<32x256xf32, #tpu.memory_space<vmem>>, vector<32x256xf32>
    tpu.vector_store %arg8[%c0_6, %c0_7], %7 {strides = array<i32>} : memref<32x256xf32, #tpu.memory_space<vmem>>, vector<32x256xf32>,
    %c3_i32 = arith.constant 3 : i32
    %9 = arith.cmpi eq, %arg2, %c3_i32 : i32
    %10 = arith.extui %9 : i1 to i32
    %c0_i32_8 = arith.constant 0 : i32
    %11 = arith.cmpi ne, %10, %c0_i32_8 : i32
    scf.if %11 {
      %c0_9 = arith.constant 0 : index
      %c0_10 = arith.constant 0 : index
      %12 = vector.load %arg8[%c0_9, %c0_10] : memref<32x256xf32, #tpu.memory_space<vmem>>, vector<32x256xf32>
      %c0_11 = arith.constant 0 : index
      %c0_12 = arith.constant 0 : index
      %13 = vector.load %arg5[%c0_11, %c0_12] : memref<1x256xf32, #tpu.memory_space<vmem>>, vector<1x256xf32>
      %14 = vector.broadcast %13 : vector<1x256xf32> to vector<32x256xf32>
      %15 = arith.mulf %12, %14 : vector<32x256xf32>
      %c0_13 = arith.constant 0 : index
      %c0_14 = arith.constant 0 : index
      %16 = vector.load %arg6[%c0_13, %c0_14] : memref<1x256xf32, #tpu.memory_space<vmem>>, vector<1x256xf32>
      %17 = vector.broadcast %16 : vector<1x256xf32> to vector<32x256xf32>
      %18 = arith.addf %15, %17 : vector<32x256xf32>
      %cst_15 = arith.constant 0.000000e+00 : f32
      %19 = vector.broadcast %cst_15 : f32 to vector<32x256xf32>
      %20 = arith.maximumf %18, %19 : vector<32x256xf32>
      %21 = arith.truncf %20 : vector<32x256xf32> to vector<32x256xbf16>
      %c0_16 = arith.constant 0 : index
      %c0_17 = arith.constant 0 : index
      %22 = vector.load %arg7[%c0_16, %c0_17] : memref<32x256xbf16, #tpu.memory_space<vmem>>, vector<32x256xbf16>
      tpu.vector_store %arg7[%c0_16, %c0_17], %21 {strides = array<i32>} : memref<32x256xbf16, #tpu.memory_space<vmem>>, vector<32x256xbf16>,
    } else {
    }
    return
  }
  func.func @transform_0(%arg0: i32, %arg1: i32, %arg2: i32) -> (i32, i32) {
    %c0_i32 = arith.constant 0 : i32
    return %arg0, %arg2 : i32, i32
  }
  func.func @transform_1(%arg0: i32, %arg1: i32, %arg2: i32) -> (i32, i32) {
    %c0_i32 = arith.constant 0 : i32
    return %arg2, %arg1 : i32, i32
  }
  func.func @transform_2(%arg0: i32, %arg1: i32, %arg2: i32) -> (i32, i32) {
    %c0_i32 = arith.constant 0 : i32
    %c0_i32_0 = arith.constant 0 : i32
    return %c0_i32, %arg1 : i32, i32
  }
  func.func @transform_3(%arg0: i32, %arg1: i32, %arg2: i32) -> (i32, i32) {
    %c0_i32 = arith.constant 0 : i32
    %c0_i32_0 = arith.constant 0 : i32
    return %c0_i32, %arg1 : i32, i32
  }
  func.func @transform_4(%arg0: i32, %arg1: i32, %arg2: i32) -> (i32, i32) {
    %c0_i32 = arith.constant 0 : i32
    return %arg0, %arg1 : i32, i32
  }
}

module attributes {stable_mosaic.version = 11 : i64} {
  func.func @kernel(%arg0: i32, %arg1: i32, %arg2: i32, %arg3: memref<128x256xbf16, #tpu.memory_space<vmem>>, %arg4: memref<256x256xbf16, #tpu.memory_space<vmem>>, %arg5: memref<1x256xf32, #tpu.memory_space<vmem>>, %arg6: memref<1x256xf32, #tpu.memory_space<vmem>>, %arg7: memref<128x256xbf16, #tpu.memory_space<vmem>>, %arg8: memref<128x256xf32, #tpu.memory_space<vmem>>) attributes {dimension_semantics = [#tpu.dimension_semantics<parallel>, #tpu.dimension_semantics<parallel>, #tpu.dimension_semantics<arbitrary>], iteration_bounds = array<i64: 1, 1, 2>, scalar_prefetch = 0 : i64, scratch_operands = 1 : i64, tpu.core_type = #tpu.core_type<tc>, window_params = [{transform_indices = @transform_0, window_bounds = array<i64: 128, 256>}, {transform_indices = @transform_1, window_bounds = array<i64: 256, 256>}, {transform_indices = @transform_2, window_bounds = array<i64: 1, 256>}, {transform_indices = @transform_3, window_bounds = array<i64: 1, 256>}, {transform_indices = @transform_4, window_bounds = array<i64: 128, 256>}]} {
    %c0_i32 = arith.constant 0 : i32
    %0 = arith.cmpi eq, %arg2, %c0_i32 : i32
    %1 = arith.extui %0 : i1 to i32
    %c0_i32_0 = arith.constant 0 : i32
    %2 = arith.cmpi ne, %1, %c0_i32_0 : i32
    scf.if %2 {
      %cst_9 = arith.constant 0.000000e+00 : f32
      %12 = vector.broadcast %cst_9 : f32 to vector<128x256xf32>
      %c0_10 = arith.constant 0 : index
      %c0_11 = arith.constant 0 : index
      %13 = vector.load %arg8[%c0_10, %c0_11] : memref<128x256xf32, #tpu.memory_space<vmem>>, vector<128x256xf32>
      tpu.vector_store %arg8[%c0_10, %c0_11], %12 {strides = array<i32>} : memref<128x256xf32, #tpu.memory_space<vmem>>, vector<128x256xf32>,
    } else {
    }
    %c0 = arith.constant 0 : index
    %c0_1 = arith.constant 0 : index
    %3 = vector.load %arg8[%c0, %c0_1] : memref<128x256xf32, #tpu.memory_space<vmem>>, vector<128x256xf32>
    %c0_2 = arith.constant 0 : index
    %c0_3 = arith.constant 0 : index
    %4 = vector.load %arg3[%c0_2, %c0_3] : memref<128x256xbf16, #tpu.memory_space<vmem>>, vector<128x256xbf16>
    %c0_4 = arith.constant 0 : index
    %c0_5 = arith.constant 0 : index
    %5 = vector.load %arg4[%c0_4, %c0_5] : memref<256x256xbf16, #tpu.memory_space<vmem>>, vector<256x256xbf16>
    %cst = arith.constant dense<0.000000e+00> : vector<128x256xf32>
    %6 = tpu.matmul %4, %5, %cst {dimension_numbers = #tpu.dot_dimension_numbers<[1], [0], [0], [1], [0, 0, 1, 1], [], []>} : vector<128x256xbf16>, vector<256x256xbf16>, vector<128x256xf32> -> vector<128x256xf32>
    %7 = arith.addf %3, %6 : vector<128x256xf32>
    %c0_6 = arith.constant 0 : index
    %c0_7 = arith.constant 0 : index
    %8 = vector.load %arg8[%c0_6, %c0_7] : memref<128x256xf32, #tpu.memory_space<vmem>>, vector<128x256xf32>
    tpu.vector_store %arg8[%c0_6, %c0_7], %7 {strides = array<i32>} : memref<128x256xf32, #tpu.memory_space<vmem>>, vector<128x256xf32>,
    %c1_i32 = arith.constant 1 : i32
    %9 = arith.cmpi eq, %arg2, %c1_i32 : i32
    %10 = arith.extui %9 : i1 to i32
    %c0_i32_8 = arith.constant 0 : i32
    %11 = arith.cmpi ne, %10, %c0_i32_8 : i32
    scf.if %11 {
      %c0_9 = arith.constant 0 : index
      %c0_10 = arith.constant 0 : index
      %12 = vector.load %arg8[%c0_9, %c0_10] : memref<128x256xf32, #tpu.memory_space<vmem>>, vector<128x256xf32>
      %c0_11 = arith.constant 0 : index
      %c0_12 = arith.constant 0 : index
      %13 = vector.load %arg5[%c0_11, %c0_12] : memref<1x256xf32, #tpu.memory_space<vmem>>, vector<1x256xf32>
      %14 = vector.broadcast %13 : vector<1x256xf32> to vector<128x256xf32>
      %15 = arith.mulf %12, %14 : vector<128x256xf32>
      %c0_13 = arith.constant 0 : index
      %c0_14 = arith.constant 0 : index
      %16 = vector.load %arg6[%c0_13, %c0_14] : memref<1x256xf32, #tpu.memory_space<vmem>>, vector<1x256xf32>
      %17 = vector.broadcast %16 : vector<1x256xf32> to vector<128x256xf32>
      %18 = arith.addf %15, %17 : vector<128x256xf32>
      %cst_15 = arith.constant 0.000000e+00 : f32
      %19 = vector.broadcast %cst_15 : f32 to vector<128x256xf32>
      %20 = arith.maximumf %18, %19 : vector<128x256xf32>
      %21 = arith.truncf %20 : vector<128x256xf32> to vector<128x256xbf16>
      %c0_16 = arith.constant 0 : index
      %c0_17 = arith.constant 0 : index
      %22 = vector.load %arg7[%c0_16, %c0_17] : memref<128x256xbf16, #tpu.memory_space<vmem>>, vector<128x256xbf16>
      tpu.vector_store %arg7[%c0_16, %c0_17], %21 {strides = array<i32>} : memref<128x256xbf16, #tpu.memory_space<vmem>>, vector<128x256xbf16>,
    } else {
    }
    return
  }
  func.func @transform_0(%arg0: i32, %arg1: i32, %arg2: i32) -> (i32, i32) {
    %c0_i32 = arith.constant 0 : i32
    return %arg0, %arg2 : i32, i32
  }
  func.func @transform_1(%arg0: i32, %arg1: i32, %arg2: i32) -> (i32, i32) {
    %c0_i32 = arith.constant 0 : i32
    return %arg2, %arg1 : i32, i32
  }
  func.func @transform_2(%arg0: i32, %arg1: i32, %arg2: i32) -> (i32, i32) {
    %c0_i32 = arith.constant 0 : i32
    %c0_i32_0 = arith.constant 0 : i32
    return %c0_i32, %arg1 : i32, i32
  }
  func.func @transform_3(%arg0: i32, %arg1: i32, %arg2: i32) -> (i32, i32) {
    %c0_i32 = arith.constant 0 : i32
    %c0_i32_0 = arith.constant 0 : i32
    return %c0_i32, %arg1 : i32, i32
  }
  func.func @transform_4(%arg0: i32, %arg1: i32, %arg2: i32) -> (i32, i32) {
    %c0_i32 = arith.constant 0 : i32
    return %arg0, %arg1 : i32, i32
  }
}

module attributes {stable_mosaic.version = 11 : i64} {
  func.func @kernel(%arg0: i32, %arg1: i32, %arg2: i32, %arg3: memref<512x256xbf16, #tpu.memory_space<vmem>>, %arg4: memref<256x128xbf16, #tpu.memory_space<vmem>>, %arg5: memref<1x128xf32, #tpu.memory_space<vmem>>, %arg6: memref<1x128xf32, #tpu.memory_space<vmem>>, %arg7: memref<512x128xf32, #tpu.memory_space<vmem>>, %arg8: memref<512x128xf32, #tpu.memory_space<vmem>>) attributes {dimension_semantics = [#tpu.dimension_semantics<parallel>, #tpu.dimension_semantics<parallel>, #tpu.dimension_semantics<arbitrary>], iteration_bounds = array<i64: 1, 1, 13>, scalar_prefetch = 0 : i64, scratch_operands = 1 : i64, tpu.core_type = #tpu.core_type<tc>, window_params = [{transform_indices = @transform_0, window_bounds = array<i64: 512, 256>}, {transform_indices = @transform_1, window_bounds = array<i64: 256, 128>}, {transform_indices = @transform_2, window_bounds = array<i64: 1, 128>}, {transform_indices = @transform_3, window_bounds = array<i64: 1, 128>}, {transform_indices = @transform_4, window_bounds = array<i64: 512, 128>}]} {
    %c0_i32 = arith.constant 0 : i32
    %0 = arith.cmpi eq, %arg2, %c0_i32 : i32
    %1 = arith.extui %0 : i1 to i32
    %c0_i32_0 = arith.constant 0 : i32
    %2 = arith.cmpi ne, %1, %c0_i32_0 : i32
    scf.if %2 {
      %cst_9 = arith.constant 0.000000e+00 : f32
      %12 = vector.broadcast %cst_9 : f32 to vector<512x128xf32>
      %c0_10 = arith.constant 0 : index
      %c0_11 = arith.constant 0 : index
      %13 = vector.load %arg8[%c0_10, %c0_11] : memref<512x128xf32, #tpu.memory_space<vmem>>, vector<512x128xf32>
      tpu.vector_store %arg8[%c0_10, %c0_11], %12 {strides = array<i32>} : memref<512x128xf32, #tpu.memory_space<vmem>>, vector<512x128xf32>,
    } else {
    }
    %c0 = arith.constant 0 : index
    %c0_1 = arith.constant 0 : index
    %3 = vector.load %arg8[%c0, %c0_1] : memref<512x128xf32, #tpu.memory_space<vmem>>, vector<512x128xf32>
    %c0_2 = arith.constant 0 : index
    %c0_3 = arith.constant 0 : index
    %4 = vector.load %arg3[%c0_2, %c0_3] : memref<512x256xbf16, #tpu.memory_space<vmem>>, vector<512x256xbf16>
    %c0_4 = arith.constant 0 : index
    %c0_5 = arith.constant 0 : index
    %5 = vector.load %arg4[%c0_4, %c0_5] : memref<256x128xbf16, #tpu.memory_space<vmem>>, vector<256x128xbf16>
    %cst = arith.constant dense<0.000000e+00> : vector<512x128xf32>
    %6 = tpu.matmul %4, %5, %cst {dimension_numbers = #tpu.dot_dimension_numbers<[1], [0], [0], [1], [0, 0, 1, 1], [], []>} : vector<512x256xbf16>, vector<256x128xbf16>, vector<512x128xf32> -> vector<512x128xf32>
    %7 = arith.addf %3, %6 : vector<512x128xf32>
    %c0_6 = arith.constant 0 : index
    %c0_7 = arith.constant 0 : index
    %8 = vector.load %arg8[%c0_6, %c0_7] : memref<512x128xf32, #tpu.memory_space<vmem>>, vector<512x128xf32>
    tpu.vector_store %arg8[%c0_6, %c0_7], %7 {strides = array<i32>} : memref<512x128xf32, #tpu.memory_space<vmem>>, vector<512x128xf32>,
    %c12_i32 = arith.constant 12 : i32
    %9 = arith.cmpi eq, %arg2, %c12_i32 : i32
    %10 = arith.extui %9 : i1 to i32
    %c0_i32_8 = arith.constant 0 : i32
    %11 = arith.cmpi ne, %10, %c0_i32_8 : i32
    scf.if %11 {
      %c0_9 = arith.constant 0 : index
      %c0_10 = arith.constant 0 : index
      %12 = vector.load %arg8[%c0_9, %c0_10] : memref<512x128xf32, #tpu.memory_space<vmem>>, vector<512x128xf32>
      %c0_11 = arith.constant 0 : index
      %c0_12 = arith.constant 0 : index
      %13 = vector.load %arg5[%c0_11, %c0_12] : memref<1x128xf32, #tpu.memory_space<vmem>>, vector<1x128xf32>
      %14 = vector.broadcast %13 : vector<1x128xf32> to vector<512x128xf32>
      %15 = arith.mulf %12, %14 : vector<512x128xf32>
      %c0_13 = arith.constant 0 : index
      %c0_14 = arith.constant 0 : index
      %16 = vector.load %arg6[%c0_13, %c0_14] : memref<1x128xf32, #tpu.memory_space<vmem>>, vector<1x128xf32>
      %17 = vector.broadcast %16 : vector<1x128xf32> to vector<512x128xf32>
      %18 = arith.addf %15, %17 : vector<512x128xf32>
      %19 = math.tanh %18 : vector<512x128xf32>
      %c0_15 = arith.constant 0 : index
      %c0_16 = arith.constant 0 : index
      %20 = vector.load %arg7[%c0_15, %c0_16] : memref<512x128xf32, #tpu.memory_space<vmem>>, vector<512x128xf32>
      tpu.vector_store %arg7[%c0_15, %c0_16], %19 {strides = array<i32>} : memref<512x128xf32, #tpu.memory_space<vmem>>, vector<512x128xf32>,
    } else {
    }
    return
  }
  func.func @transform_0(%arg0: i32, %arg1: i32, %arg2: i32) -> (i32, i32) {
    %c0_i32 = arith.constant 0 : i32
    return %arg0, %arg2 : i32, i32
  }
  func.func @transform_1(%arg0: i32, %arg1: i32, %arg2: i32) -> (i32, i32) {
    %c0_i32 = arith.constant 0 : i32
    return %arg2, %arg1 : i32, i32
  }
  func.func @transform_2(%arg0: i32, %arg1: i32, %arg2: i32) -> (i32, i32) {
    %c0_i32 = arith.constant 0 : i32
    %c0_i32_0 = arith.constant 0 : i32
    return %c0_i32, %arg1 : i32, i32
  }
  func.func @transform_3(%arg0: i32, %arg1: i32, %arg2: i32) -> (i32, i32) {
    %c0_i32 = arith.constant 0 : i32
    %c0_i32_0 = arith.constant 0 : i32
    return %c0_i32, %arg1 : i32, i32
  }
  func.func @transform_4(%arg0: i32, %arg1: i32, %arg2: i32) -> (i32, i32) {
    %c0_i32 = arith.constant 0 : i32
    return %arg0, %arg1 : i32, i32
  }
}

</mosaic_0001>

<llo_original>
// kernel: res_cnn_forward.25
$region0: #{res_cnn_forward.25}
  #allocation0 [shape = 'u32[]', space=smem, size = 0x4, offset = 0x4, fixed_abs, tag = 'smem constant byte address 0x4 - core index']
  #allocation1 [shape = 'u32[144,128]{1,0:T(1,128)}', space=vmem, size = 0x12000, scoped, tag = 'internal scratch']
  #allocation2 [shape = 'f32[128,128]{1,0:T(8,128)}', space=vmem, size = 0x10000, scoped, tag = 'scratch operand']
  %s0 = inlined_call_operand.vmem [shape: bf16[128,768], index: 0, kind: input, shape index: {}]
  %s1 = inlined_call_operand.vmem [shape: bf16[768,128], index: 1, kind: input, shape index: {}]
  %s2 = inlined_call_operand.vmem [shape: f32[1,128], index: 2, kind: input, shape index: {}]
  %s3 = inlined_call_operand.vmem [shape: f32[1,128], index: 3, kind: input, shape index: {}]
  %s4 = inlined_call_operand.vmem [shape: bf16[128,128], index: 4, kind: output, shape index: {}]
  %s5 = sld [smem:[#allocation0]]
  $region95: #{res_cnn_forward.25} parent=0
    _
  %s7 = ssub.s32 1, %s5
  %s8 = scalar_select 0, %s7, %s5
  $region1: #{res_cnn_forward.25} parent=0
    #allocation3 [shape = 'u8[131072]{0}', space=vmem, size = 0x20000, scoped, tag = 'input window, operand 0']
    loop: start=0, step=1, limit=5
    $region2: #{res_cnn_forward.25} parent=1 // loop_pre_header
      _
    $region3: #{res_cnn_forward.25} parent=1 // loop_header
      %s10 = sphi 0, %s14
      %p11 = scmp.ge.s32.totalorder %s10, 5
      %s17 = sphi 0, %s36
      %s18 = sphi 0, %s32
      %s19 = sphi 0, %s28
      %s20 = sphi 0, %s17
      %s21 = sphi 0, %s18
      %s22 = sphi 0, %s19
      %s23 = sphi 0, %s20
      %s24 = sphi 0, %s21
      %s25 = sphi 0, %s22
      %s41 = sphi 0, %s43
      %s44 = sphi 0, %s41
      %s45 = sphi 0, %s44
      %s61 = sphi 0, %s45
      %s69 = sphi 0, %s71
      %s72 = sphi 0, %s69
      %s73 = sphi 0, %s72
      %s89 = sphi 0, %s73
      %s95 = sphi 0, %s97
      %s98 = sphi 0, %s95
      %s99 = sphi 0, %s98
      %s115 = sphi 0, %s99
      %s121 = sphi 0, %s123
      %s124 = sphi 0, %s121
      %s125 = sphi 0, %s124
      %s141 = sphi 0, %s125
      %s149 = sphi 0, %s151
      %s152 = sphi 0, %s149
      %s153 = sphi 0, %s152
      %s169 = sphi 0, %s153
    $region4: #{res_cnn_forward.25} parent=1 // loop_header_branch
      %13 = sbr.rel (%p11) target = $region8
    $region5: #{res_cnn_forward.25} parent=1 // loop_body
      %s15 = ssub.s32 %s10, 1
      %s16 = ssub.s32 %s10, 2
      %s26 = sadd.s32 1, %s19
      %p27 = scmp.ge.s32.totalorder %s26, 3
      %s28 = scalar_select %p27, 0, %s26
      %s29 = sadd.s32 1, %s18
      %s30 = scalar_select %p27, %s29, %s18
      %p31 = scmp.ge.s32.totalorder %s30, 1
      %s32 = scalar_select %p31, 0, %s30
      %s33 = sadd.s32 1, %s17
      %s34 = scalar_select %p31, %s33, %s17
      %p35 = scmp.ge.s32.totalorder %s34, 1
      %s36 = scalar_select %p35, 0, %s34
      %s37 = ssub.s32 %s17, %s36
      %s38 = ssub.s32 %s19, %s28
      %s39 = sor.u32 %s37, %s38
      %p40 = scmp.eq.s32.totalorder %s39, 0
      %s42 = sadd.s32 %s41, 1
      %s43 = scalar_select %p40, %s41, %s42
      %p46 = pneg %p40
      %p47 = scmp.eq.s32.totalorder %s10, 2
      %p48 = por %p46, %p47
      %p49 = scmp.ne.s32.totalorder %s41, %s44
      %p50 = scmp.eq.s32.totalorder %s10, 0
      %p51 = por %p49, %p50
      %p52 = scmp.ne.s32.totalorder %s41, %s44
      %p53 = scmp.eq.s32.totalorder %s15, 2
      %p54 = por %p52, %p53
      %p55 = scmp.ne.s32.totalorder %s44, %s45
      %p56 = scmp.eq.s32.totalorder %s15, 0
      %p57 = por %p55, %p56
      %p58 = scmp.ne.s32.totalorder %s44, %s45
      %p59 = scmp.eq.s32.totalorder %s16, 2
      %p60 = por %p58, %p59
      %p62 = scmp.ne.s32.totalorder %s45, %s61
      %p63 = scmp.eq.s32.totalorder %s16, 0
      %p64 = por %p62, %p63
      %s65 = ssub.s32 %s19, %s28
      %s66 = ssub.s32 %s18, %s32
      %s67 = sor.u32 %s65, %s66
      %p68 = scmp.eq.s32.totalorder %s67, 0
      %s70 = sadd.s32 %s69, 1
      %s71 = scalar_select %p68, %s69, %s70
      %p74 = pneg %p68
      %p75 = scmp.eq.s32.totalorder %s10, 2
      %p76 = por %p74, %p75
      %p77 = scmp.ne.s32.totalorder %s69, %s72
      %p78 = scmp.eq.s32.totalorder %s10, 0
      %p79 = por %p77, %p78
      %p80 = scmp.ne.s32.totalorder %s69, %s72
      %p81 = scmp.eq.s32.totalorder %s15, 2
      %p82 = por %p80, %p81
      %p83 = scmp.ne.s32.totalorder %s72, %s73
      %p84 = scmp.eq.s32.totalorder %s15, 0
      %p85 = por %p83, %p84
      %p86 = scmp.ne.s32.totalorder %s72, %s73
      %p87 = scmp.eq.s32.totalorder %s16, 2
      %p88 = por %p86, %p87
      %p90 = scmp.ne.s32.totalorder %s73, %s89
      %p91 = scmp.eq.s32.totalorder %s16, 0
      %p92 = por %p90, %p91
      %s93 = ssub.s32 %s18, %s32
      %p94 = scmp.eq.s32.totalorder %s93, 0
      %s96 = sadd.s32 %s95, 1
      %s97 = scalar_select %p94, %s95, %s96
      %p100 = pneg %p94
      %p101 = scmp.eq.s32.totalorder %s10, 2
      %p102 = por %p100, %p101
      %p103 = scmp.ne.s32.totalorder %s95, %s98
      %p104 = scmp.eq.s32.totalorder %s10, 0
      %p105 = por %p103, %p104
      %p106 = scmp.ne.s32.totalorder %s95, %s98
      %p107 = scmp.eq.s32.totalorder %s15, 2
      %p108 = por %p106, %p107
      %p109 = scmp.ne.s32.totalorder %s98, %s99
      %p110 = scmp.eq.s32.totalorder %s15, 0
      %p111 = por %p109, %p110
      %p112 = scmp.ne.s32.totalorder %s98, %s99
      %p113 = scmp.eq.s32.totalorder %s16, 2
      %p114 = por %p112, %p113
      %p116 = scmp.ne.s32.totalorder %s99, %s115
      %p117 = scmp.eq.s32.totalorder %s16, 0
      %p118 = por %p116, %p117
      %s119 = ssub.s32 %s18, %s32
      %p120 = scmp.eq.s32.totalorder %s119, 0
      %s122 = sadd.s32 %s121, 1
      %s123 = scalar_select %p120, %s121, %s122
      %p126 = pneg %p120
      %p127 = scmp.eq.s32.totalorder %s10, 2
      %p128 = por %p126, %p127
      %p129 = scmp.ne.s32.totalorder %s121, %s124
      %p130 = scmp.eq.s32.totalorder %s10, 0
      %p131 = por %p129, %p130
      %p132 = scmp.ne.s32.totalorder %s121, %s124
      %p133 = scmp.eq.s32.totalorder %s15, 2
      %p134 = por %p132, %p133
      %p135 = scmp.ne.s32.totalorder %s124, %s125
      %p136 = scmp.eq.s32.totalorder %s15, 0
      %p137 = por %p135, %p136
      %p138 = scmp.ne.s32.totalorder %s124, %s125
      %p139 = scmp.eq.s32.totalorder %s16, 2
      %p140 = por %p138, %p139
      %p142 = scmp.ne.s32.totalorder %s125, %s141
      %p143 = scmp.eq.s32.totalorder %s16, 0
      %p144 = por %p142, %p143
      %s145 = ssub.s32 %s17, %s36
      %s146 = ssub.s32 %s18, %s32
      %s147 = sor.u32 %s145, %s146
      %p148 = scmp.eq.s32.totalorder %s147, 0
      %s150 = sadd.s32 %s149, 1
      %s151 = scalar_select %p148, %s149, %s150
      %p154 = pneg %p148
      %p155 = scmp.eq.s32.totalorder %s10, 2
      %p156 = por %p154, %p155
      %p157 = scmp.ne.s32.totalorder %s149, %s152
      %p158 = scmp.eq.s32.totalorder %s10, 0
      %p159 = por %p157, %p158
      %p160 = scmp.ne.s32.totalorder %s149, %s152
      %p161 = scmp.eq.s32.totalorder %s15, 2
      %p162 = por %p160, %p161
      %p163 = scmp.ne.s32.totalorder %s152, %s153
      %p164 = scmp.eq.s32.totalorder %s15, 0
      %p165 = por %p163, %p164
      %p166 = scmp.ne.s32.totalorder %s152, %s153
      %p167 = scmp.eq.s32.totalorder %s16, 2
      %p168 = por %p166, %p167
      %p170 = scmp.ne.s32.totalorder %s153, %s169
      %p171 = scmp.eq.s32.totalorder %s16, 0
      %p172 = por %p170, %p171
      %p173 = scmp.le.s32.totalorder 1, %s10
      %p174 = scmp.lt.s32.totalorder %s10, 4
      %p175 = pnand %p173, %p174
      %p176 = pneg %p175
      // Predicated region
      $region9: #{res_cnn_forward.25} parent=5 // pred_check
        _
      $region10: #{res_cnn_forward.25} parent=5 // pred_check_branch
        %178 = sbr.rel (%p175) target = $region12
      $region11: #{res_cnn_forward.25} parent=5 // pred_region
        %s179 = ssub.s32 %s10, 1
        // Predicated region
        $region13: #{res_cnn_forward.25} parent=11 // pred_check
          %p180 = pneg %p111
        $region14: #{res_cnn_forward.25} parent=11 // pred_check_branch
          %182 = sbr.rel (%p180) target = $region16
        $region15: #{res_cnn_forward.25} parent=11 // pred_region
          %p183 = scmp.lt.s32.totalorder %s21, 0
          %s184 = scalar_select %p183, %s21, 0
          %s185 = scalar_lea.vmem %s2, %s184
        $region16: #{res_cnn_forward.25} parent=11 // pred_fallthru
          _
        // Predicated region
        $region17: #{res_cnn_forward.25} parent=11 // pred_check
          %p186 = pneg %p137
        $region18: #{res_cnn_forward.25} parent=11 // pred_check_branch
          %188 = sbr.rel (%p186) target = $region20
        $region19: #{res_cnn_forward.25} parent=11 // pred_region
          %p189 = scmp.lt.s32.totalorder %s21, 0
          %s190 = scalar_select %p189, %s21, 0
          %s191 = scalar_lea.vmem %s3, %s190
        $region20: #{res_cnn_forward.25} parent=11 // pred_fallthru
          _
      $region12: #{res_cnn_forward.25} parent=5 // pred_fallthru
        _
      %p192 = scmp.lt.s32.totalorder %s10, 3
      // Predicated region
      $region21: #{res_cnn_forward.25} parent=5 // pred_check
        %p193 = pneg %p192
      $region22: #{res_cnn_forward.25} parent=5 // pred_check_branch
        %195 = sbr.rel (%p193) target = $region24
      $region23: #{res_cnn_forward.25} parent=5 // pred_region
        // Predicated region
        $region25: #{res_cnn_forward.25} parent=23 // pred_check
          %p196 = pneg %p51
        $region26: #{res_cnn_forward.25} parent=23 // pred_check_branch
          %198 = sbr.rel (%p196) target = $region28
        $region27: #{res_cnn_forward.25} parent=23 // pred_region
          %s199 = sand.u32 %s41, 1
          %s200 = sand.u32 %s41, 1
          %s201 = smul.addr %s200, 128
          %s202 = scalar_lea.vmem [#allocation3], %s201
          %s203 = smul.u32 16, %s17
          %s204 = smul.u32 2, %s19
          %s205 = smul.addr %s203, 6
          %s206 = sadd.s32 %s204, %s205
          %s207 = smul.addr %s206, 4
          %s208 = scalar_lea.vmem %s0, %s207
          // Predicated region
          $region29: #{res_cnn_forward.25} parent=27 // pred_check
            _
          $region30: #{res_cnn_forward.25} parent=27 // pred_check_branch
            %210 = sbr.rel (0) target = $region32
          $region31: #{res_cnn_forward.25} parent=27 // pred_region
            // Predicated region
            $region33: #{res_cnn_forward.25} parent=31 // pred_check
              _
            $region34: #{res_cnn_forward.25} parent=31 // pred_check_branch
              %212 = sbr.rel (0) target = $region36
            $region35: #{res_cnn_forward.25} parent=31 // pred_region
              // Predicated region
              $region48: #{res_cnn_forward.25} parent=35 // pred_check
                _
              $region49: #{res_cnn_forward.25} parent=35 // pred_check_branch
                %258 = sbr.rel (0) target = $region51
              $region50: #{res_cnn_forward.25} parent=35 // pred_region
                loop: start=0, step=1, limit=1
                $region52: #{res_cnn_forward.25} parent=50 // loop_pre_header
                  _
                $region53: #{res_cnn_forward.25} parent=50 // loop_header
                  %s260 = sphi 0, %s264
                  %p261 = scmp.ge.s32.totalorder %s260, 1
                  %s265 = sphi %s208, %s208
                  %s266 = sphi %s202, %s202
                $region54: #{res_cnn_forward.25} parent=50 // loop_header_branch
                  %263 = sbr.rel (%p261) target = $region58
                $region55: #{res_cnn_forward.25} parent=50 // loop_body
                  %v267 = vld [vmem:[%s265] sm:$0xff]
                  %268 = vst [vmem:[%s266] sm:$0xff] %v267
                  %v269 = vld [vmem:[%s265 + $0x18] sm:$0xff]
                  %270 = vst [vmem:[%s266 + $0x8] sm:$0xff] %v269
                  %v271 = vld [vmem:[%s265 + $0x30] sm:$0xff]
                  %272 = vst [vmem:[%s266 + $0x10] sm:$0xff] %v271
                  %v273 = vld [vmem:[%s265 + $0x48] sm:$0xff]
                  %274 = vst [vmem:[%s266 + $0x18] sm:$0xff] %v273
                  %v275 = vld [vmem:[%s265 + $0x60] sm:$0xff]
                  %276 = vst [vmem:[%s266 + $0x20] sm:$0xff] %v275
                  %v277 = vld [vmem:[%s265 + $0x78] sm:$0xff]
                  %278 = vst [vmem:[%s266 + $0x28] sm:$0xff] %v277
                  %v279 = vld [vmem:[%s265 + $0x90] sm:$0xff]
                  %280 = vst [vmem:[%s266 + $0x30] sm:$0xff] %v279
                  %v281 = vld [vmem:[%s265 + $0xa8] sm:$0xff]
                  %282 = vst [vmem:[%s266 + $0x38] sm:$0xff] %v281
                  %v283 = vld [vmem:[%s265 + $0xc0] sm:$0xff]
                  %284 = vst [vmem:[%s266 + $0x40] sm:$0xff] %v283
                  %v285 = vld [vmem:[%s265 + $0xd8] sm:$0xff]
                  %286 = vst [vmem:[%s266 + $0x48] sm:$0xff] %v285
                  %v287 = vld [vmem:[%s265 + $0xf0] sm:$0xff]
                  %288 = vst [vmem:[%s266 + $0x50] sm:$0xff] %v287
                  %v289 = vld [vmem:[%s265 + $0x108] sm:$0xff]
                  %290 = vst [vmem:[%s266 + $0x58] sm:$0xff] %v289
                  %v291 = vld [vmem:[%s265 + $0x120] sm:$0xff]
                  %292 = vst [vmem:[%s266 + $0x60] sm:$0xff] %v291
                  %v293 = vld [vmem:[%s265 + $0x138] sm:$0xff]
                  %294 = vst [vmem:[%s266 + $0x68] sm:$0xff] %v293
                  %v295 = vld [vmem:[%s265 + $0x150] sm:$0xff]
                  %296 = vst [vmem:[%s266 + $0x70] sm:$0xff] %v295
                  %v297 = vld [vmem:[%s265 + $0x168] sm:$0xff]
                  %298 = vst [vmem:[%s266 + $0x78] sm:$0xff] %v297
                $region56: #{res_cnn_forward.25} parent=50 // loop_footer
                  %s264 = sadd.s32 1, %s260
                $region57: #{res_cnn_forward.25} parent=50 // loop_footer_branch
                  %259 = sbr.rel target = $region53
                $region58: #{res_cnn_forward.25} parent=50 // loop_exit
                  _
              $region51: #{res_cnn_forward.25} parent=35 // pred_fallthru
                _
              // Predicated region
              $region59: #{res_cnn_forward.25} parent=35 // pred_check
                _
              $region60: #{res_cnn_forward.25} parent=35 // pred_check_branch
                %300 = sbr.rel target = $region62
              $region61: #{res_cnn_forward.25} parent=35 // pred_region
                _
              $region62: #{res_cnn_forward.25} parent=35 // pred_fallthru
                _
            $region36: #{res_cnn_forward.25} parent=31 // pred_fallthru
              _
            // Predicated region
            $region37: #{res_cnn_forward.25} parent=31 // pred_check
              _
            $region38: #{res_cnn_forward.25} parent=31 // pred_check_branch
              %214 = sbr.rel target = $region40
            $region39: #{res_cnn_forward.25} parent=31 // pred_region
              %s216 = ssub.s32 256, 1
              loop: start=0, step=1, limit=1
              $region41: #{res_cnn_forward.25} parent=39 // loop_pre_header
                _
              $region42: #{res_cnn_forward.25} parent=39 // loop_header
                %s218 = sphi 0, %s222
                %p219 = scmp.ge.s32.totalorder %s218, 1
                %s223 = sphi %s208, %s208
                %s224 = sphi %s202, %s202
              $region43: #{res_cnn_forward.25} parent=39 // loop_header_branch
                %221 = sbr.rel (%p219) target = $region47
              $region44: #{res_cnn_forward.25} parent=39 // loop_body
                %v225 = vld [vmem:[%s223] sm:%s216]
                %226 = vst [vmem:[%s224] sm:%s216] %v225
                %v227 = vld [vmem:[%s223 + $0x18] sm:%s216]
                %228 = vst [vmem:[%s224 + $0x8] sm:%s216] %v227
                %v229 = vld [vmem:[%s223 + $0x30] sm:%s216]
                %230 = vst [vmem:[%s224 + $0x10] sm:%s216] %v229
                %v231 = vld [vmem:[%s223 + $0x48] sm:%s216]
                %232 = vst [vmem:[%s224 + $0x18] sm:%s216] %v231
                %v233 = vld [vmem:[%s223 + $0x60] sm:%s216]
                %234 = vst [vmem:[%s224 + $0x20] sm:%s216] %v233
                %v235 = vld [vmem:[%s223 + $0x78] sm:%s216]
                %236 = vst [vmem:[%s224 + $0x28] sm:%s216] %v235
                %v237 = vld [vmem:[%s223 + $0x90] sm:%s216]
                %238 = vst [vmem:[%s224 + $0x30] sm:%s216] %v237
                %v239 = vld [vmem:[%s223 + $0xa8] sm:%s216]
                %240 = vst [vmem:[%s224 + $0x38] sm:%s216] %v239
                %v241 = vld [vmem:[%s223 + $0xc0] sm:%s216]
                %242 = vst [vmem:[%s224 + $0x40] sm:%s216] %v241
                %v243 = vld [vmem:[%s223 + $0xd8] sm:%s216]
                %244 = vst [vmem:[%s224 + $0x48] sm:%s216] %v243
                %v245 = vld [vmem:[%s223 + $0xf0] sm:%s216]
                %246 = vst [vmem:[%s224 + $0x50] sm:%s216] %v245
                %v247 = vld [vmem:[%s223 + $0x108] sm:%s216]
                %248 = vst [vmem:[%s224 + $0x58] sm:%s216] %v247
                %v249 = vld [vmem:[%s223 + $0x120] sm:%s216]
                %250 = vst [vmem:[%s224 + $0x60] sm:%s216] %v249
                %v251 = vld [vmem:[%s223 + $0x138] sm:%s216]
                %252 = vst [vmem:[%s224 + $0x68] sm:%s216] %v251
                %v253 = vld [vmem:[%s223 + $0x150] sm:%s216]
                %254 = vst [vmem:[%s224 + $0x70] sm:%s216] %v253
                %v255 = vld [vmem:[%s223 + $0x168] sm:%s216]
                %256 = vst [vmem:[%s224 + $0x78] sm:%s216] %v255
              $region45: #{res_cnn_forward.25} parent=39 // loop_footer
                %s222 = sadd.s32 1, %s218
              $region46: #{res_cnn_forward.25} parent=39 // loop_footer_branch
                %217 = sbr.rel target = $region42
              $region47: #{res_cnn_forward.25} parent=39 // loop_exit
                _
            $region40: #{res_cnn_forward.25} parent=31 // pred_fallthru
              _
          $region32: #{res_cnn_forward.25} parent=27 // pred_fallthru
            _
          %301 = vnop
        $region28: #{res_cnn_forward.25} parent=23 // pred_fallthru
          _
        // Predicated region
        $region63: #{res_cnn_forward.25} parent=23 // pred_check
          %p302 = pneg %p79
        $region64: #{res_cnn_forward.25} parent=23 // pred_check_branch
          %304 = sbr.rel (%p302) target = $region66
        $region65: #{res_cnn_forward.25} parent=23 // pred_region
          %s305 = smul.u32 32, %s19
          %p306 = scmp.lt.s32.totalorder %s305, 95
          %s307 = scalar_select %p306, %s305, 95
          %p308 = scmp.lt.s32.totalorder %s18, 0
          %s309 = scalar_select %p308, %s18, 0
          %s310 = sadd.s32 %s309, %s307
          %s311 = smul.addr %s310, 4
          %s312 = scalar_lea.vmem %s1, %s311
          %s313 = smul.u32 32, %s19
        $region66: #{res_cnn_forward.25} parent=23 // pred_fallthru
          _
      $region24: #{res_cnn_forward.25} parent=5 // pred_fallthru
        _
      %p314 = scmp.le.s32.totalorder 1, %s10
      %p315 = scmp.lt.s32.totalorder %s10, 4
      %p316 = pnand %p314, %p315
      %p317 = pneg %p316
      // Predicated region
      $region67: #{res_cnn_forward.25} parent=5 // pred_check
        _
      $region68: #{res_cnn_forward.25} parent=5 // pred_check_branch
        %319 = sbr.rel (%p316) target = $region70
      $region69: #{res_cnn_forward.25} parent=5 // pred_region
        %s320 = ssub.s32 %s10, 1
        %s321 = sand.u32 %s44, 1
        %s322 = sand.u32 %s44, 1
        %s323 = smul.addr %s322, 128
        %s324 = scalar_lea.vmem [#allocation3], %s323
        // Predicated region
        $region71: #{res_cnn_forward.25} parent=69 // pred_check
          %p325 = pneg %p57
        $region72: #{res_cnn_forward.25} parent=69 // pred_check_branch
          %327 = sbr.rel (%p325) target = $region74
        $region73: #{res_cnn_forward.25} parent=69 // pred_region
          _
        $region74: #{res_cnn_forward.25} parent=69 // pred_fallthru
          _
        %s328 = sand.u32 %s44, 1
        %s329 = sand.u32 %s44, 1
        %s330 = smul.addr %s329, 128
        %s331 = scalar_lea.vmem [#allocation3], %s330
        %p332 = pneg %p57
        %p333 = pneg %p54
        %s334 = smul.u32 32, %s22
        %p335 = scmp.lt.s32.totalorder %s334, 95
        %s336 = scalar_select %p335, %s334, 95
        %p337 = scmp.lt.s32.totalorder %s21, 0
        %s338 = scalar_select %p337, %s21, 0
        %s339 = sadd.s32 %s338, %s336
        %s340 = smul.addr %s339, 4
        %s341 = scalar_lea.vmem %s1, %s340
        %p342 = pneg %p85
        %p343 = pneg %p82
        %p344 = scmp.lt.s32.totalorder %s21, 0
        %s345 = scalar_select %p344, %s21, 0
        %s346 = scalar_lea.vmem %s2, %s345
        %p347 = pneg %p111
        %p348 = pneg %p108
        %p349 = scmp.lt.s32.totalorder %s21, 0
        %s350 = scalar_select %p349, %s21, 0
        %s351 = scalar_lea.vmem %s3, %s350
        %p352 = pneg %p137
        %p353 = pneg %p134
        %p354 = pneg %p165
        %p355 = pneg %p162
        %s356 = smul.u32 16, %s20
        %p357 = scmp.lt.s32.totalorder %s356, 15
        %s358 = scalar_select %p357, %s356, 15
        %p359 = scmp.lt.s32.totalorder %s21, 0
        %s360 = scalar_select %p359, %s21, 0
        %s361 = sadd.s32 %s360, %s358
        %s362 = smul.addr %s361, 4
        %s363 = scalar_lea.vmem %s4, %s362
        %s364 = smul.u32 16, %s20
        %s365 = smul.u32 2, %s22
        %s366 = smul.u32 32, %s22
        %p367 = scmp.lt.s32.totalorder %s366, 95
        %s368 = scalar_select %p367, %s366, 95
        %p369 = scmp.lt.s32.totalorder %s21, 0
        %s370 = scalar_select %p369, %s21, 0
        %s371 = sadd.s32 %s370, %s368
        %s372 = smul.addr %s371, 4
        %s373 = scalar_lea.vmem %s1, %s372
        %s374 = smul.u32 32, %s22
        %p375 = scmp.lt.s32.totalorder %s21, 0
        %s376 = scalar_select %p375, %s21, 0
        %s377 = scalar_lea.vmem %s2, %s376
        %p378 = scmp.lt.s32.totalorder %s21, 0
        %s379 = scalar_select %p378, %s21, 0
        %s380 = scalar_lea.vmem %s3, %s379
        %s381 = smul.u32 16, %s20
        %p382 = scmp.lt.s32.totalorder %s381, 15
        %s383 = scalar_select %p382, %s381, 15
        %p384 = scmp.lt.s32.totalorder %s21, 0
        %s385 = scalar_select %p384, %s21, 0
        %s386 = sadd.s32 %s385, %s383
        %s387 = smul.addr %s386, 4
        %s388 = scalar_lea.vmem %s4, %s387
        %s389 = smul.u32 16, %s20
        %p391 = scmp.eq.s32.totalorder %s22, 0
        // Predicated region
        $region75: #{res_cnn_forward.25} parent=69 // pred_check
          %p392 = pneg %p391
        $region76: #{res_cnn_forward.25} parent=69 // pred_check_branch
          %394 = sbr.rel (%p392) target = $region78
        $region77: #{res_cnn_forward.25} parent=69 // pred_region
          %395 = vst [vmem:[#allocation2] sm:$0xff] 0.0
          %396 = vst [vmem:[#allocation2 + $0x8] sm:$0xff] 0.0
          %397 = vst [vmem:[#allocation2 + $0x10] sm:$0xff] 0.0
          %398 = vst [vmem:[#allocation2 + $0x18] sm:$0xff] 0.0
          %399 = vst [vmem:[#allocation2 + $0x20] sm:$0xff] 0.0
          %400 = vst [vmem:[#allocation2 + $0x28] sm:$0xff] 0.0
          %401 = vst [vmem:[#allocation2 + $0x30] sm:$0xff] 0.0
          %402 = vst [vmem:[#allocation2 + $0x38] sm:$0xff] 0.0
          %403 = vst [vmem:[#allocation2 + $0x40] sm:$0xff] 0.0
          %404 = vst [vmem:[#allocation2 + $0x48] sm:$0xff] 0.0
          %405 = vst [vmem:[#allocation2 + $0x50] sm:$0xff] 0.0
          %406 = vst [vmem:[#allocation2 + $0x58] sm:$0xff] 0.0
          %407 = vst [vmem:[#allocation2 + $0x60] sm:$0xff] 0.0
          %408 = vst [vmem:[#allocation2 + $0x68] sm:$0xff] 0.0
          %409 = vst [vmem:[#allocation2 + $0x70] sm:$0xff] 0.0
          %410 = vst [vmem:[#allocation2 + $0x78] sm:$0xff] 0.0
        $region78: #{res_cnn_forward.25} parent=69 // pred_fallthru
          _
        %v411 = vld [vmem:[#allocation2] sm:$0xff]
        %v412 = vld [vmem:[#allocation2 + $0x8] sm:$0xff]
        %v413 = vld [vmem:[#allocation2 + $0x10] sm:$0xff]
        %v414 = vld [vmem:[#allocation2 + $0x18] sm:$0xff]
        %v415 = vld [vmem:[#allocation2 + $0x20] sm:$0xff]
        %v416 = vld [vmem:[#allocation2 + $0x28] sm:$0xff]
        %v417 = vld [vmem:[#allocation2 + $0x30] sm:$0xff]
        %v418 = vld [vmem:[#allocation2 + $0x38] sm:$0xff]
        %v419 = vld [vmem:[#allocation2 + $0x40] sm:$0xff]
        %v420 = vld [vmem:[#allocation2 + $0x48] sm:$0xff]
        %v421 = vld [vmem:[#allocation2 + $0x50] sm:$0xff]
        %v422 = vld [vmem:[#allocation2 + $0x58] sm:$0xff]
        %v423 = vld [vmem:[#allocation2 + $0x60] sm:$0xff]
        %v424 = vld [vmem:[#allocation2 + $0x68] sm:$0xff]
        %v425 = vld [vmem:[#allocation2 + $0x70] sm:$0xff]
        %v426 = vld [vmem:[#allocation2 + $0x78] sm:$0xff]
        %v427 = vld [vmem:[%s324] sm:$0xff]
        %v428 = vld [vmem:[%s324 + $0x8] sm:$0xff]
        %v429 = vld [vmem:[%s324 + $0x10] sm:$0xff]
        %v430 = vld [vmem:[%s324 + $0x18] sm:$0xff]
        %v431 = vld [vmem:[%s324 + $0x20] sm:$0xff]
        %v432 = vld [vmem:[%s324 + $0x28] sm:$0xff]
        %v433 = vld [vmem:[%s324 + $0x30] sm:$0xff]
        %v434 = vld [vmem:[%s324 + $0x38] sm:$0xff]
        %v435 = vld [vmem:[%s324 + $0x40] sm:$0xff]
        %v436 = vld [vmem:[%s324 + $0x48] sm:$0xff]
        %v437 = vld [vmem:[%s324 + $0x50] sm:$0xff]
        %v438 = vld [vmem:[%s324 + $0x58] sm:$0xff]
        %v439 = vld [vmem:[%s324 + $0x60] sm:$0xff]
        %v440 = vld [vmem:[%s324 + $0x68] sm:$0xff]
        %v441 = vld [vmem:[%s324 + $0x70] sm:$0xff]
        %v442 = vld [vmem:[%s324 + $0x78] sm:$0xff]
        %v443 = vld [vmem:[%s373] sm:$0xf]
        %v444 = vld [vmem:[%s373 + $0x4] sm:$0xf]
        %v445 = vld [vmem:[%s373 + $0x8] sm:$0xf]
        %v446 = vld [vmem:[%s373 + $0xc] sm:$0xf]
        %v447 = vld [vmem:[%s373 + $0x10] sm:$0xf]
        %v448 = vld [vmem:[%s373 + $0x14] sm:$0xf]
        %v449 = vld [vmem:[%s373 + $0x18] sm:$0xf]
        %v450 = vld [vmem:[%s373 + $0x1c] sm:$0xf]
        %v451 = vld [vmem:[%s373 + $0x20] sm:$0xf]
        %v452 = vld [vmem:[%s373 + $0x24] sm:$0xf]
        %v453 = vld [vmem:[%s373 + $0x28] sm:$0xf]
        %v454 = vld [vmem:[%s373 + $0x2c] sm:$0xf]
        %v455 = vld [vmem:[%s373 + $0x30] sm:$0xf]
        %v456 = vld [vmem:[%s373 + $0x34] sm:$0xf]
        %v457 = vld [vmem:[%s373 + $0x38] sm:$0xf]
        %v458 = vld [vmem:[%s373 + $0x3c] sm:$0xf]
        %v459 = vld [vmem:[%s373 + $0x40] sm:$0xf]
        %v460 = vld [vmem:[%s373 + $0x44] sm:$0xf]
        %v461 = vld [vmem:[%s373 + $0x48] sm:$0xf]
        %v462 = vld [vmem:[%s373 + $0x4c] sm:$0xf]
        %v463 = vld [vmem:[%s373 + $0x50] sm:$0xf]
        %v464 = vld [vmem:[%s373 + $0x54] sm:$0xf]
        %v465 = vld [vmem:[%s373 + $0x58] sm:$0xf]
        %v466 = vld [vmem:[%s373 + $0x5c] sm:$0xf]
        %v467 = vld [vmem:[%s373 + $0x60] sm:$0xf]
        %v468 = vld [vmem:[%s373 + $0x64] sm:$0xf]
        %v469 = vld [vmem:[%s373 + $0x68] sm:$0xf]
        %v470 = vld [vmem:[%s373 + $0x6c] sm:$0xf]
        %v471 = vld [vmem:[%s373 + $0x70] sm:$0xf]
        %v472 = vld [vmem:[%s373 + $0x74] sm:$0xf]
        %v473 = vld [vmem:[%s373 + $0x78] sm:$0xf]
        %v474 = vld [vmem:[%s373 + $0x7c] sm:$0xf]
        %v491 = vunpack.c.l.b16 %v427
        %v492 = vunpack.c.h.b16 %v427
        %v493 = vunpack.c.l.b16 %v428
        %v494 = vunpack.c.h.b16 %v428
        %v495 = vunpack.c.l.b16 %v429
        %v496 = vunpack.c.h.b16 %v429
        %v497 = vunpack.c.l.b16 %v430
        %v498 = vunpack.c.h.b16 %v430
        %v499 = vunpack.c.l.b16 %v431
        %v500 = vunpack.c.h.b16 %v431
        %v501 = vunpack.c.l.b16 %v432
        %v502 = vunpack.c.h.b16 %v432
        %v503 = vunpack.c.l.b16 %v433
        %v504 = vunpack.c.h.b16 %v433
        %v505 = vunpack.c.l.b16 %v434
        %v506 = vunpack.c.h.b16 %v434
        %v507 = vunpack.c.l.b16 %v435
        %v508 = vunpack.c.h.b16 %v435
        %v509 = vunpack.c.l.b16 %v436
        %v510 = vunpack.c.h.b16 %v436
        %v511 = vunpack.c.l.b16 %v437
        %v512 = vunpack.c.h.b16 %v437
        %v513 = vunpack.c.l.b16 %v438
        %v514 = vunpack.c.h.b16 %v438
        %v515 = vunpack.c.l.b16 %v439
        %v516 = vunpack.c.h.b16 %v439
        %v517 = vunpack.c.l.b16 %v440
        %v518 = vunpack.c.h.b16 %v440
        %v519 = vunpack.c.l.b16 %v441
        %v520 = vunpack.c.h.b16 %v441
        %v521 = vunpack.c.l.b16 %v442
        %v522 = vunpack.c.h.b16 %v442
        %v523 = vpack.c.b16 %v493, %v491
        %v524 = vpack.c.b16 %v494, %v492
        %v525 = vpack.c.b16 %v497, %v495
        %v526 = vpack.c.b16 %v498, %v496
        %v527 = vpack.c.b16 %v501, %v499
        %v528 = vpack.c.b16 %v502, %v500
        %v529 = vpack.c.b16 %v505, %v503
        %v530 = vpack.c.b16 %v506, %v504
        %v531 = vpack.c.b16 %v509, %v507
        %v532 = vpack.c.b16 %v510, %v508
        %v533 = vpack.c.b16 %v513, %v511
        %v534 = vpack.c.b16 %v514, %v512
        %v535 = vpack.c.b16 %v517, %v515
        %v536 = vpack.c.b16 %v518, %v516
        %v537 = vpack.c.b16 %v521, %v519
        %v538 = vpack.c.b16 %v522, %v520
        %v587 = vunpack.c.l.b16 %v443
        %v588 = vunpack.c.l.b16 %v444
        %v589 = vunpack.c.l.b16 %v445
        %v590 = vunpack.c.l.b16 %v446
        %v591 = vunpack.c.l.b16 %v447
        %v592 = vunpack.c.l.b16 %v448
        %v593 = vunpack.c.l.b16 %v449
        %v594 = vunpack.c.l.b16 %v450
        %v595 = vunpack.c.l.b16 %v451
        %v596 = vunpack.c.l.b16 %v452
        %v597 = vunpack.c.l.b16 %v453
        %v598 = vunpack.c.l.b16 %v454
        %v599 = vunpack.c.l.b16 %v455
        %v600 = vunpack.c.l.b16 %v456
        %v601 = vunpack.c.l.b16 %v457
        %v602 = vunpack.c.l.b16 %v458
        %v603 = vunpack.c.l.b16 %v459
        %v604 = vunpack.c.l.b16 %v460
        %v605 = vunpack.c.l.b16 %v461
        %v606 = vunpack.c.l.b16 %v462
        %v607 = vunpack.c.l.b16 %v463
        %v608 = vunpack.c.l.b16 %v464
        %v609 = vunpack.c.l.b16 %v465
        %v610 = vunpack.c.l.b16 %v466
        %v611 = vunpack.c.l.b16 %v467
        %v612 = vunpack.c.l.b16 %v468
        %v613 = vunpack.c.l.b16 %v469
        %v614 = vunpack.c.l.b16 %v470
        %v615 = vunpack.c.l.b16 %v471
        %v616 = vunpack.c.l.b16 %v472
        %v617 = vunpack.c.l.b16 %v473
        %v618 = vunpack.c.l.b16 %v474
        %v619 = vpack.c.b16 %v588, %v587
        %v620 = vpack.c.b16 %v590, %v589
        %v621 = vpack.c.b16 %v592, %v591
        %v622 = vpack.c.b16 %v594, %v593
        %v623 = vpack.c.b16 %v596, %v595
        %v624 = vpack.c.b16 %v598, %v597
        %v625 = vpack.c.b16 %v600, %v599
        %v626 = vpack.c.b16 %v602, %v601
        %v627 = vpack.c.b16 %v604, %v603
        %v628 = vpack.c.b16 %v606, %v605
        %v629 = vpack.c.b16 %v608, %v607
        %v630 = vpack.c.b16 %v610, %v609
        %v631 = vpack.c.b16 %v612, %v611
        %v632 = vpack.c.b16 %v614, %v613
        %v633 = vpack.c.b16 %v616, %v615
        %v634 = vpack.c.b16 %v618, %v617
        %651 = vmatprep.subr.bf16.mxu0 0
        %652 = vmatpush1.bf16.msra.mxu0 %v626
        %653 = vmatprep.subr.bf16.mxu0 0
        %654 = vmatpush1.bf16.msra.mxu0 %v625
        %655 = vmatprep.subr.bf16.mxu0 0
        %656 = vmatpush1.bf16.msra.mxu0 %v624
        %657 = vmatprep.subr.bf16.mxu0 0
        %658 = vmatpush1.bf16.msra.mxu0 %v623
        %659 = vmatprep.subr.bf16.mxu0 0
        %660 = vmatpush1.bf16.msra.mxu0 %v622
        %661 = vmatprep.subr.bf16.mxu0 0
        %662 = vmatpush1.bf16.msra.mxu0 %v621
        %663 = vmatprep.subr.bf16.mxu0 0
        %664 = vmatpush1.bf16.msra.mxu0 %v620
        %665 = vmatprep.subr.bf16.mxu0 0
        %666 = vmatpush1.bf16.msra.mxu0 %v619
        %667 = vmatprep.subr.bf16.mxu0 0
        %668 = vmatpush2.bf16.msra.mxu0 %v634
        %669 = vmatprep.subr.bf16.mxu0 0
        %670 = vmatpush2.bf16.msra.mxu0 %v633
        %671 = vmatprep.subr.bf16.mxu0 0
        %672 = vmatpush2.bf16.msra.mxu0 %v632
        %673 = vmatprep.subr.bf16.mxu0 0
        %674 = vmatpush2.bf16.msra.mxu0 %v631
        %675 = vmatprep.subr.bf16.mxu0 0
        %676 = vmatpush2.bf16.msra.mxu0 %v630
        %677 = vmatprep.subr.bf16.mxu0 0
        %678 = vmatpush2.bf16.msra.mxu0 %v629
        %679 = vmatprep.subr.bf16.mxu0 0
        %680 = vmatpush2.bf16.msra.mxu0 %v628
        %681 = vmatprep.subr.bf16.mxu0 0
        %682 = vmatpush2.bf16.msra.mxu0 %v627
        %683 = vmatprep.mubr.bf16.mxu0 %v524
        %684 = vmatmul.mubr.bf16.gmra.mxu0 %v523
        %v685 = vpop.f32.mrf.mxu0
        %v686 = vadd.f32 0.0, %v685
        %v687 = vpop.f32.mrf.mxu0
        %v688 = vpop.f32.mrf.mxu0
        %v689 = vadd.f32 0.0, %v688
        %v690 = vpop.f32.mrf.mxu0
        %691 = vmatprep.mubr.bf16.mxu0 %v526
        %692 = vmatmul.mubr.bf16.gmra.mxu0 %v525
        %v693 = vpop.f32.mrf.mxu0
        %v694 = vadd.f32 0.0, %v693
        %v695 = vpop.f32.mrf.mxu0
        %v696 = vpop.f32.mrf.mxu0
        %v697 = vadd.f32 0.0, %v696
        %v698 = vpop.f32.mrf.mxu0
        %699 = vmatprep.mubr.bf16.mxu0 %v528
        %700 = vmatmul.mubr.bf16.gmra.mxu0 %v527
        %v701 = vpop.f32.mrf.mxu0
        %v702 = vadd.f32 0.0, %v701
        %v703 = vpop.f32.mrf.mxu0
        %v704 = vpop.f32.mrf.mxu0
        %v705 = vadd.f32 0.0, %v704
        %v706 = vpop.f32.mrf.mxu0
        %707 = vmatprep.mubr.bf16.mxu0 %v530
        %708 = vmatmul.mubr.bf16.gmra.mxu0 %v529
        %v709 = vpop.f32.mrf.mxu0
        %v710 = vadd.f32 0.0, %v709
        %v711 = vpop.f32.mrf.mxu0
        %v712 = vpop.f32.mrf.mxu0
        %v713 = vadd.f32 0.0, %v712
        %v714 = vpop.f32.mrf.mxu0
        %715 = vmatprep.mubr.bf16.mxu0 %v532
        %716 = vmatmul.mubr.bf16.gmra.mxu0 %v531
        %v717 = vpop.f32.mrf.mxu0
        %v718 = vadd.f32 0.0, %v717
        %v719 = vpop.f32.mrf.mxu0
        %v720 = vpop.f32.mrf.mxu0
        %v721 = vadd.f32 0.0, %v720
        %v722 = vpop.f32.mrf.mxu0
        %723 = vmatprep.mubr.bf16.mxu0 %v534
        %724 = vmatmul.mubr.bf16.gmra.mxu0 %v533
        %v725 = vpop.f32.mrf.mxu0
        %v726 = vadd.f32 0.0, %v725
        %v727 = vpop.f32.mrf.mxu0
        %v728 = vpop.f32.mrf.mxu0
        %v729 = vadd.f32 0.0, %v728
        %v730 = vpop.f32.mrf.mxu0
        %731 = vmatprep.mubr.bf16.mxu0 %v536
        %732 = vmatmul.mubr.bf16.gmra.mxu0 %v535
        %v733 = vpop.f32.mrf.mxu0
        %v734 = vadd.f32 0.0, %v733
        %v735 = vpop.f32.mrf.mxu0
        %v736 = vpop.f32.mrf.mxu0
        %v737 = vadd.f32 0.0, %v736
        %v738 = vpop.f32.mrf.mxu0
        %739 = vmatprep.mubr.bf16.mxu0 %v538
        %740 = vmatmul.mubr.bf16.gmra.mxu0 %v537
        %v741 = vpop.f32.mrf.mxu0
        %v742 = vadd.f32 0.0, %v741
        %v743 = vpop.f32.mrf.mxu0
        %v744 = vpop.f32.mrf.mxu0
        %v745 = vadd.f32 0.0, %v744
        %v746 = vpop.f32.mrf.mxu0
        %747 = vdwg.mxu0
        %v748 = vadd.f32 %v411, %v686
        %v749 = vadd.f32 %v412, %v689
        %v750 = vadd.f32 %v413, %v694
        %v751 = vadd.f32 %v414, %v697
        %v752 = vadd.f32 %v415, %v702
        %v753 = vadd.f32 %v416, %v705
        %v754 = vadd.f32 %v417, %v710
        %v755 = vadd.f32 %v418, %v713
        %v756 = vadd.f32 %v419, %v718
        %v757 = vadd.f32 %v420, %v721
        %v758 = vadd.f32 %v421, %v726
        %v759 = vadd.f32 %v422, %v729
        %v760 = vadd.f32 %v423, %v734
        %v761 = vadd.f32 %v424, %v737
        %v762 = vadd.f32 %v425, %v742
        %v763 = vadd.f32 %v426, %v745
        %764 = vst [vmem:[#allocation2] sm:$0xff] %v748
        %765 = vst [vmem:[#allocation2 + $0x8] sm:$0xff] %v749
        %766 = vst [vmem:[#allocation2 + $0x10] sm:$0xff] %v750
        %767 = vst [vmem:[#allocation2 + $0x18] sm:$0xff] %v751
        %768 = vst [vmem:[#allocation2 + $0x20] sm:$0xff] %v752
        %769 = vst [vmem:[#allocation2 + $0x28] sm:$0xff] %v753
        %770 = vst [vmem:[#allocation2 + $0x30] sm:$0xff] %v754
        %771 = vst [vmem:[#allocation2 + $0x38] sm:$0xff] %v755
        %772 = vst [vmem:[#allocation2 + $0x40] sm:$0xff] %v756
        %773 = vst [vmem:[#allocation2 + $0x48] sm:$0xff] %v757
        %774 = vst [vmem:[#allocation2 + $0x50] sm:$0xff] %v758
        %775 = vst [vmem:[#allocation2 + $0x58] sm:$0xff] %v759
        %776 = vst [vmem:[#allocation2 + $0x60] sm:$0xff] %v760
        %777 = vst [vmem:[#allocation2 + $0x68] sm:$0xff] %v761
        %778 = vst [vmem:[#allocation2 + $0x70] sm:$0xff] %v762
        %779 = vst [vmem:[#allocation2 + $0x78] sm:$0xff] %v763
        %p780 = scmp.eq.s32.totalorder %s22, 2
        // Predicated region
        $region79: #{res_cnn_forward.25} parent=69 // pred_check
          %p781 = pneg %p780
        $region80: #{res_cnn_forward.25} parent=69 // pred_check_branch
          %783 = sbr.rel (%p781) target = $region82
        $region81: #{res_cnn_forward.25} parent=69 // pred_region
          %v784 = vld [vmem:[#allocation2] sm:$0xff]
          %v785 = vld [vmem:[#allocation2 + $0x8] sm:$0xff]
          %v786 = vld [vmem:[#allocation2 + $0x10] sm:$0xff]
          %v787 = vld [vmem:[#allocation2 + $0x18] sm:$0xff]
          %v788 = vld [vmem:[#allocation2 + $0x20] sm:$0xff]
          %v789 = vld [vmem:[#allocation2 + $0x28] sm:$0xff]
          %v790 = vld [vmem:[#allocation2 + $0x30] sm:$0xff]
          %v791 = vld [vmem:[#allocation2 + $0x38] sm:$0xff]
          %v792 = vld [vmem:[#allocation2 + $0x40] sm:$0xff]
          %v793 = vld [vmem:[#allocation2 + $0x48] sm:$0xff]
          %v794 = vld [vmem:[#allocation2 + $0x50] sm:$0xff]
          %v795 = vld [vmem:[#allocation2 + $0x58] sm:$0xff]
          %v796 = vld [vmem:[#allocation2 + $0x60] sm:$0xff]
          %v797 = vld [vmem:[#allocation2 + $0x68] sm:$0xff]
          %v798 = vld [vmem:[#allocation2 + $0x70] sm:$0xff]
          %v799 = vld [vmem:[#allocation2 + $0x78] sm:$0xff]
          %v800 = vld [vmem:[%s377] sm:$0x1]
          %v802 = vlaneseq
          %v803 = vshrl.u32 %v802, 7
          %v804 = vsub.s32 0, %v803
          %v805 = vrot.slane %v800, %v804
          %v807 = vmul.f32 %v784, %v805
          %v808 = vmul.f32 %v785, %v805
          %v809 = vmul.f32 %v786, %v805
          %v810 = vmul.f32 %v787, %v805
          %v811 = vmul.f32 %v788, %v805
          %v812 = vmul.f32 %v789, %v805
          %v813 = vmul.f32 %v790, %v805
          %v814 = vmul.f32 %v791, %v805
          %v815 = vmul.f32 %v792, %v805
          %v816 = vmul.f32 %v793, %v805
          %v817 = vmul.f32 %v794, %v805
          %v818 = vmul.f32 %v795, %v805
          %v819 = vmul.f32 %v796, %v805
          %v820 = vmul.f32 %v797, %v805
          %v821 = vmul.f32 %v798, %v805
          %v822 = vmul.f32 %v799, %v805
          %v823 = vld [vmem:[%s380] sm:$0x1]
          %v825 = vlaneseq
          %v826 = vshrl.u32 %v825, 7
          %v827 = vsub.s32 0, %v826
          %v828 = vrot.slane %v823, %v827
          %v830 = vadd.f32 %v807, %v828
          %v831 = vadd.f32 %v808, %v828
          %v832 = vadd.f32 %v809, %v828
          %v833 = vadd.f32 %v810, %v828
          %v834 = vadd.f32 %v811, %v828
          %v835 = vadd.f32 %v812, %v828
          %v836 = vadd.f32 %v813, %v828
          %v837 = vadd.f32 %v814, %v828
          %v838 = vadd.f32 %v815, %v828
          %v839 = vadd.f32 %v816, %v828
          %v840 = vadd.f32 %v817, %v828
          %v841 = vadd.f32 %v818, %v828
          %v842 = vadd.f32 %v819, %v828
          %v843 = vadd.f32 %v820, %v828
          %v844 = vadd.f32 %v821, %v828
          %v845 = vadd.f32 %v822, %v828
          %v846 = vmax.f32 %v830, 0.0
          %v847 = vmax.f32 %v831, 0.0
          %v848 = vmax.f32 %v832, 0.0
          %v849 = vmax.f32 %v833, 0.0
          %v850 = vmax.f32 %v834, 0.0
          %v851 = vmax.f32 %v835, 0.0
          %v852 = vmax.f32 %v836, 0.0
          %v853 = vmax.f32 %v837, 0.0
          %v854 = vmax.f32 %v838, 0.0
          %v855 = vmax.f32 %v839, 0.0
          %v856 = vmax.f32 %v840, 0.0
          %v857 = vmax.f32 %v841, 0.0
          %v858 = vmax.f32 %v842, 0.0
          %v859 = vmax.f32 %v843, 0.0
          %v860 = vmax.f32 %v844, 0.0
          %v861 = vmax.f32 %v845, 0.0
          %v862 = vpack.c.bf16 %v847, %v846
          %v863 = vpack.c.bf16 %v849, %v848
          %v864 = vpack.c.bf16 %v851, %v850
          %v865 = vpack.c.bf16 %v853, %v852
          %v866 = vpack.c.bf16 %v855, %v854
          %v867 = vpack.c.bf16 %v857, %v856
          %v868 = vpack.c.bf16 %v859, %v858
          %v869 = vpack.c.bf16 %v861, %v860
          %v878 = vunpack.c.l.b16 %v862
          %v879 = vunpack.c.h.b16 %v862
          %v880 = vunpack.c.l.b16 %v863
          %v881 = vunpack.c.h.b16 %v863
          %v882 = vunpack.c.l.b16 %v864
          %v883 = vunpack.c.h.b16 %v864
          %v884 = vunpack.c.l.b16 %v865
          %v885 = vunpack.c.h.b16 %v865
          %v886 = vunpack.c.l.b16 %v866
          %v887 = vunpack.c.h.b16 %v866
          %v888 = vunpack.c.l.b16 %v867
          %v889 = vunpack.c.h.b16 %v867
          %v890 = vunpack.c.l.b16 %v868
          %v891 = vunpack.c.h.b16 %v868
          %v892 = vunpack.c.l.b16 %v869
          %v893 = vunpack.c.h.b16 %v869
          %v894 = vpack.c.b16 %v878, %v878
          %v895 = vpack.c.b16 %v879, %v879
          %v896 = vpack.c.b16 %v880, %v880
          %v897 = vpack.c.b16 %v881, %v881
          %v898 = vpack.c.b16 %v882, %v882
          %v899 = vpack.c.b16 %v883, %v883
          %v900 = vpack.c.b16 %v884, %v884
          %v901 = vpack.c.b16 %v885, %v885
          %v902 = vpack.c.b16 %v886, %v886
          %v903 = vpack.c.b16 %v887, %v887
          %v904 = vpack.c.b16 %v888, %v888
          %v905 = vpack.c.b16 %v889, %v889
          %v906 = vpack.c.b16 %v890, %v890
          %v907 = vpack.c.b16 %v891, %v891
          %v908 = vpack.c.b16 %v892, %v892
          %v909 = vpack.c.b16 %v893, %v893
          %926 = vst [vmem:[%s388] sm:$0xf] %v894
          %927 = vst [vmem:[%s388 + $0x4] sm:$0xf] %v895
          %928 = vst [vmem:[%s388 + $0x8] sm:$0xf] %v896
          %929 = vst [vmem:[%s388 + $0xc] sm:$0xf] %v897
          %930 = vst [vmem:[%s388 + $0x10] sm:$0xf] %v898
          %931 = vst [vmem:[%s388 + $0x14] sm:$0xf] %v899
          %932 = vst [vmem:[%s388 + $0x18] sm:$0xf] %v900
          %933 = vst [vmem:[%s388 + $0x1c] sm:$0xf] %v901
          %934 = vst [vmem:[%s388 + $0x20] sm:$0xf] %v902
          %935 = vst [vmem:[%s388 + $0x24] sm:$0xf] %v903
          %936 = vst [vmem:[%s388 + $0x28] sm:$0xf] %v904
          %937 = vst [vmem:[%s388 + $0x2c] sm:$0xf] %v905
          %938 = vst [vmem:[%s388 + $0x30] sm:$0xf] %v906
          %939 = vst [vmem:[%s388 + $0x34] sm:$0xf] %v907
          %940 = vst [vmem:[%s388 + $0x38] sm:$0xf] %v908
          %941 = vst [vmem:[%s388 + $0x3c] sm:$0xf] %v909
        $region82: #{res_cnn_forward.25} parent=69 // pred_fallthru
          _
        %s942 = smul.u32 16, %s20
        %p943 = scmp.lt.s32.totalorder %s942, 15
        %s944 = scalar_select %p943, %s942, 15
        %p945 = scmp.lt.s32.totalorder %s21, 0
        %s946 = scalar_select %p945, %s21, 0
        %s947 = sadd.s32 %s946, %s944
        %s948 = smul.addr %s947, 4
        %s949 = scalar_lea.vmem %s4, %s948
        // Predicated region
        $region83: #{res_cnn_forward.25} parent=69 // pred_check
          %p950 = pneg %p162
        $region84: #{res_cnn_forward.25} parent=69 // pred_check_branch
          %952 = sbr.rel (%p950) target = $region86
        $region85: #{res_cnn_forward.25} parent=69 // pred_region
          %s953 = smul.u32 16, %s20
        $region86: #{res_cnn_forward.25} parent=69 // pred_fallthru
          _
        // Predicated region
        $region87: #{res_cnn_forward.25} parent=69 // pred_check
          %p954 = pneg %p162
        $region88: #{res_cnn_forward.25} parent=69 // pred_check_branch
          %956 = sbr.rel (%p954) target = $region90
        $region89: #{res_cnn_forward.25} parent=69 // pred_region
          %s957 = smul.u32 16, %s20
          %p958 = scmp.lt.s32.totalorder %s957, 15
          %s959 = scalar_select %p958, %s957, 15
          %p960 = scmp.lt.s32.totalorder %s21, 0
          %s961 = scalar_select %p960, %s21, 0
          %s962 = sadd.s32 %s961, %s959
          %s963 = smul.addr %s962, 4
          %s964 = scalar_lea.vmem %s4, %s963
        $region90: #{res_cnn_forward.25} parent=69 // pred_fallthru
          _
      $region70: #{res_cnn_forward.25} parent=5 // pred_fallthru
        _
      %p965 = scmp.le.s32.totalorder 2, %s10
      // Predicated region
      $region91: #{res_cnn_forward.25} parent=5 // pred_check
        %p966 = pneg %p965
      $region92: #{res_cnn_forward.25} parent=5 // pred_check_branch
        %968 = sbr.rel (%p966) target = $region94
      $region93: #{res_cnn_forward.25} parent=5 // pred_region
        %s969 = ssub.s32 %s10, 2
      $region94: #{res_cnn_forward.25} parent=5 // pred_fallthru
        _
    $region6: #{res_cnn_forward.25} parent=1 // loop_footer
      %s14 = sadd.s32 1, %s10
    $region7: #{res_cnn_forward.25} parent=1 // loop_footer_branch
      %9 = sbr.rel target = $region3
    $region8: #{res_cnn_forward.25} parent=1 // loop_exit
      _

// kernel: res_cnn_forward.24
$region0: #{res_cnn_forward.24}
  #allocation0 [shape = 'u32[]', space=smem, size = 0x4, offset = 0x4, fixed_abs, tag = 'smem constant byte address 0x4 - core index']
  #allocation1 [shape = 'u32[144,128]{1,0:T(1,128)}', space=vmem, size = 0x12000, scoped, tag = 'internal scratch']
  #allocation2 [shape = 'f32[512,128]{1,0:T(8,128)}', space=vmem, size = 0x40000, scoped, tag = 'scratch operand']
  %s0 = inlined_call_operand.vmem [shape: bf16[512,128], index: 0, kind: input, shape index: {}]
  %s1 = inlined_call_operand.vmem [shape: bf16[128,128], index: 1, kind: input, shape index: {}]
  %s2 = inlined_call_operand.vmem [shape: f32[1,128], index: 2, kind: input, shape index: {}]
  %s3 = inlined_call_operand.vmem [shape: f32[1,128], index: 3, kind: input, shape index: {}]
  %s4 = inlined_call_operand.vmem [shape: bf16[512,128], index: 4, kind: output, shape index: {}]
  %s5 = sld [smem:[#allocation0]]
  $region34: #{res_cnn_forward.24} parent=0
    _
  %s7 = ssub.s32 1, %s5
  %s8 = scalar_select 0, %s7, %s5
  // Predicated region
  $region2: #{res_cnn_forward.24} parent=0 // pred_check
    _
  $region3: #{res_cnn_forward.24} parent=0 // pred_check_branch
    %10 = sbr.rel (0) target = $region5
  $region4: #{res_cnn_forward.24} parent=0 // pred_region
    _
  $region5: #{res_cnn_forward.24} parent=0 // pred_fallthru
    _
  // Predicated region
  $region6: #{res_cnn_forward.24} parent=0 // pred_check
    _
  $region7: #{res_cnn_forward.24} parent=0 // pred_check_branch
    %12 = sbr.rel (0) target = $region9
  $region8: #{res_cnn_forward.24} parent=0 // pred_region
    _
  $region9: #{res_cnn_forward.24} parent=0 // pred_fallthru
    _
  // Predicated region
  $region10: #{res_cnn_forward.24} parent=0 // pred_check
    _
  $region11: #{res_cnn_forward.24} parent=0 // pred_check_branch
    %14 = sbr.rel (0) target = $region13
  $region12: #{res_cnn_forward.24} parent=0 // pred_region
    _
  $region13: #{res_cnn_forward.24} parent=0 // pred_fallthru
    _
  // Predicated region
  $region14: #{res_cnn_forward.24} parent=0 // pred_check
    _
  $region15: #{res_cnn_forward.24} parent=0 // pred_check_branch
    %16 = sbr.rel (0) target = $region17
  $region16: #{res_cnn_forward.24} parent=0 // pred_region
    _
  $region17: #{res_cnn_forward.24} parent=0 // pred_fallthru
    _
  %p18 = scmp.eq.s32.totalorder 0, 0
  // Predicated region
  $region18: #{res_cnn_forward.24} parent=0 // pred_check
    %p19 = pneg %p18
  $region19: #{res_cnn_forward.24} parent=0 // pred_check_branch
    %21 = sbr.rel (%p19) target = $region21
  $region20: #{res_cnn_forward.24} parent=0 // pred_region
    %22 = vst [vmem:[#allocation2] sm:$0xff] 0.0
    %23 = vst [vmem:[#allocation2 + $0x8] sm:$0xff] 0.0
    %24 = vst [vmem:[#allocation2 + $0x10] sm:$0xff] 0.0
    %25 = vst [vmem:[#allocation2 + $0x18] sm:$0xff] 0.0
    %26 = vst [vmem:[#allocation2 + $0x20] sm:$0xff] 0.0
    %27 = vst [vmem:[#allocation2 + $0x28] sm:$0xff] 0.0
    %28 = vst [vmem:[#allocation2 + $0x30] sm:$0xff] 0.0
    %29 = vst [vmem:[#allocation2 + $0x38] sm:$0xff] 0.0
    %30 = vst [vmem:[#allocation2 + $0x40] sm:$0xff] 0.0
    %31 = vst [vmem:[#allocation2 + $0x48] sm:$0xff] 0.0
    %32 = vst [vmem:[#allocation2 + $0x50] sm:$0xff] 0.0
    %33 = vst [vmem:[#allocation2 + $0x58] sm:$0xff] 0.0
    %34 = vst [vmem:[#allocation2 + $0x60] sm:$0xff] 0.0
    %35 = vst [vmem:[#allocation2 + $0x68] sm:$0xff] 0.0
    %36 = vst [vmem:[#allocation2 + $0x70] sm:$0xff] 0.0
    %37 = vst [vmem:[#allocation2 + $0x78] sm:$0xff] 0.0
    %38 = vst [vmem:[#allocation2 + $0x80] sm:$0xff] 0.0
    %39 = vst [vmem:[#allocation2 + $0x88] sm:$0xff] 0.0
    %40 = vst [vmem:[#allocation2 + $0x90] sm:$0xff] 0.0
    %41 = vst [vmem:[#allocation2 + $0x98] sm:$0xff] 0.0
    %42 = vst [vmem:[#allocation2 + $0xa0] sm:$0xff] 0.0
    %43 = vst [vmem:[#allocation2 + $0xa8] sm:$0xff] 0.0
    %44 = vst [vmem:[#allocation2 + $0xb0] sm:$0xff] 0.0
    %45 = vst [vmem:[#allocation2 + $0xb8] sm:$0xff] 0.0
    %46 = vst [vmem:[#allocation2 + $0xc0] sm:$0xff] 0.0
    %47 = vst [vmem:[#allocation2 + $0xc8] sm:$0xff] 0.0
    %48 = vst [vmem:[#allocation2 + $0xd0] sm:$0xff] 0.0
    %49 = vst [vmem:[#allocation2 + $0xd8] sm:$0xff] 0.0
    %50 = vst [vmem:[#allocation2 + $0xe0] sm:$0xff] 0.0
    %51 = vst [vmem:[#allocation2 + $0xe8] sm:$0xff] 0.0
    %52 = vst [vmem:[#allocation2 + $0xf0] sm:$0xff] 0.0
    %53 = vst [vmem:[#allocation2 + $0xf8] sm:$0xff] 0.0
    %54 = vst [vmem:[#allocation2 + $0x100] sm:$0xff] 0.0
    %55 = vst [vmem:[#allocation2 + $0x108] sm:$0xff] 0.0
    %56 = vst [vmem:[#allocation2 + $0x110] sm:$0xff] 0.0
    %57 = vst [vmem:[#allocation2 + $0x118] sm:$0xff] 0.0
    %58 = vst [vmem:[#allocation2 + $0x120] sm:$0xff] 0.0
    %59 = vst [vmem:[#allocation2 + $0x128] sm:$0xff] 0.0
    %60 = vst [vmem:[#allocation2 + $0x130] sm:$0xff] 0.0
    %61 = vst [vmem:[#allocation2 + $0x138] sm:$0xff] 0.0
    %62 = vst [vmem:[#allocation2 + $0x140] sm:$0xff] 0.0
    %63 = vst [vmem:[#allocation2 + $0x148] sm:$0xff] 0.0
    %64 = vst [vmem:[#allocation2 + $0x150] sm:$0xff] 0.0
    %65 = vst [vmem:[#allocation2 + $0x158] sm:$0xff] 0.0
    %66 = vst [vmem:[#allocation2 + $0x160] sm:$0xff] 0.0
    %67 = vst [vmem:[#allocation2 + $0x168] sm:$0xff] 0.0
    %68 = vst [vmem:[#allocation2 + $0x170] sm:$0xff] 0.0
    %69 = vst [vmem:[#allocation2 + $0x178] sm:$0xff] 0.0
    %70 = vst [vmem:[#allocation2 + $0x180] sm:$0xff] 0.0
    %71 = vst [vmem:[#allocation2 + $0x188] sm:$0xff] 0.0
    %72 = vst [vmem:[#allocation2 + $0x190] sm:$0xff] 0.0
    %73 = vst [vmem:[#allocation2 + $0x198] sm:$0xff] 0.0
    %74 = vst [vmem:[#allocation2 + $0x1a0] sm:$0xff] 0.0
    %75 = vst [vmem:[#allocation2 + $0x1a8] sm:$0xff] 0.0
    %76 = vst [vmem:[#allocation2 + $0x1b0] sm:$0xff] 0.0
    %77 = vst [vmem:[#allocation2 + $0x1b8] sm:$0xff] 0.0
    %78 = vst [vmem:[#allocation2 + $0x1c0] sm:$0xff] 0.0
    %79 = vst [vmem:[#allocation2 + $0x1c8] sm:$0xff] 0.0
    %80 = vst [vmem:[#allocation2 + $0x1d0] sm:$0xff] 0.0
    %81 = vst [vmem:[#allocation2 + $0x1d8] sm:$0xff] 0.0
    %82 = vst [vmem:[#allocation2 + $0x1e0] sm:$0xff] 0.0
    %83 = vst [vmem:[#allocation2 + $0x1e8] sm:$0xff] 0.0
    %84 = vst [vmem:[#allocation2 + $0x1f0] sm:$0xff] 0.0
    %85 = vst [vmem:[#allocation2 + $0x1f8] sm:$0xff] 0.0
  $region21: #{res_cnn_forward.24} parent=0 // pred_fallthru
    _
  %v86 = vld [vmem:[#allocation2] sm:$0xff]
  %v87 = vld [vmem:[#allocation2 + $0x8] sm:$0xff]
  %v88 = vld [vmem:[#allocation2 + $0x10] sm:$0xff]
  %v89 = vld [vmem:[#allocation2 + $0x18] sm:$0xff]
  %v90 = vld [vmem:[#allocation2 + $0x20] sm:$0xff]
  %v91 = vld [vmem:[#allocation2 + $0x28] sm:$0xff]
  %v92 = vld [vmem:[#allocation2 + $0x30] sm:$0xff]
  %v93 = vld [vmem:[#allocation2 + $0x38] sm:$0xff]
  %v94 = vld [vmem:[#allocation2 + $0x40] sm:$0xff]
  %v95 = vld [vmem:[#allocation2 + $0x48] sm:$0xff]
  %v96 = vld [vmem:[#allocation2 + $0x50] sm:$0xff]
  %v97 = vld [vmem:[#allocation2 + $0x58] sm:$0xff]
  %v98 = vld [vmem:[#allocation2 + $0x60] sm:$0xff]
  %v99 = vld [vmem:[#allocation2 + $0x68] sm:$0xff]
  %v100 = vld [vmem:[#allocation2 + $0x70] sm:$0xff]
  %v101 = vld [vmem:[#allocation2 + $0x78] sm:$0xff]
  %v102 = vld [vmem:[#allocation2 + $0x80] sm:$0xff]
  %v103 = vld [vmem:[#allocation2 + $0x88] sm:$0xff]
  %v104 = vld [vmem:[#allocation2 + $0x90] sm:$0xff]
  %v105 = vld [vmem:[#allocation2 + $0x98] sm:$0xff]
  %v106 = vld [vmem:[#allocation2 + $0xa0] sm:$0xff]
  %v107 = vld [vmem:[#allocation2 + $0xa8] sm:$0xff]
  %v108 = vld [vmem:[#allocation2 + $0xb0] sm:$0xff]
  %v109 = vld [vmem:[#allocation2 + $0xb8] sm:$0xff]
  %v110 = vld [vmem:[#allocation2 + $0xc0] sm:$0xff]
  %v111 = vld [vmem:[#allocation2 + $0xc8] sm:$0xff]
  %v112 = vld [vmem:[#allocation2 + $0xd0] sm:$0xff]
  %v113 = vld [vmem:[#allocation2 + $0xd8] sm:$0xff]
  %v114 = vld [vmem:[#allocation2 + $0xe0] sm:$0xff]
  %v115 = vld [vmem:[#allocation2 + $0xe8] sm:$0xff]
  %v116 = vld [vmem:[#allocation2 + $0xf0] sm:$0xff]
  %v117 = vld [vmem:[#allocation2 + $0xf8] sm:$0xff]
  %v118 = vld [vmem:[#allocation2 + $0x100] sm:$0xff]
  %v119 = vld [vmem:[#allocation2 + $0x108] sm:$0xff]
  %v120 = vld [vmem:[#allocation2 + $0x110] sm:$0xff]
  %v121 = vld [vmem:[#allocation2 + $0x118] sm:$0xff]
  %v122 = vld [vmem:[#allocation2 + $0x120] sm:$0xff]
  %v123 = vld [vmem:[#allocation2 + $0x128] sm:$0xff]
  %v124 = vld [vmem:[#allocation2 + $0x130] sm:$0xff]
  %v125 = vld [vmem:[#allocation2 + $0x138] sm:$0xff]
  %v126 = vld [vmem:[#allocation2 + $0x140] sm:$0xff]
  %v127 = vld [vmem:[#allocation2 + $0x148] sm:$0xff]
  %v128 = vld [vmem:[#allocation2 + $0x150] sm:$0xff]
  %v129 = vld [vmem:[#allocation2 + $0x158] sm:$0xff]
  %v130 = vld [vmem:[#allocation2 + $0x160] sm:$0xff]
  %v131 = vld [vmem:[#allocation2 + $0x168] sm:$0xff]
  %v132 = vld [vmem:[#allocation2 + $0x170] sm:$0xff]
  %v133 = vld [vmem:[#allocation2 + $0x178] sm:$0xff]
  %v134 = vld [vmem:[#allocation2 + $0x180] sm:$0xff]
  %v135 = vld [vmem:[#allocation2 + $0x188] sm:$0xff]
  %v136 = vld [vmem:[#allocation2 + $0x190] sm:$0xff]
  %v137 = vld [vmem:[#allocation2 + $0x198] sm:$0xff]
  %v138 = vld [vmem:[#allocation2 + $0x1a0] sm:$0xff]
  %v139 = vld [vmem:[#allocation2 + $0x1a8] sm:$0xff]
  %v140 = vld [vmem:[#allocation2 + $0x1b0] sm:$0xff]
  %v141 = vld [vmem:[#allocation2 + $0x1b8] sm:$0xff]
  %v142 = vld [vmem:[#allocation2 + $0x1c0] sm:$0xff]
  %v143 = vld [vmem:[#allocation2 + $0x1c8] sm:$0xff]
  %v144 = vld [vmem:[#allocation2 + $0x1d0] sm:$0xff]
  %v145 = vld [vmem:[#allocation2 + $0x1d8] sm:$0xff]
  %v146 = vld [vmem:[#allocation2 + $0x1e0] sm:$0xff]
  %v147 = vld [vmem:[#allocation2 + $0x1e8] sm:$0xff]
  %v148 = vld [vmem:[#allocation2 + $0x1f0] sm:$0xff]
  %v149 = vld [vmem:[#allocation2 + $0x1f8] sm:$0xff]
  %v150 = vld [vmem:[%s0] sm:$0xf]
  %v151 = vld [vmem:[%s0 + $0x4] sm:$0xf]
  %v152 = vld [vmem:[%s0 + $0x8] sm:$0xf]
  %v153 = vld [vmem:[%s0 + $0xc] sm:$0xf]
  %v154 = vld [vmem:[%s0 + $0x10] sm:$0xf]
  %v155 = vld [vmem:[%s0 + $0x14] sm:$0xf]
  %v156 = vld [vmem:[%s0 + $0x18] sm:$0xf]
  %v157 = vld [vmem:[%s0 + $0x1c] sm:$0xf]
  %v158 = vld [vmem:[%s0 + $0x20] sm:$0xf]
  %v159 = vld [vmem:[%s0 + $0x24] sm:$0xf]
  %v160 = vld [vmem:[%s0 + $0x28] sm:$0xf]
  %v161 = vld [vmem:[%s0 + $0x2c] sm:$0xf]
  %v162 = vld [vmem:[%s0 + $0x30] sm:$0xf]
  %v163 = vld [vmem:[%s0 + $0x34] sm:$0xf]
  %v164 = vld [vmem:[%s0 + $0x38] sm:$0xf]
  %v165 = vld [vmem:[%s0 + $0x3c] sm:$0xf]
  %v166 = vld [vmem:[%s0 + $0x40] sm:$0xf]
  %v167 = vld [vmem:[%s0 + $0x44] sm:$0xf]
  %v168 = vld [vmem:[%s0 + $0x48] sm:$0xf]
  %v169 = vld [vmem:[%s0 + $0x4c] sm:$0xf]
  %v170 = vld [vmem:[%s0 + $0x50] sm:$0xf]
  %v171 = vld [vmem:[%s0 + $0x54] sm:$0xf]
  %v172 = vld [vmem:[%s0 + $0x58] sm:$0xf]
  %v173 = vld [vmem:[%s0 + $0x5c] sm:$0xf]
  %v174 = vld [vmem:[%s0 + $0x60] sm:$0xf]
  %v175 = vld [vmem:[%s0 + $0x64] sm:$0xf]
  %v176 = vld [vmem:[%s0 + $0x68] sm:$0xf]
  %v177 = vld [vmem:[%s0 + $0x6c] sm:$0xf]
  %v178 = vld [vmem:[%s0 + $0x70] sm:$0xf]
  %v179 = vld [vmem:[%s0 + $0x74] sm:$0xf]
  %v180 = vld [vmem:[%s0 + $0x78] sm:$0xf]
  %v181 = vld [vmem:[%s0 + $0x7c] sm:$0xf]
  %v182 = vld [vmem:[%s0 + $0x80] sm:$0xf]
  %v183 = vld [vmem:[%s0 + $0x84] sm:$0xf]
  %v184 = vld [vmem:[%s0 + $0x88] sm:$0xf]
  %v185 = vld [vmem:[%s0 + $0x8c] sm:$0xf]
  %v186 = vld [vmem:[%s0 + $0x90] sm:$0xf]
  %v187 = vld [vmem:[%s0 + $0x94] sm:$0xf]
  %v188 = vld [vmem:[%s0 + $0x98] sm:$0xf]
  %v189 = vld [vmem:[%s0 + $0x9c] sm:$0xf]
  %v190 = vld [vmem:[%s0 + $0xa0] sm:$0xf]
  %v191 = vld [vmem:[%s0 + $0xa4] sm:$0xf]
  %v192 = vld [vmem:[%s0 + $0xa8] sm:$0xf]
  %v193 = vld [vmem:[%s0 + $0xac] sm:$0xf]
  %v194 = vld [vmem:[%s0 + $0xb0] sm:$0xf]
  %v195 = vld [vmem:[%s0 + $0xb4] sm:$0xf]
  %v196 = vld [vmem:[%s0 + $0xb8] sm:$0xf]
  %v197 = vld [vmem:[%s0 + $0xbc] sm:$0xf]
  %v198 = vld [vmem:[%s0 + $0xc0] sm:$0xf]
  %v199 = vld [vmem:[%s0 + $0xc4] sm:$0xf]
  %v200 = vld [vmem:[%s0 + $0xc8] sm:$0xf]
  %v201 = vld [vmem:[%s0 + $0xcc] sm:$0xf]
  %v202 = vld [vmem:[%s0 + $0xd0] sm:$0xf]
  %v203 = vld [vmem:[%s0 + $0xd4] sm:$0xf]
  %v204 = vld [vmem:[%s0 + $0xd8] sm:$0xf]
  %v205 = vld [vmem:[%s0 + $0xdc] sm:$0xf]
  %v206 = vld [vmem:[%s0 + $0xe0] sm:$0xf]
  %v207 = vld [vmem:[%s0 + $0xe4] sm:$0xf]
  %v208 = vld [vmem:[%s0 + $0xe8] sm:$0xf]
  %v209 = vld [vmem:[%s0 + $0xec] sm:$0xf]
  %v210 = vld [vmem:[%s0 + $0xf0] sm:$0xf]
  %v211 = vld [vmem:[%s0 + $0xf4] sm:$0xf]
  %v212 = vld [vmem:[%s0 + $0xf8] sm:$0xf]
  %v213 = vld [vmem:[%s0 + $0xfc] sm:$0xf]
  %v214 = vld [vmem:[%s1] sm:$0xf]
  %v215 = vld [vmem:[%s1 + $0x4] sm:$0xf]
  %v216 = vld [vmem:[%s1 + $0x8] sm:$0xf]
  %v217 = vld [vmem:[%s1 + $0xc] sm:$0xf]
  %v218 = vld [vmem:[%s1 + $0x10] sm:$0xf]
  %v219 = vld [vmem:[%s1 + $0x14] sm:$0xf]
  %v220 = vld [vmem:[%s1 + $0x18] sm:$0xf]
  %v221 = vld [vmem:[%s1 + $0x1c] sm:$0xf]
  %v222 = vld [vmem:[%s1 + $0x20] sm:$0xf]
  %v223 = vld [vmem:[%s1 + $0x24] sm:$0xf]
  %v224 = vld [vmem:[%s1 + $0x28] sm:$0xf]
  %v225 = vld [vmem:[%s1 + $0x2c] sm:$0xf]
  %v226 = vld [vmem:[%s1 + $0x30] sm:$0xf]
  %v227 = vld [vmem:[%s1 + $0x34] sm:$0xf]
  %v228 = vld [vmem:[%s1 + $0x38] sm:$0xf]
  %v229 = vld [vmem:[%s1 + $0x3c] sm:$0xf]
  %v294 = vunpack.c.l.b16 %v150
  %v295 = vunpack.c.l.b16 %v151
  %v296 = vunpack.c.l.b16 %v152
  %v297 = vunpack.c.l.b16 %v153
  %v298 = vunpack.c.l.b16 %v154
  %v299 = vunpack.c.l.b16 %v155
  %v300 = vunpack.c.l.b16 %v156
  %v301 = vunpack.c.l.b16 %v157
  %v302 = vunpack.c.l.b16 %v158
  %v303 = vunpack.c.l.b16 %v159
  %v304 = vunpack.c.l.b16 %v160
  %v305 = vunpack.c.l.b16 %v161
  %v306 = vunpack.c.l.b16 %v162
  %v307 = vunpack.c.l.b16 %v163
  %v308 = vunpack.c.l.b16 %v164
  %v309 = vunpack.c.l.b16 %v165
  %v310 = vunpack.c.l.b16 %v166
  %v311 = vunpack.c.l.b16 %v167
  %v312 = vunpack.c.l.b16 %v168
  %v313 = vunpack.c.l.b16 %v169
  %v314 = vunpack.c.l.b16 %v170
  %v315 = vunpack.c.l.b16 %v171
  %v316 = vunpack.c.l.b16 %v172
  %v317 = vunpack.c.l.b16 %v173
  %v318 = vunpack.c.l.b16 %v174
  %v319 = vunpack.c.l.b16 %v175
  %v320 = vunpack.c.l.b16 %v176
  %v321 = vunpack.c.l.b16 %v177
  %v322 = vunpack.c.l.b16 %v178
  %v323 = vunpack.c.l.b16 %v179
  %v324 = vunpack.c.l.b16 %v180
  %v325 = vunpack.c.l.b16 %v181
  %v326 = vunpack.c.l.b16 %v182
  %v327 = vunpack.c.l.b16 %v183
  %v328 = vunpack.c.l.b16 %v184
  %v329 = vunpack.c.l.b16 %v185
  %v330 = vunpack.c.l.b16 %v186
  %v331 = vunpack.c.l.b16 %v187
  %v332 = vunpack.c.l.b16 %v188
  %v333 = vunpack.c.l.b16 %v189
  %v334 = vunpack.c.l.b16 %v190
  %v335 = vunpack.c.l.b16 %v191
  %v336 = vunpack.c.l.b16 %v192
  %v337 = vunpack.c.l.b16 %v193
  %v338 = vunpack.c.l.b16 %v194
  %v339 = vunpack.c.l.b16 %v195
  %v340 = vunpack.c.l.b16 %v196
  %v341 = vunpack.c.l.b16 %v197
  %v342 = vunpack.c.l.b16 %v198
  %v343 = vunpack.c.l.b16 %v199
  %v344 = vunpack.c.l.b16 %v200
  %v345 = vunpack.c.l.b16 %v201
  %v346 = vunpack.c.l.b16 %v202
  %v347 = vunpack.c.l.b16 %v203
  %v348 = vunpack.c.l.b16 %v204
  %v349 = vunpack.c.l.b16 %v205
  %v350 = vunpack.c.l.b16 %v206
  %v351 = vunpack.c.l.b16 %v207
  %v352 = vunpack.c.l.b16 %v208
  %v353 = vunpack.c.l.b16 %v209
  %v354 = vunpack.c.l.b16 %v210
  %v355 = vunpack.c.l.b16 %v211
  %v356 = vunpack.c.l.b16 %v212
  %v357 = vunpack.c.l.b16 %v213
  %v358 = vpack.c.b16 %v295, %v294
  %v359 = vpack.c.b16 %v297, %v296
  %v360 = vpack.c.b16 %v299, %v298
  %v361 = vpack.c.b16 %v301, %v300
  %v362 = vpack.c.b16 %v303, %v302
  %v363 = vpack.c.b16 %v305, %v304
  %v364 = vpack.c.b16 %v307, %v306
  %v365 = vpack.c.b16 %v309, %v308
  %v366 = vpack.c.b16 %v311, %v310
  %v367 = vpack.c.b16 %v313, %v312
  %v368 = vpack.c.b16 %v315, %v314
  %v369 = vpack.c.b16 %v317, %v316
  %v370 = vpack.c.b16 %v319, %v318
  %v371 = vpack.c.b16 %v321, %v320
  %v372 = vpack.c.b16 %v323, %v322
  %v373 = vpack.c.b16 %v325, %v324
  %v374 = vpack.c.b16 %v327, %v326
  %v375 = vpack.c.b16 %v329, %v328
  %v376 = vpack.c.b16 %v331, %v330
  %v377 = vpack.c.b16 %v333, %v332
  %v378 = vpack.c.b16 %v335, %v334
  %v379 = vpack.c.b16 %v337, %v336
  %v380 = vpack.c.b16 %v339, %v338
  %v381 = vpack.c.b16 %v341, %v340
  %v382 = vpack.c.b16 %v343, %v342
  %v383 = vpack.c.b16 %v345, %v344
  %v384 = vpack.c.b16 %v347, %v346
  %v385 = vpack.c.b16 %v349, %v348
  %v386 = vpack.c.b16 %v351, %v350
  %v387 = vpack.c.b16 %v353, %v352
  %v388 = vpack.c.b16 %v355, %v354
  %v389 = vpack.c.b16 %v357, %v356
  %v438 = vunpack.c.l.b16 %v214
  %v439 = vunpack.c.l.b16 %v215
  %v440 = vunpack.c.l.b16 %v216
  %v441 = vunpack.c.l.b16 %v217
  %v442 = vunpack.c.l.b16 %v218
  %v443 = vunpack.c.l.b16 %v219
  %v444 = vunpack.c.l.b16 %v220
  %v445 = vunpack.c.l.b16 %v221
  %v446 = vunpack.c.l.b16 %v222
  %v447 = vunpack.c.l.b16 %v223
  %v448 = vunpack.c.l.b16 %v224
  %v449 = vunpack.c.l.b16 %v225
  %v450 = vunpack.c.l.b16 %v226
  %v451 = vunpack.c.l.b16 %v227
  %v452 = vunpack.c.l.b16 %v228
  %v453 = vunpack.c.l.b16 %v229
  %v454 = vpack.c.b16 %v439, %v438
  %v455 = vpack.c.b16 %v441, %v440
  %v456 = vpack.c.b16 %v443, %v442
  %v457 = vpack.c.b16 %v445, %v444
  %v458 = vpack.c.b16 %v447, %v446
  %v459 = vpack.c.b16 %v449, %v448
  %v460 = vpack.c.b16 %v451, %v450
  %v461 = vpack.c.b16 %v453, %v452
  %470 = vmatprep.subr.bf16.mxu0 0
  %471 = vmatpush1.bf16.msra.mxu0 %v461
  %472 = vmatprep.subr.bf16.mxu0 0
  %473 = vmatpush1.bf16.msra.mxu0 %v460
  %474 = vmatprep.subr.bf16.mxu0 0
  %475 = vmatpush1.bf16.msra.mxu0 %v459
  %476 = vmatprep.subr.bf16.mxu0 0
  %477 = vmatpush1.bf16.msra.mxu0 %v458
  %478 = vmatprep.subr.bf16.mxu0 0
  %479 = vmatpush1.bf16.msra.mxu0 %v457
  %480 = vmatprep.subr.bf16.mxu0 0
  %481 = vmatpush1.bf16.msra.mxu0 %v456
  %482 = vmatprep.subr.bf16.mxu0 0
  %483 = vmatpush1.bf16.msra.mxu0 %v455
  %484 = vmatprep.subr.bf16.mxu0 0
  %485 = vmatpush1.bf16.msra.mxu0 %v454
  %486 = vmatprep.subr.bf16.mxu0 0
  %487 = vmatpush2.bf16.msra.mxu0 0
  %488 = vmatprep.subr.bf16.mxu0 0
  %489 = vmatpush2.bf16.msra.mxu0 0
  %490 = vmatprep.subr.bf16.mxu0 0
  %491 = vmatpush2.bf16.msra.mxu0 0
  %492 = vmatprep.subr.bf16.mxu0 0
  %493 = vmatpush2.bf16.msra.mxu0 0
  %494 = vmatprep.subr.bf16.mxu0 0
  %495 = vmatpush2.bf16.msra.mxu0 0
  %496 = vmatprep.subr.bf16.mxu0 0
  %497 = vmatpush2.bf16.msra.mxu0 0
  %498 = vmatprep.subr.bf16.mxu0 0
  %499 = vmatpush2.bf16.msra.mxu0 0
  %500 = vmatprep.subr.bf16.mxu0 0
  %501 = vmatpush2.bf16.msra.mxu0 0
  %502 = vmatprep.mubr.bf16.mxu0 0
  %503 = vmatmul.mubr.bf16.gmra.mxu0 %v358
  %v504 = vpop.f32.mrf.mxu0
  %v505 = vadd.f32 0.0, %v504
  %v506 = vpop.f32.mrf.mxu0
  %v507 = vpop.f32.mrf.mxu0
  %v508 = vadd.f32 0.0, %v507
  %v509 = vpop.f32.mrf.mxu0
  %510 = vmatprep.mubr.bf16.mxu0 0
  %511 = vmatmul.mubr.bf16.gmra.mxu0 %v359
  %v512 = vpop.f32.mrf.mxu0
  %v513 = vadd.f32 0.0, %v512
  %v514 = vpop.f32.mrf.mxu0
  %v515 = vpop.f32.mrf.mxu0
  %v516 = vadd.f32 0.0, %v515
  %v517 = vpop.f32.mrf.mxu0
  %518 = vmatprep.mubr.bf16.mxu0 0
  %519 = vmatmul.mubr.bf16.gmra.mxu0 %v360
  %v520 = vpop.f32.mrf.mxu0
  %v521 = vadd.f32 0.0, %v520
  %v522 = vpop.f32.mrf.mxu0
  %v523 = vpop.f32.mrf.mxu0
  %v524 = vadd.f32 0.0, %v523
  %v525 = vpop.f32.mrf.mxu0
  %526 = vmatprep.mubr.bf16.mxu0 0
  %527 = vmatmul.mubr.bf16.gmra.mxu0 %v361
  %v528 = vpop.f32.mrf.mxu0
  %v529 = vadd.f32 0.0, %v528
  %v530 = vpop.f32.mrf.mxu0
  %v531 = vpop.f32.mrf.mxu0
  %v532 = vadd.f32 0.0, %v531
  %v533 = vpop.f32.mrf.mxu0
  %534 = vmatprep.mubr.bf16.mxu0 0
  %535 = vmatmul.mubr.bf16.gmra.mxu0 %v362
  %v536 = vpop.f32.mrf.mxu0
  %v537 = vadd.f32 0.0, %v536
  %v538 = vpop.f32.mrf.mxu0
  %v539 = vpop.f32.mrf.mxu0
  %v540 = vadd.f32 0.0, %v539
  %v541 = vpop.f32.mrf.mxu0
  %542 = vmatprep.mubr.bf16.mxu0 0
  %543 = vmatmul.mubr.bf16.gmra.mxu0 %v363
  %v544 = vpop.f32.mrf.mxu0
  %v545 = vadd.f32 0.0, %v544
  %v546 = vpop.f32.mrf.mxu0
  %v547 = vpop.f32.mrf.mxu0
  %v548 = vadd.f32 0.0, %v547
  %v549 = vpop.f32.mrf.mxu0
  %550 = vmatprep.mubr.bf16.mxu0 0
  %551 = vmatmul.mubr.bf16.gmra.mxu0 %v364
  %v552 = vpop.f32.mrf.mxu0
  %v553 = vadd.f32 0.0, %v552
  %v554 = vpop.f32.mrf.mxu0
  %v555 = vpop.f32.mrf.mxu0
  %v556 = vadd.f32 0.0, %v555
  %v557 = vpop.f32.mrf.mxu0
  %558 = vmatprep.mubr.bf16.mxu0 0
  %559 = vmatmul.mubr.bf16.gmra.mxu0 %v365
  %v560 = vpop.f32.mrf.mxu0
  %v561 = vadd.f32 0.0, %v560
  %v562 = vpop.f32.mrf.mxu0
  %v563 = vpop.f32.mrf.mxu0
  %v564 = vadd.f32 0.0, %v563
  %v565 = vpop.f32.mrf.mxu0
  %566 = vmatprep.mubr.bf16.mxu0 0
  %567 = vmatmul.mubr.bf16.gmra.mxu0 %v366
  %v568 = vpop.f32.mrf.mxu0
  %v569 = vadd.f32 0.0, %v568
  %v570 = vpop.f32.mrf.mxu0
  %v571 = vpop.f32.mrf.mxu0
  %v572 = vadd.f32 0.0, %v571
  %v573 = vpop.f32.mrf.mxu0
  %574 = vmatprep.mubr.bf16.mxu0 0
  %575 = vmatmul.mubr.bf16.gmra.mxu0 %v367
  %v576 = vpop.f32.mrf.mxu0
  %v577 = vadd.f32 0.0, %v576
  %v578 = vpop.f32.mrf.mxu0
  %v579 = vpop.f32.mrf.mxu0
  %v580 = vadd.f32 0.0, %v579
  %v581 = vpop.f32.mrf.mxu0
  %582 = vmatprep.mubr.bf16.mxu0 0
  %583 = vmatmul.mubr.bf16.gmra.mxu0 %v368
  %v584 = vpop.f32.mrf.mxu0
  %v585 = vadd.f32 0.0, %v584
  %v586 = vpop.f32.mrf.mxu0
  %v587 = vpop.f32.mrf.mxu0
  %v588 = vadd.f32 0.0, %v587
  %v589 = vpop.f32.mrf.mxu0
  %590 = vmatprep.mubr.bf16.mxu0 0
  %591 = vmatmul.mubr.bf16.gmra.mxu0 %v369
  %v592 = vpop.f32.mrf.mxu0
  %v593 = vadd.f32 0.0, %v592
  %v594 = vpop.f32.mrf.mxu0
  %v595 = vpop.f32.mrf.mxu0
  %v596 = vadd.f32 0.0, %v595
  %v597 = vpop.f32.mrf.mxu0
  %598 = vmatprep.mubr.bf16.mxu0 0
  %599 = vmatmul.mubr.bf16.gmra.mxu0 %v370
  %v600 = vpop.f32.mrf.mxu0
  %v601 = vadd.f32 0.0, %v600
  %v602 = vpop.f32.mrf.mxu0
  %v603 = vpop.f32.mrf.mxu0
  %v604 = vadd.f32 0.0, %v603
  %v605 = vpop.f32.mrf.mxu0
  %606 = vmatprep.mubr.bf16.mxu0 0
  %607 = vmatmul.mubr.bf16.gmra.mxu0 %v371
  %v608 = vpop.f32.mrf.mxu0
  %v609 = vadd.f32 0.0, %v608
  %v610 = vpop.f32.mrf.mxu0
  %v611 = vpop.f32.mrf.mxu0
  %v612 = vadd.f32 0.0, %v611
  %v613 = vpop.f32.mrf.mxu0
  %614 = vmatprep.mubr.bf16.mxu0 0
  %615 = vmatmul.mubr.bf16.gmra.mxu0 %v372
  %v616 = vpop.f32.mrf.mxu0
  %v617 = vadd.f32 0.0, %v616
  %v618 = vpop.f32.mrf.mxu0
  %v619 = vpop.f32.mrf.mxu0
  %v620 = vadd.f32 0.0, %v619
  %v621 = vpop.f32.mrf.mxu0
  %622 = vmatprep.mubr.bf16.mxu0 0
  %623 = vmatmul.mubr.bf16.gmra.mxu0 %v373
  %v624 = vpop.f32.mrf.mxu0
  %v625 = vadd.f32 0.0, %v624
  %v626 = vpop.f32.mrf.mxu0
  %v627 = vpop.f32.mrf.mxu0
  %v628 = vadd.f32 0.0, %v627
  %v629 = vpop.f32.mrf.mxu0
  %630 = vmatprep.mubr.bf16.mxu0 0
  %631 = vmatmul.mubr.bf16.gmra.mxu0 %v374
  %v632 = vpop.f32.mrf.mxu0
  %v633 = vadd.f32 0.0, %v632
  %v634 = vpop.f32.mrf.mxu0
  %v635 = vpop.f32.mrf.mxu0
  %v636 = vadd.f32 0.0, %v635
  %v637 = vpop.f32.mrf.mxu0
  %638 = vmatprep.mubr.bf16.mxu0 0
  %639 = vmatmul.mubr.bf16.gmra.mxu0 %v375
  %v640 = vpop.f32.mrf.mxu0
  %v641 = vadd.f32 0.0, %v640
  %v642 = vpop.f32.mrf.mxu0
  %v643 = vpop.f32.mrf.mxu0
  %v644 = vadd.f32 0.0, %v643
  %v645 = vpop.f32.mrf.mxu0
  %646 = vmatprep.mubr.bf16.mxu0 0
  %647 = vmatmul.mubr.bf16.gmra.mxu0 %v376
  %v648 = vpop.f32.mrf.mxu0
  %v649 = vadd.f32 0.0, %v648
  %v650 = vpop.f32.mrf.mxu0
  %v651 = vpop.f32.mrf.mxu0
  %v652 = vadd.f32 0.0, %v651
  %v653 = vpop.f32.mrf.mxu0
  %654 = vmatprep.mubr.bf16.mxu0 0
  %655 = vmatmul.mubr.bf16.gmra.mxu0 %v377
  %v656 = vpop.f32.mrf.mxu0
  %v657 = vadd.f32 0.0, %v656
  %v658 = vpop.f32.mrf.mxu0
  %v659 = vpop.f32.mrf.mxu0
  %v660 = vadd.f32 0.0, %v659
  %v661 = vpop.f32.mrf.mxu0
  %662 = vmatprep.mubr.bf16.mxu0 0
  %663 = vmatmul.mubr.bf16.gmra.mxu0 %v378
  %v664 = vpop.f32.mrf.mxu0
  %v665 = vadd.f32 0.0, %v664
  %v666 = vpop.f32.mrf.mxu0
  %v667 = vpop.f32.mrf.mxu0
  %v668 = vadd.f32 0.0, %v667
  %v669 = vpop.f32.mrf.mxu0
  %670 = vmatprep.mubr.bf16.mxu0 0
  %671 = vmatmul.mubr.bf16.gmra.mxu0 %v379
  %v672 = vpop.f32.mrf.mxu0
  %v673 = vadd.f32 0.0, %v672
  %v674 = vpop.f32.mrf.mxu0
  %v675 = vpop.f32.mrf.mxu0
  %v676 = vadd.f32 0.0, %v675
  %v677 = vpop.f32.mrf.mxu0
  %678 = vmatprep.mubr.bf16.mxu0 0
  %679 = vmatmul.mubr.bf16.gmra.mxu0 %v380
  %v680 = vpop.f32.mrf.mxu0
  %v681 = vadd.f32 0.0, %v680
  %v682 = vpop.f32.mrf.mxu0
  %v683 = vpop.f32.mrf.mxu0
  %v684 = vadd.f32 0.0, %v683
  %v685 = vpop.f32.mrf.mxu0
  %686 = vmatprep.mubr.bf16.mxu0 0
  %687 = vmatmul.mubr.bf16.gmra.mxu0 %v381
  %v688 = vpop.f32.mrf.mxu0
  %v689 = vadd.f32 0.0, %v688
  %v690 = vpop.f32.mrf.mxu0
  %v691 = vpop.f32.mrf.mxu0
  %v692 = vadd.f32 0.0, %v691
  %v693 = vpop.f32.mrf.mxu0
  %694 = vmatprep.mubr.bf16.mxu0 0
  %695 = vmatmul.mubr.bf16.gmra.mxu0 %v382
  %v696 = vpop.f32.mrf.mxu0
  %v697 = vadd.f32 0.0, %v696
  %v698 = vpop.f32.mrf.mxu0
  %v699 = vpop.f32.mrf.mxu0
  %v700 = vadd.f32 0.0, %v699
  %v701 = vpop.f32.mrf.mxu0
  %702 = vmatprep.mubr.bf16.mxu0 0
  %703 = vmatmul.mubr.bf16.gmra.mxu0 %v383
  %v704 = vpop.f32.mrf.mxu0
  %v705 = vadd.f32 0.0, %v704
  %v706 = vpop.f32.mrf.mxu0
  %v707 = vpop.f32.mrf.mxu0
  %v708 = vadd.f32 0.0, %v707
  %v709 = vpop.f32.mrf.mxu0
  %710 = vmatprep.mubr.bf16.mxu0 0
  %711 = vmatmul.mubr.bf16.gmra.mxu0 %v384
  %v712 = vpop.f32.mrf.mxu0
  %v713 = vadd.f32 0.0, %v712
  %v714 = vpop.f32.mrf.mxu0
  %v715 = vpop.f32.mrf.mxu0
  %v716 = vadd.f32 0.0, %v715
  %v717 = vpop.f32.mrf.mxu0
  %718 = vmatprep.mubr.bf16.mxu0 0
  %719 = vmatmul.mubr.bf16.gmra.mxu0 %v385
  %v720 = vpop.f32.mrf.mxu0
  %v721 = vadd.f32 0.0, %v720
  %v722 = vpop.f32.mrf.mxu0
  %v723 = vpop.f32.mrf.mxu0
  %v724 = vadd.f32 0.0, %v723
  %v725 = vpop.f32.mrf.mxu0
  %726 = vmatprep.mubr.bf16.mxu0 0
  %727 = vmatmul.mubr.bf16.gmra.mxu0 %v386
  %v728 = vpop.f32.mrf.mxu0
  %v729 = vadd.f32 0.0, %v728
  %v730 = vpop.f32.mrf.mxu0
  %v731 = vpop.f32.mrf.mxu0
  %v732 = vadd.f32 0.0, %v731
  %v733 = vpop.f32.mrf.mxu0
  %734 = vmatprep.mubr.bf16.mxu0 0
  %735 = vmatmul.mubr.bf16.gmra.mxu0 %v387
  %v736 = vpop.f32.mrf.mxu0
  %v737 = vadd.f32 0.0, %v736
  %v738 = vpop.f32.mrf.mxu0
  %v739 = vpop.f32.mrf.mxu0
  %v740 = vadd.f32 0.0, %v739
  %v741 = vpop.f32.mrf.mxu0
  %742 = vmatprep.mubr.bf16.mxu0 0
  %743 = vmatmul.mubr.bf16.gmra.mxu0 %v388
  %v744 = vpop.f32.mrf.mxu0
  %v745 = vadd.f32 0.0, %v744
  %v746 = vpop.f32.mrf.mxu0
  %v747 = vpop.f32.mrf.mxu0
  %v748 = vadd.f32 0.0, %v747
  %v749 = vpop.f32.mrf.mxu0
  %750 = vmatprep.mubr.bf16.mxu0 0
  %751 = vmatmul.mubr.bf16.gmra.mxu0 %v389
  %v752 = vpop.f32.mrf.mxu0
  %v753 = vadd.f32 0.0, %v752
  %v754 = vpop.f32.mrf.mxu0
  %v755 = vpop.f32.mrf.mxu0
  %v756 = vadd.f32 0.0, %v755
  %v757 = vpop.f32.mrf.mxu0
  %758 = vdwg.mxu0
  %v759 = vadd.f32 %v86, %v505
  %v760 = vadd.f32 %v87, %v508
  %v761 = vadd.f32 %v88, %v513
  %v762 = vadd.f32 %v89, %v516
  %v763 = vadd.f32 %v90, %v521
  %v764 = vadd.f32 %v91, %v524
  %v765 = vadd.f32 %v92, %v529
  %v766 = vadd.f32 %v93, %v532
  %v767 = vadd.f32 %v94, %v537
  %v768 = vadd.f32 %v95, %v540
  %v769 = vadd.f32 %v96, %v545
  %v770 = vadd.f32 %v97, %v548
  %v771 = vadd.f32 %v98, %v553
  %v772 = vadd.f32 %v99, %v556
  %v773 = vadd.f32 %v100, %v561
  %v774 = vadd.f32 %v101, %v564
  %v775 = vadd.f32 %v102, %v569
  %v776 = vadd.f32 %v103, %v572
  %v777 = vadd.f32 %v104, %v577
  %v778 = vadd.f32 %v105, %v580
  %v779 = vadd.f32 %v106, %v585
  %v780 = vadd.f32 %v107, %v588
  %v781 = vadd.f32 %v108, %v593
  %v782 = vadd.f32 %v109, %v596
  %v783 = vadd.f32 %v110, %v601
  %v784 = vadd.f32 %v111, %v604
  %v785 = vadd.f32 %v112, %v609
  %v786 = vadd.f32 %v113, %v612
  %v787 = vadd.f32 %v114, %v617
  %v788 = vadd.f32 %v115, %v620
  %v789 = vadd.f32 %v116, %v625
  %v790 = vadd.f32 %v117, %v628
  %v791 = vadd.f32 %v118, %v633
  %v792 = vadd.f32 %v119, %v636
  %v793 = vadd.f32 %v120, %v641
  %v794 = vadd.f32 %v121, %v644
  %v795 = vadd.f32 %v122, %v649
  %v796 = vadd.f32 %v123, %v652
  %v797 = vadd.f32 %v124, %v657
  %v798 = vadd.f32 %v125, %v660
  %v799 = vadd.f32 %v126, %v665
  %v800 = vadd.f32 %v127, %v668
  %v801 = vadd.f32 %v128, %v673
  %v802 = vadd.f32 %v129, %v676
  %v803 = vadd.f32 %v130, %v681
  %v804 = vadd.f32 %v131, %v684
  %v805 = vadd.f32 %v132, %v689
  %v806 = vadd.f32 %v133, %v692
  %v807 = vadd.f32 %v134, %v697
  %v808 = vadd.f32 %v135, %v700
  %v809 = vadd.f32 %v136, %v705
  %v810 = vadd.f32 %v137, %v708
  %v811 = vadd.f32 %v138, %v713
  %v812 = vadd.f32 %v139, %v716
  %v813 = vadd.f32 %v140, %v721
  %v814 = vadd.f32 %v141, %v724
  %v815 = vadd.f32 %v142, %v729
  %v816 = vadd.f32 %v143, %v732
  %v817 = vadd.f32 %v144, %v737
  %v818 = vadd.f32 %v145, %v740
  %v819 = vadd.f32 %v146, %v745
  %v820 = vadd.f32 %v147, %v748
  %v821 = vadd.f32 %v148, %v753
  %v822 = vadd.f32 %v149, %v756
  %823 = vst [vmem:[#allocation2] sm:$0xff] %v759
  %824 = vst [vmem:[#allocation2 + $0x8] sm:$0xff] %v760
  %825 = vst [vmem:[#allocation2 + $0x10] sm:$0xff] %v761
  %826 = vst [vmem:[#allocation2 + $0x18] sm:$0xff] %v762
  %827 = vst [vmem:[#allocation2 + $0x20] sm:$0xff] %v763
  %828 = vst [vmem:[#allocation2 + $0x28] sm:$0xff] %v764
  %829 = vst [vmem:[#allocation2 + $0x30] sm:$0xff] %v765
  %830 = vst [vmem:[#allocation2 + $0x38] sm:$0xff] %v766
  %831 = vst [vmem:[#allocation2 + $0x40] sm:$0xff] %v767
  %832 = vst [vmem:[#allocation2 + $0x48] sm:$0xff] %v768
  %833 = vst [vmem:[#allocation2 + $0x50] sm:$0xff] %v769
  %834 = vst [vmem:[#allocation2 + $0x58] sm:$0xff] %v770
  %835 = vst [vmem:[#allocation2 + $0x60] sm:$0xff] %v771
  %836 = vst [vmem:[#allocation2 + $0x68] sm:$0xff] %v772
  %837 = vst [vmem:[#allocation2 + $0x70] sm:$0xff] %v773
  %838 = vst [vmem:[#allocation2 + $0x78] sm:$0xff] %v774
  %839 = vst [vmem:[#allocation2 + $0x80] sm:$0xff] %v775
  %840 = vst [vmem:[#allocation2 + $0x88] sm:$0xff] %v776
  %841 = vst [vmem:[#allocation2 + $0x90] sm:$0xff] %v777
  %842 = vst [vmem:[#allocation2 + $0x98] sm:$0xff] %v778
  %843 = vst [vmem:[#allocation2 + $0xa0] sm:$0xff] %v779
  %844 = vst [vmem:[#allocation2 + $0xa8] sm:$0xff] %v780
  %845 = vst [vmem:[#allocation2 + $0xb0] sm:$0xff] %v781
  %846 = vst [vmem:[#allocation2 + $0xb8] sm:$0xff] %v782
  %847 = vst [vmem:[#allocation2 + $0xc0] sm:$0xff] %v783
  %848 = vst [vmem:[#allocation2 + $0xc8] sm:$0xff] %v784
  %849 = vst [vmem:[#allocation2 + $0xd0] sm:$0xff] %v785
  %850 = vst [vmem:[#allocation2 + $0xd8] sm:$0xff] %v786
  %851 = vst [vmem:[#allocation2 + $0xe0] sm:$0xff] %v787
  %852 = vst [vmem:[#allocation2 + $0xe8] sm:$0xff] %v788
  %853 = vst [vmem:[#allocation2 + $0xf0] sm:$0xff] %v789
  %854 = vst [vmem:[#allocation2 + $0xf8] sm:$0xff] %v790
  %855 = vst [vmem:[#allocation2 + $0x100] sm:$0xff] %v791
  %856 = vst [vmem:[#allocation2 + $0x108] sm:$0xff] %v792
  %857 = vst [vmem:[#allocation2 + $0x110] sm:$0xff] %v793
  %858 = vst [vmem:[#allocation2 + $0x118] sm:$0xff] %v794
  %859 = vst [vmem:[#allocation2 + $0x120] sm:$0xff] %v795
  %860 = vst [vmem:[#allocation2 + $0x128] sm:$0xff] %v796
  %861 = vst [vmem:[#allocation2 + $0x130] sm:$0xff] %v797
  %862 = vst [vmem:[#allocation2 + $0x138] sm:$0xff] %v798
  %863 = vst [vmem:[#allocation2 + $0x140] sm:$0xff] %v799
  %864 = vst [vmem:[#allocation2 + $0x148] sm:$0xff] %v800
  %865 = vst [vmem:[#allocation2 + $0x150] sm:$0xff] %v801
  %866 = vst [vmem:[#allocation2 + $0x158] sm:$0xff] %v802
  %867 = vst [vmem:[#allocation2 + $0x160] sm:$0xff] %v803
  %868 = vst [vmem:[#allocation2 + $0x168] sm:$0xff] %v804
  %869 = vst [vmem:[#allocation2 + $0x170] sm:$0xff] %v805
  %870 = vst [vmem:[#allocation2 + $0x178] sm:$0xff] %v806
  %871 = vst [vmem:[#allocation2 + $0x180] sm:$0xff] %v807
  %872 = vst [vmem:[#allocation2 + $0x188] sm:$0xff] %v808
  %873 = vst [vmem:[#allocation2 + $0x190] sm:$0xff] %v809
  %874 = vst [vmem:[#allocation2 + $0x198] sm:$0xff] %v810
  %875 = vst [vmem:[#allocation2 + $0x1a0] sm:$0xff] %v811
  %876 = vst [vmem:[#allocation2 + $0x1a8] sm:$0xff] %v812
  %877 = vst [vmem:[#allocation2 + $0x1b0] sm:$0xff] %v813
  %878 = vst [vmem:[#allocation2 + $0x1b8] sm:$0xff] %v814
  %879 = vst [vmem:[#allocation2 + $0x1c0] sm:$0xff] %v815
  %880 = vst [vmem:[#allocation2 + $0x1c8] sm:$0xff] %v816
  %881 = vst [vmem:[#allocation2 + $0x1d0] sm:$0xff] %v817
  %882 = vst [vmem:[#allocation2 + $0x1d8] sm:$0xff] %v818
  %883 = vst [vmem:[#allocation2 + $0x1e0] sm:$0xff] %v819
  %884 = vst [vmem:[#allocation2 + $0x1e8] sm:$0xff] %v820
  %885 = vst [vmem:[#allocation2 + $0x1f0] sm:$0xff] %v821
  %886 = vst [vmem:[#allocation2 + $0x1f8] sm:$0xff] %v822
  // Predicated region
  $region22: #{res_cnn_forward.24} parent=0 // pred_check
    %p887 = pneg %p18
  $region23: #{res_cnn_forward.24} parent=0 // pred_check_branch
    %889 = sbr.rel (%p887) target = $region25
  $region24: #{res_cnn_forward.24} parent=0 // pred_region
    %v890 = vld [vmem:[#allocation2] sm:$0xff]
    %v891 = vld [vmem:[#allocation2 + $0x8] sm:$0xff]
    %v892 = vld [vmem:[#allocation2 + $0x10] sm:$0xff]
    %v893 = vld [vmem:[#allocation2 + $0x18] sm:$0xff]
    %v894 = vld [vmem:[#allocation2 + $0x20] sm:$0xff]
    %v895 = vld [vmem:[#allocation2 + $0x28] sm:$0xff]
    %v896 = vld [vmem:[#allocation2 + $0x30] sm:$0xff]
    %v897 = vld [vmem:[#allocation2 + $0x38] sm:$0xff]
    %v898 = vld [vmem:[#allocation2 + $0x40] sm:$0xff]
    %v899 = vld [vmem:[#allocation2 + $0x48] sm:$0xff]
    %v900 = vld [vmem:[#allocation2 + $0x50] sm:$0xff]
    %v901 = vld [vmem:[#allocation2 + $0x58] sm:$0xff]
    %v902 = vld [vmem:[#allocation2 + $0x60] sm:$0xff]
    %v903 = vld [vmem:[#allocation2 + $0x68] sm:$0xff]
    %v904 = vld [vmem:[#allocation2 + $0x70] sm:$0xff]
    %v905 = vld [vmem:[#allocation2 + $0x78] sm:$0xff]
    %v906 = vld [vmem:[#allocation2 + $0x80] sm:$0xff]
    %v907 = vld [vmem:[#allocation2 + $0x88] sm:$0xff]
    %v908 = vld [vmem:[#allocation2 + $0x90] sm:$0xff]
    %v909 = vld [vmem:[#allocation2 + $0x98] sm:$0xff]
    %v910 = vld [vmem:[#allocation2 + $0xa0] sm:$0xff]
    %v911 = vld [vmem:[#allocation2 + $0xa8] sm:$0xff]
    %v912 = vld [vmem:[#allocation2 + $0xb0] sm:$0xff]
    %v913 = vld [vmem:[#allocation2 + $0xb8] sm:$0xff]
    %v914 = vld [vmem:[#allocation2 + $0xc0] sm:$0xff]
    %v915 = vld [vmem:[#allocation2 + $0xc8] sm:$0xff]
    %v916 = vld [vmem:[#allocation2 + $0xd0] sm:$0xff]
    %v917 = vld [vmem:[#allocation2 + $0xd8] sm:$0xff]
    %v918 = vld [vmem:[#allocation2 + $0xe0] sm:$0xff]
    %v919 = vld [vmem:[#allocation2 + $0xe8] sm:$0xff]
    %v920 = vld [vmem:[#allocation2 + $0xf0] sm:$0xff]
    %v921 = vld [vmem:[#allocation2 + $0xf8] sm:$0xff]
    %v922 = vld [vmem:[#allocation2 + $0x100] sm:$0xff]
    %v923 = vld [vmem:[#allocation2 + $0x108] sm:$0xff]
    %v924 = vld [vmem:[#allocation2 + $0x110] sm:$0xff]
    %v925 = vld [vmem:[#allocation2 + $0x118] sm:$0xff]
    %v926 = vld [vmem:[#allocation2 + $0x120] sm:$0xff]
    %v927 = vld [vmem:[#allocation2 + $0x128] sm:$0xff]
    %v928 = vld [vmem:[#allocation2 + $0x130] sm:$0xff]
    %v929 = vld [vmem:[#allocation2 + $0x138] sm:$0xff]
    %v930 = vld [vmem:[#allocation2 + $0x140] sm:$0xff]
    %v931 = vld [vmem:[#allocation2 + $0x148] sm:$0xff]
    %v932 = vld [vmem:[#allocation2 + $0x150] sm:$0xff]
    %v933 = vld [vmem:[#allocation2 + $0x158] sm:$0xff]
    %v934 = vld [vmem:[#allocation2 + $0x160] sm:$0xff]
    %v935 = vld [vmem:[#allocation2 + $0x168] sm:$0xff]
    %v936 = vld [vmem:[#allocation2 + $0x170] sm:$0xff]
    %v937 = vld [vmem:[#allocation2 + $0x178] sm:$0xff]
    %v938 = vld [vmem:[#allocation2 + $0x180] sm:$0xff]
    %v939 = vld [vmem:[#allocation2 + $0x188] sm:$0xff]
    %v940 = vld [vmem:[#allocation2 + $0x190] sm:$0xff]
    %v941 = vld [vmem:[#allocation2 + $0x198] sm:$0xff]
    %v942 = vld [vmem:[#allocation2 + $0x1a0] sm:$0xff]
    %v943 = vld [vmem:[#allocation2 + $0x1a8] sm:$0xff]
    %v944 = vld [vmem:[#allocation2 + $0x1b0] sm:$0xff]
    %v945 = vld [vmem:[#allocation2 + $0x1b8] sm:$0xff]
    %v946 = vld [vmem:[#allocation2 + $0x1c0] sm:$0xff]
    %v947 = vld [vmem:[#allocation2 + $0x1c8] sm:$0xff]
    %v948 = vld [vmem:[#allocation2 + $0x1d0] sm:$0xff]
    %v949 = vld [vmem:[#allocation2 + $0x1d8] sm:$0xff]
    %v950 = vld [vmem:[#allocation2 + $0x1e0] sm:$0xff]
    %v951 = vld [vmem:[#allocation2 + $0x1e8] sm:$0xff]
    %v952 = vld [vmem:[#allocation2 + $0x1f0] sm:$0xff]
    %v953 = vld [vmem:[#allocation2 + $0x1f8] sm:$0xff]
    %v954 = vld [vmem:[%s2] sm:$0x1]
    %v956 = vlaneseq
    %v957 = vshrl.u32 %v956, 7
    %v958 = vsub.s32 0, %v957
    %v959 = vrot.slane %v954, %v958
    %v961 = vmul.f32 %v890, %v959
    %v962 = vmul.f32 %v891, %v959
    %v963 = vmul.f32 %v892, %v959
    %v964 = vmul.f32 %v893, %v959
    %v965 = vmul.f32 %v894, %v959
    %v966 = vmul.f32 %v895, %v959
    %v967 = vmul.f32 %v896, %v959
    %v968 = vmul.f32 %v897, %v959
    %v969 = vmul.f32 %v898, %v959
    %v970 = vmul.f32 %v899, %v959
    %v971 = vmul.f32 %v900, %v959
    %v972 = vmul.f32 %v901, %v959
    %v973 = vmul.f32 %v902, %v959
    %v974 = vmul.f32 %v903, %v959
    %v975 = vmul.f32 %v904, %v959
    %v976 = vmul.f32 %v905, %v959
    %v977 = vmul.f32 %v906, %v959
    %v978 = vmul.f32 %v907, %v959
    %v979 = vmul.f32 %v908, %v959
    %v980 = vmul.f32 %v909, %v959
    %v981 = vmul.f32 %v910, %v959
    %v982 = vmul.f32 %v911, %v959
    %v983 = vmul.f32 %v912, %v959
    %v984 = vmul.f32 %v913, %v959
    %v985 = vmul.f32 %v914, %v959
    %v986 = vmul.f32 %v915, %v959
    %v987 = vmul.f32 %v916, %v959
    %v988 = vmul.f32 %v917, %v959
    %v989 = vmul.f32 %v918, %v959
    %v990 = vmul.f32 %v919, %v959
    %v991 = vmul.f32 %v920, %v959
    %v992 = vmul.f32 %v921, %v959
    %v993 = vmul.f32 %v922, %v959
    %v994 = vmul.f32 %v923, %v959
    %v995 = vmul.f32 %v924, %v959
    %v996 = vmul.f32 %v925, %v959
    %v997 = vmul.f32 %v926, %v959
    %v998 = vmul.f32 %v927, %v959
    %v999 = vmul.f32 %v928, %v959
    %v1000 = vmul.f32 %v929, %v959
    %v1001 = vmul.f32 %v930, %v959
    %v1002 = vmul.f32 %v931, %v959
    %v1003 = vmul.f32 %v932, %v959
    %v1004 = vmul.f32 %v933, %v959
    %v1005 = vmul.f32 %v934, %v959
    %v1006 = vmul.f32 %v935, %v959
    %v1007 = vmul.f32 %v936, %v959
    %v1008 = vmul.f32 %v937, %v959
    %v1009 = vmul.f32 %v938, %v959
    %v1010 = vmul.f32 %v939, %v959
    %v1011 = vmul.f32 %v940, %v959
    %v1012 = vmul.f32 %v941, %v959
    %v1013 = vmul.f32 %v942, %v959
    %v1014 = vmul.f32 %v943, %v959
    %v1015 = vmul.f32 %v944, %v959
    %v1016 = vmul.f32 %v945, %v959
    %v1017 = vmul.f32 %v946, %v959
    %v1018 = vmul.f32 %v947, %v959
    %v1019 = vmul.f32 %v948, %v959
    %v1020 = vmul.f32 %v949, %v959
    %v1021 = vmul.f32 %v950, %v959
    %v1022 = vmul.f32 %v951, %v959
    %v1023 = vmul.f32 %v952, %v959
    %v1024 = vmul.f32 %v953, %v959
    %v1025 = vld [vmem:[%s3] sm:$0x1]
    %v1027 = vlaneseq
    %v1028 = vshrl.u32 %v1027, 7
    %v1029 = vsub.s32 0, %v1028
    %v1030 = vrot.slane %v1025, %v1029
    %v1032 = vadd.f32 %v961, %v1030
    %v1033 = vadd.f32 %v962, %v1030
    %v1034 = vadd.f32 %v963, %v1030
    %v1035 = vadd.f32 %v964, %v1030
    %v1036 = vadd.f32 %v965, %v1030
    %v1037 = vadd.f32 %v966, %v1030
    %v1038 = vadd.f32 %v967, %v1030
    %v1039 = vadd.f32 %v968, %v1030
    %v1040 = vadd.f32 %v969, %v1030
    %v1041 = vadd.f32 %v970, %v1030
    %v1042 = vadd.f32 %v971, %v1030
    %v1043 = vadd.f32 %v972, %v1030
    %v1044 = vadd.f32 %v973, %v1030
    %v1045 = vadd.f32 %v974, %v1030
    %v1046 = vadd.f32 %v975, %v1030
    %v1047 = vadd.f32 %v976, %v1030
    %v1048 = vadd.f32 %v977, %v1030
    %v1049 = vadd.f32 %v978, %v1030
    %v1050 = vadd.f32 %v979, %v1030
    %v1051 = vadd.f32 %v980, %v1030
    %v1052 = vadd.f32 %v981, %v1030
    %v1053 = vadd.f32 %v982, %v1030
    %v1054 = vadd.f32 %v983, %v1030
    %v1055 = vadd.f32 %v984, %v1030
    %v1056 = vadd.f32 %v985, %v1030
    %v1057 = vadd.f32 %v986, %v1030
    %v1058 = vadd.f32 %v987, %v1030
    %v1059 = vadd.f32 %v988, %v1030
    %v1060 = vadd.f32 %v989, %v1030
    %v1061 = vadd.f32 %v990, %v1030
    %v1062 = vadd.f32 %v991, %v1030
    %v1063 = vadd.f32 %v992, %v1030
    %v1064 = vadd.f32 %v993, %v1030
    %v1065 = vadd.f32 %v994, %v1030
    %v1066 = vadd.f32 %v995, %v1030
    %v1067 = vadd.f32 %v996, %v1030
    %v1068 = vadd.f32 %v997, %v1030
    %v1069 = vadd.f32 %v998, %v1030
    %v1070 = vadd.f32 %v999, %v1030
    %v1071 = vadd.f32 %v1000, %v1030
    %v1072 = vadd.f32 %v1001, %v1030
    %v1073 = vadd.f32 %v1002, %v1030
    %v1074 = vadd.f32 %v1003, %v1030
    %v1075 = vadd.f32 %v1004, %v1030
    %v1076 = vadd.f32 %v1005, %v1030
    %v1077 = vadd.f32 %v1006, %v1030
    %v1078 = vadd.f32 %v1007, %v1030
    %v1079 = vadd.f32 %v1008, %v1030
    %v1080 = vadd.f32 %v1009, %v1030
    %v1081 = vadd.f32 %v1010, %v1030
    %v1082 = vadd.f32 %v1011, %v1030
    %v1083 = vadd.f32 %v1012, %v1030
    %v1084 = vadd.f32 %v1013, %v1030
    %v1085 = vadd.f32 %v1014, %v1030
    %v1086 = vadd.f32 %v1015, %v1030
    %v1087 = vadd.f32 %v1016, %v1030
    %v1088 = vadd.f32 %v1017, %v1030
    %v1089 = vadd.f32 %v1018, %v1030
    %v1090 = vadd.f32 %v1019, %v1030
    %v1091 = vadd.f32 %v1020, %v1030
    %v1092 = vadd.f32 %v1021, %v1030
    %v1093 = vadd.f32 %v1022, %v1030
    %v1094 = vadd.f32 %v1023, %v1030
    %v1095 = vadd.f32 %v1024, %v1030
    %v1096 = vmax.f32 %v1032, 0.0
    %v1097 = vmax.f32 %v1033, 0.0
    %v1098 = vmax.f32 %v1034, 0.0
    %v1099 = vmax.f32 %v1035, 0.0
    %v1100 = vmax.f32 %v1036, 0.0
    %v1101 = vmax.f32 %v1037, 0.0
    %v1102 = vmax.f32 %v1038, 0.0
    %v1103 = vmax.f32 %v1039, 0.0
    %v1104 = vmax.f32 %v1040, 0.0
    %v1105 = vmax.f32 %v1041, 0.0
    %v1106 = vmax.f32 %v1042, 0.0
    %v1107 = vmax.f32 %v1043, 0.0
    %v1108 = vmax.f32 %v1044, 0.0
    %v1109 = vmax.f32 %v1045, 0.0
    %v1110 = vmax.f32 %v1046, 0.0
    %v1111 = vmax.f32 %v1047, 0.0
    %v1112 = vmax.f32 %v1048, 0.0
    %v1113 = vmax.f32 %v1049, 0.0
    %v1114 = vmax.f32 %v1050, 0.0
    %v1115 = vmax.f32 %v1051, 0.0
    %v1116 = vmax.f32 %v1052, 0.0
    %v1117 = vmax.f32 %v1053, 0.0
    %v1118 = vmax.f32 %v1054, 0.0
    %v1119 = vmax.f32 %v1055, 0.0
    %v1120 = vmax.f32 %v1056, 0.0
    %v1121 = vmax.f32 %v1057, 0.0
    %v1122 = vmax.f32 %v1058, 0.0
    %v1123 = vmax.f32 %v1059, 0.0
    %v1124 = vmax.f32 %v1060, 0.0
    %v1125 = vmax.f32 %v1061, 0.0
    %v1126 = vmax.f32 %v1062, 0.0
    %v1127 = vmax.f32 %v1063, 0.0
    %v1128 = vmax.f32 %v1064, 0.0
    %v1129 = vmax.f32 %v1065, 0.0
    %v1130 = vmax.f32 %v1066, 0.0
    %v1131 = vmax.f32 %v1067, 0.0
    %v1132 = vmax.f32 %v1068, 0.0
    %v1133 = vmax.f32 %v1069, 0.0
    %v1134 = vmax.f32 %v1070, 0.0
    %v1135 = vmax.f32 %v1071, 0.0
    %v1136 = vmax.f32 %v1072, 0.0
    %v1137 = vmax.f32 %v1073, 0.0
    %v1138 = vmax.f32 %v1074, 0.0
    %v1139 = vmax.f32 %v1075, 0.0
    %v1140 = vmax.f32 %v1076, 0.0
    %v1141 = vmax.f32 %v1077, 0.0
    %v1142 = vmax.f32 %v1078, 0.0
    %v1143 = vmax.f32 %v1079, 0.0
    %v1144 = vmax.f32 %v1080, 0.0
    %v1145 = vmax.f32 %v1081, 0.0
    %v1146 = vmax.f32 %v1082, 0.0
    %v1147 = vmax.f32 %v1083, 0.0
    %v1148 = vmax.f32 %v1084, 0.0
    %v1149 = vmax.f32 %v1085, 0.0
    %v1150 = vmax.f32 %v1086, 0.0
    %v1151 = vmax.f32 %v1087, 0.0
    %v1152 = vmax.f32 %v1088, 0.0
    %v1153 = vmax.f32 %v1089, 0.0
    %v1154 = vmax.f32 %v1090, 0.0
    %v1155 = vmax.f32 %v1091, 0.0
    %v1156 = vmax.f32 %v1092, 0.0
    %v1157 = vmax.f32 %v1093, 0.0
    %v1158 = vmax.f32 %v1094, 0.0
    %v1159 = vmax.f32 %v1095, 0.0
    %v1160 = vpack.c.bf16 %v1097, %v1096
    %v1161 = vpack.c.bf16 %v1099, %v1098
    %v1162 = vpack.c.bf16 %v1101, %v1100
    %v1163 = vpack.c.bf16 %v1103, %v1102
    %v1164 = vpack.c.bf16 %v1105, %v1104
    %v1165 = vpack.c.bf16 %v1107, %v1106
    %v1166 = vpack.c.bf16 %v1109, %v1108
    %v1167 = vpack.c.bf16 %v1111, %v1110
    %v1168 = vpack.c.bf16 %v1113, %v1112
    %v1169 = vpack.c.bf16 %v1115, %v1114
    %v1170 = vpack.c.bf16 %v1117, %v1116
    %v1171 = vpack.c.bf16 %v1119, %v1118
    %v1172 = vpack.c.bf16 %v1121, %v1120
    %v1173 = vpack.c.bf16 %v1123, %v1122
    %v1174 = vpack.c.bf16 %v1125, %v1124
    %v1175 = vpack.c.bf16 %v1127, %v1126
    %v1176 = vpack.c.bf16 %v1129, %v1128
    %v1177 = vpack.c.bf16 %v1131, %v1130
    %v1178 = vpack.c.bf16 %v1133, %v1132
    %v1179 = vpack.c.bf16 %v1135, %v1134
    %v1180 = vpack.c.bf16 %v1137, %v1136
    %v1181 = vpack.c.bf16 %v1139, %v1138
    %v1182 = vpack.c.bf16 %v1141, %v1140
    %v1183 = vpack.c.bf16 %v1143, %v1142
    %v1184 = vpack.c.bf16 %v1145, %v1144
    %v1185 = vpack.c.bf16 %v1147, %v1146
    %v1186 = vpack.c.bf16 %v1149, %v1148
    %v1187 = vpack.c.bf16 %v1151, %v1150
    %v1188 = vpack.c.bf16 %v1153, %v1152
    %v1189 = vpack.c.bf16 %v1155, %v1154
    %v1190 = vpack.c.bf16 %v1157, %v1156
    %v1191 = vpack.c.bf16 %v1159, %v1158
    %v1224 = vunpack.c.l.b16 %v1160
    %v1225 = vunpack.c.h.b16 %v1160
    %v1226 = vunpack.c.l.b16 %v1161
    %v1227 = vunpack.c.h.b16 %v1161
    %v1228 = vunpack.c.l.b16 %v1162
    %v1229 = vunpack.c.h.b16 %v1162
    %v1230 = vunpack.c.l.b16 %v1163
    %v1231 = vunpack.c.h.b16 %v1163
    %v1232 = vunpack.c.l.b16 %v1164
    %v1233 = vunpack.c.h.b16 %v1164
    %v1234 = vunpack.c.l.b16 %v1165
    %v1235 = vunpack.c.h.b16 %v1165
    %v1236 = vunpack.c.l.b16 %v1166
    %v1237 = vunpack.c.h.b16 %v1166
    %v1238 = vunpack.c.l.b16 %v1167
    %v1239 = vunpack.c.h.b16 %v1167
    %v1240 = vunpack.c.l.b16 %v1168
    %v1241 = vunpack.c.h.b16 %v1168
    %v1242 = vunpack.c.l.b16 %v1169
    %v1243 = vunpack.c.h.b16 %v1169
    %v1244 = vunpack.c.l.b16 %v1170
    %v1245 = vunpack.c.h.b16 %v1170
    %v1246 = vunpack.c.l.b16 %v1171
    %v1247 = vunpack.c.h.b16 %v1171
    %v1248 = vunpack.c.l.b16 %v1172
    %v1249 = vunpack.c.h.b16 %v1172
    %v1250 = vunpack.c.l.b16 %v1173
    %v1251 = vunpack.c.h.b16 %v1173
    %v1252 = vunpack.c.l.b16 %v1174
    %v1253 = vunpack.c.h.b16 %v1174
    %v1254 = vunpack.c.l.b16 %v1175
    %v1255 = vunpack.c.h.b16 %v1175
    %v1256 = vunpack.c.l.b16 %v1176
    %v1257 = vunpack.c.h.b16 %v1176
    %v1258 = vunpack.c.l.b16 %v1177
    %v1259 = vunpack.c.h.b16 %v1177
    %v1260 = vunpack.c.l.b16 %v1178
    %v1261 = vunpack.c.h.b16 %v1178
    %v1262 = vunpack.c.l.b16 %v1179
    %v1263 = vunpack.c.h.b16 %v1179
    %v1264 = vunpack.c.l.b16 %v1180
    %v1265 = vunpack.c.h.b16 %v1180
    %v1266 = vunpack.c.l.b16 %v1181
    %v1267 = vunpack.c.h.b16 %v1181
    %v1268 = vunpack.c.l.b16 %v1182
    %v1269 = vunpack.c.h.b16 %v1182
    %v1270 = vunpack.c.l.b16 %v1183
    %v1271 = vunpack.c.h.b16 %v1183
    %v1272 = vunpack.c.l.b16 %v1184
    %v1273 = vunpack.c.h.b16 %v1184
    %v1274 = vunpack.c.l.b16 %v1185
    %v1275 = vunpack.c.h.b16 %v1185
    %v1276 = vunpack.c.l.b16 %v1186
    %v1277 = vunpack.c.h.b16 %v1186
    %v1278 = vunpack.c.l.b16 %v1187
    %v1279 = vunpack.c.h.b16 %v1187
    %v1280 = vunpack.c.l.b16 %v1188
    %v1281 = vunpack.c.h.b16 %v1188
    %v1282 = vunpack.c.l.b16 %v1189
    %v1283 = vunpack.c.h.b16 %v1189
    %v1284 = vunpack.c.l.b16 %v1190
    %v1285 = vunpack.c.h.b16 %v1190
    %v1286 = vunpack.c.l.b16 %v1191
    %v1287 = vunpack.c.h.b16 %v1191
    %v1288 = vpack.c.b16 %v1224, %v1224
    %v1289 = vpack.c.b16 %v1225, %v1225
    %v1290 = vpack.c.b16 %v1226, %v1226
    %v1291 = vpack.c.b16 %v1227, %v1227
    %v1292 = vpack.c.b16 %v1228, %v1228
    %v1293 = vpack.c.b16 %v1229, %v1229
    %v1294 = vpack.c.b16 %v1230, %v1230
    %v1295 = vpack.c.b16 %v1231, %v1231
    %v1296 = vpack.c.b16 %v1232, %v1232
    %v1297 = vpack.c.b16 %v1233, %v1233
    %v1298 = vpack.c.b16 %v1234, %v1234
    %v1299 = vpack.c.b16 %v1235, %v1235
    %v1300 = vpack.c.b16 %v1236, %v1236
    %v1301 = vpack.c.b16 %v1237, %v1237
    %v1302 = vpack.c.b16 %v1238, %v1238
    %v1303 = vpack.c.b16 %v1239, %v1239
    %v1304 = vpack.c.b16 %v1240, %v1240
    %v1305 = vpack.c.b16 %v1241, %v1241
    %v1306 = vpack.c.b16 %v1242, %v1242
    %v1307 = vpack.c.b16 %v1243, %v1243
    %v1308 = vpack.c.b16 %v1244, %v1244
    %v1309 = vpack.c.b16 %v1245, %v1245
    %v1310 = vpack.c.b16 %v1246, %v1246
    %v1311 = vpack.c.b16 %v1247, %v1247
    %v1312 = vpack.c.b16 %v1248, %v1248
    %v1313 = vpack.c.b16 %v1249, %v1249
    %v1314 = vpack.c.b16 %v1250, %v1250
    %v1315 = vpack.c.b16 %v1251, %v1251
    %v1316 = vpack.c.b16 %v1252, %v1252
    %v1317 = vpack.c.b16 %v1253, %v1253
    %v1318 = vpack.c.b16 %v1254, %v1254
    %v1319 = vpack.c.b16 %v1255, %v1255
    %v1320 = vpack.c.b16 %v1256, %v1256
    %v1321 = vpack.c.b16 %v1257, %v1257
    %v1322 = vpack.c.b16 %v1258, %v1258
    %v1323 = vpack.c.b16 %v1259, %v1259
    %v1324 = vpack.c.b16 %v1260, %v1260
    %v1325 = vpack.c.b16 %v1261, %v1261
    %v1326 = vpack.c.b16 %v1262, %v1262
    %v1327 = vpack.c.b16 %v1263, %v1263
    %v1328 = vpack.c.b16 %v1264, %v1264
    %v1329 = vpack.c.b16 %v1265, %v1265
    %v1330 = vpack.c.b16 %v1266, %v1266
    %v1331 = vpack.c.b16 %v1267, %v1267
    %v1332 = vpack.c.b16 %v1268, %v1268
    %v1333 = vpack.c.b16 %v1269, %v1269
    %v1334 = vpack.c.b16 %v1270, %v1270
    %v1335 = vpack.c.b16 %v1271, %v1271
    %v1336 = vpack.c.b16 %v1272, %v1272
    %v1337 = vpack.c.b16 %v1273, %v1273
    %v1338 = vpack.c.b16 %v1274, %v1274
    %v1339 = vpack.c.b16 %v1275, %v1275
    %v1340 = vpack.c.b16 %v1276, %v1276
    %v1341 = vpack.c.b16 %v1277, %v1277
    %v1342 = vpack.c.b16 %v1278, %v1278
    %v1343 = vpack.c.b16 %v1279, %v1279
    %v1344 = vpack.c.b16 %v1280, %v1280
    %v1345 = vpack.c.b16 %v1281, %v1281
    %v1346 = vpack.c.b16 %v1282, %v1282
    %v1347 = vpack.c.b16 %v1283, %v1283
    %v1348 = vpack.c.b16 %v1284, %v1284
    %v1349 = vpack.c.b16 %v1285, %v1285
    %v1350 = vpack.c.b16 %v1286, %v1286
    %v1351 = vpack.c.b16 %v1287, %v1287
    %1416 = vst [vmem:[%s4] sm:$0xf] %v1288
    %1417 = vst [vmem:[%s4 + $0x4] sm:$0xf] %v1289
    %1418 = vst [vmem:[%s4 + $0x8] sm:$0xf] %v1290
    %1419 = vst [vmem:[%s4 + $0xc] sm:$0xf] %v1291
    %1420 = vst [vmem:[%s4 + $0x10] sm:$0xf] %v1292
    %1421 = vst [vmem:[%s4 + $0x14] sm:$0xf] %v1293
    %1422 = vst [vmem:[%s4 + $0x18] sm:$0xf] %v1294
    %1423 = vst [vmem:[%s4 + $0x1c] sm:$0xf] %v1295
    %1424 = vst [vmem:[%s4 + $0x20] sm:$0xf] %v1296
    %1425 = vst [vmem:[%s4 + $0x24] sm:$0xf] %v1297
    %1426 = vst [vmem:[%s4 + $0x28] sm:$0xf] %v1298
    %1427 = vst [vmem:[%s4 + $0x2c] sm:$0xf] %v1299
    %1428 = vst [vmem:[%s4 + $0x30] sm:$0xf] %v1300
    %1429 = vst [vmem:[%s4 + $0x34] sm:$0xf] %v1301
    %1430 = vst [vmem:[%s4 + $0x38] sm:$0xf] %v1302
    %1431 = vst [vmem:[%s4 + $0x3c] sm:$0xf] %v1303
    %1432 = vst [vmem:[%s4 + $0x40] sm:$0xf] %v1304
    %1433 = vst [vmem:[%s4 + $0x44] sm:$0xf] %v1305
    %1434 = vst [vmem:[%s4 + $0x48] sm:$0xf] %v1306
    %1435 = vst [vmem:[%s4 + $0x4c] sm:$0xf] %v1307
    %1436 = vst [vmem:[%s4 + $0x50] sm:$0xf] %v1308
    %1437 = vst [vmem:[%s4 + $0x54] sm:$0xf] %v1309
    %1438 = vst [vmem:[%s4 + $0x58] sm:$0xf] %v1310
    %1439 = vst [vmem:[%s4 + $0x5c] sm:$0xf] %v1311
    %1440 = vst [vmem:[%s4 + $0x60] sm:$0xf] %v1312
    %1441 = vst [vmem:[%s4 + $0x64] sm:$0xf] %v1313
    %1442 = vst [vmem:[%s4 + $0x68] sm:$0xf] %v1314
    %1443 = vst [vmem:[%s4 + $0x6c] sm:$0xf] %v1315
    %1444 = vst [vmem:[%s4 + $0x70] sm:$0xf] %v1316
    %1445 = vst [vmem:[%s4 + $0x74] sm:$0xf] %v1317
    %1446 = vst [vmem:[%s4 + $0x78] sm:$0xf] %v1318
    %1447 = vst [vmem:[%s4 + $0x7c] sm:$0xf] %v1319
    %1448 = vst [vmem:[%s4 + $0x80] sm:$0xf] %v1320
    %1449 = vst [vmem:[%s4 + $0x84] sm:$0xf] %v1321
    %1450 = vst [vmem:[%s4 + $0x88] sm:$0xf] %v1322
    %1451 = vst [vmem:[%s4 + $0x8c] sm:$0xf] %v1323
    %1452 = vst [vmem:[%s4 + $0x90] sm:$0xf] %v1324
    %1453 = vst [vmem:[%s4 + $0x94] sm:$0xf] %v1325
    %1454 = vst [vmem:[%s4 + $0x98] sm:$0xf] %v1326
    %1455 = vst [vmem:[%s4 + $0x9c] sm:$0xf] %v1327
    %1456 = vst [vmem:[%s4 + $0xa0] sm:$0xf] %v1328
    %1457 = vst [vmem:[%s4 + $0xa4] sm:$0xf] %v1329
    %1458 = vst [vmem:[%s4 + $0xa8] sm:$0xf] %v1330
    %1459 = vst [vmem:[%s4 + $0xac] sm:$0xf] %v1331
    %1460 = vst [vmem:[%s4 + $0xb0] sm:$0xf] %v1332
    %1461 = vst [vmem:[%s4 + $0xb4] sm:$0xf] %v1333
    %1462 = vst [vmem:[%s4 + $0xb8] sm:$0xf] %v1334
    %1463 = vst [vmem:[%s4 + $0xbc] sm:$0xf] %v1335
    %1464 = vst [vmem:[%s4 + $0xc0] sm:$0xf] %v1336
    %1465 = vst [vmem:[%s4 + $0xc4] sm:$0xf] %v1337
    %1466 = vst [vmem:[%s4 + $0xc8] sm:$0xf] %v1338
    %1467 = vst [vmem:[%s4 + $0xcc] sm:$0xf] %v1339
    %1468 = vst [vmem:[%s4 + $0xd0] sm:$0xf] %v1340
    %1469 = vst [vmem:[%s4 + $0xd4] sm:$0xf] %v1341
    %1470 = vst [vmem:[%s4 + $0xd8] sm:$0xf] %v1342
    %1471 = vst [vmem:[%s4 + $0xdc] sm:$0xf] %v1343
    %1472 = vst [vmem:[%s4 + $0xe0] sm:$0xf] %v1344
    %1473 = vst [vmem:[%s4 + $0xe4] sm:$0xf] %v1345
    %1474 = vst [vmem:[%s4 + $0xe8] sm:$0xf] %v1346
    %1475 = vst [vmem:[%s4 + $0xec] sm:$0xf] %v1347
    %1476 = vst [vmem:[%s4 + $0xf0] sm:$0xf] %v1348
    %1477 = vst [vmem:[%s4 + $0xf4] sm:$0xf] %v1349
    %1478 = vst [vmem:[%s4 + $0xf8] sm:$0xf] %v1350
    %1479 = vst [vmem:[%s4 + $0xfc] sm:$0xf] %v1351
  $region25: #{res_cnn_forward.24} parent=0 // pred_fallthru
    _
  // Predicated region
  $region26: #{res_cnn_forward.24} parent=0 // pred_check
    _
  $region27: #{res_cnn_forward.24} parent=0 // pred_check_branch
    %1481 = sbr.rel (0) target = $region29
  $region28: #{res_cnn_forward.24} parent=0 // pred_region
    _
  $region29: #{res_cnn_forward.24} parent=0 // pred_fallthru
    _
  // Predicated region
  $region30: #{res_cnn_forward.24} parent=0 // pred_check
    _
  $region31: #{res_cnn_forward.24} parent=0 // pred_check_branch
    %1483 = sbr.rel (0) target = $region33
  $region32: #{res_cnn_forward.24} parent=0 // pred_region
    _
  $region33: #{res_cnn_forward.24} parent=0 // pred_fallthru
    _

// kernel: res_cnn_forward.26
$region0: #{res_cnn_forward.26}
  #allocation0 [shape = 'u32[]', space=smem, size = 0x4, offset = 0x4, fixed_abs, tag = 'smem constant byte address 0x4 - core index']
  #allocation1 [shape = 'u32[144,128]{1,0:T(1,128)}', space=vmem, size = 0x12000, scoped, tag = 'internal scratch']
  #allocation2 [shape = 'f32[32,256]{1,0:T(8,128)}', space=vmem, size = 0x8000, scoped, tag = 'scratch operand']
  %s0 = inlined_call_operand.vmem [shape: bf16[32,1280], index: 0, kind: input, shape index: {}]
  %s1 = inlined_call_operand.vmem [shape: bf16[1280,256], index: 1, kind: input, shape index: {}]
  %s2 = inlined_call_operand.vmem [shape: f32[1,256], index: 2, kind: input, shape index: {}]
  %s3 = inlined_call_operand.vmem [shape: f32[1,256], index: 3, kind: input, shape index: {}]
  %s4 = inlined_call_operand.vmem [shape: bf16[32,256], index: 4, kind: output, shape index: {}]
  %s5 = sld [smem:[#allocation0]]
  $region95: #{res_cnn_forward.26} parent=0
    _
  %s7 = ssub.s32 1, %s5
  %s8 = scalar_select 0, %s7, %s5
  $region1: #{res_cnn_forward.26} parent=0
    #allocation3 [shape = 'u8[32768]{0}', space=vmem, size = 0x8000, scoped, tag = 'input window, operand 0']
    loop: start=0, step=1, limit=7
    $region2: #{res_cnn_forward.26} parent=1 // loop_pre_header
      _
    $region3: #{res_cnn_forward.26} parent=1 // loop_header
      %s10 = sphi 0, %s14
      %p11 = scmp.ge.s32.totalorder %s10, 7
      %s17 = sphi 0, %s36
      %s18 = sphi 0, %s32
      %s19 = sphi 0, %s28
      %s20 = sphi 0, %s17
      %s21 = sphi 0, %s18
      %s22 = sphi 0, %s19
      %s23 = sphi 0, %s20
      %s24 = sphi 0, %s21
      %s25 = sphi 0, %s22
      %s41 = sphi 0, %s43
      %s44 = sphi 0, %s41
      %s45 = sphi 0, %s44
      %s61 = sphi 0, %s45
      %s69 = sphi 0, %s71
      %s72 = sphi 0, %s69
      %s73 = sphi 0, %s72
      %s89 = sphi 0, %s73
      %s95 = sphi 0, %s97
      %s98 = sphi 0, %s95
      %s99 = sphi 0, %s98
      %s115 = sphi 0, %s99
      %s121 = sphi 0, %s123
      %s124 = sphi 0, %s121
      %s125 = sphi 0, %s124
      %s141 = sphi 0, %s125
      %s149 = sphi 0, %s151
      %s152 = sphi 0, %s149
      %s153 = sphi 0, %s152
      %s169 = sphi 0, %s153
    $region4: #{res_cnn_forward.26} parent=1 // loop_header_branch
      %13 = sbr.rel (%p11) target = $region8
    $region5: #{res_cnn_forward.26} parent=1 // loop_body
      %s15 = ssub.s32 %s10, 1
      %s16 = ssub.s32 %s10, 2
      %s26 = sadd.s32 1, %s19
      %p27 = scmp.ge.s32.totalorder %s26, 5
      %s28 = scalar_select %p27, 0, %s26
      %s29 = sadd.s32 1, %s18
      %s30 = scalar_select %p27, %s29, %s18
      %p31 = scmp.ge.s32.totalorder %s30, 1
      %s32 = scalar_select %p31, 0, %s30
      %s33 = sadd.s32 1, %s17
      %s34 = scalar_select %p31, %s33, %s17
      %p35 = scmp.ge.s32.totalorder %s34, 1
      %s36 = scalar_select %p35, 0, %s34
      %s37 = ssub.s32 %s17, %s36
      %s38 = ssub.s32 %s19, %s28
      %s39 = sor.u32 %s37, %s38
      %p40 = scmp.eq.s32.totalorder %s39, 0
      %s42 = sadd.s32 %s41, 1
      %s43 = scalar_select %p40, %s41, %s42
      %p46 = pneg %p40
      %p47 = scmp.eq.s32.totalorder %s10, 4
      %p48 = por %p46, %p47
      %p49 = scmp.ne.s32.totalorder %s41, %s44
      %p50 = scmp.eq.s32.totalorder %s10, 0
      %p51 = por %p49, %p50
      %p52 = scmp.ne.s32.totalorder %s41, %s44
      %p53 = scmp.eq.s32.totalorder %s15, 4
      %p54 = por %p52, %p53
      %p55 = scmp.ne.s32.totalorder %s44, %s45
      %p56 = scmp.eq.s32.totalorder %s15, 0
      %p57 = por %p55, %p56
      %p58 = scmp.ne.s32.totalorder %s44, %s45
      %p59 = scmp.eq.s32.totalorder %s16, 4
      %p60 = por %p58, %p59
      %p62 = scmp.ne.s32.totalorder %s45, %s61
      %p63 = scmp.eq.s32.totalorder %s16, 0
      %p64 = por %p62, %p63
      %s65 = ssub.s32 %s19, %s28
      %s66 = ssub.s32 %s18, %s32
      %s67 = sor.u32 %s65, %s66
      %p68 = scmp.eq.s32.totalorder %s67, 0
      %s70 = sadd.s32 %s69, 1
      %s71 = scalar_select %p68, %s69, %s70
      %p74 = pneg %p68
      %p75 = scmp.eq.s32.totalorder %s10, 4
      %p76 = por %p74, %p75
      %p77 = scmp.ne.s32.totalorder %s69, %s72
      %p78 = scmp.eq.s32.totalorder %s10, 0
      %p79 = por %p77, %p78
      %p80 = scmp.ne.s32.totalorder %s69, %s72
      %p81 = scmp.eq.s32.totalorder %s15, 4
      %p82 = por %p80, %p81
      %p83 = scmp.ne.s32.totalorder %s72, %s73
      %p84 = scmp.eq.s32.totalorder %s15, 0
      %p85 = por %p83, %p84
      %p86 = scmp.ne.s32.totalorder %s72, %s73
      %p87 = scmp.eq.s32.totalorder %s16, 4
      %p88 = por %p86, %p87
      %p90 = scmp.ne.s32.totalorder %s73, %s89
      %p91 = scmp.eq.s32.totalorder %s16, 0
      %p92 = por %p90, %p91
      %s93 = ssub.s32 %s18, %s32
      %p94 = scmp.eq.s32.totalorder %s93, 0
      %s96 = sadd.s32 %s95, 1
      %s97 = scalar_select %p94, %s95, %s96
      %p100 = pneg %p94
      %p101 = scmp.eq.s32.totalorder %s10, 4
      %p102 = por %p100, %p101
      %p103 = scmp.ne.s32.totalorder %s95, %s98
      %p104 = scmp.eq.s32.totalorder %s10, 0
      %p105 = por %p103, %p104
      %p106 = scmp.ne.s32.totalorder %s95, %s98
      %p107 = scmp.eq.s32.totalorder %s15, 4
      %p108 = por %p106, %p107
      %p109 = scmp.ne.s32.totalorder %s98, %s99
      %p110 = scmp.eq.s32.totalorder %s15, 0
      %p111 = por %p109, %p110
      %p112 = scmp.ne.s32.totalorder %s98, %s99
      %p113 = scmp.eq.s32.totalorder %s16, 4
      %p114 = por %p112, %p113
      %p116 = scmp.ne.s32.totalorder %s99, %s115
      %p117 = scmp.eq.s32.totalorder %s16, 0
      %p118 = por %p116, %p117
      %s119 = ssub.s32 %s18, %s32
      %p120 = scmp.eq.s32.totalorder %s119, 0
      %s122 = sadd.s32 %s121, 1
      %s123 = scalar_select %p120, %s121, %s122
      %p126 = pneg %p120
      %p127 = scmp.eq.s32.totalorder %s10, 4
      %p128 = por %p126, %p127
      %p129 = scmp.ne.s32.totalorder %s121, %s124
      %p130 = scmp.eq.s32.totalorder %s10, 0
      %p131 = por %p129, %p130
      %p132 = scmp.ne.s32.totalorder %s121, %s124
      %p133 = scmp.eq.s32.totalorder %s15, 4
      %p134 = por %p132, %p133
      %p135 = scmp.ne.s32.totalorder %s124, %s125
      %p136 = scmp.eq.s32.totalorder %s15, 0
      %p137 = por %p135, %p136
      %p138 = scmp.ne.s32.totalorder %s124, %s125
      %p139 = scmp.eq.s32.totalorder %s16, 4
      %p140 = por %p138, %p139
      %p142 = scmp.ne.s32.totalorder %s125, %s141
      %p143 = scmp.eq.s32.totalorder %s16, 0
      %p144 = por %p142, %p143
      %s145 = ssub.s32 %s17, %s36
      %s146 = ssub.s32 %s18, %s32
      %s147 = sor.u32 %s145, %s146
      %p148 = scmp.eq.s32.totalorder %s147, 0
      %s150 = sadd.s32 %s149, 1
      %s151 = scalar_select %p148, %s149, %s150
      %p154 = pneg %p148
      %p155 = scmp.eq.s32.totalorder %s10, 4
      %p156 = por %p154, %p155
      %p157 = scmp.ne.s32.totalorder %s149, %s152
      %p158 = scmp.eq.s32.totalorder %s10, 0
      %p159 = por %p157, %p158
      %p160 = scmp.ne.s32.totalorder %s149, %s152
      %p161 = scmp.eq.s32.totalorder %s15, 4
      %p162 = por %p160, %p161
      %p163 = scmp.ne.s32.totalorder %s152, %s153
      %p164 = scmp.eq.s32.totalorder %s15, 0
      %p165 = por %p163, %p164
      %p166 = scmp.ne.s32.totalorder %s152, %s153
      %p167 = scmp.eq.s32.totalorder %s16, 4
      %p168 = por %p166, %p167
      %p170 = scmp.ne.s32.totalorder %s153, %s169
      %p171 = scmp.eq.s32.totalorder %s16, 0
      %p172 = por %p170, %p171
      %p173 = scmp.le.s32.totalorder 1, %s10
      %p174 = scmp.lt.s32.totalorder %s10, 6
      %p175 = pnand %p173, %p174
      %p176 = pneg %p175
      // Predicated region
      $region9: #{res_cnn_forward.26} parent=5 // pred_check
        _
      $region10: #{res_cnn_forward.26} parent=5 // pred_check_branch
        %178 = sbr.rel (%p175) target = $region12
      $region11: #{res_cnn_forward.26} parent=5 // pred_region
        %s179 = ssub.s32 %s10, 1
        // Predicated region
        $region13: #{res_cnn_forward.26} parent=11 // pred_check
          %p180 = pneg %p111
        $region14: #{res_cnn_forward.26} parent=11 // pred_check_branch
          %182 = sbr.rel (%p180) target = $region16
        $region15: #{res_cnn_forward.26} parent=11 // pred_region
          %s183 = smul.u32 2, %s21
          %p184 = scmp.lt.s32.totalorder %s183, 1
          %s185 = scalar_select %p184, %s183, 1
          %s186 = scalar_lea.vmem %s2, %s185
          %s187 = smul.u32 2, %s21
        $region16: #{res_cnn_forward.26} parent=11 // pred_fallthru
          _
        // Predicated region
        $region17: #{res_cnn_forward.26} parent=11 // pred_check
          %p188 = pneg %p137
        $region18: #{res_cnn_forward.26} parent=11 // pred_check_branch
          %190 = sbr.rel (%p188) target = $region20
        $region19: #{res_cnn_forward.26} parent=11 // pred_region
          %s191 = smul.u32 2, %s21
          %p192 = scmp.lt.s32.totalorder %s191, 1
          %s193 = scalar_select %p192, %s191, 1
          %s194 = scalar_lea.vmem %s3, %s193
          %s195 = smul.u32 2, %s21
        $region20: #{res_cnn_forward.26} parent=11 // pred_fallthru
          _
      $region12: #{res_cnn_forward.26} parent=5 // pred_fallthru
        _
      %p196 = scmp.lt.s32.totalorder %s10, 5
      // Predicated region
      $region21: #{res_cnn_forward.26} parent=5 // pred_check
        %p197 = pneg %p196
      $region22: #{res_cnn_forward.26} parent=5 // pred_check_branch
        %199 = sbr.rel (%p197) target = $region24
      $region23: #{res_cnn_forward.26} parent=5 // pred_region
        // Predicated region
        $region25: #{res_cnn_forward.26} parent=23 // pred_check
          %p200 = pneg %p51
        $region26: #{res_cnn_forward.26} parent=23 // pred_check_branch
          %202 = sbr.rel (%p200) target = $region28
        $region27: #{res_cnn_forward.26} parent=23 // pred_region
          %s203 = sand.u32 %s41, 1
          %s204 = sand.u32 %s41, 1
          %s205 = smul.addr %s204, 32
          %s206 = scalar_lea.vmem [#allocation3], %s205
          %s207 = smul.u32 4, %s17
          %s208 = smul.u32 2, %s19
          %s209 = smul.addr %s207, 10
          %s210 = sadd.s32 %s208, %s209
          %s211 = smul.addr %s210, 4
          %s212 = scalar_lea.vmem %s0, %s211
          // Predicated region
          $region29: #{res_cnn_forward.26} parent=27 // pred_check
            _
          $region30: #{res_cnn_forward.26} parent=27 // pred_check_branch
            %214 = sbr.rel (0) target = $region32
          $region31: #{res_cnn_forward.26} parent=27 // pred_region
            // Predicated region
            $region33: #{res_cnn_forward.26} parent=31 // pred_check
              _
            $region34: #{res_cnn_forward.26} parent=31 // pred_check_branch
              %216 = sbr.rel (0) target = $region36
            $region35: #{res_cnn_forward.26} parent=31 // pred_region
              // Predicated region
              $region48: #{res_cnn_forward.26} parent=35 // pred_check
                _
              $region49: #{res_cnn_forward.26} parent=35 // pred_check_branch
                %238 = sbr.rel (0) target = $region51
              $region50: #{res_cnn_forward.26} parent=35 // pred_region
                loop: start=0, step=1, limit=1
                $region52: #{res_cnn_forward.26} parent=50 // loop_pre_header
                  _
                $region53: #{res_cnn_forward.26} parent=50 // loop_header
                  %s240 = sphi 0, %s244
                  %p241 = scmp.ge.s32.totalorder %s240, 1
                  %s245 = sphi %s212, %s212
                  %s246 = sphi %s206, %s206
                $region54: #{res_cnn_forward.26} parent=50 // loop_header_branch
                  %243 = sbr.rel (%p241) target = $region58
                $region55: #{res_cnn_forward.26} parent=50 // loop_body
                  %v247 = vld [vmem:[%s245] sm:$0xff]
                  %248 = vst [vmem:[%s246] sm:$0xff] %v247
                  %v249 = vld [vmem:[%s245 + $0x28] sm:$0xff]
                  %250 = vst [vmem:[%s246 + $0x8] sm:$0xff] %v249
                  %v251 = vld [vmem:[%s245 + $0x50] sm:$0xff]
                  %252 = vst [vmem:[%s246 + $0x10] sm:$0xff] %v251
                  %v253 = vld [vmem:[%s245 + $0x78] sm:$0xff]
                  %254 = vst [vmem:[%s246 + $0x18] sm:$0xff] %v253
                $region56: #{res_cnn_forward.26} parent=50 // loop_footer
                  %s244 = sadd.s32 1, %s240
                $region57: #{res_cnn_forward.26} parent=50 // loop_footer_branch
                  %239 = sbr.rel target = $region53
                $region58: #{res_cnn_forward.26} parent=50 // loop_exit
                  _
              $region51: #{res_cnn_forward.26} parent=35 // pred_fallthru
                _
              // Predicated region
              $region59: #{res_cnn_forward.26} parent=35 // pred_check
                _
              $region60: #{res_cnn_forward.26} parent=35 // pred_check_branch
                %256 = sbr.rel target = $region62
              $region61: #{res_cnn_forward.26} parent=35 // pred_region
                _
              $region62: #{res_cnn_forward.26} parent=35 // pred_fallthru
                _
            $region36: #{res_cnn_forward.26} parent=31 // pred_fallthru
              _
            // Predicated region
            $region37: #{res_cnn_forward.26} parent=31 // pred_check
              _
            $region38: #{res_cnn_forward.26} parent=31 // pred_check_branch
              %218 = sbr.rel target = $region40
            $region39: #{res_cnn_forward.26} parent=31 // pred_region
              %s220 = ssub.s32 256, 1
              loop: start=0, step=1, limit=1
              $region41: #{res_cnn_forward.26} parent=39 // loop_pre_header
                _
              $region42: #{res_cnn_forward.26} parent=39 // loop_header
                %s222 = sphi 0, %s226
                %p223 = scmp.ge.s32.totalorder %s222, 1
                %s227 = sphi %s212, %s212
                %s228 = sphi %s206, %s206
              $region43: #{res_cnn_forward.26} parent=39 // loop_header_branch
                %225 = sbr.rel (%p223) target = $region47
              $region44: #{res_cnn_forward.26} parent=39 // loop_body
                %v229 = vld [vmem:[%s227] sm:%s220]
                %230 = vst [vmem:[%s228] sm:%s220] %v229
                %v231 = vld [vmem:[%s227 + $0x28] sm:%s220]
                %232 = vst [vmem:[%s228 + $0x8] sm:%s220] %v231
                %v233 = vld [vmem:[%s227 + $0x50] sm:%s220]
                %234 = vst [vmem:[%s228 + $0x10] sm:%s220] %v233
                %v235 = vld [vmem:[%s227 + $0x78] sm:%s220]
                %236 = vst [vmem:[%s228 + $0x18] sm:%s220] %v235
              $region45: #{res_cnn_forward.26} parent=39 // loop_footer
                %s226 = sadd.s32 1, %s222
              $region46: #{res_cnn_forward.26} parent=39 // loop_footer_branch
                %221 = sbr.rel target = $region42
              $region47: #{res_cnn_forward.26} parent=39 // loop_exit
                _
            $region40: #{res_cnn_forward.26} parent=31 // pred_fallthru
              _
          $region32: #{res_cnn_forward.26} parent=27 // pred_fallthru
            _
          %257 = vnop
        $region28: #{res_cnn_forward.26} parent=23 // pred_fallthru
          _
        // Predicated region
        $region63: #{res_cnn_forward.26} parent=23 // pred_check
          %p258 = pneg %p79
        $region64: #{res_cnn_forward.26} parent=23 // pred_check_branch
          %260 = sbr.rel (%p258) target = $region66
        $region65: #{res_cnn_forward.26} parent=23 // pred_region
          %s261 = smul.u32 32, %s19
          %s262 = smul.u32 2, %s18
          %p263 = scmp.lt.s32.totalorder %s261, 159
          %s264 = scalar_select %p263, %s261, 159
          %p265 = scmp.lt.s32.totalorder %s262, 1
          %s266 = scalar_select %p265, %s262, 1
          %s267 = smul.addr %s264, 2
          %s268 = sadd.s32 %s266, %s267
          %s269 = smul.addr %s268, 4
          %s270 = scalar_lea.vmem %s1, %s269
          %s271 = smul.u32 32, %s19
          %s272 = smul.u32 2, %s18
        $region66: #{res_cnn_forward.26} parent=23 // pred_fallthru
          _
      $region24: #{res_cnn_forward.26} parent=5 // pred_fallthru
        _
      %p273 = scmp.le.s32.totalorder 1, %s10
      %p274 = scmp.lt.s32.totalorder %s10, 6
      %p275 = pnand %p273, %p274
      %p276 = pneg %p275
      // Predicated region
      $region67: #{res_cnn_forward.26} parent=5 // pred_check
        _
      $region68: #{res_cnn_forward.26} parent=5 // pred_check_branch
        %278 = sbr.rel (%p275) target = $region70
      $region69: #{res_cnn_forward.26} parent=5 // pred_region
        %s279 = ssub.s32 %s10, 1
        %s280 = sand.u32 %s44, 1
        %s281 = sand.u32 %s44, 1
        %s282 = smul.addr %s281, 32
        %s283 = scalar_lea.vmem [#allocation3], %s282
        // Predicated region
        $region71: #{res_cnn_forward.26} parent=69 // pred_check
          %p284 = pneg %p57
        $region72: #{res_cnn_forward.26} parent=69 // pred_check_branch
          %286 = sbr.rel (%p284) target = $region74
        $region73: #{res_cnn_forward.26} parent=69 // pred_region
          _
        $region74: #{res_cnn_forward.26} parent=69 // pred_fallthru
          _
        %s287 = sand.u32 %s44, 1
        %s288 = sand.u32 %s44, 1
        %s289 = smul.addr %s288, 32
        %s290 = scalar_lea.vmem [#allocation3], %s289
        %p291 = pneg %p57
        %p292 = pneg %p54
        %s293 = smul.u32 32, %s22
        %s294 = smul.u32 2, %s21
        %p295 = scmp.lt.s32.totalorder %s293, 159
        %s296 = scalar_select %p295, %s293, 159
        %p297 = scmp.lt.s32.totalorder %s294, 1
        %s298 = scalar_select %p297, %s294, 1
        %s299 = smul.addr %s296, 2
        %s300 = sadd.s32 %s298, %s299
        %s301 = smul.addr %s300, 4
        %s302 = scalar_lea.vmem %s1, %s301
        %p303 = pneg %p85
        %p304 = pneg %p82
        %s305 = smul.u32 2, %s21
        %p306 = scmp.lt.s32.totalorder %s305, 1
        %s307 = scalar_select %p306, %s305, 1
        %s308 = scalar_lea.vmem %s2, %s307
        %p309 = pneg %p111
        %p310 = pneg %p108
        %s311 = smul.u32 2, %s21
        %p312 = scmp.lt.s32.totalorder %s311, 1
        %s313 = scalar_select %p312, %s311, 1
        %s314 = scalar_lea.vmem %s3, %s313
        %p315 = pneg %p137
        %p316 = pneg %p134
        %p317 = pneg %p165
        %p318 = pneg %p162
        %s319 = smul.u32 4, %s20
        %s320 = smul.u32 2, %s21
        %p321 = scmp.lt.s32.totalorder %s319, 3
        %s322 = scalar_select %p321, %s319, 3
        %p323 = scmp.lt.s32.totalorder %s320, 1
        %s324 = scalar_select %p323, %s320, 1
        %s325 = smul.addr %s322, 2
        %s326 = sadd.s32 %s324, %s325
        %s327 = smul.addr %s326, 4
        %s328 = scalar_lea.vmem %s4, %s327
        %s329 = smul.u32 4, %s20
        %s330 = smul.u32 2, %s22
        %s331 = smul.u32 32, %s22
        %s332 = smul.u32 2, %s21
        %p333 = scmp.lt.s32.totalorder %s331, 159
        %s334 = scalar_select %p333, %s331, 159
        %p335 = scmp.lt.s32.totalorder %s332, 1
        %s336 = scalar_select %p335, %s332, 1
        %s337 = smul.addr %s334, 2
        %s338 = sadd.s32 %s336, %s337
        %s339 = smul.addr %s338, 4
        %s340 = scalar_lea.vmem %s1, %s339
        %s341 = smul.u32 32, %s22
        %s342 = smul.u32 2, %s21
        %s343 = smul.u32 2, %s21
        %p344 = scmp.lt.s32.totalorder %s343, 1
        %s345 = scalar_select %p344, %s343, 1
        %s346 = scalar_lea.vmem %s2, %s345
        %s347 = smul.u32 2, %s21
        %s348 = smul.u32 2, %s21
        %p349 = scmp.lt.s32.totalorder %s348, 1
        %s350 = scalar_select %p349, %s348, 1
        %s351 = scalar_lea.vmem %s3, %s350
        %s352 = smul.u32 2, %s21
        %s353 = smul.u32 4, %s20
        %s354 = smul.u32 2, %s21
        %p355 = scmp.lt.s32.totalorder %s353, 3
        %s356 = scalar_select %p355, %s353, 3
        %p357 = scmp.lt.s32.totalorder %s354, 1
        %s358 = scalar_select %p357, %s354, 1
        %s359 = smul.addr %s356, 2
        %s360 = sadd.s32 %s358, %s359
        %s361 = smul.addr %s360, 4
        %s362 = scalar_lea.vmem %s4, %s361
        %s363 = smul.u32 4, %s20
        %s364 = smul.u32 2, %s21
        %p365 = scmp.eq.s32.totalorder %s22, 0
        // Predicated region
        $region75: #{res_cnn_forward.26} parent=69 // pred_check
          %p366 = pneg %p365
        $region76: #{res_cnn_forward.26} parent=69 // pred_check_branch
          %368 = sbr.rel (%p366) target = $region78
        $region77: #{res_cnn_forward.26} parent=69 // pred_region
          %369 = vst [vmem:[#allocation2] sm:$0xff] 0.0
          %370 = vst [vmem:[#allocation2 + $0x8] sm:$0xff] 0.0
          %371 = vst [vmem:[#allocation2 + $0x10] sm:$0xff] 0.0
          %372 = vst [vmem:[#allocation2 + $0x18] sm:$0xff] 0.0
          %373 = vst [vmem:[#allocation2 + $0x20] sm:$0xff] 0.0
          %374 = vst [vmem:[#allocation2 + $0x28] sm:$0xff] 0.0
          %375 = vst [vmem:[#allocation2 + $0x30] sm:$0xff] 0.0
          %376 = vst [vmem:[#allocation2 + $0x38] sm:$0xff] 0.0
        $region78: #{res_cnn_forward.26} parent=69 // pred_fallthru
          _
        %v377 = vld [vmem:[#allocation2] sm:$0xff]
        %v378 = vld [vmem:[#allocation2 + $0x8] sm:$0xff]
        %v379 = vld [vmem:[#allocation2 + $0x10] sm:$0xff]
        %v380 = vld [vmem:[#allocation2 + $0x18] sm:$0xff]
        %v381 = vld [vmem:[#allocation2 + $0x20] sm:$0xff]
        %v382 = vld [vmem:[#allocation2 + $0x28] sm:$0xff]
        %v383 = vld [vmem:[#allocation2 + $0x30] sm:$0xff]
        %v384 = vld [vmem:[#allocation2 + $0x38] sm:$0xff]
        %v385 = vld [vmem:[%s283] sm:$0xff]
        %v386 = vld [vmem:[%s283 + $0x8] sm:$0xff]
        %v387 = vld [vmem:[%s283 + $0x10] sm:$0xff]
        %v388 = vld [vmem:[%s283 + $0x18] sm:$0xff]
        %v389 = vld [vmem:[%s340] sm:$0xff]
        %v390 = vld [vmem:[%s340 + $0x8] sm:$0xff]
        %v391 = vld [vmem:[%s340 + $0x10] sm:$0xff]
        %v392 = vld [vmem:[%s340 + $0x18] sm:$0xff]
        %v393 = vld [vmem:[%s340 + $0x20] sm:$0xff]
        %v394 = vld [vmem:[%s340 + $0x28] sm:$0xff]
        %v395 = vld [vmem:[%s340 + $0x30] sm:$0xff]
        %v396 = vld [vmem:[%s340 + $0x38] sm:$0xff]
        %v397 = vld [vmem:[%s340 + $0x40] sm:$0xff]
        %v398 = vld [vmem:[%s340 + $0x48] sm:$0xff]
        %v399 = vld [vmem:[%s340 + $0x50] sm:$0xff]
        %v400 = vld [vmem:[%s340 + $0x58] sm:$0xff]
        %v401 = vld [vmem:[%s340 + $0x60] sm:$0xff]
        %v402 = vld [vmem:[%s340 + $0x68] sm:$0xff]
        %v403 = vld [vmem:[%s340 + $0x70] sm:$0xff]
        %v404 = vld [vmem:[%s340 + $0x78] sm:$0xff]
        %v405 = vld [vmem:[%s340 + $0x80] sm:$0xff]
        %v406 = vld [vmem:[%s340 + $0x88] sm:$0xff]
        %v407 = vld [vmem:[%s340 + $0x90] sm:$0xff]
        %v408 = vld [vmem:[%s340 + $0x98] sm:$0xff]
        %v409 = vld [vmem:[%s340 + $0xa0] sm:$0xff]
        %v410 = vld [vmem:[%s340 + $0xa8] sm:$0xff]
        %v411 = vld [vmem:[%s340 + $0xb0] sm:$0xff]
        %v412 = vld [vmem:[%s340 + $0xb8] sm:$0xff]
        %v413 = vld [vmem:[%s340 + $0xc0] sm:$0xff]
        %v414 = vld [vmem:[%s340 + $0xc8] sm:$0xff]
        %v415 = vld [vmem:[%s340 + $0xd0] sm:$0xff]
        %v416 = vld [vmem:[%s340 + $0xd8] sm:$0xff]
        %v417 = vld [vmem:[%s340 + $0xe0] sm:$0xff]
        %v418 = vld [vmem:[%s340 + $0xe8] sm:$0xff]
        %v419 = vld [vmem:[%s340 + $0xf0] sm:$0xff]
        %v420 = vld [vmem:[%s340 + $0xf8] sm:$0xff]
        %v425 = vunpack.c.l.b16 %v385
        %v426 = vunpack.c.h.b16 %v385
        %v427 = vunpack.c.l.b16 %v386
        %v428 = vunpack.c.h.b16 %v386
        %v429 = vunpack.c.l.b16 %v387
        %v430 = vunpack.c.h.b16 %v387
        %v431 = vunpack.c.l.b16 %v388
        %v432 = vunpack.c.h.b16 %v388
        %v433 = vpack.c.b16 %v427, %v425
        %v434 = vpack.c.b16 %v428, %v426
        %v435 = vpack.c.b16 %v431, %v429
        %v436 = vpack.c.b16 %v432, %v430
        %v473 = vunpack.c.l.b16 %v389
        %v474 = vunpack.c.h.b16 %v389
        %v475 = vunpack.c.l.b16 %v390
        %v476 = vunpack.c.h.b16 %v390
        %v477 = vunpack.c.l.b16 %v391
        %v478 = vunpack.c.h.b16 %v391
        %v479 = vunpack.c.l.b16 %v392
        %v480 = vunpack.c.h.b16 %v392
        %v481 = vunpack.c.l.b16 %v393
        %v482 = vunpack.c.h.b16 %v393
        %v483 = vunpack.c.l.b16 %v394
        %v484 = vunpack.c.h.b16 %v394
        %v485 = vunpack.c.l.b16 %v395
        %v486 = vunpack.c.h.b16 %v395
        %v487 = vunpack.c.l.b16 %v396
        %v488 = vunpack.c.h.b16 %v396
        %v489 = vunpack.c.l.b16 %v397
        %v490 = vunpack.c.h.b16 %v397
        %v491 = vunpack.c.l.b16 %v398
        %v492 = vunpack.c.h.b16 %v398
        %v493 = vunpack.c.l.b16 %v399
        %v494 = vunpack.c.h.b16 %v399
        %v495 = vunpack.c.l.b16 %v400
        %v496 = vunpack.c.h.b16 %v400
        %v497 = vunpack.c.l.b16 %v401
        %v498 = vunpack.c.h.b16 %v401
        %v499 = vunpack.c.l.b16 %v402
        %v500 = vunpack.c.h.b16 %v402
        %v501 = vunpack.c.l.b16 %v403
        %v502 = vunpack.c.h.b16 %v403
        %v503 = vunpack.c.l.b16 %v404
        %v504 = vunpack.c.h.b16 %v404
        %v505 = vunpack.c.l.b16 %v405
        %v506 = vunpack.c.h.b16 %v405
        %v507 = vunpack.c.l.b16 %v406
        %v508 = vunpack.c.h.b16 %v406
        %v509 = vunpack.c.l.b16 %v407
        %v510 = vunpack.c.h.b16 %v407
        %v511 = vunpack.c.l.b16 %v408
        %v512 = vunpack.c.h.b16 %v408
        %v513 = vunpack.c.l.b16 %v409
        %v514 = vunpack.c.h.b16 %v409
        %v515 = vunpack.c.l.b16 %v410
        %v516 = vunpack.c.h.b16 %v410
        %v517 = vunpack.c.l.b16 %v411
        %v518 = vunpack.c.h.b16 %v411
        %v519 = vunpack.c.l.b16 %v412
        %v520 = vunpack.c.h.b16 %v412
        %v521 = vunpack.c.l.b16 %v413
        %v522 = vunpack.c.h.b16 %v413
        %v523 = vunpack.c.l.b16 %v414
        %v524 = vunpack.c.h.b16 %v414
        %v525 = vunpack.c.l.b16 %v415
        %v526 = vunpack.c.h.b16 %v415
        %v527 = vunpack.c.l.b16 %v416
        %v528 = vunpack.c.h.b16 %v416
        %v529 = vunpack.c.l.b16 %v417
        %v530 = vunpack.c.h.b16 %v417
        %v531 = vunpack.c.l.b16 %v418
        %v532 = vunpack.c.h.b16 %v418
        %v533 = vunpack.c.l.b16 %v419
        %v534 = vunpack.c.h.b16 %v419
        %v535 = vunpack.c.l.b16 %v420
        %v536 = vunpack.c.h.b16 %v420
        %v537 = vpack.c.b16 %v475, %v473
        %v538 = vpack.c.b16 %v476, %v474
        %v539 = vpack.c.b16 %v479, %v477
        %v540 = vpack.c.b16 %v480, %v478
        %v541 = vpack.c.b16 %v483, %v481
        %v542 = vpack.c.b16 %v484, %v482
        %v543 = vpack.c.b16 %v487, %v485
        %v544 = vpack.c.b16 %v488, %v486
        %v545 = vpack.c.b16 %v491, %v489
        %v546 = vpack.c.b16 %v492, %v490
        %v547 = vpack.c.b16 %v495, %v493
        %v548 = vpack.c.b16 %v496, %v494
        %v549 = vpack.c.b16 %v499, %v497
        %v550 = vpack.c.b16 %v500, %v498
        %v551 = vpack.c.b16 %v503, %v501
        %v552 = vpack.c.b16 %v504, %v502
        %v553 = vpack.c.b16 %v507, %v505
        %v554 = vpack.c.b16 %v508, %v506
        %v555 = vpack.c.b16 %v511, %v509
        %v556 = vpack.c.b16 %v512, %v510
        %v557 = vpack.c.b16 %v515, %v513
        %v558 = vpack.c.b16 %v516, %v514
        %v559 = vpack.c.b16 %v519, %v517
        %v560 = vpack.c.b16 %v520, %v518
        %v561 = vpack.c.b16 %v523, %v521
        %v562 = vpack.c.b16 %v524, %v522
        %v563 = vpack.c.b16 %v527, %v525
        %v564 = vpack.c.b16 %v528, %v526
        %v565 = vpack.c.b16 %v531, %v529
        %v566 = vpack.c.b16 %v532, %v530
        %v567 = vpack.c.b16 %v535, %v533
        %v568 = vpack.c.b16 %v536, %v534
        %601 = vmatprep.subr.bf16.mxu0 %v552
        %602 = vmatpush1.bf16.msra.mxu0 %v551
        %603 = vmatprep.subr.bf16.mxu0 %v550
        %604 = vmatpush1.bf16.msra.mxu0 %v549
        %605 = vmatprep.subr.bf16.mxu0 %v548
        %606 = vmatpush1.bf16.msra.mxu0 %v547
        %607 = vmatprep.subr.bf16.mxu0 %v546
        %608 = vmatpush1.bf16.msra.mxu0 %v545
        %609 = vmatprep.subr.bf16.mxu0 %v544
        %610 = vmatpush1.bf16.msra.mxu0 %v543
        %611 = vmatprep.subr.bf16.mxu0 %v542
        %612 = vmatpush1.bf16.msra.mxu0 %v541
        %613 = vmatprep.subr.bf16.mxu0 %v540
        %614 = vmatpush1.bf16.msra.mxu0 %v539
        %615 = vmatprep.subr.bf16.mxu0 %v538
        %616 = vmatpush1.bf16.msra.mxu0 %v537
        %617 = vmatprep.subr.bf16.mxu0 %v568
        %618 = vmatpush2.bf16.msra.mxu0 %v567
        %619 = vmatprep.subr.bf16.mxu0 %v566
        %620 = vmatpush2.bf16.msra.mxu0 %v565
        %621 = vmatprep.subr.bf16.mxu0 %v564
        %622 = vmatpush2.bf16.msra.mxu0 %v563
        %623 = vmatprep.subr.bf16.mxu0 %v562
        %624 = vmatpush2.bf16.msra.mxu0 %v561
        %625 = vmatprep.subr.bf16.mxu0 %v560
        %626 = vmatpush2.bf16.msra.mxu0 %v559
        %627 = vmatprep.subr.bf16.mxu0 %v558
        %628 = vmatpush2.bf16.msra.mxu0 %v557
        %629 = vmatprep.subr.bf16.mxu0 %v556
        %630 = vmatpush2.bf16.msra.mxu0 %v555
        %631 = vmatprep.subr.bf16.mxu0 %v554
        %632 = vmatpush2.bf16.msra.mxu0 %v553
        %633 = vmatprep.mubr.bf16.mxu0 %v434
        %634 = vmatmul.mubr.bf16.gmra.mxu0 %v433
        %v635 = vpop.f32.mrf.mxu0
        %v636 = vadd.f32 0.0, %v635
        %v637 = vpop.f32.mrf.mxu0
        %v638 = vadd.f32 0.0, %v637
        %v639 = vpop.f32.mrf.mxu0
        %v640 = vadd.f32 0.0, %v639
        %v641 = vpop.f32.mrf.mxu0
        %v642 = vadd.f32 0.0, %v641
        %643 = vmatprep.mubr.bf16.mxu0 %v436
        %644 = vmatmul.mubr.bf16.gmra.mxu0 %v435
        %v645 = vpop.f32.mrf.mxu0
        %v646 = vadd.f32 0.0, %v645
        %v647 = vpop.f32.mrf.mxu0
        %v648 = vadd.f32 0.0, %v647
        %v649 = vpop.f32.mrf.mxu0
        %v650 = vadd.f32 0.0, %v649
        %v651 = vpop.f32.mrf.mxu0
        %v652 = vadd.f32 0.0, %v651
        %653 = vdwg.mxu0
        %v654 = vadd.f32 %v377, %v636
        %v655 = vadd.f32 %v378, %v638
        %v656 = vadd.f32 %v379, %v640
        %v657 = vadd.f32 %v380, %v642
        %v658 = vadd.f32 %v381, %v646
        %v659 = vadd.f32 %v382, %v648
        %v660 = vadd.f32 %v383, %v650
        %v661 = vadd.f32 %v384, %v652
        %662 = vst [vmem:[#allocation2] sm:$0xff] %v654
        %663 = vst [vmem:[#allocation2 + $0x8] sm:$0xff] %v655
        %664 = vst [vmem:[#allocation2 + $0x10] sm:$0xff] %v656
        %665 = vst [vmem:[#allocation2 + $0x18] sm:$0xff] %v657
        %666 = vst [vmem:[#allocation2 + $0x20] sm:$0xff] %v658
        %667 = vst [vmem:[#allocation2 + $0x28] sm:$0xff] %v659
        %668 = vst [vmem:[#allocation2 + $0x30] sm:$0xff] %v660
        %669 = vst [vmem:[#allocation2 + $0x38] sm:$0xff] %v661
        %p670 = scmp.eq.s32.totalorder %s22, 4
        // Predicated region
        $region79: #{res_cnn_forward.26} parent=69 // pred_check
          %p671 = pneg %p670
        $region80: #{res_cnn_forward.26} parent=69 // pred_check_branch
          %673 = sbr.rel (%p671) target = $region82
        $region81: #{res_cnn_forward.26} parent=69 // pred_region
          %v674 = vld [vmem:[#allocation2] sm:$0xff]
          %v675 = vld [vmem:[#allocation2 + $0x8] sm:$0xff]
          %v676 = vld [vmem:[#allocation2 + $0x10] sm:$0xff]
          %v677 = vld [vmem:[#allocation2 + $0x18] sm:$0xff]
          %v678 = vld [vmem:[#allocation2 + $0x20] sm:$0xff]
          %v679 = vld [vmem:[#allocation2 + $0x28] sm:$0xff]
          %v680 = vld [vmem:[#allocation2 + $0x30] sm:$0xff]
          %v681 = vld [vmem:[#allocation2 + $0x38] sm:$0xff]
          %v682 = vld [vmem:[%s346] sm:$0x3]
          %v684 = vlaneseq
          %v685 = vshrl.u32 %v684, 7
          %v686 = vsub.s32 0, %v685
          %v687 = vrot.slane %v682, %v686
          %v688 = vlaneseq
          %v689 = vshrl.u32 %v688, 7
          %v690 = vsub.s32 1, %v689
          %v691 = vrot.slane %v682, %v690
          %v694 = vmul.f32 %v674, %v687
          %v695 = vmul.f32 %v675, %v691
          %v696 = vmul.f32 %v676, %v687
          %v697 = vmul.f32 %v677, %v691
          %v698 = vmul.f32 %v678, %v687
          %v699 = vmul.f32 %v679, %v691
          %v700 = vmul.f32 %v680, %v687
          %v701 = vmul.f32 %v681, %v691
          %v702 = vld [vmem:[%s351] sm:$0x3]
          %v704 = vlaneseq
          %v705 = vshrl.u32 %v704, 7
          %v706 = vsub.s32 0, %v705
          %v707 = vrot.slane %v702, %v706
          %v708 = vlaneseq
          %v709 = vshrl.u32 %v708, 7
          %v710 = vsub.s32 1, %v709
          %v711 = vrot.slane %v702, %v710
          %v714 = vadd.f32 %v694, %v707
          %v715 = vadd.f32 %v695, %v711
          %v716 = vadd.f32 %v696, %v707
          %v717 = vadd.f32 %v697, %v711
          %v718 = vadd.f32 %v698, %v707
          %v719 = vadd.f32 %v699, %v711
          %v720 = vadd.f32 %v700, %v707
          %v721 = vadd.f32 %v701, %v711
          %v722 = vmax.f32 %v714, 0.0
          %v723 = vmax.f32 %v715, 0.0
          %v724 = vmax.f32 %v716, 0.0
          %v725 = vmax.f32 %v717, 0.0
          %v726 = vmax.f32 %v718, 0.0
          %v727 = vmax.f32 %v719, 0.0
          %v728 = vmax.f32 %v720, 0.0
          %v729 = vmax.f32 %v721, 0.0
          %v730 = vpack.c.bf16 %v724, %v722
          %v731 = vpack.c.bf16 %v725, %v723
          %v732 = vpack.c.bf16 %v728, %v726
          %v733 = vpack.c.bf16 %v729, %v727
          %v738 = vunpack.c.l.b16 %v730
          %v739 = vunpack.c.l.b16 %v731
          %v740 = vunpack.c.h.b16 %v730
          %v741 = vunpack.c.h.b16 %v731
          %v742 = vunpack.c.l.b16 %v732
          %v743 = vunpack.c.l.b16 %v733
          %v744 = vunpack.c.h.b16 %v732
          %v745 = vunpack.c.h.b16 %v733
          %v746 = vpack.c.b16 %v739, %v738
          %v747 = vpack.c.b16 %v741, %v740
          %v748 = vpack.c.b16 %v743, %v742
          %v749 = vpack.c.b16 %v745, %v744
          %754 = vst [vmem:[%s362] sm:$0xff] %v746
          %755 = vst [vmem:[%s362 + $0x8] sm:$0xff] %v747
          %756 = vst [vmem:[%s362 + $0x10] sm:$0xff] %v748
          %757 = vst [vmem:[%s362 + $0x18] sm:$0xff] %v749
        $region82: #{res_cnn_forward.26} parent=69 // pred_fallthru
          _
        %s758 = smul.u32 4, %s20
        %s759 = smul.u32 2, %s21
        %p760 = scmp.lt.s32.totalorder %s758, 3
        %s761 = scalar_select %p760, %s758, 3
        %p762 = scmp.lt.s32.totalorder %s759, 1
        %s763 = scalar_select %p762, %s759, 1
        %s764 = smul.addr %s761, 2
        %s765 = sadd.s32 %s763, %s764
        %s766 = smul.addr %s765, 4
        %s767 = scalar_lea.vmem %s4, %s766
        // Predicated region
        $region83: #{res_cnn_forward.26} parent=69 // pred_check
          %p768 = pneg %p162
        $region84: #{res_cnn_forward.26} parent=69 // pred_check_branch
          %770 = sbr.rel (%p768) target = $region86
        $region85: #{res_cnn_forward.26} parent=69 // pred_region
          %s771 = smul.u32 4, %s20
          %s772 = smul.u32 2, %s21
        $region86: #{res_cnn_forward.26} parent=69 // pred_fallthru
          _
        // Predicated region
        $region87: #{res_cnn_forward.26} parent=69 // pred_check
          %p773 = pneg %p162
        $region88: #{res_cnn_forward.26} parent=69 // pred_check_branch
          %775 = sbr.rel (%p773) target = $region90
        $region89: #{res_cnn_forward.26} parent=69 // pred_region
          %s776 = smul.u32 4, %s20
          %s777 = smul.u32 2, %s21
          %p778 = scmp.lt.s32.totalorder %s776, 3
          %s779 = scalar_select %p778, %s776, 3
          %p780 = scmp.lt.s32.totalorder %s777, 1
          %s781 = scalar_select %p780, %s777, 1
          %s782 = smul.addr %s779, 2
          %s783 = sadd.s32 %s781, %s782
          %s784 = smul.addr %s783, 4
          %s785 = scalar_lea.vmem %s4, %s784
        $region90: #{res_cnn_forward.26} parent=69 // pred_fallthru
          _
      $region70: #{res_cnn_forward.26} parent=5 // pred_fallthru
        _
      %p786 = scmp.le.s32.totalorder 2, %s10
      // Predicated region
      $region91: #{res_cnn_forward.26} parent=5 // pred_check
        %p787 = pneg %p786
      $region92: #{res_cnn_forward.26} parent=5 // pred_check_branch
        %789 = sbr.rel (%p787) target = $region94
      $region93: #{res_cnn_forward.26} parent=5 // pred_region
        %s790 = ssub.s32 %s10, 2
      $region94: #{res_cnn_forward.26} parent=5 // pred_fallthru
        _
    $region6: #{res_cnn_forward.26} parent=1 // loop_footer
      %s14 = sadd.s32 1, %s10
    $region7: #{res_cnn_forward.26} parent=1 // loop_footer_branch
      %9 = sbr.rel target = $region3
    $region8: #{res_cnn_forward.26} parent=1 // loop_exit
      _

// kernel: tile.2
$region0: #{tile.2}
  #allocation0 [shape = 's32[1]{0}', space=sflag, size = 0x4, scoped, tag = 'scoped memory for tile.2']
  %s0 = inlined_call_operand.<no memory space> [shape: f32[], index: 0, kind: input, shape index: {}]
  %s1 = inlined_call_operand.vmem [shape: f32[1,512], index: 1, kind: output, shape index: {}]
  %v2 = vstv %s0
  %3 = vst [vmem:[%s1] sm:$0x1] %v2
  %s4 = scalar_lea.vmem %s1, 1
  %5 = vst [vmem:[%s4] sm:$0x1] %v2
  %s6 = scalar_lea.vmem %s1, 2
  %7 = vst [vmem:[%s6] sm:$0x1] %v2
  %s8 = scalar_lea.vmem %s1, 3
  %9 = vst [vmem:[%s8] sm:$0x1] %v2

// kernel: res_cnn_forward.27
$region0: #{res_cnn_forward.27}
  #allocation0 [shape = 'u32[]', space=smem, size = 0x4, offset = 0x4, fixed_abs, tag = 'smem constant byte address 0x4 - core index']
  #allocation1 [shape = 'u32[144,128]{1,0:T(1,128)}', space=vmem, size = 0x12000, scoped, tag = 'internal scratch']
  #allocation2 [shape = 'f32[32,256]{1,0:T(8,128)}', space=vmem, size = 0x8000, scoped, tag = 'scratch operand']
  %s0 = inlined_call_operand.hbm [shape: bf16[32,2304], index: 0, kind: input, shape index: {}]
  %s1 = inlined_call_operand.vmem [shape: bf16[2304,256], index: 1, kind: input, shape index: {}]
  %s2 = inlined_call_operand.vmem [shape: f32[1,256], index: 2, kind: input, shape index: {}]
  %s3 = inlined_call_operand.vmem [shape: f32[1,256], index: 3, kind: input, shape index: {}]
  %s4 = inlined_call_operand.vmem [shape: bf16[32,256], index: 4, kind: output, shape index: {}]
  %s5 = sld [smem:[#allocation0]]
  $region61: #{res_cnn_forward.27} parent=0
    _
  %s7 = ssub.s32 1, %s5
  %s8 = scalar_select 0, %s7, %s5
  $region1: #{res_cnn_forward.27} parent=0
    #allocation3 [shape = 'u8[32768]{0}', space=vmem, size = 0x8000, scoped, tag = 'input window, operand 0']
    #allocation4 [shape = 's32[2]{0}', space=sflag, size = 0x8, scoped, tag = 'scoped memory for res_cnn_forward.27']
    %9 = vsyncpa [#allocation4], 0
    %s10 = scalar_lea.sflag [#allocation4], 1
    %11 = vsyncpa %s10, 0
    loop: start=0, step=1, limit=11
    $region2: #{res_cnn_forward.27} parent=1 // loop_pre_header
      _
    $region3: #{res_cnn_forward.27} parent=1 // loop_header
      %s13 = sphi 0, %s17
      %p14 = scmp.ge.s32.totalorder %s13, 11
      %s20 = sphi 0, %s39
      %s21 = sphi 0, %s35
      %s22 = sphi 0, %s31
      %s23 = sphi 0, %s20
      %s24 = sphi 0, %s21
      %s25 = sphi 0, %s22
      %s26 = sphi 0, %s23
      %s27 = sphi 0, %s24
      %s28 = sphi 0, %s25
      %s44 = sphi 0, %s46
      %s47 = sphi 0, %s44
      %s48 = sphi 0, %s47
      %s64 = sphi 0, %s48
      %s72 = sphi 0, %s74
      %s75 = sphi 0, %s72
      %s76 = sphi 0, %s75
      %s92 = sphi 0, %s76
      %s98 = sphi 0, %s100
      %s101 = sphi 0, %s98
      %s102 = sphi 0, %s101
      %s118 = sphi 0, %s102
      %s124 = sphi 0, %s126
      %s127 = sphi 0, %s124
      %s128 = sphi 0, %s127
      %s144 = sphi 0, %s128
      %s152 = sphi 0, %s154
      %s155 = sphi 0, %s152
      %s156 = sphi 0, %s155
      %s172 = sphi 0, %s156
    $region4: #{res_cnn_forward.27} parent=1 // loop_header_branch
      %16 = sbr.rel (%p14) target = $region8
    $region5: #{res_cnn_forward.27} parent=1 // loop_body
      %s18 = ssub.s32 %s13, 1
      %s19 = ssub.s32 %s13, 2
      %s29 = sadd.s32 1, %s22
      %p30 = scmp.ge.s32.totalorder %s29, 9
      %s31 = scalar_select %p30, 0, %s29
      %s32 = sadd.s32 1, %s21
      %s33 = scalar_select %p30, %s32, %s21
      %p34 = scmp.ge.s32.totalorder %s33, 1
      %s35 = scalar_select %p34, 0, %s33
      %s36 = sadd.s32 1, %s20
      %s37 = scalar_select %p34, %s36, %s20
      %p38 = scmp.ge.s32.totalorder %s37, 1
      %s39 = scalar_select %p38, 0, %s37
      %s40 = ssub.s32 %s20, %s39
      %s41 = ssub.s32 %s22, %s31
      %s42 = sor.u32 %s40, %s41
      %p43 = scmp.eq.s32.totalorder %s42, 0
      %s45 = sadd.s32 %s44, 1
      %s46 = scalar_select %p43, %s44, %s45
      %p49 = pneg %p43
      %p50 = scmp.eq.s32.totalorder %s13, 8
      %p51 = por %p49, %p50
      %p52 = scmp.ne.s32.totalorder %s44, %s47
      %p53 = scmp.eq.s32.totalorder %s13, 0
      %p54 = por %p52, %p53
      %p55 = scmp.ne.s32.totalorder %s44, %s47
      %p56 = scmp.eq.s32.totalorder %s18, 8
      %p57 = por %p55, %p56
      %p58 = scmp.ne.s32.totalorder %s47, %s48
      %p59 = scmp.eq.s32.totalorder %s18, 0
      %p60 = por %p58, %p59
      %p61 = scmp.ne.s32.totalorder %s47, %s48
      %p62 = scmp.eq.s32.totalorder %s19, 8
      %p63 = por %p61, %p62
      %p65 = scmp.ne.s32.totalorder %s48, %s64
      %p66 = scmp.eq.s32.totalorder %s19, 0
      %p67 = por %p65, %p66
      %s68 = ssub.s32 %s22, %s31
      %s69 = ssub.s32 %s21, %s35
      %s70 = sor.u32 %s68, %s69
      %p71 = scmp.eq.s32.totalorder %s70, 0
      %s73 = sadd.s32 %s72, 1
      %s74 = scalar_select %p71, %s72, %s73
      %p77 = pneg %p71
      %p78 = scmp.eq.s32.totalorder %s13, 8
      %p79 = por %p77, %p78
      %p80 = scmp.ne.s32.totalorder %s72, %s75
      %p81 = scmp.eq.s32.totalorder %s13, 0
      %p82 = por %p80, %p81
      %p83 = scmp.ne.s32.totalorder %s72, %s75
      %p84 = scmp.eq.s32.totalorder %s18, 8
      %p85 = por %p83, %p84
      %p86 = scmp.ne.s32.totalorder %s75, %s76
      %p87 = scmp.eq.s32.totalorder %s18, 0
      %p88 = por %p86, %p87
      %p89 = scmp.ne.s32.totalorder %s75, %s76
      %p90 = scmp.eq.s32.totalorder %s19, 8
      %p91 = por %p89, %p90
      %p93 = scmp.ne.s32.totalorder %s76, %s92
      %p94 = scmp.eq.s32.totalorder %s19, 0
      %p95 = por %p93, %p94
      %s96 = ssub.s32 %s21, %s35
      %p97 = scmp.eq.s32.totalorder %s96, 0
      %s99 = sadd.s32 %s98, 1
      %s100 = scalar_select %p97, %s98, %s99
      %p103 = pneg %p97
      %p104 = scmp.eq.s32.totalorder %s13, 8
      %p105 = por %p103, %p104
      %p106 = scmp.ne.s32.totalorder %s98, %s101
      %p107 = scmp.eq.s32.totalorder %s13, 0
      %p108 = por %p106, %p107
      %p109 = scmp.ne.s32.totalorder %s98, %s101
      %p110 = scmp.eq.s32.totalorder %s18, 8
      %p111 = por %p109, %p110
      %p112 = scmp.ne.s32.totalorder %s101, %s102
      %p113 = scmp.eq.s32.totalorder %s18, 0
      %p114 = por %p112, %p113
      %p115 = scmp.ne.s32.totalorder %s101, %s102
      %p116 = scmp.eq.s32.totalorder %s19, 8
      %p117 = por %p115, %p116
      %p119 = scmp.ne.s32.totalorder %s102, %s118
      %p120 = scmp.eq.s32.totalorder %s19, 0
      %p121 = por %p119, %p120
      %s122 = ssub.s32 %s21, %s35
      %p123 = scmp.eq.s32.totalorder %s122, 0
      %s125 = sadd.s32 %s124, 1
      %s126 = scalar_select %p123, %s124, %s125
      %p129 = pneg %p123
      %p130 = scmp.eq.s32.totalorder %s13, 8
      %p131 = por %p129, %p130
      %p132 = scmp.ne.s32.totalorder %s124, %s127
      %p133 = scmp.eq.s32.totalorder %s13, 0
      %p134 = por %p132, %p133
      %p135 = scmp.ne.s32.totalorder %s124, %s127
      %p136 = scmp.eq.s32.totalorder %s18, 8
      %p137 = por %p135, %p136
      %p138 = scmp.ne.s32.totalorder %s127, %s128
      %p139 = scmp.eq.s32.totalorder %s18, 0
      %p140 = por %p138, %p139
      %p141 = scmp.ne.s32.totalorder %s127, %s128
      %p142 = scmp.eq.s32.totalorder %s19, 8
      %p143 = por %p141, %p142
      %p145 = scmp.ne.s32.totalorder %s128, %s144
      %p146 = scmp.eq.s32.totalorder %s19, 0
      %p147 = por %p145, %p146
      %s148 = ssub.s32 %s20, %s39
      %s149 = ssub.s32 %s21, %s35
      %s150 = sor.u32 %s148, %s149
      %p151 = scmp.eq.s32.totalorder %s150, 0
      %s153 = sadd.s32 %s152, 1
      %s154 = scalar_select %p151, %s152, %s153
      %p157 = pneg %p151
      %p158 = scmp.eq.s32.totalorder %s13, 8
      %p159 = por %p157, %p158
      %p160 = scmp.ne.s32.totalorder %s152, %s155
      %p161 = scmp.eq.s32.totalorder %s13, 0
      %p162 = por %p160, %p161
      %p163 = scmp.ne.s32.totalorder %s152, %s155
      %p164 = scmp.eq.s32.totalorder %s18, 8
      %p165 = por %p163, %p164
      %p166 = scmp.ne.s32.totalorder %s155, %s156
      %p167 = scmp.eq.s32.totalorder %s18, 0
      %p168 = por %p166, %p167
      %p169 = scmp.ne.s32.totalorder %s155, %s156
      %p170 = scmp.eq.s32.totalorder %s19, 8
      %p171 = por %p169, %p170
      %p173 = scmp.ne.s32.totalorder %s156, %s172
      %p174 = scmp.eq.s32.totalorder %s19, 0
      %p175 = por %p173, %p174
      %p176 = scmp.le.s32.totalorder 1, %s13
      %p177 = scmp.lt.s32.totalorder %s13, 10
      %p178 = pnand %p176, %p177
      %p179 = pneg %p178
      // Predicated region
      $region9: #{res_cnn_forward.27} parent=5 // pred_check
        _
      $region10: #{res_cnn_forward.27} parent=5 // pred_check_branch
        %181 = sbr.rel (%p178) target = $region12
      $region11: #{res_cnn_forward.27} parent=5 // pred_region
        %s182 = ssub.s32 %s13, 1
        // Predicated region
        $region13: #{res_cnn_forward.27} parent=11 // pred_check
          %p183 = pneg %p114
        $region14: #{res_cnn_forward.27} parent=11 // pred_check_branch
          %185 = sbr.rel (%p183) target = $region16
        $region15: #{res_cnn_forward.27} parent=11 // pred_region
          %s186 = smul.u32 2, %s24
          %p187 = scmp.lt.s32.totalorder %s186, 1
          %s188 = scalar_select %p187, %s186, 1
          %s189 = scalar_lea.vmem %s2, %s188
          %s190 = smul.u32 2, %s24
        $region16: #{res_cnn_forward.27} parent=11 // pred_fallthru
          _
        // Predicated region
        $region17: #{res_cnn_forward.27} parent=11 // pred_check
          %p191 = pneg %p140
        $region18: #{res_cnn_forward.27} parent=11 // pred_check_branch
          %193 = sbr.rel (%p191) target = $region20
        $region19: #{res_cnn_forward.27} parent=11 // pred_region
          %s194 = smul.u32 2, %s24
          %p195 = scmp.lt.s32.totalorder %s194, 1
          %s196 = scalar_select %p195, %s194, 1
          %s197 = scalar_lea.vmem %s3, %s196
          %s198 = smul.u32 2, %s24
        $region20: #{res_cnn_forward.27} parent=11 // pred_fallthru
          _
      $region12: #{res_cnn_forward.27} parent=5 // pred_fallthru
        _
      %p199 = scmp.lt.s32.totalorder %s13, 9
      // Predicated region
      $region21: #{res_cnn_forward.27} parent=5 // pred_check
        %p200 = pneg %p199
      $region22: #{res_cnn_forward.27} parent=5 // pred_check_branch
        %202 = sbr.rel (%p200) target = $region24
      $region23: #{res_cnn_forward.27} parent=5 // pred_region
        // Predicated region
        $region25: #{res_cnn_forward.27} parent=23 // pred_check
          %p203 = pneg %p54
        $region26: #{res_cnn_forward.27} parent=23 // pred_check_branch
          %205 = sbr.rel (%p203) target = $region28
        $region27: #{res_cnn_forward.27} parent=23 // pred_region
          %s206 = sand.u32 %s44, 1
          %s207 = scalar_lea.sflag [#allocation4], %s206
          %s208 = sand.u32 %s44, 1
          %s209 = smul.addr %s208, 32
          %s210 = scalar_lea.vmem [#allocation3], %s209
          %s211 = smul.u32 4, %s20
          %s212 = smul.u32 2, %s22
          %s214 = ssub.s32 512, 512
          %215 = vsyncadd %s207, %s214
          %s216 = smul.addr %s211, 18
          %s217 = sadd.s32 %s212, %s216
          %s218 = smul.addr %s217, 64
          %s219 = scalar_lea.hbm %s0, %s218
          %s220 = sshll.u32 %s210, 4
          %s221 = int_to_ptr.vmem [resolvable:$true] %s220
          %226 = dma.hbm_to_vmem [thread:$0]  %s219, 512, %s221, %s207, 1152, 128, 8
        $region28: #{res_cnn_forward.27} parent=23 // pred_fallthru
          _
        // Predicated region
        $region29: #{res_cnn_forward.27} parent=23 // pred_check
          %p227 = pneg %p82
        $region30: #{res_cnn_forward.27} parent=23 // pred_check_branch
          %229 = sbr.rel (%p227) target = $region32
        $region31: #{res_cnn_forward.27} parent=23 // pred_region
          %s230 = smul.u32 32, %s22
          %s231 = smul.u32 2, %s21
          %p232 = scmp.lt.s32.totalorder %s230, 287
          %s233 = scalar_select %p232, %s230, 287
          %p234 = scmp.lt.s32.totalorder %s231, 1
          %s235 = scalar_select %p234, %s231, 1
          %s236 = smul.addr %s233, 2
          %s237 = sadd.s32 %s235, %s236
          %s238 = smul.addr %s237, 4
          %s239 = scalar_lea.vmem %s1, %s238
          %s240 = smul.u32 32, %s22
          %s241 = smul.u32 2, %s21
        $region32: #{res_cnn_forward.27} parent=23 // pred_fallthru
          _
      $region24: #{res_cnn_forward.27} parent=5 // pred_fallthru
        _
      %p242 = scmp.le.s32.totalorder 1, %s13
      %p243 = scmp.lt.s32.totalorder %s13, 10
      %p244 = pnand %p242, %p243
      %p245 = pneg %p244
      // Predicated region
      $region33: #{res_cnn_forward.27} parent=5 // pred_check
        _
      $region34: #{res_cnn_forward.27} parent=5 // pred_check_branch
        %247 = sbr.rel (%p244) target = $region36
      $region35: #{res_cnn_forward.27} parent=5 // pred_region
        %s248 = ssub.s32 %s13, 1
        %s249 = sand.u32 %s47, 1
        %s250 = scalar_lea.sflag [#allocation4], %s249
        %s251 = sand.u32 %s47, 1
        %s252 = smul.addr %s251, 32
        %s253 = scalar_lea.vmem [#allocation3], %s252
        // Predicated region
        $region37: #{res_cnn_forward.27} parent=35 // pred_check
          %p254 = pneg %p60
        $region38: #{res_cnn_forward.27} parent=35 // pred_check_branch
          %256 = sbr.rel (%p254) target = $region40
        $region39: #{res_cnn_forward.27} parent=35 // pred_region
          %257 = dma.done %s250, 512
        $region40: #{res_cnn_forward.27} parent=35 // pred_fallthru
          _
        %s258 = sand.u32 %s47, 1
        %s259 = scalar_lea.sflag [#allocation4], %s258
        %s260 = sand.u32 %s47, 1
        %s261 = smul.addr %s260, 32
        %s262 = scalar_lea.vmem [#allocation3], %s261
        %p263 = pneg %p60
        %p264 = pneg %p57
        %s265 = smul.u32 32, %s25
        %s266 = smul.u32 2, %s24
        %p267 = scmp.lt.s32.totalorder %s265, 287
        %s268 = scalar_select %p267, %s265, 287
        %p269 = scmp.lt.s32.totalorder %s266, 1
        %s270 = scalar_select %p269, %s266, 1
        %s271 = smul.addr %s268, 2
        %s272 = sadd.s32 %s270, %s271
        %s273 = smul.addr %s272, 4
        %s274 = scalar_lea.vmem %s1, %s273
        %p275 = pneg %p88
        %p276 = pneg %p85
        %s277 = smul.u32 2, %s24
        %p278 = scmp.lt.s32.totalorder %s277, 1
        %s279 = scalar_select %p278, %s277, 1
        %s280 = scalar_lea.vmem %s2, %s279
        %p281 = pneg %p114
        %p282 = pneg %p111
        %s283 = smul.u32 2, %s24
        %p284 = scmp.lt.s32.totalorder %s283, 1
        %s285 = scalar_select %p284, %s283, 1
        %s286 = scalar_lea.vmem %s3, %s285
        %p287 = pneg %p140
        %p288 = pneg %p137
        %p289 = pneg %p168
        %p290 = pneg %p165
        %s291 = smul.u32 4, %s23
        %s292 = smul.u32 2, %s24
        %p293 = scmp.lt.s32.totalorder %s291, 3
        %s294 = scalar_select %p293, %s291, 3
        %p295 = scmp.lt.s32.totalorder %s292, 1
        %s296 = scalar_select %p295, %s292, 1
        %s297 = smul.addr %s294, 2
        %s298 = sadd.s32 %s296, %s297
        %s299 = smul.addr %s298, 4
        %s300 = scalar_lea.vmem %s4, %s299
        %s301 = smul.u32 4, %s23
        %s302 = smul.u32 2, %s25
        %s303 = smul.u32 32, %s25
        %s304 = smul.u32 2, %s24
        %p305 = scmp.lt.s32.totalorder %s303, 287
        %s306 = scalar_select %p305, %s303, 287
        %p307 = scmp.lt.s32.totalorder %s304, 1
        %s308 = scalar_select %p307, %s304, 1
        %s309 = smul.addr %s306, 2
        %s310 = sadd.s32 %s308, %s309
        %s311 = smul.addr %s310, 4
        %s312 = scalar_lea.vmem %s1, %s311
        %s313 = smul.u32 32, %s25
        %s314 = smul.u32 2, %s24
        %s315 = smul.u32 2, %s24
        %p316 = scmp.lt.s32.totalorder %s315, 1
        %s317 = scalar_select %p316, %s315, 1
        %s318 = scalar_lea.vmem %s2, %s317
        %s319 = smul.u32 2, %s24
        %s320 = smul.u32 2, %s24
        %p321 = scmp.lt.s32.totalorder %s320, 1
        %s322 = scalar_select %p321, %s320, 1
        %s323 = scalar_lea.vmem %s3, %s322
        %s324 = smul.u32 2, %s24
        %s325 = smul.u32 4, %s23
        %s326 = smul.u32 2, %s24
        %p327 = scmp.lt.s32.totalorder %s325, 3
        %s328 = scalar_select %p327, %s325, 3
        %p329 = scmp.lt.s32.totalorder %s326, 1
        %s330 = scalar_select %p329, %s326, 1
        %s331 = smul.addr %s328, 2
        %s332 = sadd.s32 %s330, %s331
        %s333 = smul.addr %s332, 4
        %s334 = scalar_lea.vmem %s4, %s333
        %s335 = smul.u32 4, %s23
        %s336 = smul.u32 2, %s24
        %p337 = scmp.eq.s32.totalorder %s25, 0
        // Predicated region
        $region41: #{res_cnn_forward.27} parent=35 // pred_check
          %p338 = pneg %p337
        $region42: #{res_cnn_forward.27} parent=35 // pred_check_branch
          %340 = sbr.rel (%p338) target = $region44
        $region43: #{res_cnn_forward.27} parent=35 // pred_region
          %341 = vst [vmem:[#allocation2] sm:$0xff] 0.0
          %342 = vst [vmem:[#allocation2 + $0x8] sm:$0xff] 0.0
          %343 = vst [vmem:[#allocation2 + $0x10] sm:$0xff] 0.0
          %344 = vst [vmem:[#allocation2 + $0x18] sm:$0xff] 0.0
          %345 = vst [vmem:[#allocation2 + $0x20] sm:$0xff] 0.0
          %346 = vst [vmem:[#allocation2 + $0x28] sm:$0xff] 0.0
          %347 = vst [vmem:[#allocation2 + $0x30] sm:$0xff] 0.0
          %348 = vst [vmem:[#allocation2 + $0x38] sm:$0xff] 0.0
        $region44: #{res_cnn_forward.27} parent=35 // pred_fallthru
          _
        %v349 = vld [vmem:[#allocation2] sm:$0xff]
        %v350 = vld [vmem:[#allocation2 + $0x8] sm:$0xff]
        %v351 = vld [vmem:[#allocation2 + $0x10] sm:$0xff]
        %v352 = vld [vmem:[#allocation2 + $0x18] sm:$0xff]
        %v353 = vld [vmem:[#allocation2 + $0x20] sm:$0xff]
        %v354 = vld [vmem:[#allocation2 + $0x28] sm:$0xff]
        %v355 = vld [vmem:[#allocation2 + $0x30] sm:$0xff]
        %v356 = vld [vmem:[#allocation2 + $0x38] sm:$0xff]
        %v357 = vld [vmem:[%s253] sm:$0xff]
        %v358 = vld [vmem:[%s253 + $0x8] sm:$0xff]
        %v359 = vld [vmem:[%s253 + $0x10] sm:$0xff]
        %v360 = vld [vmem:[%s253 + $0x18] sm:$0xff]
        %v361 = vld [vmem:[%s312] sm:$0xff]
        %v362 = vld [vmem:[%s312 + $0x8] sm:$0xff]
        %v363 = vld [vmem:[%s312 + $0x10] sm:$0xff]
        %v364 = vld [vmem:[%s312 + $0x18] sm:$0xff]
        %v365 = vld [vmem:[%s312 + $0x20] sm:$0xff]
        %v366 = vld [vmem:[%s312 + $0x28] sm:$0xff]
        %v367 = vld [vmem:[%s312 + $0x30] sm:$0xff]
        %v368 = vld [vmem:[%s312 + $0x38] sm:$0xff]
        %v369 = vld [vmem:[%s312 + $0x40] sm:$0xff]
        %v370 = vld [vmem:[%s312 + $0x48] sm:$0xff]
        %v371 = vld [vmem:[%s312 + $0x50] sm:$0xff]
        %v372 = vld [vmem:[%s312 + $0x58] sm:$0xff]
        %v373 = vld [vmem:[%s312 + $0x60] sm:$0xff]
        %v374 = vld [vmem:[%s312 + $0x68] sm:$0xff]
        %v375 = vld [vmem:[%s312 + $0x70] sm:$0xff]
        %v376 = vld [vmem:[%s312 + $0x78] sm:$0xff]
        %v377 = vld [vmem:[%s312 + $0x80] sm:$0xff]
        %v378 = vld [vmem:[%s312 + $0x88] sm:$0xff]
        %v379 = vld [vmem:[%s312 + $0x90] sm:$0xff]
        %v380 = vld [vmem:[%s312 + $0x98] sm:$0xff]
        %v381 = vld [vmem:[%s312 + $0xa0] sm:$0xff]
        %v382 = vld [vmem:[%s312 + $0xa8] sm:$0xff]
        %v383 = vld [vmem:[%s312 + $0xb0] sm:$0xff]
        %v384 = vld [vmem:[%s312 + $0xb8] sm:$0xff]
        %v385 = vld [vmem:[%s312 + $0xc0] sm:$0xff]
        %v386 = vld [vmem:[%s312 + $0xc8] sm:$0xff]
        %v387 = vld [vmem:[%s312 + $0xd0] sm:$0xff]
        %v388 = vld [vmem:[%s312 + $0xd8] sm:$0xff]
        %v389 = vld [vmem:[%s312 + $0xe0] sm:$0xff]
        %v390 = vld [vmem:[%s312 + $0xe8] sm:$0xff]
        %v391 = vld [vmem:[%s312 + $0xf0] sm:$0xff]
        %v392 = vld [vmem:[%s312 + $0xf8] sm:$0xff]
        %v397 = vunpack.c.l.b16 %v357
        %v398 = vunpack.c.h.b16 %v357
        %v399 = vunpack.c.l.b16 %v358
        %v400 = vunpack.c.h.b16 %v358
        %v401 = vunpack.c.l.b16 %v359
        %v402 = vunpack.c.h.b16 %v359
        %v403 = vunpack.c.l.b16 %v360
        %v404 = vunpack.c.h.b16 %v360
        %v405 = vpack.c.b16 %v399, %v397
        %v406 = vpack.c.b16 %v400, %v398
        %v407 = vpack.c.b16 %v403, %v401
        %v408 = vpack.c.b16 %v404, %v402
        %v445 = vunpack.c.l.b16 %v361
        %v446 = vunpack.c.h.b16 %v361
        %v447 = vunpack.c.l.b16 %v362
        %v448 = vunpack.c.h.b16 %v362
        %v449 = vunpack.c.l.b16 %v363
        %v450 = vunpack.c.h.b16 %v363
        %v451 = vunpack.c.l.b16 %v364
        %v452 = vunpack.c.h.b16 %v364
        %v453 = vunpack.c.l.b16 %v365
        %v454 = vunpack.c.h.b16 %v365
        %v455 = vunpack.c.l.b16 %v366
        %v456 = vunpack.c.h.b16 %v366
        %v457 = vunpack.c.l.b16 %v367
        %v458 = vunpack.c.h.b16 %v367
        %v459 = vunpack.c.l.b16 %v368
        %v460 = vunpack.c.h.b16 %v368
        %v461 = vunpack.c.l.b16 %v369
        %v462 = vunpack.c.h.b16 %v369
        %v463 = vunpack.c.l.b16 %v370
        %v464 = vunpack.c.h.b16 %v370
        %v465 = vunpack.c.l.b16 %v371
        %v466 = vunpack.c.h.b16 %v371
        %v467 = vunpack.c.l.b16 %v372
        %v468 = vunpack.c.h.b16 %v372
        %v469 = vunpack.c.l.b16 %v373
        %v470 = vunpack.c.h.b16 %v373
        %v471 = vunpack.c.l.b16 %v374
        %v472 = vunpack.c.h.b16 %v374
        %v473 = vunpack.c.l.b16 %v375
        %v474 = vunpack.c.h.b16 %v375
        %v475 = vunpack.c.l.b16 %v376
        %v476 = vunpack.c.h.b16 %v376
        %v477 = vunpack.c.l.b16 %v377
        %v478 = vunpack.c.h.b16 %v377
        %v479 = vunpack.c.l.b16 %v378
        %v480 = vunpack.c.h.b16 %v378
        %v481 = vunpack.c.l.b16 %v379
        %v482 = vunpack.c.h.b16 %v379
        %v483 = vunpack.c.l.b16 %v380
        %v484 = vunpack.c.h.b16 %v380
        %v485 = vunpack.c.l.b16 %v381
        %v486 = vunpack.c.h.b16 %v381
        %v487 = vunpack.c.l.b16 %v382
        %v488 = vunpack.c.h.b16 %v382
        %v489 = vunpack.c.l.b16 %v383
        %v490 = vunpack.c.h.b16 %v383
        %v491 = vunpack.c.l.b16 %v384
        %v492 = vunpack.c.h.b16 %v384
        %v493 = vunpack.c.l.b16 %v385
        %v494 = vunpack.c.h.b16 %v385
        %v495 = vunpack.c.l.b16 %v386
        %v496 = vunpack.c.h.b16 %v386
        %v497 = vunpack.c.l.b16 %v387
        %v498 = vunpack.c.h.b16 %v387
        %v499 = vunpack.c.l.b16 %v388
        %v500 = vunpack.c.h.b16 %v388
        %v501 = vunpack.c.l.b16 %v389
        %v502 = vunpack.c.h.b16 %v389
        %v503 = vunpack.c.l.b16 %v390
        %v504 = vunpack.c.h.b16 %v390
        %v505 = vunpack.c.l.b16 %v391
        %v506 = vunpack.c.h.b16 %v391
        %v507 = vunpack.c.l.b16 %v392
        %v508 = vunpack.c.h.b16 %v392
        %v509 = vpack.c.b16 %v447, %v445
        %v510 = vpack.c.b16 %v448, %v446
        %v511 = vpack.c.b16 %v451, %v449
        %v512 = vpack.c.b16 %v452, %v450
        %v513 = vpack.c.b16 %v455, %v453
        %v514 = vpack.c.b16 %v456, %v454
        %v515 = vpack.c.b16 %v459, %v457
        %v516 = vpack.c.b16 %v460, %v458
        %v517 = vpack.c.b16 %v463, %v461
        %v518 = vpack.c.b16 %v464, %v462
        %v519 = vpack.c.b16 %v467, %v465
        %v520 = vpack.c.b16 %v468, %v466
        %v521 = vpack.c.b16 %v471, %v469
        %v522 = vpack.c.b16 %v472, %v470
        %v523 = vpack.c.b16 %v475, %v473
        %v524 = vpack.c.b16 %v476, %v474
        %v525 = vpack.c.b16 %v479, %v477
        %v526 = vpack.c.b16 %v480, %v478
        %v527 = vpack.c.b16 %v483, %v481
        %v528 = vpack.c.b16 %v484, %v482
        %v529 = vpack.c.b16 %v487, %v485
        %v530 = vpack.c.b16 %v488, %v486
        %v531 = vpack.c.b16 %v491, %v489
        %v532 = vpack.c.b16 %v492, %v490
        %v533 = vpack.c.b16 %v495, %v493
        %v534 = vpack.c.b16 %v496, %v494
        %v535 = vpack.c.b16 %v499, %v497
        %v536 = vpack.c.b16 %v500, %v498
        %v537 = vpack.c.b16 %v503, %v501
        %v538 = vpack.c.b16 %v504, %v502
        %v539 = vpack.c.b16 %v507, %v505
        %v540 = vpack.c.b16 %v508, %v506
        %573 = vmatprep.subr.bf16.mxu0 %v524
        %574 = vmatpush1.bf16.msra.mxu0 %v523
        %575 = vmatprep.subr.bf16.mxu0 %v522
        %576 = vmatpush1.bf16.msra.mxu0 %v521
        %577 = vmatprep.subr.bf16.mxu0 %v520
        %578 = vmatpush1.bf16.msra.mxu0 %v519
        %579 = vmatprep.subr.bf16.mxu0 %v518
        %580 = vmatpush1.bf16.msra.mxu0 %v517
        %581 = vmatprep.subr.bf16.mxu0 %v516
        %582 = vmatpush1.bf16.msra.mxu0 %v515
        %583 = vmatprep.subr.bf16.mxu0 %v514
        %584 = vmatpush1.bf16.msra.mxu0 %v513
        %585 = vmatprep.subr.bf16.mxu0 %v512
        %586 = vmatpush1.bf16.msra.mxu0 %v511
        %587 = vmatprep.subr.bf16.mxu0 %v510
        %588 = vmatpush1.bf16.msra.mxu0 %v509
        %589 = vmatprep.subr.bf16.mxu0 %v540
        %590 = vmatpush2.bf16.msra.mxu0 %v539
        %591 = vmatprep.subr.bf16.mxu0 %v538
        %592 = vmatpush2.bf16.msra.mxu0 %v537
        %593 = vmatprep.subr.bf16.mxu0 %v536
        %594 = vmatpush2.bf16.msra.mxu0 %v535
        %595 = vmatprep.subr.bf16.mxu0 %v534
        %596 = vmatpush2.bf16.msra.mxu0 %v533
        %597 = vmatprep.subr.bf16.mxu0 %v532
        %598 = vmatpush2.bf16.msra.mxu0 %v531
        %599 = vmatprep.subr.bf16.mxu0 %v530
        %600 = vmatpush2.bf16.msra.mxu0 %v529
        %601 = vmatprep.subr.bf16.mxu0 %v528
        %602 = vmatpush2.bf16.msra.mxu0 %v527
        %603 = vmatprep.subr.bf16.mxu0 %v526
        %604 = vmatpush2.bf16.msra.mxu0 %v525
        %605 = vmatprep.mubr.bf16.mxu0 %v406
        %606 = vmatmul.mubr.bf16.gmra.mxu0 %v405
        %v607 = vpop.f32.mrf.mxu0
        %v608 = vadd.f32 0.0, %v607
        %v609 = vpop.f32.mrf.mxu0
        %v610 = vadd.f32 0.0, %v609
        %v611 = vpop.f32.mrf.mxu0
        %v612 = vadd.f32 0.0, %v611
        %v613 = vpop.f32.mrf.mxu0
        %v614 = vadd.f32 0.0, %v613
        %615 = vmatprep.mubr.bf16.mxu0 %v408
        %616 = vmatmul.mubr.bf16.gmra.mxu0 %v407
        %v617 = vpop.f32.mrf.mxu0
        %v618 = vadd.f32 0.0, %v617
        %v619 = vpop.f32.mrf.mxu0
        %v620 = vadd.f32 0.0, %v619
        %v621 = vpop.f32.mrf.mxu0
        %v622 = vadd.f32 0.0, %v621
        %v623 = vpop.f32.mrf.mxu0
        %v624 = vadd.f32 0.0, %v623
        %625 = vdwg.mxu0
        %v626 = vadd.f32 %v349, %v608
        %v627 = vadd.f32 %v350, %v610
        %v628 = vadd.f32 %v351, %v612
        %v629 = vadd.f32 %v352, %v614
        %v630 = vadd.f32 %v353, %v618
        %v631 = vadd.f32 %v354, %v620
        %v632 = vadd.f32 %v355, %v622
        %v633 = vadd.f32 %v356, %v624
        %634 = vst [vmem:[#allocation2] sm:$0xff] %v626
        %635 = vst [vmem:[#allocation2 + $0x8] sm:$0xff] %v627
        %636 = vst [vmem:[#allocation2 + $0x10] sm:$0xff] %v628
        %637 = vst [vmem:[#allocation2 + $0x18] sm:$0xff] %v629
        %638 = vst [vmem:[#allocation2 + $0x20] sm:$0xff] %v630
        %639 = vst [vmem:[#allocation2 + $0x28] sm:$0xff] %v631
        %640 = vst [vmem:[#allocation2 + $0x30] sm:$0xff] %v632
        %641 = vst [vmem:[#allocation2 + $0x38] sm:$0xff] %v633
        %p642 = scmp.eq.s32.totalorder %s25, 8
        // Predicated region
        $region45: #{res_cnn_forward.27} parent=35 // pred_check
          %p643 = pneg %p642
        $region46: #{res_cnn_forward.27} parent=35 // pred_check_branch
          %645 = sbr.rel (%p643) target = $region48
        $region47: #{res_cnn_forward.27} parent=35 // pred_region
          %v646 = vld [vmem:[#allocation2] sm:$0xff]
          %v647 = vld [vmem:[#allocation2 + $0x8] sm:$0xff]
          %v648 = vld [vmem:[#allocation2 + $0x10] sm:$0xff]
          %v649 = vld [vmem:[#allocation2 + $0x18] sm:$0xff]
          %v650 = vld [vmem:[#allocation2 + $0x20] sm:$0xff]
          %v651 = vld [vmem:[#allocation2 + $0x28] sm:$0xff]
          %v652 = vld [vmem:[#allocation2 + $0x30] sm:$0xff]
          %v653 = vld [vmem:[#allocation2 + $0x38] sm:$0xff]
          %v654 = vld [vmem:[%s318] sm:$0x3]
          %v656 = vlaneseq
          %v657 = vshrl.u32 %v656, 7
          %v658 = vsub.s32 0, %v657
          %v659 = vrot.slane %v654, %v658
          %v660 = vlaneseq
          %v661 = vshrl.u32 %v660, 7
          %v662 = vsub.s32 1, %v661
          %v663 = vrot.slane %v654, %v662
          %v666 = vmul.f32 %v646, %v659
          %v667 = vmul.f32 %v647, %v663
          %v668 = vmul.f32 %v648, %v659
          %v669 = vmul.f32 %v649, %v663
          %v670 = vmul.f32 %v650, %v659
          %v671 = vmul.f32 %v651, %v663
          %v672 = vmul.f32 %v652, %v659
          %v673 = vmul.f32 %v653, %v663
          %v674 = vld [vmem:[%s323] sm:$0x3]
          %v676 = vlaneseq
          %v677 = vshrl.u32 %v676, 7
          %v678 = vsub.s32 0, %v677
          %v679 = vrot.slane %v674, %v678
          %v680 = vlaneseq
          %v681 = vshrl.u32 %v680, 7
          %v682 = vsub.s32 1, %v681
          %v683 = vrot.slane %v674, %v682
          %v686 = vadd.f32 %v666, %v679
          %v687 = vadd.f32 %v667, %v683
          %v688 = vadd.f32 %v668, %v679
          %v689 = vadd.f32 %v669, %v683
          %v690 = vadd.f32 %v670, %v679
          %v691 = vadd.f32 %v671, %v683
          %v692 = vadd.f32 %v672, %v679
          %v693 = vadd.f32 %v673, %v683
          %v694 = vmax.f32 %v686, 0.0
          %v695 = vmax.f32 %v687, 0.0
          %v696 = vmax.f32 %v688, 0.0
          %v697 = vmax.f32 %v689, 0.0
          %v698 = vmax.f32 %v690, 0.0
          %v699 = vmax.f32 %v691, 0.0
          %v700 = vmax.f32 %v692, 0.0
          %v701 = vmax.f32 %v693, 0.0
          %v702 = vpack.c.bf16 %v696, %v694
          %v703 = vpack.c.bf16 %v697, %v695
          %v704 = vpack.c.bf16 %v700, %v698
          %v705 = vpack.c.bf16 %v701, %v699
          %v710 = vunpack.c.l.b16 %v702
          %v711 = vunpack.c.l.b16 %v703
          %v712 = vunpack.c.h.b16 %v702
          %v713 = vunpack.c.h.b16 %v703
          %v714 = vunpack.c.l.b16 %v704
          %v715 = vunpack.c.l.b16 %v705
          %v716 = vunpack.c.h.b16 %v704
          %v717 = vunpack.c.h.b16 %v705
          %v718 = vpack.c.b16 %v711, %v710
          %v719 = vpack.c.b16 %v713, %v712
          %v720 = vpack.c.b16 %v715, %v714
          %v721 = vpack.c.b16 %v717, %v716
          %726 = vst [vmem:[%s334] sm:$0xff] %v718
          %727 = vst [vmem:[%s334 + $0x8] sm:$0xff] %v719
          %728 = vst [vmem:[%s334 + $0x10] sm:$0xff] %v720
          %729 = vst [vmem:[%s334 + $0x18] sm:$0xff] %v721
        $region48: #{res_cnn_forward.27} parent=35 // pred_fallthru
          _
        %s730 = smul.u32 4, %s23
        %s731 = smul.u32 2, %s24
        %p732 = scmp.lt.s32.totalorder %s730, 3
        %s733 = scalar_select %p732, %s730, 3
        %p734 = scmp.lt.s32.totalorder %s731, 1
        %s735 = scalar_select %p734, %s731, 1
        %s736 = smul.addr %s733, 2
        %s737 = sadd.s32 %s735, %s736
        %s738 = smul.addr %s737, 4
        %s739 = scalar_lea.vmem %s4, %s738
        // Predicated region
        $region49: #{res_cnn_forward.27} parent=35 // pred_check
          %p740 = pneg %p165
        $region50: #{res_cnn_forward.27} parent=35 // pred_check_branch
          %742 = sbr.rel (%p740) target = $region52
        $region51: #{res_cnn_forward.27} parent=35 // pred_region
          %s743 = smul.u32 4, %s23
          %s744 = smul.u32 2, %s24
        $region52: #{res_cnn_forward.27} parent=35 // pred_fallthru
          _
        // Predicated region
        $region53: #{res_cnn_forward.27} parent=35 // pred_check
          %p745 = pneg %p165
        $region54: #{res_cnn_forward.27} parent=35 // pred_check_branch
          %747 = sbr.rel (%p745) target = $region56
        $region55: #{res_cnn_forward.27} parent=35 // pred_region
          %s748 = smul.u32 4, %s23
          %s749 = smul.u32 2, %s24
          %p750 = scmp.lt.s32.totalorder %s748, 3
          %s751 = scalar_select %p750, %s748, 3
          %p752 = scmp.lt.s32.totalorder %s749, 1
          %s753 = scalar_select %p752, %s749, 1
          %s754 = smul.addr %s751, 2
          %s755 = sadd.s32 %s753, %s754
          %s756 = smul.addr %s755, 4
          %s757 = scalar_lea.vmem %s4, %s756
        $region56: #{res_cnn_forward.27} parent=35 // pred_fallthru
          _
      $region36: #{res_cnn_forward.27} parent=5 // pred_fallthru
        _
      %p758 = scmp.le.s32.totalorder 2, %s13
      // Predicated region
      $region57: #{res_cnn_forward.27} parent=5 // pred_check
        %p759 = pneg %p758
      $region58: #{res_cnn_forward.27} parent=5 // pred_check_branch
        %761 = sbr.rel (%p759) target = $region60
      $region59: #{res_cnn_forward.27} parent=5 // pred_region
        %s762 = ssub.s32 %s13, 2
      $region60: #{res_cnn_forward.27} parent=5 // pred_fallthru
        _
    $region6: #{res_cnn_forward.27} parent=1 // loop_footer
      %s17 = sadd.s32 1, %s13
    $region7: #{res_cnn_forward.27} parent=1 // loop_footer_branch
      %12 = sbr.rel target = $region3
    $region8: #{res_cnn_forward.27} parent=1 // loop_exit
      _
    %763 = vsyncpa [#allocation4], 1
    %s764 = scalar_lea.sflag [#allocation4], 1
    %765 = vsyncpa %s764, 1

// kernel: res_cnn_forward.28
$region0: #{res_cnn_forward.28}
  #allocation0 [shape = 'u32[]', space=smem, size = 0x4, offset = 0x4, fixed_abs, tag = 'smem constant byte address 0x4 - core index']
  #allocation1 [shape = 'u32[144,128]{1,0:T(1,128)}', space=vmem, size = 0x12000, scoped, tag = 'internal scratch']
  #allocation2 [shape = 'f32[32,256]{1,0:T(8,128)}', space=vmem, size = 0x8000, scoped, tag = 'scratch operand']
  %s0 = inlined_call_operand.hbm [shape: bf16[32,2304], index: 0, kind: input, shape index: {}]
  %s1 = inlined_call_operand.vmem [shape: bf16[2304,256], index: 1, kind: input, shape index: {}]
  %s2 = inlined_call_operand.vmem [shape: f32[1,256], index: 2, kind: input, shape index: {}]
  %s3 = inlined_call_operand.vmem [shape: f32[1,256], index: 3, kind: input, shape index: {}]
  %s4 = inlined_call_operand.vmem [shape: bf16[32,256], index: 4, kind: input, shape index: {}]
  %s5 = inlined_call_operand.vmem [shape: bf16[32,256], index: 5, kind: output, shape index: {}]
  %s6 = sld [smem:[#allocation0]]
  $region65: #{res_cnn_forward.28} parent=0
    _
  %s8 = ssub.s32 1, %s6
  %s9 = scalar_select 0, %s8, %s6
  $region1: #{res_cnn_forward.28} parent=0
    #allocation3 [shape = 'u8[32768]{0}', space=vmem, size = 0x8000, scoped, tag = 'input window, operand 0']
    #allocation4 [shape = 's32[2]{0}', space=sflag, size = 0x8, scoped, tag = 'scoped memory for res_cnn_forward.28']
    %10 = vsyncpa [#allocation4], 0
    %s11 = scalar_lea.sflag [#allocation4], 1
    %12 = vsyncpa %s11, 0
    loop: start=0, step=1, limit=11
    $region2: #{res_cnn_forward.28} parent=1 // loop_pre_header
      _
    $region3: #{res_cnn_forward.28} parent=1 // loop_header
      %s14 = sphi 0, %s18
      %p15 = scmp.ge.s32.totalorder %s14, 11
      %s21 = sphi 0, %s40
      %s22 = sphi 0, %s36
      %s23 = sphi 0, %s32
      %s24 = sphi 0, %s21
      %s25 = sphi 0, %s22
      %s26 = sphi 0, %s23
      %s27 = sphi 0, %s24
      %s28 = sphi 0, %s25
      %s29 = sphi 0, %s26
      %s45 = sphi 0, %s47
      %s48 = sphi 0, %s45
      %s49 = sphi 0, %s48
      %s65 = sphi 0, %s49
      %s73 = sphi 0, %s75
      %s76 = sphi 0, %s73
      %s77 = sphi 0, %s76
      %s93 = sphi 0, %s77
      %s99 = sphi 0, %s101
      %s102 = sphi 0, %s99
      %s103 = sphi 0, %s102
      %s119 = sphi 0, %s103
      %s125 = sphi 0, %s127
      %s128 = sphi 0, %s125
      %s129 = sphi 0, %s128
      %s145 = sphi 0, %s129
      %s153 = sphi 0, %s155
      %s156 = sphi 0, %s153
      %s157 = sphi 0, %s156
      %s173 = sphi 0, %s157
      %s181 = sphi 0, %s183
      %s184 = sphi 0, %s181
      %s185 = sphi 0, %s184
      %s201 = sphi 0, %s185
    $region4: #{res_cnn_forward.28} parent=1 // loop_header_branch
      %17 = sbr.rel (%p15) target = $region8
    $region5: #{res_cnn_forward.28} parent=1 // loop_body
      %s19 = ssub.s32 %s14, 1
      %s20 = ssub.s32 %s14, 2
      %s30 = sadd.s32 1, %s23
      %p31 = scmp.ge.s32.totalorder %s30, 9
      %s32 = scalar_select %p31, 0, %s30
      %s33 = sadd.s32 1, %s22
      %s34 = scalar_select %p31, %s33, %s22
      %p35 = scmp.ge.s32.totalorder %s34, 1
      %s36 = scalar_select %p35, 0, %s34
      %s37 = sadd.s32 1, %s21
      %s38 = scalar_select %p35, %s37, %s21
      %p39 = scmp.ge.s32.totalorder %s38, 1
      %s40 = scalar_select %p39, 0, %s38
      %s41 = ssub.s32 %s21, %s40
      %s42 = ssub.s32 %s23, %s32
      %s43 = sor.u32 %s41, %s42
      %p44 = scmp.eq.s32.totalorder %s43, 0
      %s46 = sadd.s32 %s45, 1
      %s47 = scalar_select %p44, %s45, %s46
      %p50 = pneg %p44
      %p51 = scmp.eq.s32.totalorder %s14, 8
      %p52 = por %p50, %p51
      %p53 = scmp.ne.s32.totalorder %s45, %s48
      %p54 = scmp.eq.s32.totalorder %s14, 0
      %p55 = por %p53, %p54
      %p56 = scmp.ne.s32.totalorder %s45, %s48
      %p57 = scmp.eq.s32.totalorder %s19, 8
      %p58 = por %p56, %p57
      %p59 = scmp.ne.s32.totalorder %s48, %s49
      %p60 = scmp.eq.s32.totalorder %s19, 0
      %p61 = por %p59, %p60
      %p62 = scmp.ne.s32.totalorder %s48, %s49
      %p63 = scmp.eq.s32.totalorder %s20, 8
      %p64 = por %p62, %p63
      %p66 = scmp.ne.s32.totalorder %s49, %s65
      %p67 = scmp.eq.s32.totalorder %s20, 0
      %p68 = por %p66, %p67
      %s69 = ssub.s32 %s23, %s32
      %s70 = ssub.s32 %s22, %s36
      %s71 = sor.u32 %s69, %s70
      %p72 = scmp.eq.s32.totalorder %s71, 0
      %s74 = sadd.s32 %s73, 1
      %s75 = scalar_select %p72, %s73, %s74
      %p78 = pneg %p72
      %p79 = scmp.eq.s32.totalorder %s14, 8
      %p80 = por %p78, %p79
      %p81 = scmp.ne.s32.totalorder %s73, %s76
      %p82 = scmp.eq.s32.totalorder %s14, 0
      %p83 = por %p81, %p82
      %p84 = scmp.ne.s32.totalorder %s73, %s76
      %p85 = scmp.eq.s32.totalorder %s19, 8
      %p86 = por %p84, %p85
      %p87 = scmp.ne.s32.totalorder %s76, %s77
      %p88 = scmp.eq.s32.totalorder %s19, 0
      %p89 = por %p87, %p88
      %p90 = scmp.ne.s32.totalorder %s76, %s77
      %p91 = scmp.eq.s32.totalorder %s20, 8
      %p92 = por %p90, %p91
      %p94 = scmp.ne.s32.totalorder %s77, %s93
      %p95 = scmp.eq.s32.totalorder %s20, 0
      %p96 = por %p94, %p95
      %s97 = ssub.s32 %s22, %s36
      %p98 = scmp.eq.s32.totalorder %s97, 0
      %s100 = sadd.s32 %s99, 1
      %s101 = scalar_select %p98, %s99, %s100
      %p104 = pneg %p98
      %p105 = scmp.eq.s32.totalorder %s14, 8
      %p106 = por %p104, %p105
      %p107 = scmp.ne.s32.totalorder %s99, %s102
      %p108 = scmp.eq.s32.totalorder %s14, 0
      %p109 = por %p107, %p108
      %p110 = scmp.ne.s32.totalorder %s99, %s102
      %p111 = scmp.eq.s32.totalorder %s19, 8
      %p112 = por %p110, %p111
      %p113 = scmp.ne.s32.totalorder %s102, %s103
      %p114 = scmp.eq.s32.totalorder %s19, 0
      %p115 = por %p113, %p114
      %p116 = scmp.ne.s32.totalorder %s102, %s103
      %p117 = scmp.eq.s32.totalorder %s20, 8
      %p118 = por %p116, %p117
      %p120 = scmp.ne.s32.totalorder %s103, %s119
      %p121 = scmp.eq.s32.totalorder %s20, 0
      %p122 = por %p120, %p121
      %s123 = ssub.s32 %s22, %s36
      %p124 = scmp.eq.s32.totalorder %s123, 0
      %s126 = sadd.s32 %s125, 1
      %s127 = scalar_select %p124, %s125, %s126
      %p130 = pneg %p124
      %p131 = scmp.eq.s32.totalorder %s14, 8
      %p132 = por %p130, %p131
      %p133 = scmp.ne.s32.totalorder %s125, %s128
      %p134 = scmp.eq.s32.totalorder %s14, 0
      %p135 = por %p133, %p134
      %p136 = scmp.ne.s32.totalorder %s125, %s128
      %p137 = scmp.eq.s32.totalorder %s19, 8
      %p138 = por %p136, %p137
      %p139 = scmp.ne.s32.totalorder %s128, %s129
      %p140 = scmp.eq.s32.totalorder %s19, 0
      %p141 = por %p139, %p140
      %p142 = scmp.ne.s32.totalorder %s128, %s129
      %p143 = scmp.eq.s32.totalorder %s20, 8
      %p144 = por %p142, %p143
      %p146 = scmp.ne.s32.totalorder %s129, %s145
      %p147 = scmp.eq.s32.totalorder %s20, 0
      %p148 = por %p146, %p147
      %s149 = ssub.s32 %s21, %s40
      %s150 = ssub.s32 %s22, %s36
      %s151 = sor.u32 %s149, %s150
      %p152 = scmp.eq.s32.totalorder %s151, 0
      %s154 = sadd.s32 %s153, 1
      %s155 = scalar_select %p152, %s153, %s154
      %p158 = pneg %p152
      %p159 = scmp.eq.s32.totalorder %s14, 8
      %p160 = por %p158, %p159
      %p161 = scmp.ne.s32.totalorder %s153, %s156
      %p162 = scmp.eq.s32.totalorder %s14, 0
      %p163 = por %p161, %p162
      %p164 = scmp.ne.s32.totalorder %s153, %s156
      %p165 = scmp.eq.s32.totalorder %s19, 8
      %p166 = por %p164, %p165
      %p167 = scmp.ne.s32.totalorder %s156, %s157
      %p168 = scmp.eq.s32.totalorder %s19, 0
      %p169 = por %p167, %p168
      %p170 = scmp.ne.s32.totalorder %s156, %s157
      %p171 = scmp.eq.s32.totalorder %s20, 8
      %p172 = por %p170, %p171
      %p174 = scmp.ne.s32.totalorder %s157, %s173
      %p175 = scmp.eq.s32.totalorder %s20, 0
      %p176 = por %p174, %p175
      %s177 = ssub.s32 %s21, %s40
      %s178 = ssub.s32 %s22, %s36
      %s179 = sor.u32 %s177, %s178
      %p180 = scmp.eq.s32.totalorder %s179, 0
      %s182 = sadd.s32 %s181, 1
      %s183 = scalar_select %p180, %s181, %s182
      %p186 = pneg %p180
      %p187 = scmp.eq.s32.totalorder %s14, 8
      %p188 = por %p186, %p187
      %p189 = scmp.ne.s32.totalorder %s181, %s184
      %p190 = scmp.eq.s32.totalorder %s14, 0
      %p191 = por %p189, %p190
      %p192 = scmp.ne.s32.totalorder %s181, %s184
      %p193 = scmp.eq.s32.totalorder %s19, 8
      %p194 = por %p192, %p193
      %p195 = scmp.ne.s32.totalorder %s184, %s185
      %p196 = scmp.eq.s32.totalorder %s19, 0
      %p197 = por %p195, %p196
      %p198 = scmp.ne.s32.totalorder %s184, %s185
      %p199 = scmp.eq.s32.totalorder %s20, 8
      %p200 = por %p198, %p199
      %p202 = scmp.ne.s32.totalorder %s185, %s201
      %p203 = scmp.eq.s32.totalorder %s20, 0
      %p204 = por %p202, %p203
      %p205 = scmp.le.s32.totalorder 1, %s14
      %p206 = scmp.lt.s32.totalorder %s14, 10
      %p207 = pnand %p205, %p206
      %p208 = pneg %p207
      // Predicated region
      $region9: #{res_cnn_forward.28} parent=5 // pred_check
        _
      $region10: #{res_cnn_forward.28} parent=5 // pred_check_branch
        %210 = sbr.rel (%p207) target = $region12
      $region11: #{res_cnn_forward.28} parent=5 // pred_region
        %s211 = ssub.s32 %s14, 1
        // Predicated region
        $region13: #{res_cnn_forward.28} parent=11 // pred_check
          %p212 = pneg %p115
        $region14: #{res_cnn_forward.28} parent=11 // pred_check_branch
          %214 = sbr.rel (%p212) target = $region16
        $region15: #{res_cnn_forward.28} parent=11 // pred_region
          %s215 = smul.u32 2, %s25
          %p216 = scmp.lt.s32.totalorder %s215, 1
          %s217 = scalar_select %p216, %s215, 1
          %s218 = scalar_lea.vmem %s2, %s217
          %s219 = smul.u32 2, %s25
        $region16: #{res_cnn_forward.28} parent=11 // pred_fallthru
          _
        // Predicated region
        $region17: #{res_cnn_forward.28} parent=11 // pred_check
          %p220 = pneg %p141
        $region18: #{res_cnn_forward.28} parent=11 // pred_check_branch
          %222 = sbr.rel (%p220) target = $region20
        $region19: #{res_cnn_forward.28} parent=11 // pred_region
          %s223 = smul.u32 2, %s25
          %p224 = scmp.lt.s32.totalorder %s223, 1
          %s225 = scalar_select %p224, %s223, 1
          %s226 = scalar_lea.vmem %s3, %s225
          %s227 = smul.u32 2, %s25
        $region20: #{res_cnn_forward.28} parent=11 // pred_fallthru
          _
        // Predicated region
        $region21: #{res_cnn_forward.28} parent=11 // pred_check
          %p228 = pneg %p169
        $region22: #{res_cnn_forward.28} parent=11 // pred_check_branch
          %230 = sbr.rel (%p228) target = $region24
        $region23: #{res_cnn_forward.28} parent=11 // pred_region
          %s231 = smul.u32 4, %s24
          %s232 = smul.u32 2, %s25
          %p233 = scmp.lt.s32.totalorder %s231, 3
          %s234 = scalar_select %p233, %s231, 3
          %p235 = scmp.lt.s32.totalorder %s232, 1
          %s236 = scalar_select %p235, %s232, 1
          %s237 = smul.addr %s234, 2
          %s238 = sadd.s32 %s236, %s237
          %s239 = smul.addr %s238, 4
          %s240 = scalar_lea.vmem %s4, %s239
          %s241 = smul.u32 4, %s24
          %s242 = smul.u32 2, %s25
        $region24: #{res_cnn_forward.28} parent=11 // pred_fallthru
          _
      $region12: #{res_cnn_forward.28} parent=5 // pred_fallthru
        _
      %p243 = scmp.lt.s32.totalorder %s14, 9
      // Predicated region
      $region25: #{res_cnn_forward.28} parent=5 // pred_check
        %p244 = pneg %p243
      $region26: #{res_cnn_forward.28} parent=5 // pred_check_branch
        %246 = sbr.rel (%p244) target = $region28
      $region27: #{res_cnn_forward.28} parent=5 // pred_region
        // Predicated region
        $region29: #{res_cnn_forward.28} parent=27 // pred_check
          %p247 = pneg %p55
        $region30: #{res_cnn_forward.28} parent=27 // pred_check_branch
          %249 = sbr.rel (%p247) target = $region32
        $region31: #{res_cnn_forward.28} parent=27 // pred_region
          %s250 = sand.u32 %s45, 1
          %s251 = scalar_lea.sflag [#allocation4], %s250
          %s252 = sand.u32 %s45, 1
          %s253 = smul.addr %s252, 32
          %s254 = scalar_lea.vmem [#allocation3], %s253
          %s255 = smul.u32 4, %s21
          %s256 = smul.u32 2, %s23
          %s258 = ssub.s32 512, 512
          %259 = vsyncadd %s251, %s258
          %s260 = smul.addr %s255, 18
          %s261 = sadd.s32 %s256, %s260
          %s262 = smul.addr %s261, 64
          %s263 = scalar_lea.hbm %s0, %s262
          %s264 = sshll.u32 %s254, 4
          %s265 = int_to_ptr.vmem [resolvable:$true] %s264
          %270 = dma.hbm_to_vmem [thread:$0]  %s263, 512, %s265, %s251, 1152, 128, 8
        $region32: #{res_cnn_forward.28} parent=27 // pred_fallthru
          _
        // Predicated region
        $region33: #{res_cnn_forward.28} parent=27 // pred_check
          %p271 = pneg %p83
        $region34: #{res_cnn_forward.28} parent=27 // pred_check_branch
          %273 = sbr.rel (%p271) target = $region36
        $region35: #{res_cnn_forward.28} parent=27 // pred_region
          %s274 = smul.u32 32, %s23
          %s275 = smul.u32 2, %s22
          %p276 = scmp.lt.s32.totalorder %s274, 287
          %s277 = scalar_select %p276, %s274, 287
          %p278 = scmp.lt.s32.totalorder %s275, 1
          %s279 = scalar_select %p278, %s275, 1
          %s280 = smul.addr %s277, 2
          %s281 = sadd.s32 %s279, %s280
          %s282 = smul.addr %s281, 4
          %s283 = scalar_lea.vmem %s1, %s282
          %s284 = smul.u32 32, %s23
          %s285 = smul.u32 2, %s22
        $region36: #{res_cnn_forward.28} parent=27 // pred_fallthru
          _
      $region28: #{res_cnn_forward.28} parent=5 // pred_fallthru
        _
      %p286 = scmp.le.s32.totalorder 1, %s14
      %p287 = scmp.lt.s32.totalorder %s14, 10
      %p288 = pnand %p286, %p287
      %p289 = pneg %p288
      // Predicated region
      $region37: #{res_cnn_forward.28} parent=5 // pred_check
        _
      $region38: #{res_cnn_forward.28} parent=5 // pred_check_branch
        %291 = sbr.rel (%p288) target = $region40
      $region39: #{res_cnn_forward.28} parent=5 // pred_region
        %s292 = ssub.s32 %s14, 1
        %s293 = sand.u32 %s48, 1
        %s294 = scalar_lea.sflag [#allocation4], %s293
        %s295 = sand.u32 %s48, 1
        %s296 = smul.addr %s295, 32
        %s297 = scalar_lea.vmem [#allocation3], %s296
        // Predicated region
        $region41: #{res_cnn_forward.28} parent=39 // pred_check
          %p298 = pneg %p61
        $region42: #{res_cnn_forward.28} parent=39 // pred_check_branch
          %300 = sbr.rel (%p298) target = $region44
        $region43: #{res_cnn_forward.28} parent=39 // pred_region
          %301 = dma.done %s294, 512
        $region44: #{res_cnn_forward.28} parent=39 // pred_fallthru
          _
        %s302 = sand.u32 %s48, 1
        %s303 = scalar_lea.sflag [#allocation4], %s302
        %s304 = sand.u32 %s48, 1
        %s305 = smul.addr %s304, 32
        %s306 = scalar_lea.vmem [#allocation3], %s305
        %p307 = pneg %p61
        %p308 = pneg %p58
        %s309 = smul.u32 32, %s26
        %s310 = smul.u32 2, %s25
        %p311 = scmp.lt.s32.totalorder %s309, 287
        %s312 = scalar_select %p311, %s309, 287
        %p313 = scmp.lt.s32.totalorder %s310, 1
        %s314 = scalar_select %p313, %s310, 1
        %s315 = smul.addr %s312, 2
        %s316 = sadd.s32 %s314, %s315
        %s317 = smul.addr %s316, 4
        %s318 = scalar_lea.vmem %s1, %s317
        %p319 = pneg %p89
        %p320 = pneg %p86
        %s321 = smul.u32 2, %s25
        %p322 = scmp.lt.s32.totalorder %s321, 1
        %s323 = scalar_select %p322, %s321, 1
        %s324 = scalar_lea.vmem %s2, %s323
        %p325 = pneg %p115
        %p326 = pneg %p112
        %s327 = smul.u32 2, %s25
        %p328 = scmp.lt.s32.totalorder %s327, 1
        %s329 = scalar_select %p328, %s327, 1
        %s330 = scalar_lea.vmem %s3, %s329
        %p331 = pneg %p141
        %p332 = pneg %p138
        %s333 = smul.u32 4, %s24
        %s334 = smul.u32 2, %s25
        %p335 = scmp.lt.s32.totalorder %s333, 3
        %s336 = scalar_select %p335, %s333, 3
        %p337 = scmp.lt.s32.totalorder %s334, 1
        %s338 = scalar_select %p337, %s334, 1
        %s339 = smul.addr %s336, 2
        %s340 = sadd.s32 %s338, %s339
        %s341 = smul.addr %s340, 4
        %s342 = scalar_lea.vmem %s4, %s341
        %p343 = pneg %p169
        %p344 = pneg %p166
        %p345 = pneg %p197
        %p346 = pneg %p194
        %s347 = smul.u32 4, %s24
        %s348 = smul.u32 2, %s25
        %p349 = scmp.lt.s32.totalorder %s347, 3
        %s350 = scalar_select %p349, %s347, 3
        %p351 = scmp.lt.s32.totalorder %s348, 1
        %s352 = scalar_select %p351, %s348, 1
        %s353 = smul.addr %s350, 2
        %s354 = sadd.s32 %s352, %s353
        %s355 = smul.addr %s354, 4
        %s356 = scalar_lea.vmem %s5, %s355
        %s357 = smul.u32 4, %s24
        %s358 = smul.u32 2, %s26
        %s359 = smul.u32 32, %s26
        %s360 = smul.u32 2, %s25
        %p361 = scmp.lt.s32.totalorder %s359, 287
        %s362 = scalar_select %p361, %s359, 287
        %p363 = scmp.lt.s32.totalorder %s360, 1
        %s364 = scalar_select %p363, %s360, 1
        %s365 = smul.addr %s362, 2
        %s366 = sadd.s32 %s364, %s365
        %s367 = smul.addr %s366, 4
        %s368 = scalar_lea.vmem %s1, %s367
        %s369 = smul.u32 32, %s26
        %s370 = smul.u32 2, %s25
        %s371 = smul.u32 2, %s25
        %p372 = scmp.lt.s32.totalorder %s371, 1
        %s373 = scalar_select %p372, %s371, 1
        %s374 = scalar_lea.vmem %s2, %s373
        %s375 = smul.u32 2, %s25
        %s376 = smul.u32 2, %s25
        %p377 = scmp.lt.s32.totalorder %s376, 1
        %s378 = scalar_select %p377, %s376, 1
        %s379 = scalar_lea.vmem %s3, %s378
        %s380 = smul.u32 2, %s25
        %s381 = smul.u32 4, %s24
        %s382 = smul.u32 2, %s25
        %p383 = scmp.lt.s32.totalorder %s381, 3
        %s384 = scalar_select %p383, %s381, 3
        %p385 = scmp.lt.s32.totalorder %s382, 1
        %s386 = scalar_select %p385, %s382, 1
        %s387 = smul.addr %s384, 2
        %s388 = sadd.s32 %s386, %s387
        %s389 = smul.addr %s388, 4
        %s390 = scalar_lea.vmem %s4, %s389
        %s391 = smul.u32 4, %s24
        %s392 = smul.u32 2, %s25
        %s393 = smul.u32 4, %s24
        %s394 = smul.u32 2, %s25
        %p395 = scmp.lt.s32.totalorder %s393, 3
        %s396 = scalar_select %p395, %s393, 3
        %p397 = scmp.lt.s32.totalorder %s394, 1
        %s398 = scalar_select %p397, %s394, 1
        %s399 = smul.addr %s396, 2
        %s400 = sadd.s32 %s398, %s399
        %s401 = smul.addr %s400, 4
        %s402 = scalar_lea.vmem %s5, %s401
        %s403 = smul.u32 4, %s24
        %s404 = smul.u32 2, %s25
        %p405 = scmp.eq.s32.totalorder %s26, 0
        // Predicated region
        $region45: #{res_cnn_forward.28} parent=39 // pred_check
          %p406 = pneg %p405
        $region46: #{res_cnn_forward.28} parent=39 // pred_check_branch
          %408 = sbr.rel (%p406) target = $region48
        $region47: #{res_cnn_forward.28} parent=39 // pred_region
          %409 = vst [vmem:[#allocation2] sm:$0xff] 0.0
          %410 = vst [vmem:[#allocation2 + $0x8] sm:$0xff] 0.0
          %411 = vst [vmem:[#allocation2 + $0x10] sm:$0xff] 0.0
          %412 = vst [vmem:[#allocation2 + $0x18] sm:$0xff] 0.0
          %413 = vst [vmem:[#allocation2 + $0x20] sm:$0xff] 0.0
          %414 = vst [vmem:[#allocation2 + $0x28] sm:$0xff] 0.0
          %415 = vst [vmem:[#allocation2 + $0x30] sm:$0xff] 0.0
          %416 = vst [vmem:[#allocation2 + $0x38] sm:$0xff] 0.0
        $region48: #{res_cnn_forward.28} parent=39 // pred_fallthru
          _
        %v417 = vld [vmem:[#allocation2] sm:$0xff]
        %v418 = vld [vmem:[#allocation2 + $0x8] sm:$0xff]
        %v419 = vld [vmem:[#allocation2 + $0x10] sm:$0xff]
        %v420 = vld [vmem:[#allocation2 + $0x18] sm:$0xff]
        %v421 = vld [vmem:[#allocation2 + $0x20] sm:$0xff]
        %v422 = vld [vmem:[#allocation2 + $0x28] sm:$0xff]
        %v423 = vld [vmem:[#allocation2 + $0x30] sm:$0xff]
        %v424 = vld [vmem:[#allocation2 + $0x38] sm:$0xff]
        %v425 = vld [vmem:[%s297] sm:$0xff]
        %v426 = vld [vmem:[%s297 + $0x8] sm:$0xff]
        %v427 = vld [vmem:[%s297 + $0x10] sm:$0xff]
        %v428 = vld [vmem:[%s297 + $0x18] sm:$0xff]
        %v429 = vld [vmem:[%s368] sm:$0xff]
        %v430 = vld [vmem:[%s368 + $0x8] sm:$0xff]
        %v431 = vld [vmem:[%s368 + $0x10] sm:$0xff]
        %v432 = vld [vmem:[%s368 + $0x18] sm:$0xff]
        %v433 = vld [vmem:[%s368 + $0x20] sm:$0xff]
        %v434 = vld [vmem:[%s368 + $0x28] sm:$0xff]
        %v435 = vld [vmem:[%s368 + $0x30] sm:$0xff]
        %v436 = vld [vmem:[%s368 + $0x38] sm:$0xff]
        %v437 = vld [vmem:[%s368 + $0x40] sm:$0xff]
        %v438 = vld [vmem:[%s368 + $0x48] sm:$0xff]
        %v439 = vld [vmem:[%s368 + $0x50] sm:$0xff]
        %v440 = vld [vmem:[%s368 + $0x58] sm:$0xff]
        %v441 = vld [vmem:[%s368 + $0x60] sm:$0xff]
        %v442 = vld [vmem:[%s368 + $0x68] sm:$0xff]
        %v443 = vld [vmem:[%s368 + $0x70] sm:$0xff]
        %v444 = vld [vmem:[%s368 + $0x78] sm:$0xff]
        %v445 = vld [vmem:[%s368 + $0x80] sm:$0xff]
        %v446 = vld [vmem:[%s368 + $0x88] sm:$0xff]
        %v447 = vld [vmem:[%s368 + $0x90] sm:$0xff]
        %v448 = vld [vmem:[%s368 + $0x98] sm:$0xff]
        %v449 = vld [vmem:[%s368 + $0xa0] sm:$0xff]
        %v450 = vld [vmem:[%s368 + $0xa8] sm:$0xff]
        %v451 = vld [vmem:[%s368 + $0xb0] sm:$0xff]
        %v452 = vld [vmem:[%s368 + $0xb8] sm:$0xff]
        %v453 = vld [vmem:[%s368 + $0xc0] sm:$0xff]
        %v454 = vld [vmem:[%s368 + $0xc8] sm:$0xff]
        %v455 = vld [vmem:[%s368 + $0xd0] sm:$0xff]
        %v456 = vld [vmem:[%s368 + $0xd8] sm:$0xff]
        %v457 = vld [vmem:[%s368 + $0xe0] sm:$0xff]
        %v458 = vld [vmem:[%s368 + $0xe8] sm:$0xff]
        %v459 = vld [vmem:[%s368 + $0xf0] sm:$0xff]
        %v460 = vld [vmem:[%s368 + $0xf8] sm:$0xff]
        %v465 = vunpack.c.l.b16 %v425
        %v466 = vunpack.c.h.b16 %v425
        %v467 = vunpack.c.l.b16 %v426
        %v468 = vunpack.c.h.b16 %v426
        %v469 = vunpack.c.l.b16 %v427
        %v470 = vunpack.c.h.b16 %v427
        %v471 = vunpack.c.l.b16 %v428
        %v472 = vunpack.c.h.b16 %v428
        %v473 = vpack.c.b16 %v467, %v465
        %v474 = vpack.c.b16 %v468, %v466
        %v475 = vpack.c.b16 %v471, %v469
        %v476 = vpack.c.b16 %v472, %v470
        %v513 = vunpack.c.l.b16 %v429
        %v514 = vunpack.c.h.b16 %v429
        %v515 = vunpack.c.l.b16 %v430
        %v516 = vunpack.c.h.b16 %v430
        %v517 = vunpack.c.l.b16 %v431
        %v518 = vunpack.c.h.b16 %v431
        %v519 = vunpack.c.l.b16 %v432
        %v520 = vunpack.c.h.b16 %v432
        %v521 = vunpack.c.l.b16 %v433
        %v522 = vunpack.c.h.b16 %v433
        %v523 = vunpack.c.l.b16 %v434
        %v524 = vunpack.c.h.b16 %v434
        %v525 = vunpack.c.l.b16 %v435
        %v526 = vunpack.c.h.b16 %v435
        %v527 = vunpack.c.l.b16 %v436
        %v528 = vunpack.c.h.b16 %v436
        %v529 = vunpack.c.l.b16 %v437
        %v530 = vunpack.c.h.b16 %v437
        %v531 = vunpack.c.l.b16 %v438
        %v532 = vunpack.c.h.b16 %v438
        %v533 = vunpack.c.l.b16 %v439
        %v534 = vunpack.c.h.b16 %v439
        %v535 = vunpack.c.l.b16 %v440
        %v536 = vunpack.c.h.b16 %v440
        %v537 = vunpack.c.l.b16 %v441
        %v538 = vunpack.c.h.b16 %v441
        %v539 = vunpack.c.l.b16 %v442
        %v540 = vunpack.c.h.b16 %v442
        %v541 = vunpack.c.l.b16 %v443
        %v542 = vunpack.c.h.b16 %v443
        %v543 = vunpack.c.l.b16 %v444
        %v544 = vunpack.c.h.b16 %v444
        %v545 = vunpack.c.l.b16 %v445
        %v546 = vunpack.c.h.b16 %v445
        %v547 = vunpack.c.l.b16 %v446
        %v548 = vunpack.c.h.b16 %v446
        %v549 = vunpack.c.l.b16 %v447
        %v550 = vunpack.c.h.b16 %v447
        %v551 = vunpack.c.l.b16 %v448
        %v552 = vunpack.c.h.b16 %v448
        %v553 = vunpack.c.l.b16 %v449
        %v554 = vunpack.c.h.b16 %v449
        %v555 = vunpack.c.l.b16 %v450
        %v556 = vunpack.c.h.b16 %v450
        %v557 = vunpack.c.l.b16 %v451
        %v558 = vunpack.c.h.b16 %v451
        %v559 = vunpack.c.l.b16 %v452
        %v560 = vunpack.c.h.b16 %v452
        %v561 = vunpack.c.l.b16 %v453
        %v562 = vunpack.c.h.b16 %v453
        %v563 = vunpack.c.l.b16 %v454
        %v564 = vunpack.c.h.b16 %v454
        %v565 = vunpack.c.l.b16 %v455
        %v566 = vunpack.c.h.b16 %v455
        %v567 = vunpack.c.l.b16 %v456
        %v568 = vunpack.c.h.b16 %v456
        %v569 = vunpack.c.l.b16 %v457
        %v570 = vunpack.c.h.b16 %v457
        %v571 = vunpack.c.l.b16 %v458
        %v572 = vunpack.c.h.b16 %v458
        %v573 = vunpack.c.l.b16 %v459
        %v574 = vunpack.c.h.b16 %v459
        %v575 = vunpack.c.l.b16 %v460
        %v576 = vunpack.c.h.b16 %v460
        %v577 = vpack.c.b16 %v515, %v513
        %v578 = vpack.c.b16 %v516, %v514
        %v579 = vpack.c.b16 %v519, %v517
        %v580 = vpack.c.b16 %v520, %v518
        %v581 = vpack.c.b16 %v523, %v521
        %v582 = vpack.c.b16 %v524, %v522
        %v583 = vpack.c.b16 %v527, %v525
        %v584 = vpack.c.b16 %v528, %v526
        %v585 = vpack.c.b16 %v531, %v529
        %v586 = vpack.c.b16 %v532, %v530
        %v587 = vpack.c.b16 %v535, %v533
        %v588 = vpack.c.b16 %v536, %v534
        %v589 = vpack.c.b16 %v539, %v537
        %v590 = vpack.c.b16 %v540, %v538
        %v591 = vpack.c.b16 %v543, %v541
        %v592 = vpack.c.b16 %v544, %v542
        %v593 = vpack.c.b16 %v547, %v545
        %v594 = vpack.c.b16 %v548, %v546
        %v595 = vpack.c.b16 %v551, %v549
        %v596 = vpack.c.b16 %v552, %v550
        %v597 = vpack.c.b16 %v555, %v553
        %v598 = vpack.c.b16 %v556, %v554
        %v599 = vpack.c.b16 %v559, %v557
        %v600 = vpack.c.b16 %v560, %v558
        %v601 = vpack.c.b16 %v563, %v561
        %v602 = vpack.c.b16 %v564, %v562
        %v603 = vpack.c.b16 %v567, %v565
        %v604 = vpack.c.b16 %v568, %v566
        %v605 = vpack.c.b16 %v571, %v569
        %v606 = vpack.c.b16 %v572, %v570
        %v607 = vpack.c.b16 %v575, %v573
        %v608 = vpack.c.b16 %v576, %v574
        %641 = vmatprep.subr.bf16.mxu0 %v592
        %642 = vmatpush1.bf16.msra.mxu0 %v591
        %643 = vmatprep.subr.bf16.mxu0 %v590
        %644 = vmatpush1.bf16.msra.mxu0 %v589
        %645 = vmatprep.subr.bf16.mxu0 %v588
        %646 = vmatpush1.bf16.msra.mxu0 %v587
        %647 = vmatprep.subr.bf16.mxu0 %v586
        %648 = vmatpush1.bf16.msra.mxu0 %v585
        %649 = vmatprep.subr.bf16.mxu0 %v584
        %650 = vmatpush1.bf16.msra.mxu0 %v583
        %651 = vmatprep.subr.bf16.mxu0 %v582
        %652 = vmatpush1.bf16.msra.mxu0 %v581
        %653 = vmatprep.subr.bf16.mxu0 %v580
        %654 = vmatpush1.bf16.msra.mxu0 %v579
        %655 = vmatprep.subr.bf16.mxu0 %v578
        %656 = vmatpush1.bf16.msra.mxu0 %v577
        %657 = vmatprep.subr.bf16.mxu0 %v608
        %658 = vmatpush2.bf16.msra.mxu0 %v607
        %659 = vmatprep.subr.bf16.mxu0 %v606
        %660 = vmatpush2.bf16.msra.mxu0 %v605
        %661 = vmatprep.subr.bf16.mxu0 %v604
        %662 = vmatpush2.bf16.msra.mxu0 %v603
        %663 = vmatprep.subr.bf16.mxu0 %v602
        %664 = vmatpush2.bf16.msra.mxu0 %v601
        %665 = vmatprep.subr.bf16.mxu0 %v600
        %666 = vmatpush2.bf16.msra.mxu0 %v599
        %667 = vmatprep.subr.bf16.mxu0 %v598
        %668 = vmatpush2.bf16.msra.mxu0 %v597
        %669 = vmatprep.subr.bf16.mxu0 %v596
        %670 = vmatpush2.bf16.msra.mxu0 %v595
        %671 = vmatprep.subr.bf16.mxu0 %v594
        %672 = vmatpush2.bf16.msra.mxu0 %v593
        %673 = vmatprep.mubr.bf16.mxu0 %v474
        %674 = vmatmul.mubr.bf16.gmra.mxu0 %v473
        %v675 = vpop.f32.mrf.mxu0
        %v676 = vadd.f32 0.0, %v675
        %v677 = vpop.f32.mrf.mxu0
        %v678 = vadd.f32 0.0, %v677
        %v679 = vpop.f32.mrf.mxu0
        %v680 = vadd.f32 0.0, %v679
        %v681 = vpop.f32.mrf.mxu0
        %v682 = vadd.f32 0.0, %v681
        %683 = vmatprep.mubr.bf16.mxu0 %v476
        %684 = vmatmul.mubr.bf16.gmra.mxu0 %v475
        %v685 = vpop.f32.mrf.mxu0
        %v686 = vadd.f32 0.0, %v685
        %v687 = vpop.f32.mrf.mxu0
        %v688 = vadd.f32 0.0, %v687
        %v689 = vpop.f32.mrf.mxu0
        %v690 = vadd.f32 0.0, %v689
        %v691 = vpop.f32.mrf.mxu0
        %v692 = vadd.f32 0.0, %v691
        %693 = vdwg.mxu0
        %v694 = vadd.f32 %v417, %v676
        %v695 = vadd.f32 %v418, %v678
        %v696 = vadd.f32 %v419, %v680
        %v697 = vadd.f32 %v420, %v682
        %v698 = vadd.f32 %v421, %v686
        %v699 = vadd.f32 %v422, %v688
        %v700 = vadd.f32 %v423, %v690
        %v701 = vadd.f32 %v424, %v692
        %702 = vst [vmem:[#allocation2] sm:$0xff] %v694
        %703 = vst [vmem:[#allocation2 + $0x8] sm:$0xff] %v695
        %704 = vst [vmem:[#allocation2 + $0x10] sm:$0xff] %v696
        %705 = vst [vmem:[#allocation2 + $0x18] sm:$0xff] %v697
        %706 = vst [vmem:[#allocation2 + $0x20] sm:$0xff] %v698
        %707 = vst [vmem:[#allocation2 + $0x28] sm:$0xff] %v699
        %708 = vst [vmem:[#allocation2 + $0x30] sm:$0xff] %v700
        %709 = vst [vmem:[#allocation2 + $0x38] sm:$0xff] %v701
        %p710 = scmp.eq.s32.totalorder %s26, 8
        // Predicated region
        $region49: #{res_cnn_forward.28} parent=39 // pred_check
          %p711 = pneg %p710
        $region50: #{res_cnn_forward.28} parent=39 // pred_check_branch
          %713 = sbr.rel (%p711) target = $region52
        $region51: #{res_cnn_forward.28} parent=39 // pred_region
          %v714 = vld [vmem:[#allocation2] sm:$0xff]
          %v715 = vld [vmem:[#allocation2 + $0x8] sm:$0xff]
          %v716 = vld [vmem:[#allocation2 + $0x10] sm:$0xff]
          %v717 = vld [vmem:[#allocation2 + $0x18] sm:$0xff]
          %v718 = vld [vmem:[#allocation2 + $0x20] sm:$0xff]
          %v719 = vld [vmem:[#allocation2 + $0x28] sm:$0xff]
          %v720 = vld [vmem:[#allocation2 + $0x30] sm:$0xff]
          %v721 = vld [vmem:[#allocation2 + $0x38] sm:$0xff]
          %v722 = vld [vmem:[%s374] sm:$0x3]
          %v724 = vlaneseq
          %v725 = vshrl.u32 %v724, 7
          %v726 = vsub.s32 0, %v725
          %v727 = vrot.slane %v722, %v726
          %v728 = vlaneseq
          %v729 = vshrl.u32 %v728, 7
          %v730 = vsub.s32 1, %v729
          %v731 = vrot.slane %v722, %v730
          %v734 = vmul.f32 %v714, %v727
          %v735 = vmul.f32 %v715, %v731
          %v736 = vmul.f32 %v716, %v727
          %v737 = vmul.f32 %v717, %v731
          %v738 = vmul.f32 %v718, %v727
          %v739 = vmul.f32 %v719, %v731
          %v740 = vmul.f32 %v720, %v727
          %v741 = vmul.f32 %v721, %v731
          %v742 = vld [vmem:[%s379] sm:$0x3]
          %v744 = vlaneseq
          %v745 = vshrl.u32 %v744, 7
          %v746 = vsub.s32 0, %v745
          %v747 = vrot.slane %v742, %v746
          %v748 = vlaneseq
          %v749 = vshrl.u32 %v748, 7
          %v750 = vsub.s32 1, %v749
          %v751 = vrot.slane %v742, %v750
          %v754 = vadd.f32 %v734, %v747
          %v755 = vadd.f32 %v735, %v751
          %v756 = vadd.f32 %v736, %v747
          %v757 = vadd.f32 %v737, %v751
          %v758 = vadd.f32 %v738, %v747
          %v759 = vadd.f32 %v739, %v751
          %v760 = vadd.f32 %v740, %v747
          %v761 = vadd.f32 %v741, %v751
          %v762 = vld [vmem:[%s390] sm:$0xff]
          %v763 = vld [vmem:[%s390 + $0x8] sm:$0xff]
          %v764 = vld [vmem:[%s390 + $0x10] sm:$0xff]
          %v765 = vld [vmem:[%s390 + $0x18] sm:$0xff]
          %v766 = vunpack.c.l.bf16 %v762
          %v767 = vunpack.c.h.bf16 %v762
          %v768 = vunpack.c.l.bf16 %v763
          %v769 = vunpack.c.h.bf16 %v763
          %v770 = vunpack.c.l.bf16 %v764
          %v771 = vunpack.c.h.bf16 %v764
          %v772 = vunpack.c.l.bf16 %v765
          %v773 = vunpack.c.h.bf16 %v765
          %v774 = vadd.f32 %v754, %v766
          %v775 = vadd.f32 %v755, %v767
          %v776 = vadd.f32 %v756, %v768
          %v777 = vadd.f32 %v757, %v769
          %v778 = vadd.f32 %v758, %v770
          %v779 = vadd.f32 %v759, %v771
          %v780 = vadd.f32 %v760, %v772
          %v781 = vadd.f32 %v761, %v773
          %v782 = vpack.c.bf16 %v776, %v774
          %v783 = vpack.c.bf16 %v777, %v775
          %v784 = vpack.c.bf16 %v780, %v778
          %v785 = vpack.c.bf16 %v781, %v779
          %v790 = vunpack.c.l.b16 %v782
          %v791 = vunpack.c.l.b16 %v783
          %v792 = vunpack.c.h.b16 %v782
          %v793 = vunpack.c.h.b16 %v783
          %v794 = vunpack.c.l.b16 %v784
          %v795 = vunpack.c.l.b16 %v785
          %v796 = vunpack.c.h.b16 %v784
          %v797 = vunpack.c.h.b16 %v785
          %v798 = vpack.c.b16 %v791, %v790
          %v799 = vpack.c.b16 %v793, %v792
          %v800 = vpack.c.b16 %v795, %v794
          %v801 = vpack.c.b16 %v797, %v796
          %806 = vst [vmem:[%s402] sm:$0xff] %v798
          %807 = vst [vmem:[%s402 + $0x8] sm:$0xff] %v799
          %808 = vst [vmem:[%s402 + $0x10] sm:$0xff] %v800
          %809 = vst [vmem:[%s402 + $0x18] sm:$0xff] %v801
        $region52: #{res_cnn_forward.28} parent=39 // pred_fallthru
          _
        %s810 = smul.u32 4, %s24
        %s811 = smul.u32 2, %s25
        %p812 = scmp.lt.s32.totalorder %s810, 3
        %s813 = scalar_select %p812, %s810, 3
        %p814 = scmp.lt.s32.totalorder %s811, 1
        %s815 = scalar_select %p814, %s811, 1
        %s816 = smul.addr %s813, 2
        %s817 = sadd.s32 %s815, %s816
        %s818 = smul.addr %s817, 4
        %s819 = scalar_lea.vmem %s5, %s818
        // Predicated region
        $region53: #{res_cnn_forward.28} parent=39 // pred_check
          %p820 = pneg %p194
        $region54: #{res_cnn_forward.28} parent=39 // pred_check_branch
          %822 = sbr.rel (%p820) target = $region56
        $region55: #{res_cnn_forward.28} parent=39 // pred_region
          %s823 = smul.u32 4, %s24
          %s824 = smul.u32 2, %s25
        $region56: #{res_cnn_forward.28} parent=39 // pred_fallthru
          _
        // Predicated region
        $region57: #{res_cnn_forward.28} parent=39 // pred_check
          %p825 = pneg %p194
        $region58: #{res_cnn_forward.28} parent=39 // pred_check_branch
          %827 = sbr.rel (%p825) target = $region60
        $region59: #{res_cnn_forward.28} parent=39 // pred_region
          %s828 = smul.u32 4, %s24
          %s829 = smul.u32 2, %s25
          %p830 = scmp.lt.s32.totalorder %s828, 3
          %s831 = scalar_select %p830, %s828, 3
          %p832 = scmp.lt.s32.totalorder %s829, 1
          %s833 = scalar_select %p832, %s829, 1
          %s834 = smul.addr %s831, 2
          %s835 = sadd.s32 %s833, %s834
          %s836 = smul.addr %s835, 4
          %s837 = scalar_lea.vmem %s5, %s836
        $region60: #{res_cnn_forward.28} parent=39 // pred_fallthru
          _
      $region40: #{res_cnn_forward.28} parent=5 // pred_fallthru
        _
      %p838 = scmp.le.s32.totalorder 2, %s14
      // Predicated region
      $region61: #{res_cnn_forward.28} parent=5 // pred_check
        %p839 = pneg %p838
      $region62: #{res_cnn_forward.28} parent=5 // pred_check_branch
        %841 = sbr.rel (%p839) target = $region64
      $region63: #{res_cnn_forward.28} parent=5 // pred_region
        %s842 = ssub.s32 %s14, 2
      $region64: #{res_cnn_forward.28} parent=5 // pred_fallthru
        _
    $region6: #{res_cnn_forward.28} parent=1 // loop_footer
      %s18 = sadd.s32 1, %s14
    $region7: #{res_cnn_forward.28} parent=1 // loop_footer_branch
      %13 = sbr.rel target = $region3
    $region8: #{res_cnn_forward.28} parent=1 // loop_exit
      _
    %843 = vsyncpa [#allocation4], 1
    %s844 = scalar_lea.sflag [#allocation4], 1
    %845 = vsyncpa %s844, 1

// kernel: res_cnn_forward.45
$region0: #{res_cnn_forward.45}
  #allocation0 [shape = 'u32[]', space=smem, size = 0x4, offset = 0x4, fixed_abs, tag = 'smem constant byte address 0x4 - core index']
  #allocation1 [shape = 'u32[144,128]{1,0:T(1,128)}', space=vmem, size = 0x12000, scoped, tag = 'internal scratch']
  #allocation2 [shape = 'f32[32,256]{1,0:T(8,128)}', space=vmem, size = 0x8000, scoped, tag = 'scratch operand']
  %s0 = inlined_call_operand.vmem [shape: bf16[32,1024], index: 0, kind: input, shape index: {}]
  %s1 = inlined_call_operand.vmem [shape: bf16[1024,512], index: 1, kind: input, shape index: {}]
  %s2 = inlined_call_operand.vmem [shape: f32[1,512], index: 2, kind: input, shape index: {}]
  %s3 = inlined_call_operand.vmem [shape: f32[1,512], index: 3, kind: input, shape index: {}]
  %s4 = inlined_call_operand.vmem [shape: bf16[32,512], index: 4, kind: output, shape index: {}]
  %s5 = sld [smem:[#allocation0]]
  $region167: #{res_cnn_forward.45} parent=0
    _
  %s7 = ssub.s32 1, %s5
  %s8 = scalar_select 0, %s7, %s5
  $region1: #{res_cnn_forward.45} parent=0
    #allocation3 [shape = 'u8[32768]{0}', space=vmem, size = 0x8000, scoped, tag = 'input window, operand 0']
    #allocation4 [shape = 'u8[262144]{0}', space=vmem, size = 0x40000, scoped, tag = 'input window, operand 1']
    #allocation5 [shape = 'u8[32768]{0}', space=vmem, size = 0x8000, scoped, tag = 'output window, operand 0']
    loop: start=0, step=1, limit=10
    $region2: #{res_cnn_forward.45} parent=1 // loop_pre_header
      _
    $region3: #{res_cnn_forward.45} parent=1 // loop_header
      %s10 = sphi 0, %s14
      %p11 = scmp.ge.s32.totalorder %s10, 10
      %s17 = sphi 0, %s36
      %s18 = sphi 0, %s32
      %s19 = sphi 0, %s28
      %s20 = sphi 0, %s17
      %s21 = sphi 0, %s18
      %s22 = sphi 0, %s19
      %s23 = sphi 0, %s20
      %s24 = sphi 0, %s21
      %s25 = sphi 0, %s22
      %s41 = sphi 0, %s43
      %s44 = sphi 0, %s41
      %s45 = sphi 0, %s44
      %s61 = sphi 0, %s45
      %s69 = sphi 0, %s71
      %s72 = sphi 0, %s69
      %s73 = sphi 0, %s72
      %s89 = sphi 0, %s73
      %s95 = sphi 0, %s97
      %s98 = sphi 0, %s95
      %s99 = sphi 0, %s98
      %s115 = sphi 0, %s99
      %s121 = sphi 0, %s123
      %s124 = sphi 0, %s121
      %s125 = sphi 0, %s124
      %s141 = sphi 0, %s125
      %s149 = sphi 0, %s151
      %s152 = sphi 0, %s149
      %s153 = sphi 0, %s152
      %s169 = sphi 0, %s153
    $region4: #{res_cnn_forward.45} parent=1 // loop_header_branch
      %13 = sbr.rel (%p11) target = $region8
    $region5: #{res_cnn_forward.45} parent=1 // loop_body
      %s15 = ssub.s32 %s10, 1
      %s16 = ssub.s32 %s10, 2
      %s26 = sadd.s32 1, %s19
      %p27 = scmp.ge.s32.totalorder %s26, 4
      %s28 = scalar_select %p27, 0, %s26
      %s29 = sadd.s32 1, %s18
      %s30 = scalar_select %p27, %s29, %s18
      %p31 = scmp.ge.s32.totalorder %s30, 2
      %s32 = scalar_select %p31, 0, %s30
      %s33 = sadd.s32 1, %s17
      %s34 = scalar_select %p31, %s33, %s17
      %p35 = scmp.ge.s32.totalorder %s34, 1
      %s36 = scalar_select %p35, 0, %s34
      %s37 = ssub.s32 %s17, %s36
      %s38 = ssub.s32 %s19, %s28
      %s39 = sor.u32 %s37, %s38
      %p40 = scmp.eq.s32.totalorder %s39, 0
      %s42 = sadd.s32 %s41, 1
      %s43 = scalar_select %p40, %s41, %s42
      %p46 = pneg %p40
      %p47 = scmp.eq.s32.totalorder %s10, 7
      %p48 = por %p46, %p47
      %p49 = scmp.ne.s32.totalorder %s41, %s44
      %p50 = scmp.eq.s32.totalorder %s10, 0
      %p51 = por %p49, %p50
      %p52 = scmp.ne.s32.totalorder %s41, %s44
      %p53 = scmp.eq.s32.totalorder %s15, 7
      %p54 = por %p52, %p53
      %p55 = scmp.ne.s32.totalorder %s44, %s45
      %p56 = scmp.eq.s32.totalorder %s15, 0
      %p57 = por %p55, %p56
      %p58 = scmp.ne.s32.totalorder %s44, %s45
      %p59 = scmp.eq.s32.totalorder %s16, 7
      %p60 = por %p58, %p59
      %p62 = scmp.ne.s32.totalorder %s45, %s61
      %p63 = scmp.eq.s32.totalorder %s16, 0
      %p64 = por %p62, %p63
      %s65 = ssub.s32 %s19, %s28
      %s66 = ssub.s32 %s18, %s32
      %s67 = sor.u32 %s65, %s66
      %p68 = scmp.eq.s32.totalorder %s67, 0
      %s70 = sadd.s32 %s69, 1
      %s71 = scalar_select %p68, %s69, %s70
      %p74 = pneg %p68
      %p75 = scmp.eq.s32.totalorder %s10, 7
      %p76 = por %p74, %p75
      %p77 = scmp.ne.s32.totalorder %s69, %s72
      %p78 = scmp.eq.s32.totalorder %s10, 0
      %p79 = por %p77, %p78
      %p80 = scmp.ne.s32.totalorder %s69, %s72
      %p81 = scmp.eq.s32.totalorder %s15, 7
      %p82 = por %p80, %p81
      %p83 = scmp.ne.s32.totalorder %s72, %s73
      %p84 = scmp.eq.s32.totalorder %s15, 0
      %p85 = por %p83, %p84
      %p86 = scmp.ne.s32.totalorder %s72, %s73
      %p87 = scmp.eq.s32.totalorder %s16, 7
      %p88 = por %p86, %p87
      %p90 = scmp.ne.s32.totalorder %s73, %s89
      %p91 = scmp.eq.s32.totalorder %s16, 0
      %p92 = por %p90, %p91
      %s93 = ssub.s32 %s18, %s32
      %p94 = scmp.eq.s32.totalorder %s93, 0
      %s96 = sadd.s32 %s95, 1
      %s97 = scalar_select %p94, %s95, %s96
      %p100 = pneg %p94
      %p101 = scmp.eq.s32.totalorder %s10, 7
      %p102 = por %p100, %p101
      %p103 = scmp.ne.s32.totalorder %s95, %s98
      %p104 = scmp.eq.s32.totalorder %s10, 0
      %p105 = por %p103, %p104
      %p106 = scmp.ne.s32.totalorder %s95, %s98
      %p107 = scmp.eq.s32.totalorder %s15, 7
      %p108 = por %p106, %p107
      %p109 = scmp.ne.s32.totalorder %s98, %s99
      %p110 = scmp.eq.s32.totalorder %s15, 0
      %p111 = por %p109, %p110
      %p112 = scmp.ne.s32.totalorder %s98, %s99
      %p113 = scmp.eq.s32.totalorder %s16, 7
      %p114 = por %p112, %p113
      %p116 = scmp.ne.s32.totalorder %s99, %s115
      %p117 = scmp.eq.s32.totalorder %s16, 0
      %p118 = por %p116, %p117
      %s119 = ssub.s32 %s18, %s32
      %p120 = scmp.eq.s32.totalorder %s119, 0
      %s122 = sadd.s32 %s121, 1
      %s123 = scalar_select %p120, %s121, %s122
      %p126 = pneg %p120
      %p127 = scmp.eq.s32.totalorder %s10, 7
      %p128 = por %p126, %p127
      %p129 = scmp.ne.s32.totalorder %s121, %s124
      %p130 = scmp.eq.s32.totalorder %s10, 0
      %p131 = por %p129, %p130
      %p132 = scmp.ne.s32.totalorder %s121, %s124
      %p133 = scmp.eq.s32.totalorder %s15, 7
      %p134 = por %p132, %p133
      %p135 = scmp.ne.s32.totalorder %s124, %s125
      %p136 = scmp.eq.s32.totalorder %s15, 0
      %p137 = por %p135, %p136
      %p138 = scmp.ne.s32.totalorder %s124, %s125
      %p139 = scmp.eq.s32.totalorder %s16, 7
      %p140 = por %p138, %p139
      %p142 = scmp.ne.s32.totalorder %s125, %s141
      %p143 = scmp.eq.s32.totalorder %s16, 0
      %p144 = por %p142, %p143
      %s145 = ssub.s32 %s17, %s36
      %s146 = ssub.s32 %s18, %s32
      %s147 = sor.u32 %s145, %s146
      %p148 = scmp.eq.s32.totalorder %s147, 0
      %s150 = sadd.s32 %s149, 1
      %s151 = scalar_select %p148, %s149, %s150
      %p154 = pneg %p148
      %p155 = scmp.eq.s32.totalorder %s10, 7
      %p156 = por %p154, %p155
      %p157 = scmp.ne.s32.totalorder %s149, %s152
      %p158 = scmp.eq.s32.totalorder %s10, 0
      %p159 = por %p157, %p158
      %p160 = scmp.ne.s32.totalorder %s149, %s152
      %p161 = scmp.eq.s32.totalorder %s15, 7
      %p162 = por %p160, %p161
      %p163 = scmp.ne.s32.totalorder %s152, %s153
      %p164 = scmp.eq.s32.totalorder %s15, 0
      %p165 = por %p163, %p164
      %p166 = scmp.ne.s32.totalorder %s152, %s153
      %p167 = scmp.eq.s32.totalorder %s16, 7
      %p168 = por %p166, %p167
      %p170 = scmp.ne.s32.totalorder %s153, %s169
      %p171 = scmp.eq.s32.totalorder %s16, 0
      %p172 = por %p170, %p171
      %p173 = scmp.le.s32.totalorder 1, %s10
      %p174 = scmp.lt.s32.totalorder %s10, 9
      %p175 = pnand %p173, %p174
      %p176 = pneg %p175
      // Predicated region
      $region9: #{res_cnn_forward.45} parent=5 // pred_check
        _
      $region10: #{res_cnn_forward.45} parent=5 // pred_check_branch
        %178 = sbr.rel (%p175) target = $region12
      $region11: #{res_cnn_forward.45} parent=5 // pred_region
        %s179 = ssub.s32 %s10, 1
      $region12: #{res_cnn_forward.45} parent=5 // pred_fallthru
        _
      %p180 = scmp.lt.s32.totalorder %s10, 8
      // Predicated region
      $region13: #{res_cnn_forward.45} parent=5 // pred_check
        %p181 = pneg %p180
      $region14: #{res_cnn_forward.45} parent=5 // pred_check_branch
        %183 = sbr.rel (%p181) target = $region16
      $region15: #{res_cnn_forward.45} parent=5 // pred_region
        // Predicated region
        $region17: #{res_cnn_forward.45} parent=15 // pred_check
          %p184 = pneg %p51
        $region18: #{res_cnn_forward.45} parent=15 // pred_check_branch
          %186 = sbr.rel (%p184) target = $region20
        $region19: #{res_cnn_forward.45} parent=15 // pred_region
          %s187 = sand.u32 %s41, 1
          %s188 = sand.u32 %s41, 1
          %s189 = smul.addr %s188, 32
          %s190 = scalar_lea.vmem [#allocation3], %s189
          %s191 = smul.u32 4, %s17
          %s192 = smul.u32 2, %s19
          %s193 = smul.addr %s191, 8
          %s194 = sadd.s32 %s192, %s193
          %s195 = smul.addr %s194, 4
          %s196 = scalar_lea.vmem %s0, %s195
          // Predicated region
          $region21: #{res_cnn_forward.45} parent=19 // pred_check
            _
          $region22: #{res_cnn_forward.45} parent=19 // pred_check_branch
            %198 = sbr.rel (0) target = $region24
          $region23: #{res_cnn_forward.45} parent=19 // pred_region
            // Predicated region
            $region25: #{res_cnn_forward.45} parent=23 // pred_check
              _
            $region26: #{res_cnn_forward.45} parent=23 // pred_check_branch
              %200 = sbr.rel (0) target = $region28
            $region27: #{res_cnn_forward.45} parent=23 // pred_region
              // Predicated region
              $region40: #{res_cnn_forward.45} parent=27 // pred_check
                _
              $region41: #{res_cnn_forward.45} parent=27 // pred_check_branch
                %222 = sbr.rel (0) target = $region43
              $region42: #{res_cnn_forward.45} parent=27 // pred_region
                loop: start=0, step=1, limit=1
                $region44: #{res_cnn_forward.45} parent=42 // loop_pre_header
                  _
                $region45: #{res_cnn_forward.45} parent=42 // loop_header
                  %s224 = sphi 0, %s228
                  %p225 = scmp.ge.s32.totalorder %s224, 1
                  %s229 = sphi %s196, %s196
                  %s230 = sphi %s190, %s190
                $region46: #{res_cnn_forward.45} parent=42 // loop_header_branch
                  %227 = sbr.rel (%p225) target = $region50
                $region47: #{res_cnn_forward.45} parent=42 // loop_body
                  %v231 = vld [vmem:[%s229] sm:$0xff]
                  %232 = vst [vmem:[%s230] sm:$0xff] %v231
                  %v233 = vld [vmem:[%s229 + $0x20] sm:$0xff]
                  %234 = vst [vmem:[%s230 + $0x8] sm:$0xff] %v233
                  %v235 = vld [vmem:[%s229 + $0x40] sm:$0xff]
                  %236 = vst [vmem:[%s230 + $0x10] sm:$0xff] %v235
                  %v237 = vld [vmem:[%s229 + $0x60] sm:$0xff]
                  %238 = vst [vmem:[%s230 + $0x18] sm:$0xff] %v237
                $region48: #{res_cnn_forward.45} parent=42 // loop_footer
                  %s228 = sadd.s32 1, %s224
                $region49: #{res_cnn_forward.45} parent=42 // loop_footer_branch
                  %223 = sbr.rel target = $region45
                $region50: #{res_cnn_forward.45} parent=42 // loop_exit
                  _
              $region43: #{res_cnn_forward.45} parent=27 // pred_fallthru
                _
              // Predicated region
              $region51: #{res_cnn_forward.45} parent=27 // pred_check
                _
              $region52: #{res_cnn_forward.45} parent=27 // pred_check_branch
                %240 = sbr.rel target = $region54
              $region53: #{res_cnn_forward.45} parent=27 // pred_region
                _
              $region54: #{res_cnn_forward.45} parent=27 // pred_fallthru
                _
            $region28: #{res_cnn_forward.45} parent=23 // pred_fallthru
              _
            // Predicated region
            $region29: #{res_cnn_forward.45} parent=23 // pred_check
              _
            $region30: #{res_cnn_forward.45} parent=23 // pred_check_branch
              %202 = sbr.rel target = $region32
            $region31: #{res_cnn_forward.45} parent=23 // pred_region
              %s204 = ssub.s32 256, 1
              loop: start=0, step=1, limit=1
              $region33: #{res_cnn_forward.45} parent=31 // loop_pre_header
                _
              $region34: #{res_cnn_forward.45} parent=31 // loop_header
                %s206 = sphi 0, %s210
                %p207 = scmp.ge.s32.totalorder %s206, 1
                %s211 = sphi %s196, %s196
                %s212 = sphi %s190, %s190
              $region35: #{res_cnn_forward.45} parent=31 // loop_header_branch
                %209 = sbr.rel (%p207) target = $region39
              $region36: #{res_cnn_forward.45} parent=31 // loop_body
                %v213 = vld [vmem:[%s211] sm:%s204]
                %214 = vst [vmem:[%s212] sm:%s204] %v213
                %v215 = vld [vmem:[%s211 + $0x20] sm:%s204]
                %216 = vst [vmem:[%s212 + $0x8] sm:%s204] %v215
                %v217 = vld [vmem:[%s211 + $0x40] sm:%s204]
                %218 = vst [vmem:[%s212 + $0x10] sm:%s204] %v217
                %v219 = vld [vmem:[%s211 + $0x60] sm:%s204]
                %220 = vst [vmem:[%s212 + $0x18] sm:%s204] %v219
              $region37: #{res_cnn_forward.45} parent=31 // loop_footer
                %s210 = sadd.s32 1, %s206
              $region38: #{res_cnn_forward.45} parent=31 // loop_footer_branch
                %205 = sbr.rel target = $region34
              $region39: #{res_cnn_forward.45} parent=31 // loop_exit
                _
            $region32: #{res_cnn_forward.45} parent=23 // pred_fallthru
              _
          $region24: #{res_cnn_forward.45} parent=19 // pred_fallthru
            _
          %241 = vnop
        $region20: #{res_cnn_forward.45} parent=15 // pred_fallthru
          _
        // Predicated region
        $region55: #{res_cnn_forward.45} parent=15 // pred_check
          %p242 = pneg %p79
        $region56: #{res_cnn_forward.45} parent=15 // pred_check_branch
          %244 = sbr.rel (%p242) target = $region58
        $region57: #{res_cnn_forward.45} parent=15 // pred_region
          %s245 = sand.u32 %s69, 1
          %s246 = sand.u32 %s69, 1
          %s247 = smul.addr %s246, 256
          %s248 = scalar_lea.vmem [#allocation4], %s247
          %s249 = smul.u32 32, %s19
          %s250 = smul.u32 2, %s18
          %s251 = smul.addr %s249, 4
          %s252 = sadd.s32 %s250, %s251
          %s253 = smul.addr %s252, 4
          %s254 = scalar_lea.vmem %s1, %s253
          // Predicated region
          $region59: #{res_cnn_forward.45} parent=57 // pred_check
            _
          $region60: #{res_cnn_forward.45} parent=57 // pred_check_branch
            %256 = sbr.rel (0) target = $region62
          $region61: #{res_cnn_forward.45} parent=57 // pred_region
            // Predicated region
            $region63: #{res_cnn_forward.45} parent=61 // pred_check
              _
            $region64: #{res_cnn_forward.45} parent=61 // pred_check_branch
              %258 = sbr.rel (0) target = $region66
            $region65: #{res_cnn_forward.45} parent=61 // pred_region
              // Predicated region
              $region78: #{res_cnn_forward.45} parent=65 // pred_check
                _
              $region79: #{res_cnn_forward.45} parent=65 // pred_check_branch
                %336 = sbr.rel (0) target = $region81
              $region80: #{res_cnn_forward.45} parent=65 // pred_region
                loop: start=0, step=1, limit=1
                $region82: #{res_cnn_forward.45} parent=80 // loop_pre_header
                  _
                $region83: #{res_cnn_forward.45} parent=80 // loop_header
                  %s338 = sphi 0, %s342
                  %p339 = scmp.ge.s32.totalorder %s338, 1
                  %s343 = sphi %s254, %s254
                  %s344 = sphi %s248, %s248
                $region84: #{res_cnn_forward.45} parent=80 // loop_header_branch
                  %341 = sbr.rel (%p339) target = $region88
                $region85: #{res_cnn_forward.45} parent=80 // loop_body
                  %v345 = vld [vmem:[%s343] sm:$0xff]
                  %346 = vst [vmem:[%s344] sm:$0xff] %v345
                  %v347 = vld [vmem:[%s343 + $0x10] sm:$0xff]
                  %348 = vst [vmem:[%s344 + $0x8] sm:$0xff] %v347
                  %v349 = vld [vmem:[%s343 + $0x20] sm:$0xff]
                  %350 = vst [vmem:[%s344 + $0x10] sm:$0xff] %v349
                  %v351 = vld [vmem:[%s343 + $0x30] sm:$0xff]
                  %352 = vst [vmem:[%s344 + $0x18] sm:$0xff] %v351
                  %v353 = vld [vmem:[%s343 + $0x40] sm:$0xff]
                  %354 = vst [vmem:[%s344 + $0x20] sm:$0xff] %v353
                  %v355 = vld [vmem:[%s343 + $0x50] sm:$0xff]
                  %356 = vst [vmem:[%s344 + $0x28] sm:$0xff] %v355
                  %v357 = vld [vmem:[%s343 + $0x60] sm:$0xff]
                  %358 = vst [vmem:[%s344 + $0x30] sm:$0xff] %v357
                  %v359 = vld [vmem:[%s343 + $0x70] sm:$0xff]
                  %360 = vst [vmem:[%s344 + $0x38] sm:$0xff] %v359
                  %v361 = vld [vmem:[%s343 + $0x80] sm:$0xff]
                  %362 = vst [vmem:[%s344 + $0x40] sm:$0xff] %v361
                  %v363 = vld [vmem:[%s343 + $0x90] sm:$0xff]
                  %364 = vst [vmem:[%s344 + $0x48] sm:$0xff] %v363
                  %v365 = vld [vmem:[%s343 + $0xa0] sm:$0xff]
                  %366 = vst [vmem:[%s344 + $0x50] sm:$0xff] %v365
                  %v367 = vld [vmem:[%s343 + $0xb0] sm:$0xff]
                  %368 = vst [vmem:[%s344 + $0x58] sm:$0xff] %v367
                  %v369 = vld [vmem:[%s343 + $0xc0] sm:$0xff]
                  %370 = vst [vmem:[%s344 + $0x60] sm:$0xff] %v369
                  %v371 = vld [vmem:[%s343 + $0xd0] sm:$0xff]
                  %372 = vst [vmem:[%s344 + $0x68] sm:$0xff] %v371
                  %v373 = vld [vmem:[%s343 + $0xe0] sm:$0xff]
                  %374 = vst [vmem:[%s344 + $0x70] sm:$0xff] %v373
                  %v375 = vld [vmem:[%s343 + $0xf0] sm:$0xff]
                  %376 = vst [vmem:[%s344 + $0x78] sm:$0xff] %v375
                  %v377 = vld [vmem:[%s343 + $0x100] sm:$0xff]
                  %378 = vst [vmem:[%s344 + $0x80] sm:$0xff] %v377
                  %v379 = vld [vmem:[%s343 + $0x110] sm:$0xff]
                  %380 = vst [vmem:[%s344 + $0x88] sm:$0xff] %v379
                  %v381 = vld [vmem:[%s343 + $0x120] sm:$0xff]
                  %382 = vst [vmem:[%s344 + $0x90] sm:$0xff] %v381
                  %v383 = vld [vmem:[%s343 + $0x130] sm:$0xff]
                  %384 = vst [vmem:[%s344 + $0x98] sm:$0xff] %v383
                  %v385 = vld [vmem:[%s343 + $0x140] sm:$0xff]
                  %386 = vst [vmem:[%s344 + $0xa0] sm:$0xff] %v385
                  %v387 = vld [vmem:[%s343 + $0x150] sm:$0xff]
                  %388 = vst [vmem:[%s344 + $0xa8] sm:$0xff] %v387
                  %v389 = vld [vmem:[%s343 + $0x160] sm:$0xff]
                  %390 = vst [vmem:[%s344 + $0xb0] sm:$0xff] %v389
                  %v391 = vld [vmem:[%s343 + $0x170] sm:$0xff]
                  %392 = vst [vmem:[%s344 + $0xb8] sm:$0xff] %v391
                  %v393 = vld [vmem:[%s343 + $0x180] sm:$0xff]
                  %394 = vst [vmem:[%s344 + $0xc0] sm:$0xff] %v393
                  %v395 = vld [vmem:[%s343 + $0x190] sm:$0xff]
                  %396 = vst [vmem:[%s344 + $0xc8] sm:$0xff] %v395
                  %v397 = vld [vmem:[%s343 + $0x1a0] sm:$0xff]
                  %398 = vst [vmem:[%s344 + $0xd0] sm:$0xff] %v397
                  %v399 = vld [vmem:[%s343 + $0x1b0] sm:$0xff]
                  %400 = vst [vmem:[%s344 + $0xd8] sm:$0xff] %v399
                  %v401 = vld [vmem:[%s343 + $0x1c0] sm:$0xff]
                  %402 = vst [vmem:[%s344 + $0xe0] sm:$0xff] %v401
                  %v403 = vld [vmem:[%s343 + $0x1d0] sm:$0xff]
                  %404 = vst [vmem:[%s344 + $0xe8] sm:$0xff] %v403
                  %v405 = vld [vmem:[%s343 + $0x1e0] sm:$0xff]
                  %406 = vst [vmem:[%s344 + $0xf0] sm:$0xff] %v405
                  %v407 = vld [vmem:[%s343 + $0x1f0] sm:$0xff]
                  %408 = vst [vmem:[%s344 + $0xf8] sm:$0xff] %v407
                $region86: #{res_cnn_forward.45} parent=80 // loop_footer
                  %s342 = sadd.s32 1, %s338
                $region87: #{res_cnn_forward.45} parent=80 // loop_footer_branch
                  %337 = sbr.rel target = $region83
                $region88: #{res_cnn_forward.45} parent=80 // loop_exit
                  _
              $region81: #{res_cnn_forward.45} parent=65 // pred_fallthru
                _
              // Predicated region
              $region89: #{res_cnn_forward.45} parent=65 // pred_check
                _
              $region90: #{res_cnn_forward.45} parent=65 // pred_check_branch
                %410 = sbr.rel target = $region92
              $region91: #{res_cnn_forward.45} parent=65 // pred_region
                _
              $region92: #{res_cnn_forward.45} parent=65 // pred_fallthru
                _
            $region66: #{res_cnn_forward.45} parent=61 // pred_fallthru
              _
            // Predicated region
            $region67: #{res_cnn_forward.45} parent=61 // pred_check
              _
            $region68: #{res_cnn_forward.45} parent=61 // pred_check_branch
              %260 = sbr.rel target = $region70
            $region69: #{res_cnn_forward.45} parent=61 // pred_region
              %s262 = ssub.s32 256, 1
              loop: start=0, step=1, limit=1
              $region71: #{res_cnn_forward.45} parent=69 // loop_pre_header
                _
              $region72: #{res_cnn_forward.45} parent=69 // loop_header
                %s264 = sphi 0, %s268
                %p265 = scmp.ge.s32.totalorder %s264, 1
                %s269 = sphi %s254, %s254
                %s270 = sphi %s248, %s248
              $region73: #{res_cnn_forward.45} parent=69 // loop_header_branch
                %267 = sbr.rel (%p265) target = $region77
              $region74: #{res_cnn_forward.45} parent=69 // loop_body
                %v271 = vld [vmem:[%s269] sm:%s262]
                %272 = vst [vmem:[%s270] sm:%s262] %v271
                %v273 = vld [vmem:[%s269 + $0x10] sm:%s262]
                %274 = vst [vmem:[%s270 + $0x8] sm:%s262] %v273
                %v275 = vld [vmem:[%s269 + $0x20] sm:%s262]
                %276 = vst [vmem:[%s270 + $0x10] sm:%s262] %v275
                %v277 = vld [vmem:[%s269 + $0x30] sm:%s262]
                %278 = vst [vmem:[%s270 + $0x18] sm:%s262] %v277
                %v279 = vld [vmem:[%s269 + $0x40] sm:%s262]
                %280 = vst [vmem:[%s270 + $0x20] sm:%s262] %v279
                %v281 = vld [vmem:[%s269 + $0x50] sm:%s262]
                %282 = vst [vmem:[%s270 + $0x28] sm:%s262] %v281
                %v283 = vld [vmem:[%s269 + $0x60] sm:%s262]
                %284 = vst [vmem:[%s270 + $0x30] sm:%s262] %v283
                %v285 = vld [vmem:[%s269 + $0x70] sm:%s262]
                %286 = vst [vmem:[%s270 + $0x38] sm:%s262] %v285
                %v287 = vld [vmem:[%s269 + $0x80] sm:%s262]
                %288 = vst [vmem:[%s270 + $0x40] sm:%s262] %v287
                %v289 = vld [vmem:[%s269 + $0x90] sm:%s262]
                %290 = vst [vmem:[%s270 + $0x48] sm:%s262] %v289
                %v291 = vld [vmem:[%s269 + $0xa0] sm:%s262]
                %292 = vst [vmem:[%s270 + $0x50] sm:%s262] %v291
                %v293 = vld [vmem:[%s269 + $0xb0] sm:%s262]
                %294 = vst [vmem:[%s270 + $0x58] sm:%s262] %v293
                %v295 = vld [vmem:[%s269 + $0xc0] sm:%s262]
                %296 = vst [vmem:[%s270 + $0x60] sm:%s262] %v295
                %v297 = vld [vmem:[%s269 + $0xd0] sm:%s262]
                %298 = vst [vmem:[%s270 + $0x68] sm:%s262] %v297
                %v299 = vld [vmem:[%s269 + $0xe0] sm:%s262]
                %300 = vst [vmem:[%s270 + $0x70] sm:%s262] %v299
                %v301 = vld [vmem:[%s269 + $0xf0] sm:%s262]
                %302 = vst [vmem:[%s270 + $0x78] sm:%s262] %v301
                %v303 = vld [vmem:[%s269 + $0x100] sm:%s262]
                %304 = vst [vmem:[%s270 + $0x80] sm:%s262] %v303
                %v305 = vld [vmem:[%s269 + $0x110] sm:%s262]
                %306 = vst [vmem:[%s270 + $0x88] sm:%s262] %v305
                %v307 = vld [vmem:[%s269 + $0x120] sm:%s262]
                %308 = vst [vmem:[%s270 + $0x90] sm:%s262] %v307
                %v309 = vld [vmem:[%s269 + $0x130] sm:%s262]
                %310 = vst [vmem:[%s270 + $0x98] sm:%s262] %v309
                %v311 = vld [vmem:[%s269 + $0x140] sm:%s262]
                %312 = vst [vmem:[%s270 + $0xa0] sm:%s262] %v311
                %v313 = vld [vmem:[%s269 + $0x150] sm:%s262]
                %314 = vst [vmem:[%s270 + $0xa8] sm:%s262] %v313
                %v315 = vld [vmem:[%s269 + $0x160] sm:%s262]
                %316 = vst [vmem:[%s270 + $0xb0] sm:%s262] %v315
                %v317 = vld [vmem:[%s269 + $0x170] sm:%s262]
                %318 = vst [vmem:[%s270 + $0xb8] sm:%s262] %v317
                %v319 = vld [vmem:[%s269 + $0x180] sm:%s262]
                %320 = vst [vmem:[%s270 + $0xc0] sm:%s262] %v319
                %v321 = vld [vmem:[%s269 + $0x190] sm:%s262]
                %322 = vst [vmem:[%s270 + $0xc8] sm:%s262] %v321
                %v323 = vld [vmem:[%s269 + $0x1a0] sm:%s262]
                %324 = vst [vmem:[%s270 + $0xd0] sm:%s262] %v323
                %v325 = vld [vmem:[%s269 + $0x1b0] sm:%s262]
                %326 = vst [vmem:[%s270 + $0xd8] sm:%s262] %v325
                %v327 = vld [vmem:[%s269 + $0x1c0] sm:%s262]
                %328 = vst [vmem:[%s270 + $0xe0] sm:%s262] %v327
                %v329 = vld [vmem:[%s269 + $0x1d0] sm:%s262]
                %330 = vst [vmem:[%s270 + $0xe8] sm:%s262] %v329
                %v331 = vld [vmem:[%s269 + $0x1e0] sm:%s262]
                %332 = vst [vmem:[%s270 + $0xf0] sm:%s262] %v331
                %v333 = vld [vmem:[%s269 + $0x1f0] sm:%s262]
                %334 = vst [vmem:[%s270 + $0xf8] sm:%s262] %v333
              $region75: #{res_cnn_forward.45} parent=69 // loop_footer
                %s268 = sadd.s32 1, %s264
              $region76: #{res_cnn_forward.45} parent=69 // loop_footer_branch
                %263 = sbr.rel target = $region72
              $region77: #{res_cnn_forward.45} parent=69 // loop_exit
                _
            $region70: #{res_cnn_forward.45} parent=61 // pred_fallthru
              _
          $region62: #{res_cnn_forward.45} parent=57 // pred_fallthru
            _
          %411 = vnop
        $region58: #{res_cnn_forward.45} parent=15 // pred_fallthru
          _
        // Predicated region
        $region93: #{res_cnn_forward.45} parent=15 // pred_check
          %p412 = pneg %p105
        $region94: #{res_cnn_forward.45} parent=15 // pred_check_branch
          %414 = sbr.rel (%p412) target = $region96
        $region95: #{res_cnn_forward.45} parent=15 // pred_region
          %s415 = smul.u32 2, %s18
          %p416 = scmp.lt.s32.totalorder %s415, 3
          %s417 = scalar_select %p416, %s415, 3
          %s418 = scalar_lea.vmem %s2, %s417
          %s419 = smul.u32 2, %s18
        $region96: #{res_cnn_forward.45} parent=15 // pred_fallthru
          _
        // Predicated region
        $region97: #{res_cnn_forward.45} parent=15 // pred_check
          %p420 = pneg %p131
        $region98: #{res_cnn_forward.45} parent=15 // pred_check_branch
          %422 = sbr.rel (%p420) target = $region100
        $region99: #{res_cnn_forward.45} parent=15 // pred_region
          %s423 = smul.u32 2, %s18
          %p424 = scmp.lt.s32.totalorder %s423, 3
          %s425 = scalar_select %p424, %s423, 3
          %s426 = scalar_lea.vmem %s3, %s425
          %s427 = smul.u32 2, %s18
        $region100: #{res_cnn_forward.45} parent=15 // pred_fallthru
          _
      $region16: #{res_cnn_forward.45} parent=5 // pred_fallthru
        _
      %p428 = scmp.le.s32.totalorder 1, %s10
      %p429 = scmp.lt.s32.totalorder %s10, 9
      %p430 = pnand %p428, %p429
      %p431 = pneg %p430
      // Predicated region
      $region101: #{res_cnn_forward.45} parent=5 // pred_check
        _
      $region102: #{res_cnn_forward.45} parent=5 // pred_check_branch
        %433 = sbr.rel (%p430) target = $region104
      $region103: #{res_cnn_forward.45} parent=5 // pred_region
        %s434 = ssub.s32 %s10, 1
        %s435 = sand.u32 %s44, 1
        %s436 = sand.u32 %s44, 1
        %s437 = smul.addr %s436, 32
        %s438 = scalar_lea.vmem [#allocation3], %s437
        // Predicated region
        $region105: #{res_cnn_forward.45} parent=103 // pred_check
          %p439 = pneg %p57
        $region106: #{res_cnn_forward.45} parent=103 // pred_check_branch
          %441 = sbr.rel (%p439) target = $region108
        $region107: #{res_cnn_forward.45} parent=103 // pred_region
          _
        $region108: #{res_cnn_forward.45} parent=103 // pred_fallthru
          _
        %s442 = sand.u32 %s72, 1
        %s443 = sand.u32 %s72, 1
        %s444 = smul.addr %s443, 256
        %s445 = scalar_lea.vmem [#allocation4], %s444
        // Predicated region
        $region109: #{res_cnn_forward.45} parent=103 // pred_check
          %p446 = pneg %p85
        $region110: #{res_cnn_forward.45} parent=103 // pred_check_branch
          %448 = sbr.rel (%p446) target = $region112
        $region111: #{res_cnn_forward.45} parent=103 // pred_region
          _
        $region112: #{res_cnn_forward.45} parent=103 // pred_fallthru
          _
        %s449 = sand.u32 %s44, 1
        %s450 = sand.u32 %s44, 1
        %s451 = smul.addr %s450, 32
        %s452 = scalar_lea.vmem [#allocation3], %s451
        %p453 = pneg %p57
        %p454 = pneg %p54
        %s455 = sand.u32 %s72, 1
        %s456 = sand.u32 %s72, 1
        %s457 = smul.addr %s456, 256
        %s458 = scalar_lea.vmem [#allocation4], %s457
        %p459 = pneg %p85
        %p460 = pneg %p82
        %s461 = smul.u32 2, %s21
        %p462 = scmp.lt.s32.totalorder %s461, 3
        %s463 = scalar_select %p462, %s461, 3
        %s464 = scalar_lea.vmem %s2, %s463
        %p465 = pneg %p111
        %p466 = pneg %p108
        %s467 = smul.u32 2, %s21
        %p468 = scmp.lt.s32.totalorder %s467, 3
        %s469 = scalar_select %p468, %s467, 3
        %s470 = scalar_lea.vmem %s3, %s469
        %p471 = pneg %p137
        %p472 = pneg %p134
        %p473 = pneg %p165
        %p474 = pneg %p162
        %s475 = sand.u32 %s152, 1
        %s476 = sand.u32 %s152, 1
        %s477 = smul.addr %s476, 32
        %s478 = scalar_lea.vmem [#allocation5], %s477
        %s479 = smul.u32 4, %s20
        %s480 = smul.u32 2, %s22
        %s481 = smul.u32 32, %s22
        %s482 = smul.u32 2, %s21
        %s483 = smul.u32 2, %s21
        %p484 = scmp.lt.s32.totalorder %s483, 3
        %s485 = scalar_select %p484, %s483, 3
        %s486 = scalar_lea.vmem %s2, %s485
        %s487 = smul.u32 2, %s21
        %s488 = smul.u32 2, %s21
        %p489 = scmp.lt.s32.totalorder %s488, 3
        %s490 = scalar_select %p489, %s488, 3
        %s491 = scalar_lea.vmem %s3, %s490
        %s492 = smul.u32 2, %s21
        %s493 = smul.u32 4, %s20
        %s494 = smul.u32 2, %s21
        %p495 = scmp.eq.s32.totalorder %s22, 0
        // Predicated region
        $region113: #{res_cnn_forward.45} parent=103 // pred_check
          %p496 = pneg %p495
        $region114: #{res_cnn_forward.45} parent=103 // pred_check_branch
          %498 = sbr.rel (%p496) target = $region116
        $region115: #{res_cnn_forward.45} parent=103 // pred_region
          %499 = vst [vmem:[#allocation2] sm:$0xff] 0.0
          %500 = vst [vmem:[#allocation2 + $0x8] sm:$0xff] 0.0
          %501 = vst [vmem:[#allocation2 + $0x10] sm:$0xff] 0.0
          %502 = vst [vmem:[#allocation2 + $0x18] sm:$0xff] 0.0
          %503 = vst [vmem:[#allocation2 + $0x20] sm:$0xff] 0.0
          %504 = vst [vmem:[#allocation2 + $0x28] sm:$0xff] 0.0
          %505 = vst [vmem:[#allocation2 + $0x30] sm:$0xff] 0.0
          %506 = vst [vmem:[#allocation2 + $0x38] sm:$0xff] 0.0
        $region116: #{res_cnn_forward.45} parent=103 // pred_fallthru
          _
        %v507 = vld [vmem:[#allocation2] sm:$0xff]
        %v508 = vld [vmem:[#allocation2 + $0x8] sm:$0xff]
        %v509 = vld [vmem:[#allocation2 + $0x10] sm:$0xff]
        %v510 = vld [vmem:[#allocation2 + $0x18] sm:$0xff]
        %v511 = vld [vmem:[#allocation2 + $0x20] sm:$0xff]
        %v512 = vld [vmem:[#allocation2 + $0x28] sm:$0xff]
        %v513 = vld [vmem:[#allocation2 + $0x30] sm:$0xff]
        %v514 = vld [vmem:[#allocation2 + $0x38] sm:$0xff]
        %v515 = vld [vmem:[%s438] sm:$0xff]
        %v516 = vld [vmem:[%s438 + $0x8] sm:$0xff]
        %v517 = vld [vmem:[%s438 + $0x10] sm:$0xff]
        %v518 = vld [vmem:[%s438 + $0x18] sm:$0xff]
        %v519 = vld [vmem:[%s445] sm:$0xff]
        %v520 = vld [vmem:[%s445 + $0x8] sm:$0xff]
        %v521 = vld [vmem:[%s445 + $0x10] sm:$0xff]
        %v522 = vld [vmem:[%s445 + $0x18] sm:$0xff]
        %v523 = vld [vmem:[%s445 + $0x20] sm:$0xff]
        %v524 = vld [vmem:[%s445 + $0x28] sm:$0xff]
        %v525 = vld [vmem:[%s445 + $0x30] sm:$0xff]
        %v526 = vld [vmem:[%s445 + $0x38] sm:$0xff]
        %v527 = vld [vmem:[%s445 + $0x40] sm:$0xff]
        %v528 = vld [vmem:[%s445 + $0x48] sm:$0xff]
        %v529 = vld [vmem:[%s445 + $0x50] sm:$0xff]
        %v530 = vld [vmem:[%s445 + $0x58] sm:$0xff]
        %v531 = vld [vmem:[%s445 + $0x60] sm:$0xff]
        %v532 = vld [vmem:[%s445 + $0x68] sm:$0xff]
        %v533 = vld [vmem:[%s445 + $0x70] sm:$0xff]
        %v534 = vld [vmem:[%s445 + $0x78] sm:$0xff]
        %v535 = vld [vmem:[%s445 + $0x80] sm:$0xff]
        %v536 = vld [vmem:[%s445 + $0x88] sm:$0xff]
        %v537 = vld [vmem:[%s445 + $0x90] sm:$0xff]
        %v538 = vld [vmem:[%s445 + $0x98] sm:$0xff]
        %v539 = vld [vmem:[%s445 + $0xa0] sm:$0xff]
        %v540 = vld [vmem:[%s445 + $0xa8] sm:$0xff]
        %v541 = vld [vmem:[%s445 + $0xb0] sm:$0xff]
        %v542 = vld [vmem:[%s445 + $0xb8] sm:$0xff]
        %v543 = vld [vmem:[%s445 + $0xc0] sm:$0xff]
        %v544 = vld [vmem:[%s445 + $0xc8] sm:$0xff]
        %v545 = vld [vmem:[%s445 + $0xd0] sm:$0xff]
        %v546 = vld [vmem:[%s445 + $0xd8] sm:$0xff]
        %v547 = vld [vmem:[%s445 + $0xe0] sm:$0xff]
        %v548 = vld [vmem:[%s445 + $0xe8] sm:$0xff]
        %v549 = vld [vmem:[%s445 + $0xf0] sm:$0xff]
        %v550 = vld [vmem:[%s445 + $0xf8] sm:$0xff]
        %v555 = vunpack.c.l.b16 %v515
        %v556 = vunpack.c.h.b16 %v515
        %v557 = vunpack.c.l.b16 %v516
        %v558 = vunpack.c.h.b16 %v516
        %v559 = vunpack.c.l.b16 %v517
        %v560 = vunpack.c.h.b16 %v517
        %v561 = vunpack.c.l.b16 %v518
        %v562 = vunpack.c.h.b16 %v518
        %v563 = vpack.c.b16 %v557, %v555
        %v564 = vpack.c.b16 %v558, %v556
        %v565 = vpack.c.b16 %v561, %v559
        %v566 = vpack.c.b16 %v562, %v560
        %v603 = vunpack.c.l.b16 %v519
        %v604 = vunpack.c.h.b16 %v519
        %v605 = vunpack.c.l.b16 %v520
        %v606 = vunpack.c.h.b16 %v520
        %v607 = vunpack.c.l.b16 %v521
        %v608 = vunpack.c.h.b16 %v521
        %v609 = vunpack.c.l.b16 %v522
        %v610 = vunpack.c.h.b16 %v522
        %v611 = vunpack.c.l.b16 %v523
        %v612 = vunpack.c.h.b16 %v523
        %v613 = vunpack.c.l.b16 %v524
        %v614 = vunpack.c.h.b16 %v524
        %v615 = vunpack.c.l.b16 %v525
        %v616 = vunpack.c.h.b16 %v525
        %v617 = vunpack.c.l.b16 %v526
        %v618 = vunpack.c.h.b16 %v526
        %v619 = vunpack.c.l.b16 %v527
        %v620 = vunpack.c.h.b16 %v527
        %v621 = vunpack.c.l.b16 %v528
        %v622 = vunpack.c.h.b16 %v528
        %v623 = vunpack.c.l.b16 %v529
        %v624 = vunpack.c.h.b16 %v529
        %v625 = vunpack.c.l.b16 %v530
        %v626 = vunpack.c.h.b16 %v530
        %v627 = vunpack.c.l.b16 %v531
        %v628 = vunpack.c.h.b16 %v531
        %v629 = vunpack.c.l.b16 %v532
        %v630 = vunpack.c.h.b16 %v532
        %v631 = vunpack.c.l.b16 %v533
        %v632 = vunpack.c.h.b16 %v533
        %v633 = vunpack.c.l.b16 %v534
        %v634 = vunpack.c.h.b16 %v534
        %v635 = vunpack.c.l.b16 %v535
        %v636 = vunpack.c.h.b16 %v535
        %v637 = vunpack.c.l.b16 %v536
        %v638 = vunpack.c.h.b16 %v536
        %v639 = vunpack.c.l.b16 %v537
        %v640 = vunpack.c.h.b16 %v537
        %v641 = vunpack.c.l.b16 %v538
        %v642 = vunpack.c.h.b16 %v538
        %v643 = vunpack.c.l.b16 %v539
        %v644 = vunpack.c.h.b16 %v539
        %v645 = vunpack.c.l.b16 %v540
        %v646 = vunpack.c.h.b16 %v540
        %v647 = vunpack.c.l.b16 %v541
        %v648 = vunpack.c.h.b16 %v541
        %v649 = vunpack.c.l.b16 %v542
        %v650 = vunpack.c.h.b16 %v542
        %v651 = vunpack.c.l.b16 %v543
        %v652 = vunpack.c.h.b16 %v543
        %v653 = vunpack.c.l.b16 %v544
        %v654 = vunpack.c.h.b16 %v544
        %v655 = vunpack.c.l.b16 %v545
        %v656 = vunpack.c.h.b16 %v545
        %v657 = vunpack.c.l.b16 %v546
        %v658 = vunpack.c.h.b16 %v546
        %v659 = vunpack.c.l.b16 %v547
        %v660 = vunpack.c.h.b16 %v547
        %v661 = vunpack.c.l.b16 %v548
        %v662 = vunpack.c.h.b16 %v548
        %v663 = vunpack.c.l.b16 %v549
        %v664 = vunpack.c.h.b16 %v549
        %v665 = vunpack.c.l.b16 %v550
        %v666 = vunpack.c.h.b16 %v550
        %v667 = vpack.c.b16 %v605, %v603
        %v668 = vpack.c.b16 %v606, %v604
        %v669 = vpack.c.b16 %v609, %v607
        %v670 = vpack.c.b16 %v610, %v608
        %v671 = vpack.c.b16 %v613, %v611
        %v672 = vpack.c.b16 %v614, %v612
        %v673 = vpack.c.b16 %v617, %v615
        %v674 = vpack.c.b16 %v618, %v616
        %v675 = vpack.c.b16 %v621, %v619
        %v676 = vpack.c.b16 %v622, %v620
        %v677 = vpack.c.b16 %v625, %v623
        %v678 = vpack.c.b16 %v626, %v624
        %v679 = vpack.c.b16 %v629, %v627
        %v680 = vpack.c.b16 %v630, %v628
        %v681 = vpack.c.b16 %v633, %v631
        %v682 = vpack.c.b16 %v634, %v632
        %v683 = vpack.c.b16 %v637, %v635
        %v684 = vpack.c.b16 %v638, %v636
        %v685 = vpack.c.b16 %v641, %v639
        %v686 = vpack.c.b16 %v642, %v640
        %v687 = vpack.c.b16 %v645, %v643
        %v688 = vpack.c.b16 %v646, %v644
        %v689 = vpack.c.b16 %v649, %v647
        %v690 = vpack.c.b16 %v650, %v648
        %v691 = vpack.c.b16 %v653, %v651
        %v692 = vpack.c.b16 %v654, %v652
        %v693 = vpack.c.b16 %v657, %v655
        %v694 = vpack.c.b16 %v658, %v656
        %v695 = vpack.c.b16 %v661, %v659
        %v696 = vpack.c.b16 %v662, %v660
        %v697 = vpack.c.b16 %v665, %v663
        %v698 = vpack.c.b16 %v666, %v664
        %731 = vmatprep.subr.bf16.mxu0 %v682
        %732 = vmatpush1.bf16.msra.mxu0 %v681
        %733 = vmatprep.subr.bf16.mxu0 %v680
        %734 = vmatpush1.bf16.msra.mxu0 %v679
        %735 = vmatprep.subr.bf16.mxu0 %v678
        %736 = vmatpush1.bf16.msra.mxu0 %v677
        %737 = vmatprep.subr.bf16.mxu0 %v676
        %738 = vmatpush1.bf16.msra.mxu0 %v675
        %739 = vmatprep.subr.bf16.mxu0 %v674
        %740 = vmatpush1.bf16.msra.mxu0 %v673
        %741 = vmatprep.subr.bf16.mxu0 %v672
        %742 = vmatpush1.bf16.msra.mxu0 %v671
        %743 = vmatprep.subr.bf16.mxu0 %v670
        %744 = vmatpush1.bf16.msra.mxu0 %v669
        %745 = vmatprep.subr.bf16.mxu0 %v668
        %746 = vmatpush1.bf16.msra.mxu0 %v667
        %747 = vmatprep.subr.bf16.mxu0 %v698
        %748 = vmatpush2.bf16.msra.mxu0 %v697
        %749 = vmatprep.subr.bf16.mxu0 %v696
        %750 = vmatpush2.bf16.msra.mxu0 %v695
        %751 = vmatprep.subr.bf16.mxu0 %v694
        %752 = vmatpush2.bf16.msra.mxu0 %v693
        %753 = vmatprep.subr.bf16.mxu0 %v692
        %754 = vmatpush2.bf16.msra.mxu0 %v691
        %755 = vmatprep.subr.bf16.mxu0 %v690
        %756 = vmatpush2.bf16.msra.mxu0 %v689
        %757 = vmatprep.subr.bf16.mxu0 %v688
        %758 = vmatpush2.bf16.msra.mxu0 %v687
        %759 = vmatprep.subr.bf16.mxu0 %v686
        %760 = vmatpush2.bf16.msra.mxu0 %v685
        %761 = vmatprep.subr.bf16.mxu0 %v684
        %762 = vmatpush2.bf16.msra.mxu0 %v683
        %763 = vmatprep.mubr.bf16.mxu0 %v564
        %764 = vmatmul.mubr.bf16.gmra.mxu0 %v563
        %v765 = vpop.f32.mrf.mxu0
        %v766 = vadd.f32 0.0, %v765
        %v767 = vpop.f32.mrf.mxu0
        %v768 = vadd.f32 0.0, %v767
        %v769 = vpop.f32.mrf.mxu0
        %v770 = vadd.f32 0.0, %v769
        %v771 = vpop.f32.mrf.mxu0
        %v772 = vadd.f32 0.0, %v771
        %773 = vmatprep.mubr.bf16.mxu0 %v566
        %774 = vmatmul.mubr.bf16.gmra.mxu0 %v565
        %v775 = vpop.f32.mrf.mxu0
        %v776 = vadd.f32 0.0, %v775
        %v777 = vpop.f32.mrf.mxu0
        %v778 = vadd.f32 0.0, %v777
        %v779 = vpop.f32.mrf.mxu0
        %v780 = vadd.f32 0.0, %v779
        %v781 = vpop.f32.mrf.mxu0
        %v782 = vadd.f32 0.0, %v781
        %783 = vdwg.mxu0
        %v784 = vadd.f32 %v507, %v766
        %v785 = vadd.f32 %v508, %v768
        %v786 = vadd.f32 %v509, %v770
        %v787 = vadd.f32 %v510, %v772
        %v788 = vadd.f32 %v511, %v776
        %v789 = vadd.f32 %v512, %v778
        %v790 = vadd.f32 %v513, %v780
        %v791 = vadd.f32 %v514, %v782
        %792 = vst [vmem:[#allocation2] sm:$0xff] %v784
        %793 = vst [vmem:[#allocation2 + $0x8] sm:$0xff] %v785
        %794 = vst [vmem:[#allocation2 + $0x10] sm:$0xff] %v786
        %795 = vst [vmem:[#allocation2 + $0x18] sm:$0xff] %v787
        %796 = vst [vmem:[#allocation2 + $0x20] sm:$0xff] %v788
        %797 = vst [vmem:[#allocation2 + $0x28] sm:$0xff] %v789
        %798 = vst [vmem:[#allocation2 + $0x30] sm:$0xff] %v790
        %799 = vst [vmem:[#allocation2 + $0x38] sm:$0xff] %v791
        %p800 = scmp.eq.s32.totalorder %s22, 3
        // Predicated region
        $region117: #{res_cnn_forward.45} parent=103 // pred_check
          %p801 = pneg %p800
        $region118: #{res_cnn_forward.45} parent=103 // pred_check_branch
          %803 = sbr.rel (%p801) target = $region120
        $region119: #{res_cnn_forward.45} parent=103 // pred_region
          %v804 = vld [vmem:[#allocation2] sm:$0xff]
          %v805 = vld [vmem:[#allocation2 + $0x8] sm:$0xff]
          %v806 = vld [vmem:[#allocation2 + $0x10] sm:$0xff]
          %v807 = vld [vmem:[#allocation2 + $0x18] sm:$0xff]
          %v808 = vld [vmem:[#allocation2 + $0x20] sm:$0xff]
          %v809 = vld [vmem:[#allocation2 + $0x28] sm:$0xff]
          %v810 = vld [vmem:[#allocation2 + $0x30] sm:$0xff]
          %v811 = vld [vmem:[#allocation2 + $0x38] sm:$0xff]
          %v812 = vld [vmem:[%s486] sm:$0x3]
          %v814 = vlaneseq
          %v815 = vshrl.u32 %v814, 7
          %v816 = vsub.s32 0, %v815
          %v817 = vrot.slane %v812, %v816
          %v818 = vlaneseq
          %v819 = vshrl.u32 %v818, 7
          %v820 = vsub.s32 1, %v819
          %v821 = vrot.slane %v812, %v820
          %v824 = vmul.f32 %v804, %v817
          %v825 = vmul.f32 %v805, %v821
          %v826 = vmul.f32 %v806, %v817
          %v827 = vmul.f32 %v807, %v821
          %v828 = vmul.f32 %v808, %v817
          %v829 = vmul.f32 %v809, %v821
          %v830 = vmul.f32 %v810, %v817
          %v831 = vmul.f32 %v811, %v821
          %v832 = vld [vmem:[%s491] sm:$0x3]
          %v834 = vlaneseq
          %v835 = vshrl.u32 %v834, 7
          %v836 = vsub.s32 0, %v835
          %v837 = vrot.slane %v832, %v836
          %v838 = vlaneseq
          %v839 = vshrl.u32 %v838, 7
          %v840 = vsub.s32 1, %v839
          %v841 = vrot.slane %v832, %v840
          %v844 = vadd.f32 %v824, %v837
          %v845 = vadd.f32 %v825, %v841
          %v846 = vadd.f32 %v826, %v837
          %v847 = vadd.f32 %v827, %v841
          %v848 = vadd.f32 %v828, %v837
          %v849 = vadd.f32 %v829, %v841
          %v850 = vadd.f32 %v830, %v837
          %v851 = vadd.f32 %v831, %v841
          %v852 = vmax.f32 %v844, 0.0
          %v853 = vmax.f32 %v845, 0.0
          %v854 = vmax.f32 %v846, 0.0
          %v855 = vmax.f32 %v847, 0.0
          %v856 = vmax.f32 %v848, 0.0
          %v857 = vmax.f32 %v849, 0.0
          %v858 = vmax.f32 %v850, 0.0
          %v859 = vmax.f32 %v851, 0.0
          %v860 = vpack.c.bf16 %v854, %v852
          %v861 = vpack.c.bf16 %v855, %v853
          %v862 = vpack.c.bf16 %v858, %v856
          %v863 = vpack.c.bf16 %v859, %v857
          %v868 = vunpack.c.l.b16 %v860
          %v869 = vunpack.c.l.b16 %v861
          %v870 = vunpack.c.h.b16 %v860
          %v871 = vunpack.c.h.b16 %v861
          %v872 = vunpack.c.l.b16 %v862
          %v873 = vunpack.c.l.b16 %v863
          %v874 = vunpack.c.h.b16 %v862
          %v875 = vunpack.c.h.b16 %v863
          %v876 = vpack.c.b16 %v869, %v868
          %v877 = vpack.c.b16 %v871, %v870
          %v878 = vpack.c.b16 %v873, %v872
          %v879 = vpack.c.b16 %v875, %v874
          %884 = vst [vmem:[%s478] sm:$0xff] %v876
          %885 = vst [vmem:[%s478 + $0x8] sm:$0xff] %v877
          %886 = vst [vmem:[%s478 + $0x10] sm:$0xff] %v878
          %887 = vst [vmem:[%s478 + $0x18] sm:$0xff] %v879
        $region120: #{res_cnn_forward.45} parent=103 // pred_fallthru
          _
        %s888 = sand.u32 %s152, 1
        %s889 = sand.u32 %s152, 1
        %s890 = smul.addr %s889, 32
        %s891 = scalar_lea.vmem [#allocation5], %s890
        // Predicated region
        $region121: #{res_cnn_forward.45} parent=103 // pred_check
          %p892 = pneg %p162
        $region122: #{res_cnn_forward.45} parent=103 // pred_check_branch
          %894 = sbr.rel (%p892) target = $region124
        $region123: #{res_cnn_forward.45} parent=103 // pred_region
          %s895 = smul.u32 4, %s20
          %s896 = smul.u32 2, %s21
          %s897 = smul.addr %s895, 4
          %s898 = sadd.s32 %s896, %s897
          %s899 = smul.addr %s898, 4
          %s900 = scalar_lea.vmem %s4, %s899
          // Predicated region
          $region125: #{res_cnn_forward.45} parent=123 // pred_check
            _
          $region126: #{res_cnn_forward.45} parent=123 // pred_check_branch
            %902 = sbr.rel (0) target = $region128
          $region127: #{res_cnn_forward.45} parent=123 // pred_region
            // Predicated region
            $region129: #{res_cnn_forward.45} parent=127 // pred_check
              _
            $region130: #{res_cnn_forward.45} parent=127 // pred_check_branch
              %904 = sbr.rel (0) target = $region132
            $region131: #{res_cnn_forward.45} parent=127 // pred_region
              // Predicated region
              $region144: #{res_cnn_forward.45} parent=131 // pred_check
                _
              $region145: #{res_cnn_forward.45} parent=131 // pred_check_branch
                %926 = sbr.rel (0) target = $region147
              $region146: #{res_cnn_forward.45} parent=131 // pred_region
                loop: start=0, step=1, limit=1
                $region148: #{res_cnn_forward.45} parent=146 // loop_pre_header
                  _
                $region149: #{res_cnn_forward.45} parent=146 // loop_header
                  %s928 = sphi 0, %s932
                  %p929 = scmp.ge.s32.totalorder %s928, 1
                  %s933 = sphi %s891, %s891
                  %s934 = sphi %s900, %s900
                $region150: #{res_cnn_forward.45} parent=146 // loop_header_branch
                  %931 = sbr.rel (%p929) target = $region154
                $region151: #{res_cnn_forward.45} parent=146 // loop_body
                  %v935 = vld [vmem:[%s933] sm:$0xff]
                  %936 = vst [vmem:[%s934] sm:$0xff] %v935
                  %v937 = vld [vmem:[%s933 + $0x8] sm:$0xff]
                  %938 = vst [vmem:[%s934 + $0x10] sm:$0xff] %v937
                  %v939 = vld [vmem:[%s933 + $0x10] sm:$0xff]
                  %940 = vst [vmem:[%s934 + $0x20] sm:$0xff] %v939
                  %v941 = vld [vmem:[%s933 + $0x18] sm:$0xff]
                  %942 = vst [vmem:[%s934 + $0x30] sm:$0xff] %v941
                $region152: #{res_cnn_forward.45} parent=146 // loop_footer
                  %s932 = sadd.s32 1, %s928
                $region153: #{res_cnn_forward.45} parent=146 // loop_footer_branch
                  %927 = sbr.rel target = $region149
                $region154: #{res_cnn_forward.45} parent=146 // loop_exit
                  _
              $region147: #{res_cnn_forward.45} parent=131 // pred_fallthru
                _
              // Predicated region
              $region155: #{res_cnn_forward.45} parent=131 // pred_check
                _
              $region156: #{res_cnn_forward.45} parent=131 // pred_check_branch
                %944 = sbr.rel target = $region158
              $region157: #{res_cnn_forward.45} parent=131 // pred_region
                _
              $region158: #{res_cnn_forward.45} parent=131 // pred_fallthru
                _
            $region132: #{res_cnn_forward.45} parent=127 // pred_fallthru
              _
            // Predicated region
            $region133: #{res_cnn_forward.45} parent=127 // pred_check
              _
            $region134: #{res_cnn_forward.45} parent=127 // pred_check_branch
              %906 = sbr.rel target = $region136
            $region135: #{res_cnn_forward.45} parent=127 // pred_region
              %s908 = ssub.s32 256, 1
              loop: start=0, step=1, limit=1
              $region137: #{res_cnn_forward.45} parent=135 // loop_pre_header
                _
              $region138: #{res_cnn_forward.45} parent=135 // loop_header
                %s910 = sphi 0, %s914
                %p911 = scmp.ge.s32.totalorder %s910, 1
                %s915 = sphi %s891, %s891
                %s916 = sphi %s900, %s900
              $region139: #{res_cnn_forward.45} parent=135 // loop_header_branch
                %913 = sbr.rel (%p911) target = $region143
              $region140: #{res_cnn_forward.45} parent=135 // loop_body
                %v917 = vld [vmem:[%s915] sm:%s908]
                %918 = vst [vmem:[%s916] sm:%s908] %v917
                %v919 = vld [vmem:[%s915 + $0x8] sm:%s908]
                %920 = vst [vmem:[%s916 + $0x10] sm:%s908] %v919
                %v921 = vld [vmem:[%s915 + $0x10] sm:%s908]
                %922 = vst [vmem:[%s916 + $0x20] sm:%s908] %v921
                %v923 = vld [vmem:[%s915 + $0x18] sm:%s908]
                %924 = vst [vmem:[%s916 + $0x30] sm:%s908] %v923
              $region141: #{res_cnn_forward.45} parent=135 // loop_footer
                %s914 = sadd.s32 1, %s910
              $region142: #{res_cnn_forward.45} parent=135 // loop_footer_branch
                %909 = sbr.rel target = $region138
              $region143: #{res_cnn_forward.45} parent=135 // loop_exit
                _
            $region136: #{res_cnn_forward.45} parent=127 // pred_fallthru
              _
          $region128: #{res_cnn_forward.45} parent=123 // pred_fallthru
            _
          %945 = vnop
        $region124: #{res_cnn_forward.45} parent=103 // pred_fallthru
          _
      $region104: #{res_cnn_forward.45} parent=5 // pred_fallthru
        _
      %p946 = scmp.le.s32.totalorder 2, %s10
      // Predicated region
      $region159: #{res_cnn_forward.45} parent=5 // pred_check
        %p947 = pneg %p946
      $region160: #{res_cnn_forward.45} parent=5 // pred_check_branch
        %949 = sbr.rel (%p947) target = $region162
      $region161: #{res_cnn_forward.45} parent=5 // pred_region
        %s950 = ssub.s32 %s10, 2
        // Predicated region
        $region163: #{res_cnn_forward.45} parent=161 // pred_check
          %p951 = pneg %p168
        $region164: #{res_cnn_forward.45} parent=161 // pred_check_branch
          %953 = sbr.rel (%p951) target = $region166
        $region165: #{res_cnn_forward.45} parent=161 // pred_region
          %s954 = sand.u32 %s153, 1
          %s955 = sand.u32 %s153, 1
          %s956 = smul.addr %s955, 32
          %s957 = scalar_lea.vmem [#allocation5], %s956
        $region166: #{res_cnn_forward.45} parent=161 // pred_fallthru
          _
      $region162: #{res_cnn_forward.45} parent=5 // pred_fallthru
        _
    $region6: #{res_cnn_forward.45} parent=1 // loop_footer
      %s14 = sadd.s32 1, %s10
    $region7: #{res_cnn_forward.45} parent=1 // loop_footer_branch
      %9 = sbr.rel target = $region3
    $region8: #{res_cnn_forward.45} parent=1 // loop_exit
      _

// kernel: res_cnn_forward.46
$region0: #{res_cnn_forward.46}
  #allocation0 [shape = 'u32[]', space=smem, size = 0x4, offset = 0x4, fixed_abs, tag = 'smem constant byte address 0x4 - core index']
  #allocation1 [shape = 'u32[144,128]{1,0:T(1,128)}', space=vmem, size = 0x12000, scoped, tag = 'internal scratch']
  #allocation2 [shape = 'f32[128,256]{1,0:T(8,128)}', space=vmem, size = 0x20000, scoped, tag = 'scratch operand']
  %s0 = inlined_call_operand.vmem [shape: bf16[128,512], index: 0, kind: input, shape index: {}]
  %s1 = inlined_call_operand.vmem [shape: bf16[512,256], index: 1, kind: input, shape index: {}]
  %s2 = inlined_call_operand.vmem [shape: f32[1,256], index: 2, kind: input, shape index: {}]
  %s3 = inlined_call_operand.vmem [shape: f32[1,256], index: 3, kind: input, shape index: {}]
  %s4 = inlined_call_operand.vmem [shape: bf16[128,256], index: 4, kind: output, shape index: {}]
  %s5 = sld [smem:[#allocation0]]
  $region95: #{res_cnn_forward.46} parent=0
    _
  %s7 = ssub.s32 1, %s5
  %s8 = scalar_select 0, %s7, %s5
  $region1: #{res_cnn_forward.46} parent=0
    #allocation3 [shape = 'u8[131072]{0}', space=vmem, size = 0x20000, scoped, tag = 'input window, operand 0']
    loop: start=0, step=1, limit=4
    $region2: #{res_cnn_forward.46} parent=1 // loop_pre_header
      _
    $region3: #{res_cnn_forward.46} parent=1 // loop_header
      %s10 = sphi 0, %s14
      %p11 = scmp.ge.s32.totalorder %s10, 4
      %s17 = sphi 0, %s36
      %s18 = sphi 0, %s32
      %s19 = sphi 0, %s28
      %s20 = sphi 0, %s17
      %s21 = sphi 0, %s18
      %s22 = sphi 0, %s19
      %s23 = sphi 0, %s20
      %s24 = sphi 0, %s21
      %s25 = sphi 0, %s22
      %s41 = sphi 0, %s43
      %s44 = sphi 0, %s41
      %s45 = sphi 0, %s44
      %s61 = sphi 0, %s45
      %s69 = sphi 0, %s71
      %s72 = sphi 0, %s69
      %s73 = sphi 0, %s72
      %s89 = sphi 0, %s73
      %s95 = sphi 0, %s97
      %s98 = sphi 0, %s95
      %s99 = sphi 0, %s98
      %s115 = sphi 0, %s99
      %s121 = sphi 0, %s123
      %s124 = sphi 0, %s121
      %s125 = sphi 0, %s124
      %s141 = sphi 0, %s125
      %s149 = sphi 0, %s151
      %s152 = sphi 0, %s149
      %s153 = sphi 0, %s152
      %s169 = sphi 0, %s153
    $region4: #{res_cnn_forward.46} parent=1 // loop_header_branch
      %13 = sbr.rel (%p11) target = $region8
    $region5: #{res_cnn_forward.46} parent=1 // loop_body
      %s15 = ssub.s32 %s10, 1
      %s16 = ssub.s32 %s10, 2
      %s26 = sadd.s32 1, %s19
      %p27 = scmp.ge.s32.totalorder %s26, 2
      %s28 = scalar_select %p27, 0, %s26
      %s29 = sadd.s32 1, %s18
      %s30 = scalar_select %p27, %s29, %s18
      %p31 = scmp.ge.s32.totalorder %s30, 1
      %s32 = scalar_select %p31, 0, %s30
      %s33 = sadd.s32 1, %s17
      %s34 = scalar_select %p31, %s33, %s17
      %p35 = scmp.ge.s32.totalorder %s34, 1
      %s36 = scalar_select %p35, 0, %s34
      %s37 = ssub.s32 %s17, %s36
      %s38 = ssub.s32 %s19, %s28
      %s39 = sor.u32 %s37, %s38
      %p40 = scmp.eq.s32.totalorder %s39, 0
      %s42 = sadd.s32 %s41, 1
      %s43 = scalar_select %p40, %s41, %s42
      %p46 = pneg %p40
      %p47 = scmp.eq.s32.totalorder %s10, 1
      %p48 = por %p46, %p47
      %p49 = scmp.ne.s32.totalorder %s41, %s44
      %p50 = scmp.eq.s32.totalorder %s10, 0
      %p51 = por %p49, %p50
      %p52 = scmp.ne.s32.totalorder %s41, %s44
      %p53 = scmp.eq.s32.totalorder %s15, 1
      %p54 = por %p52, %p53
      %p55 = scmp.ne.s32.totalorder %s44, %s45
      %p56 = scmp.eq.s32.totalorder %s15, 0
      %p57 = por %p55, %p56
      %p58 = scmp.ne.s32.totalorder %s44, %s45
      %p59 = scmp.eq.s32.totalorder %s16, 1
      %p60 = por %p58, %p59
      %p62 = scmp.ne.s32.totalorder %s45, %s61
      %p63 = scmp.eq.s32.totalorder %s16, 0
      %p64 = por %p62, %p63
      %s65 = ssub.s32 %s19, %s28
      %s66 = ssub.s32 %s18, %s32
      %s67 = sor.u32 %s65, %s66
      %p68 = scmp.eq.s32.totalorder %s67, 0
      %s70 = sadd.s32 %s69, 1
      %s71 = scalar_select %p68, %s69, %s70
      %p74 = pneg %p68
      %p75 = scmp.eq.s32.totalorder %s10, 1
      %p76 = por %p74, %p75
      %p77 = scmp.ne.s32.totalorder %s69, %s72
      %p78 = scmp.eq.s32.totalorder %s10, 0
      %p79 = por %p77, %p78
      %p80 = scmp.ne.s32.totalorder %s69, %s72
      %p81 = scmp.eq.s32.totalorder %s15, 1
      %p82 = por %p80, %p81
      %p83 = scmp.ne.s32.totalorder %s72, %s73
      %p84 = scmp.eq.s32.totalorder %s15, 0
      %p85 = por %p83, %p84
      %p86 = scmp.ne.s32.totalorder %s72, %s73
      %p87 = scmp.eq.s32.totalorder %s16, 1
      %p88 = por %p86, %p87
      %p90 = scmp.ne.s32.totalorder %s73, %s89
      %p91 = scmp.eq.s32.totalorder %s16, 0
      %p92 = por %p90, %p91
      %s93 = ssub.s32 %s18, %s32
      %p94 = scmp.eq.s32.totalorder %s93, 0
      %s96 = sadd.s32 %s95, 1
      %s97 = scalar_select %p94, %s95, %s96
      %p100 = pneg %p94
      %p101 = scmp.eq.s32.totalorder %s10, 1
      %p102 = por %p100, %p101
      %p103 = scmp.ne.s32.totalorder %s95, %s98
      %p104 = scmp.eq.s32.totalorder %s10, 0
      %p105 = por %p103, %p104
      %p106 = scmp.ne.s32.totalorder %s95, %s98
      %p107 = scmp.eq.s32.totalorder %s15, 1
      %p108 = por %p106, %p107
      %p109 = scmp.ne.s32.totalorder %s98, %s99
      %p110 = scmp.eq.s32.totalorder %s15, 0
      %p111 = por %p109, %p110
      %p112 = scmp.ne.s32.totalorder %s98, %s99
      %p113 = scmp.eq.s32.totalorder %s16, 1
      %p114 = por %p112, %p113
      %p116 = scmp.ne.s32.totalorder %s99, %s115
      %p117 = scmp.eq.s32.totalorder %s16, 0
      %p118 = por %p116, %p117
      %s119 = ssub.s32 %s18, %s32
      %p120 = scmp.eq.s32.totalorder %s119, 0
      %s122 = sadd.s32 %s121, 1
      %s123 = scalar_select %p120, %s121, %s122
      %p126 = pneg %p120
      %p127 = scmp.eq.s32.totalorder %s10, 1
      %p128 = por %p126, %p127
      %p129 = scmp.ne.s32.totalorder %s121, %s124
      %p130 = scmp.eq.s32.totalorder %s10, 0
      %p131 = por %p129, %p130
      %p132 = scmp.ne.s32.totalorder %s121, %s124
      %p133 = scmp.eq.s32.totalorder %s15, 1
      %p134 = por %p132, %p133
      %p135 = scmp.ne.s32.totalorder %s124, %s125
      %p136 = scmp.eq.s32.totalorder %s15, 0
      %p137 = por %p135, %p136
      %p138 = scmp.ne.s32.totalorder %s124, %s125
      %p139 = scmp.eq.s32.totalorder %s16, 1
      %p140 = por %p138, %p139
      %p142 = scmp.ne.s32.totalorder %s125, %s141
      %p143 = scmp.eq.s32.totalorder %s16, 0
      %p144 = por %p142, %p143
      %s145 = ssub.s32 %s17, %s36
      %s146 = ssub.s32 %s18, %s32
      %s147 = sor.u32 %s145, %s146
      %p148 = scmp.eq.s32.totalorder %s147, 0
      %s150 = sadd.s32 %s149, 1
      %s151 = scalar_select %p148, %s149, %s150
      %p154 = pneg %p148
      %p155 = scmp.eq.s32.totalorder %s10, 1
      %p156 = por %p154, %p155
      %p157 = scmp.ne.s32.totalorder %s149, %s152
      %p158 = scmp.eq.s32.totalorder %s10, 0
      %p159 = por %p157, %p158
      %p160 = scmp.ne.s32.totalorder %s149, %s152
      %p161 = scmp.eq.s32.totalorder %s15, 1
      %p162 = por %p160, %p161
      %p163 = scmp.ne.s32.totalorder %s152, %s153
      %p164 = scmp.eq.s32.totalorder %s15, 0
      %p165 = por %p163, %p164
      %p166 = scmp.ne.s32.totalorder %s152, %s153
      %p167 = scmp.eq.s32.totalorder %s16, 1
      %p168 = por %p166, %p167
      %p170 = scmp.ne.s32.totalorder %s153, %s169
      %p171 = scmp.eq.s32.totalorder %s16, 0
      %p172 = por %p170, %p171
      %p173 = scmp.le.s32.totalorder 1, %s10
      %p174 = scmp.lt.s32.totalorder %s10, 3
      %p175 = pnand %p173, %p174
      %p176 = pneg %p175
      // Predicated region
      $region9: #{res_cnn_forward.46} parent=5 // pred_check
        _
      $region10: #{res_cnn_forward.46} parent=5 // pred_check_branch
        %178 = sbr.rel (%p175) target = $region12
      $region11: #{res_cnn_forward.46} parent=5 // pred_region
        %s179 = ssub.s32 %s10, 1
        // Predicated region
        $region13: #{res_cnn_forward.46} parent=11 // pred_check
          %p180 = pneg %p111
        $region14: #{res_cnn_forward.46} parent=11 // pred_check_branch
          %182 = sbr.rel (%p180) target = $region16
        $region15: #{res_cnn_forward.46} parent=11 // pred_region
          %s183 = smul.u32 2, %s21
          %p184 = scmp.lt.s32.totalorder %s183, 1
          %s185 = scalar_select %p184, %s183, 1
          %s186 = scalar_lea.vmem %s2, %s185
          %s187 = smul.u32 2, %s21
        $region16: #{res_cnn_forward.46} parent=11 // pred_fallthru
          _
        // Predicated region
        $region17: #{res_cnn_forward.46} parent=11 // pred_check
          %p188 = pneg %p137
        $region18: #{res_cnn_forward.46} parent=11 // pred_check_branch
          %190 = sbr.rel (%p188) target = $region20
        $region19: #{res_cnn_forward.46} parent=11 // pred_region
          %s191 = smul.u32 2, %s21
          %p192 = scmp.lt.s32.totalorder %s191, 1
          %s193 = scalar_select %p192, %s191, 1
          %s194 = scalar_lea.vmem %s3, %s193
          %s195 = smul.u32 2, %s21
        $region20: #{res_cnn_forward.46} parent=11 // pred_fallthru
          _
      $region12: #{res_cnn_forward.46} parent=5 // pred_fallthru
        _
      %p196 = scmp.lt.s32.totalorder %s10, 2
      // Predicated region
      $region21: #{res_cnn_forward.46} parent=5 // pred_check
        %p197 = pneg %p196
      $region22: #{res_cnn_forward.46} parent=5 // pred_check_branch
        %199 = sbr.rel (%p197) target = $region24
      $region23: #{res_cnn_forward.46} parent=5 // pred_region
        // Predicated region
        $region25: #{res_cnn_forward.46} parent=23 // pred_check
          %p200 = pneg %p51
        $region26: #{res_cnn_forward.46} parent=23 // pred_check_branch
          %202 = sbr.rel (%p200) target = $region28
        $region27: #{res_cnn_forward.46} parent=23 // pred_region
          %s203 = sand.u32 %s41, 1
          %s204 = sand.u32 %s41, 1
          %s205 = smul.addr %s204, 128
          %s206 = scalar_lea.vmem [#allocation3], %s205
          %s207 = smul.u32 16, %s17
          %s208 = smul.u32 2, %s19
          %s209 = smul.addr %s207, 4
          %s210 = sadd.s32 %s208, %s209
          %s211 = smul.addr %s210, 4
          %s212 = scalar_lea.vmem %s0, %s211
          // Predicated region
          $region29: #{res_cnn_forward.46} parent=27 // pred_check
            _
          $region30: #{res_cnn_forward.46} parent=27 // pred_check_branch
            %214 = sbr.rel (0) target = $region32
          $region31: #{res_cnn_forward.46} parent=27 // pred_region
            // Predicated region
            $region33: #{res_cnn_forward.46} parent=31 // pred_check
              _
            $region34: #{res_cnn_forward.46} parent=31 // pred_check_branch
              %216 = sbr.rel (0) target = $region36
            $region35: #{res_cnn_forward.46} parent=31 // pred_region
              // Predicated region
              $region48: #{res_cnn_forward.46} parent=35 // pred_check
                _
              $region49: #{res_cnn_forward.46} parent=35 // pred_check_branch
                %262 = sbr.rel (0) target = $region51
              $region50: #{res_cnn_forward.46} parent=35 // pred_region
                loop: start=0, step=1, limit=1
                $region52: #{res_cnn_forward.46} parent=50 // loop_pre_header
                  _
                $region53: #{res_cnn_forward.46} parent=50 // loop_header
                  %s264 = sphi 0, %s268
                  %p265 = scmp.ge.s32.totalorder %s264, 1
                  %s269 = sphi %s212, %s212
                  %s270 = sphi %s206, %s206
                $region54: #{res_cnn_forward.46} parent=50 // loop_header_branch
                  %267 = sbr.rel (%p265) target = $region58
                $region55: #{res_cnn_forward.46} parent=50 // loop_body
                  %v271 = vld [vmem:[%s269] sm:$0xff]
                  %272 = vst [vmem:[%s270] sm:$0xff] %v271
                  %v273 = vld [vmem:[%s269 + $0x10] sm:$0xff]
                  %274 = vst [vmem:[%s270 + $0x8] sm:$0xff] %v273
                  %v275 = vld [vmem:[%s269 + $0x20] sm:$0xff]
                  %276 = vst [vmem:[%s270 + $0x10] sm:$0xff] %v275
                  %v277 = vld [vmem:[%s269 + $0x30] sm:$0xff]
                  %278 = vst [vmem:[%s270 + $0x18] sm:$0xff] %v277
                  %v279 = vld [vmem:[%s269 + $0x40] sm:$0xff]
                  %280 = vst [vmem:[%s270 + $0x20] sm:$0xff] %v279
                  %v281 = vld [vmem:[%s269 + $0x50] sm:$0xff]
                  %282 = vst [vmem:[%s270 + $0x28] sm:$0xff] %v281
                  %v283 = vld [vmem:[%s269 + $0x60] sm:$0xff]
                  %284 = vst [vmem:[%s270 + $0x30] sm:$0xff] %v283
                  %v285 = vld [vmem:[%s269 + $0x70] sm:$0xff]
                  %286 = vst [vmem:[%s270 + $0x38] sm:$0xff] %v285
                  %v287 = vld [vmem:[%s269 + $0x80] sm:$0xff]
                  %288 = vst [vmem:[%s270 + $0x40] sm:$0xff] %v287
                  %v289 = vld [vmem:[%s269 + $0x90] sm:$0xff]
                  %290 = vst [vmem:[%s270 + $0x48] sm:$0xff] %v289
                  %v291 = vld [vmem:[%s269 + $0xa0] sm:$0xff]
                  %292 = vst [vmem:[%s270 + $0x50] sm:$0xff] %v291
                  %v293 = vld [vmem:[%s269 + $0xb0] sm:$0xff]
                  %294 = vst [vmem:[%s270 + $0x58] sm:$0xff] %v293
                  %v295 = vld [vmem:[%s269 + $0xc0] sm:$0xff]
                  %296 = vst [vmem:[%s270 + $0x60] sm:$0xff] %v295
                  %v297 = vld [vmem:[%s269 + $0xd0] sm:$0xff]
                  %298 = vst [vmem:[%s270 + $0x68] sm:$0xff] %v297
                  %v299 = vld [vmem:[%s269 + $0xe0] sm:$0xff]
                  %300 = vst [vmem:[%s270 + $0x70] sm:$0xff] %v299
                  %v301 = vld [vmem:[%s269 + $0xf0] sm:$0xff]
                  %302 = vst [vmem:[%s270 + $0x78] sm:$0xff] %v301
                $region56: #{res_cnn_forward.46} parent=50 // loop_footer
                  %s268 = sadd.s32 1, %s264
                $region57: #{res_cnn_forward.46} parent=50 // loop_footer_branch
                  %263 = sbr.rel target = $region53
                $region58: #{res_cnn_forward.46} parent=50 // loop_exit
                  _
              $region51: #{res_cnn_forward.46} parent=35 // pred_fallthru
                _
              // Predicated region
              $region59: #{res_cnn_forward.46} parent=35 // pred_check
                _
              $region60: #{res_cnn_forward.46} parent=35 // pred_check_branch
                %304 = sbr.rel target = $region62
              $region61: #{res_cnn_forward.46} parent=35 // pred_region
                _
              $region62: #{res_cnn_forward.46} parent=35 // pred_fallthru
                _
            $region36: #{res_cnn_forward.46} parent=31 // pred_fallthru
              _
            // Predicated region
            $region37: #{res_cnn_forward.46} parent=31 // pred_check
              _
            $region38: #{res_cnn_forward.46} parent=31 // pred_check_branch
              %218 = sbr.rel target = $region40
            $region39: #{res_cnn_forward.46} parent=31 // pred_region
              %s220 = ssub.s32 256, 1
              loop: start=0, step=1, limit=1
              $region41: #{res_cnn_forward.46} parent=39 // loop_pre_header
                _
              $region42: #{res_cnn_forward.46} parent=39 // loop_header
                %s222 = sphi 0, %s226
                %p223 = scmp.ge.s32.totalorder %s222, 1
                %s227 = sphi %s212, %s212
                %s228 = sphi %s206, %s206
              $region43: #{res_cnn_forward.46} parent=39 // loop_header_branch
                %225 = sbr.rel (%p223) target = $region47
              $region44: #{res_cnn_forward.46} parent=39 // loop_body
                %v229 = vld [vmem:[%s227] sm:%s220]
                %230 = vst [vmem:[%s228] sm:%s220] %v229
                %v231 = vld [vmem:[%s227 + $0x10] sm:%s220]
                %232 = vst [vmem:[%s228 + $0x8] sm:%s220] %v231
                %v233 = vld [vmem:[%s227 + $0x20] sm:%s220]
                %234 = vst [vmem:[%s228 + $0x10] sm:%s220] %v233
                %v235 = vld [vmem:[%s227 + $0x30] sm:%s220]
                %236 = vst [vmem:[%s228 + $0x18] sm:%s220] %v235
                %v237 = vld [vmem:[%s227 + $0x40] sm:%s220]
                %238 = vst [vmem:[%s228 + $0x20] sm:%s220] %v237
                %v239 = vld [vmem:[%s227 + $0x50] sm:%s220]
                %240 = vst [vmem:[%s228 + $0x28] sm:%s220] %v239
                %v241 = vld [vmem:[%s227 + $0x60] sm:%s220]
                %242 = vst [vmem:[%s228 + $0x30] sm:%s220] %v241
                %v243 = vld [vmem:[%s227 + $0x70] sm:%s220]
                %244 = vst [vmem:[%s228 + $0x38] sm:%s220] %v243
                %v245 = vld [vmem:[%s227 + $0x80] sm:%s220]
                %246 = vst [vmem:[%s228 + $0x40] sm:%s220] %v245
                %v247 = vld [vmem:[%s227 + $0x90] sm:%s220]
                %248 = vst [vmem:[%s228 + $0x48] sm:%s220] %v247
                %v249 = vld [vmem:[%s227 + $0xa0] sm:%s220]
                %250 = vst [vmem:[%s228 + $0x50] sm:%s220] %v249
                %v251 = vld [vmem:[%s227 + $0xb0] sm:%s220]
                %252 = vst [vmem:[%s228 + $0x58] sm:%s220] %v251
                %v253 = vld [vmem:[%s227 + $0xc0] sm:%s220]
                %254 = vst [vmem:[%s228 + $0x60] sm:%s220] %v253
                %v255 = vld [vmem:[%s227 + $0xd0] sm:%s220]
                %256 = vst [vmem:[%s228 + $0x68] sm:%s220] %v255
                %v257 = vld [vmem:[%s227 + $0xe0] sm:%s220]
                %258 = vst [vmem:[%s228 + $0x70] sm:%s220] %v257
                %v259 = vld [vmem:[%s227 + $0xf0] sm:%s220]
                %260 = vst [vmem:[%s228 + $0x78] sm:%s220] %v259
              $region45: #{res_cnn_forward.46} parent=39 // loop_footer
                %s226 = sadd.s32 1, %s222
              $region46: #{res_cnn_forward.46} parent=39 // loop_footer_branch
                %221 = sbr.rel target = $region42
              $region47: #{res_cnn_forward.46} parent=39 // loop_exit
                _
            $region40: #{res_cnn_forward.46} parent=31 // pred_fallthru
              _
          $region32: #{res_cnn_forward.46} parent=27 // pred_fallthru
            _
          %305 = vnop
        $region28: #{res_cnn_forward.46} parent=23 // pred_fallthru
          _
        // Predicated region
        $region63: #{res_cnn_forward.46} parent=23 // pred_check
          %p306 = pneg %p79
        $region64: #{res_cnn_forward.46} parent=23 // pred_check_branch
          %308 = sbr.rel (%p306) target = $region66
        $region65: #{res_cnn_forward.46} parent=23 // pred_region
          %s309 = smul.u32 32, %s19
          %s310 = smul.u32 2, %s18
          %p311 = scmp.lt.s32.totalorder %s309, 63
          %s312 = scalar_select %p311, %s309, 63
          %p313 = scmp.lt.s32.totalorder %s310, 1
          %s314 = scalar_select %p313, %s310, 1
          %s315 = smul.addr %s312, 2
          %s316 = sadd.s32 %s314, %s315
          %s317 = smul.addr %s316, 4
          %s318 = scalar_lea.vmem %s1, %s317
          %s319 = smul.u32 32, %s19
          %s320 = smul.u32 2, %s18
        $region66: #{res_cnn_forward.46} parent=23 // pred_fallthru
          _
      $region24: #{res_cnn_forward.46} parent=5 // pred_fallthru
        _
      %p321 = scmp.le.s32.totalorder 1, %s10
      %p322 = scmp.lt.s32.totalorder %s10, 3
      %p323 = pnand %p321, %p322
      %p324 = pneg %p323
      // Predicated region
      $region67: #{res_cnn_forward.46} parent=5 // pred_check
        _
      $region68: #{res_cnn_forward.46} parent=5 // pred_check_branch
        %326 = sbr.rel (%p323) target = $region70
      $region69: #{res_cnn_forward.46} parent=5 // pred_region
        %s327 = ssub.s32 %s10, 1
        %s328 = sand.u32 %s44, 1
        %s329 = sand.u32 %s44, 1
        %s330 = smul.addr %s329, 128
        %s331 = scalar_lea.vmem [#allocation3], %s330
        // Predicated region
        $region71: #{res_cnn_forward.46} parent=69 // pred_check
          %p332 = pneg %p57
        $region72: #{res_cnn_forward.46} parent=69 // pred_check_branch
          %334 = sbr.rel (%p332) target = $region74
        $region73: #{res_cnn_forward.46} parent=69 // pred_region
          _
        $region74: #{res_cnn_forward.46} parent=69 // pred_fallthru
          _
        %s335 = sand.u32 %s44, 1
        %s336 = sand.u32 %s44, 1
        %s337 = smul.addr %s336, 128
        %s338 = scalar_lea.vmem [#allocation3], %s337
        %p339 = pneg %p57
        %p340 = pneg %p54
        %s341 = smul.u32 32, %s22
        %s342 = smul.u32 2, %s21
        %p343 = scmp.lt.s32.totalorder %s341, 63
        %s344 = scalar_select %p343, %s341, 63
        %p345 = scmp.lt.s32.totalorder %s342, 1
        %s346 = scalar_select %p345, %s342, 1
        %s347 = smul.addr %s344, 2
        %s348 = sadd.s32 %s346, %s347
        %s349 = smul.addr %s348, 4
        %s350 = scalar_lea.vmem %s1, %s349
        %p351 = pneg %p85
        %p352 = pneg %p82
        %s353 = smul.u32 2, %s21
        %p354 = scmp.lt.s32.totalorder %s353, 1
        %s355 = scalar_select %p354, %s353, 1
        %s356 = scalar_lea.vmem %s2, %s355
        %p357 = pneg %p111
        %p358 = pneg %p108
        %s359 = smul.u32 2, %s21
        %p360 = scmp.lt.s32.totalorder %s359, 1
        %s361 = scalar_select %p360, %s359, 1
        %s362 = scalar_lea.vmem %s3, %s361
        %p363 = pneg %p137
        %p364 = pneg %p134
        %p365 = pneg %p165
        %p366 = pneg %p162
        %s367 = smul.u32 16, %s20
        %s368 = smul.u32 2, %s21
        %p369 = scmp.lt.s32.totalorder %s367, 15
        %s370 = scalar_select %p369, %s367, 15
        %p371 = scmp.lt.s32.totalorder %s368, 1
        %s372 = scalar_select %p371, %s368, 1
        %s373 = smul.addr %s370, 2
        %s374 = sadd.s32 %s372, %s373
        %s375 = smul.addr %s374, 4
        %s376 = scalar_lea.vmem %s4, %s375
        %s377 = smul.u32 16, %s20
        %s378 = smul.u32 2, %s22
        %s379 = smul.u32 32, %s22
        %s380 = smul.u32 2, %s21
        %p381 = scmp.lt.s32.totalorder %s379, 63
        %s382 = scalar_select %p381, %s379, 63
        %p383 = scmp.lt.s32.totalorder %s380, 1
        %s384 = scalar_select %p383, %s380, 1
        %s385 = smul.addr %s382, 2
        %s386 = sadd.s32 %s384, %s385
        %s387 = smul.addr %s386, 4
        %s388 = scalar_lea.vmem %s1, %s387
        %s389 = smul.u32 32, %s22
        %s390 = smul.u32 2, %s21
        %s391 = smul.u32 2, %s21
        %p392 = scmp.lt.s32.totalorder %s391, 1
        %s393 = scalar_select %p392, %s391, 1
        %s394 = scalar_lea.vmem %s2, %s393
        %s395 = smul.u32 2, %s21
        %s396 = smul.u32 2, %s21
        %p397 = scmp.lt.s32.totalorder %s396, 1
        %s398 = scalar_select %p397, %s396, 1
        %s399 = scalar_lea.vmem %s3, %s398
        %s400 = smul.u32 2, %s21
        %s401 = smul.u32 16, %s20
        %s402 = smul.u32 2, %s21
        %p403 = scmp.lt.s32.totalorder %s401, 15
        %s404 = scalar_select %p403, %s401, 15
        %p405 = scmp.lt.s32.totalorder %s402, 1
        %s406 = scalar_select %p405, %s402, 1
        %s407 = smul.addr %s404, 2
        %s408 = sadd.s32 %s406, %s407
        %s409 = smul.addr %s408, 4
        %s410 = scalar_lea.vmem %s4, %s409
        %s411 = smul.u32 16, %s20
        %s412 = smul.u32 2, %s21
        %p413 = scmp.eq.s32.totalorder %s22, 0
        // Predicated region
        $region75: #{res_cnn_forward.46} parent=69 // pred_check
          %p414 = pneg %p413
        $region76: #{res_cnn_forward.46} parent=69 // pred_check_branch
          %416 = sbr.rel (%p414) target = $region78
        $region77: #{res_cnn_forward.46} parent=69 // pred_region
          %417 = vst [vmem:[#allocation2] sm:$0xff] 0.0
          %418 = vst [vmem:[#allocation2 + $0x8] sm:$0xff] 0.0
          %419 = vst [vmem:[#allocation2 + $0x10] sm:$0xff] 0.0
          %420 = vst [vmem:[#allocation2 + $0x18] sm:$0xff] 0.0
          %421 = vst [vmem:[#allocation2 + $0x20] sm:$0xff] 0.0
          %422 = vst [vmem:[#allocation2 + $0x28] sm:$0xff] 0.0
          %423 = vst [vmem:[#allocation2 + $0x30] sm:$0xff] 0.0
          %424 = vst [vmem:[#allocation2 + $0x38] sm:$0xff] 0.0
          %425 = vst [vmem:[#allocation2 + $0x40] sm:$0xff] 0.0
          %426 = vst [vmem:[#allocation2 + $0x48] sm:$0xff] 0.0
          %427 = vst [vmem:[#allocation2 + $0x50] sm:$0xff] 0.0
          %428 = vst [vmem:[#allocation2 + $0x58] sm:$0xff] 0.0
          %429 = vst [vmem:[#allocation2 + $0x60] sm:$0xff] 0.0
          %430 = vst [vmem:[#allocation2 + $0x68] sm:$0xff] 0.0
          %431 = vst [vmem:[#allocation2 + $0x70] sm:$0xff] 0.0
          %432 = vst [vmem:[#allocation2 + $0x78] sm:$0xff] 0.0
          %433 = vst [vmem:[#allocation2 + $0x80] sm:$0xff] 0.0
          %434 = vst [vmem:[#allocation2 + $0x88] sm:$0xff] 0.0
          %435 = vst [vmem:[#allocation2 + $0x90] sm:$0xff] 0.0
          %436 = vst [vmem:[#allocation2 + $0x98] sm:$0xff] 0.0
          %437 = vst [vmem:[#allocation2 + $0xa0] sm:$0xff] 0.0
          %438 = vst [vmem:[#allocation2 + $0xa8] sm:$0xff] 0.0
          %439 = vst [vmem:[#allocation2 + $0xb0] sm:$0xff] 0.0
          %440 = vst [vmem:[#allocation2 + $0xb8] sm:$0xff] 0.0
          %441 = vst [vmem:[#allocation2 + $0xc0] sm:$0xff] 0.0
          %442 = vst [vmem:[#allocation2 + $0xc8] sm:$0xff] 0.0
          %443 = vst [vmem:[#allocation2 + $0xd0] sm:$0xff] 0.0
          %444 = vst [vmem:[#allocation2 + $0xd8] sm:$0xff] 0.0
          %445 = vst [vmem:[#allocation2 + $0xe0] sm:$0xff] 0.0
          %446 = vst [vmem:[#allocation2 + $0xe8] sm:$0xff] 0.0
          %447 = vst [vmem:[#allocation2 + $0xf0] sm:$0xff] 0.0
          %448 = vst [vmem:[#allocation2 + $0xf8] sm:$0xff] 0.0
        $region78: #{res_cnn_forward.46} parent=69 // pred_fallthru
          _
        %v449 = vld [vmem:[#allocation2] sm:$0xff]
        %v450 = vld [vmem:[#allocation2 + $0x8] sm:$0xff]
        %v451 = vld [vmem:[#allocation2 + $0x10] sm:$0xff]
        %v452 = vld [vmem:[#allocation2 + $0x18] sm:$0xff]
        %v453 = vld [vmem:[#allocation2 + $0x20] sm:$0xff]
        %v454 = vld [vmem:[#allocation2 + $0x28] sm:$0xff]
        %v455 = vld [vmem:[#allocation2 + $0x30] sm:$0xff]
        %v456 = vld [vmem:[#allocation2 + $0x38] sm:$0xff]
        %v457 = vld [vmem:[#allocation2 + $0x40] sm:$0xff]
        %v458 = vld [vmem:[#allocation2 + $0x48] sm:$0xff]
        %v459 = vld [vmem:[#allocation2 + $0x50] sm:$0xff]
        %v460 = vld [vmem:[#allocation2 + $0x58] sm:$0xff]
        %v461 = vld [vmem:[#allocation2 + $0x60] sm:$0xff]
        %v462 = vld [vmem:[#allocation2 + $0x68] sm:$0xff]
        %v463 = vld [vmem:[#allocation2 + $0x70] sm:$0xff]
        %v464 = vld [vmem:[#allocation2 + $0x78] sm:$0xff]
        %v465 = vld [vmem:[#allocation2 + $0x80] sm:$0xff]
        %v466 = vld [vmem:[#allocation2 + $0x88] sm:$0xff]
        %v467 = vld [vmem:[#allocation2 + $0x90] sm:$0xff]
        %v468 = vld [vmem:[#allocation2 + $0x98] sm:$0xff]
        %v469 = vld [vmem:[#allocation2 + $0xa0] sm:$0xff]
        %v470 = vld [vmem:[#allocation2 + $0xa8] sm:$0xff]
        %v471 = vld [vmem:[#allocation2 + $0xb0] sm:$0xff]
        %v472 = vld [vmem:[#allocation2 + $0xb8] sm:$0xff]
        %v473 = vld [vmem:[#allocation2 + $0xc0] sm:$0xff]
        %v474 = vld [vmem:[#allocation2 + $0xc8] sm:$0xff]
        %v475 = vld [vmem:[#allocation2 + $0xd0] sm:$0xff]
        %v476 = vld [vmem:[#allocation2 + $0xd8] sm:$0xff]
        %v477 = vld [vmem:[#allocation2 + $0xe0] sm:$0xff]
        %v478 = vld [vmem:[#allocation2 + $0xe8] sm:$0xff]
        %v479 = vld [vmem:[#allocation2 + $0xf0] sm:$0xff]
        %v480 = vld [vmem:[#allocation2 + $0xf8] sm:$0xff]
        %v481 = vld [vmem:[%s331] sm:$0xff]
        %v482 = vld [vmem:[%s331 + $0x8] sm:$0xff]
        %v483 = vld [vmem:[%s331 + $0x10] sm:$0xff]
        %v484 = vld [vmem:[%s331 + $0x18] sm:$0xff]
        %v485 = vld [vmem:[%s331 + $0x20] sm:$0xff]
        %v486 = vld [vmem:[%s331 + $0x28] sm:$0xff]
        %v487 = vld [vmem:[%s331 + $0x30] sm:$0xff]
        %v488 = vld [vmem:[%s331 + $0x38] sm:$0xff]
        %v489 = vld [vmem:[%s331 + $0x40] sm:$0xff]
        %v490 = vld [vmem:[%s331 + $0x48] sm:$0xff]
        %v491 = vld [vmem:[%s331 + $0x50] sm:$0xff]
        %v492 = vld [vmem:[%s331 + $0x58] sm:$0xff]
        %v493 = vld [vmem:[%s331 + $0x60] sm:$0xff]
        %v494 = vld [vmem:[%s331 + $0x68] sm:$0xff]
        %v495 = vld [vmem:[%s331 + $0x70] sm:$0xff]
        %v496 = vld [vmem:[%s331 + $0x78] sm:$0xff]
        %v497 = vld [vmem:[%s388] sm:$0xff]
        %v498 = vld [vmem:[%s388 + $0x8] sm:$0xff]
        %v499 = vld [vmem:[%s388 + $0x10] sm:$0xff]
        %v500 = vld [vmem:[%s388 + $0x18] sm:$0xff]
        %v501 = vld [vmem:[%s388 + $0x20] sm:$0xff]
        %v502 = vld [vmem:[%s388 + $0x28] sm:$0xff]
        %v503 = vld [vmem:[%s388 + $0x30] sm:$0xff]
        %v504 = vld [vmem:[%s388 + $0x38] sm:$0xff]
        %v505 = vld [vmem:[%s388 + $0x40] sm:$0xff]
        %v506 = vld [vmem:[%s388 + $0x48] sm:$0xff]
        %v507 = vld [vmem:[%s388 + $0x50] sm:$0xff]
        %v508 = vld [vmem:[%s388 + $0x58] sm:$0xff]
        %v509 = vld [vmem:[%s388 + $0x60] sm:$0xff]
        %v510 = vld [vmem:[%s388 + $0x68] sm:$0xff]
        %v511 = vld [vmem:[%s388 + $0x70] sm:$0xff]
        %v512 = vld [vmem:[%s388 + $0x78] sm:$0xff]
        %v513 = vld [vmem:[%s388 + $0x80] sm:$0xff]
        %v514 = vld [vmem:[%s388 + $0x88] sm:$0xff]
        %v515 = vld [vmem:[%s388 + $0x90] sm:$0xff]
        %v516 = vld [vmem:[%s388 + $0x98] sm:$0xff]
        %v517 = vld [vmem:[%s388 + $0xa0] sm:$0xff]
        %v518 = vld [vmem:[%s388 + $0xa8] sm:$0xff]
        %v519 = vld [vmem:[%s388 + $0xb0] sm:$0xff]
        %v520 = vld [vmem:[%s388 + $0xb8] sm:$0xff]
        %v521 = vld [vmem:[%s388 + $0xc0] sm:$0xff]
        %v522 = vld [vmem:[%s388 + $0xc8] sm:$0xff]
        %v523 = vld [vmem:[%s388 + $0xd0] sm:$0xff]
        %v524 = vld [vmem:[%s388 + $0xd8] sm:$0xff]
        %v525 = vld [vmem:[%s388 + $0xe0] sm:$0xff]
        %v526 = vld [vmem:[%s388 + $0xe8] sm:$0xff]
        %v527 = vld [vmem:[%s388 + $0xf0] sm:$0xff]
        %v528 = vld [vmem:[%s388 + $0xf8] sm:$0xff]
        %v545 = vunpack.c.l.b16 %v481
        %v546 = vunpack.c.h.b16 %v481
        %v547 = vunpack.c.l.b16 %v482
        %v548 = vunpack.c.h.b16 %v482
        %v549 = vunpack.c.l.b16 %v483
        %v550 = vunpack.c.h.b16 %v483
        %v551 = vunpack.c.l.b16 %v484
        %v552 = vunpack.c.h.b16 %v484
        %v553 = vunpack.c.l.b16 %v485
        %v554 = vunpack.c.h.b16 %v485
        %v555 = vunpack.c.l.b16 %v486
        %v556 = vunpack.c.h.b16 %v486
        %v557 = vunpack.c.l.b16 %v487
        %v558 = vunpack.c.h.b16 %v487
        %v559 = vunpack.c.l.b16 %v488
        %v560 = vunpack.c.h.b16 %v488
        %v561 = vunpack.c.l.b16 %v489
        %v562 = vunpack.c.h.b16 %v489
        %v563 = vunpack.c.l.b16 %v490
        %v564 = vunpack.c.h.b16 %v490
        %v565 = vunpack.c.l.b16 %v491
        %v566 = vunpack.c.h.b16 %v491
        %v567 = vunpack.c.l.b16 %v492
        %v568 = vunpack.c.h.b16 %v492
        %v569 = vunpack.c.l.b16 %v493
        %v570 = vunpack.c.h.b16 %v493
        %v571 = vunpack.c.l.b16 %v494
        %v572 = vunpack.c.h.b16 %v494
        %v573 = vunpack.c.l.b16 %v495
        %v574 = vunpack.c.h.b16 %v495
        %v575 = vunpack.c.l.b16 %v496
        %v576 = vunpack.c.h.b16 %v496
        %v577 = vpack.c.b16 %v547, %v545
        %v578 = vpack.c.b16 %v548, %v546
        %v579 = vpack.c.b16 %v551, %v549
        %v580 = vpack.c.b16 %v552, %v550
        %v581 = vpack.c.b16 %v555, %v553
        %v582 = vpack.c.b16 %v556, %v554
        %v583 = vpack.c.b16 %v559, %v557
        %v584 = vpack.c.b16 %v560, %v558
        %v585 = vpack.c.b16 %v563, %v561
        %v586 = vpack.c.b16 %v564, %v562
        %v587 = vpack.c.b16 %v567, %v565
        %v588 = vpack.c.b16 %v568, %v566
        %v589 = vpack.c.b16 %v571, %v569
        %v590 = vpack.c.b16 %v572, %v570
        %v591 = vpack.c.b16 %v575, %v573
        %v592 = vpack.c.b16 %v576, %v574
        %v641 = vunpack.c.l.b16 %v497
        %v642 = vunpack.c.h.b16 %v497
        %v643 = vunpack.c.l.b16 %v498
        %v644 = vunpack.c.h.b16 %v498
        %v645 = vunpack.c.l.b16 %v499
        %v646 = vunpack.c.h.b16 %v499
        %v647 = vunpack.c.l.b16 %v500
        %v648 = vunpack.c.h.b16 %v500
        %v649 = vunpack.c.l.b16 %v501
        %v650 = vunpack.c.h.b16 %v501
        %v651 = vunpack.c.l.b16 %v502
        %v652 = vunpack.c.h.b16 %v502
        %v653 = vunpack.c.l.b16 %v503
        %v654 = vunpack.c.h.b16 %v503
        %v655 = vunpack.c.l.b16 %v504
        %v656 = vunpack.c.h.b16 %v504
        %v657 = vunpack.c.l.b16 %v505
        %v658 = vunpack.c.h.b16 %v505
        %v659 = vunpack.c.l.b16 %v506
        %v660 = vunpack.c.h.b16 %v506
        %v661 = vunpack.c.l.b16 %v507
        %v662 = vunpack.c.h.b16 %v507
        %v663 = vunpack.c.l.b16 %v508
        %v664 = vunpack.c.h.b16 %v508
        %v665 = vunpack.c.l.b16 %v509
        %v666 = vunpack.c.h.b16 %v509
        %v667 = vunpack.c.l.b16 %v510
        %v668 = vunpack.c.h.b16 %v510
        %v669 = vunpack.c.l.b16 %v511
        %v670 = vunpack.c.h.b16 %v511
        %v671 = vunpack.c.l.b16 %v512
        %v672 = vunpack.c.h.b16 %v512
        %v673 = vunpack.c.l.b16 %v513
        %v674 = vunpack.c.h.b16 %v513
        %v675 = vunpack.c.l.b16 %v514
        %v676 = vunpack.c.h.b16 %v514
        %v677 = vunpack.c.l.b16 %v515
        %v678 = vunpack.c.h.b16 %v515
        %v679 = vunpack.c.l.b16 %v516
        %v680 = vunpack.c.h.b16 %v516
        %v681 = vunpack.c.l.b16 %v517
        %v682 = vunpack.c.h.b16 %v517
        %v683 = vunpack.c.l.b16 %v518
        %v684 = vunpack.c.h.b16 %v518
        %v685 = vunpack.c.l.b16 %v519
        %v686 = vunpack.c.h.b16 %v519
        %v687 = vunpack.c.l.b16 %v520
        %v688 = vunpack.c.h.b16 %v520
        %v689 = vunpack.c.l.b16 %v521
        %v690 = vunpack.c.h.b16 %v521
        %v691 = vunpack.c.l.b16 %v522
        %v692 = vunpack.c.h.b16 %v522
        %v693 = vunpack.c.l.b16 %v523
        %v694 = vunpack.c.h.b16 %v523
        %v695 = vunpack.c.l.b16 %v524
        %v696 = vunpack.c.h.b16 %v524
        %v697 = vunpack.c.l.b16 %v525
        %v698 = vunpack.c.h.b16 %v525
        %v699 = vunpack.c.l.b16 %v526
        %v700 = vunpack.c.h.b16 %v526
        %v701 = vunpack.c.l.b16 %v527
        %v702 = vunpack.c.h.b16 %v527
        %v703 = vunpack.c.l.b16 %v528
        %v704 = vunpack.c.h.b16 %v528
        %v705 = vpack.c.b16 %v643, %v641
        %v706 = vpack.c.b16 %v644, %v642
        %v707 = vpack.c.b16 %v647, %v645
        %v708 = vpack.c.b16 %v648, %v646
        %v709 = vpack.c.b16 %v651, %v649
        %v710 = vpack.c.b16 %v652, %v650
        %v711 = vpack.c.b16 %v655, %v653
        %v712 = vpack.c.b16 %v656, %v654
        %v713 = vpack.c.b16 %v659, %v657
        %v714 = vpack.c.b16 %v660, %v658
        %v715 = vpack.c.b16 %v663, %v661
        %v716 = vpack.c.b16 %v664, %v662
        %v717 = vpack.c.b16 %v667, %v665
        %v718 = vpack.c.b16 %v668, %v666
        %v719 = vpack.c.b16 %v671, %v669
        %v720 = vpack.c.b16 %v672, %v670
        %v721 = vpack.c.b16 %v675, %v673
        %v722 = vpack.c.b16 %v676, %v674
        %v723 = vpack.c.b16 %v679, %v677
        %v724 = vpack.c.b16 %v680, %v678
        %v725 = vpack.c.b16 %v683, %v681
        %v726 = vpack.c.b16 %v684, %v682
        %v727 = vpack.c.b16 %v687, %v685
        %v728 = vpack.c.b16 %v688, %v686
        %v729 = vpack.c.b16 %v691, %v689
        %v730 = vpack.c.b16 %v692, %v690
        %v731 = vpack.c.b16 %v695, %v693
        %v732 = vpack.c.b16 %v696, %v694
        %v733 = vpack.c.b16 %v699, %v697
        %v734 = vpack.c.b16 %v700, %v698
        %v735 = vpack.c.b16 %v703, %v701
        %v736 = vpack.c.b16 %v704, %v702
        %769 = vmatprep.subr.bf16.mxu0 %v720
        %770 = vmatpush1.bf16.msra.mxu0 %v719
        %771 = vmatprep.subr.bf16.mxu0 %v718
        %772 = vmatpush1.bf16.msra.mxu0 %v717
        %773 = vmatprep.subr.bf16.mxu0 %v716
        %774 = vmatpush1.bf16.msra.mxu0 %v715
        %775 = vmatprep.subr.bf16.mxu0 %v714
        %776 = vmatpush1.bf16.msra.mxu0 %v713
        %777 = vmatprep.subr.bf16.mxu0 %v712
        %778 = vmatpush1.bf16.msra.mxu0 %v711
        %779 = vmatprep.subr.bf16.mxu0 %v710
        %780 = vmatpush1.bf16.msra.mxu0 %v709
        %781 = vmatprep.subr.bf16.mxu0 %v708
        %782 = vmatpush1.bf16.msra.mxu0 %v707
        %783 = vmatprep.subr.bf16.mxu0 %v706
        %784 = vmatpush1.bf16.msra.mxu0 %v705
        %785 = vmatprep.subr.bf16.mxu0 %v736
        %786 = vmatpush2.bf16.msra.mxu0 %v735
        %787 = vmatprep.subr.bf16.mxu0 %v734
        %788 = vmatpush2.bf16.msra.mxu0 %v733
        %789 = vmatprep.subr.bf16.mxu0 %v732
        %790 = vmatpush2.bf16.msra.mxu0 %v731
        %791 = vmatprep.subr.bf16.mxu0 %v730
        %792 = vmatpush2.bf16.msra.mxu0 %v729
        %793 = vmatprep.subr.bf16.mxu0 %v728
        %794 = vmatpush2.bf16.msra.mxu0 %v727
        %795 = vmatprep.subr.bf16.mxu0 %v726
        %796 = vmatpush2.bf16.msra.mxu0 %v725
        %797 = vmatprep.subr.bf16.mxu0 %v724
        %798 = vmatpush2.bf16.msra.mxu0 %v723
        %799 = vmatprep.subr.bf16.mxu0 %v722
        %800 = vmatpush2.bf16.msra.mxu0 %v721
        %801 = vmatprep.mubr.bf16.mxu0 %v578
        %802 = vmatmul.mubr.bf16.gmra.mxu0 %v577
        %v803 = vpop.f32.mrf.mxu0
        %v804 = vadd.f32 0.0, %v803
        %v805 = vpop.f32.mrf.mxu0
        %v806 = vadd.f32 0.0, %v805
        %v807 = vpop.f32.mrf.mxu0
        %v808 = vadd.f32 0.0, %v807
        %v809 = vpop.f32.mrf.mxu0
        %v810 = vadd.f32 0.0, %v809
        %811 = vmatprep.mubr.bf16.mxu0 %v580
        %812 = vmatmul.mubr.bf16.gmra.mxu0 %v579
        %v813 = vpop.f32.mrf.mxu0
        %v814 = vadd.f32 0.0, %v813
        %v815 = vpop.f32.mrf.mxu0
        %v816 = vadd.f32 0.0, %v815
        %v817 = vpop.f32.mrf.mxu0
        %v818 = vadd.f32 0.0, %v817
        %v819 = vpop.f32.mrf.mxu0
        %v820 = vadd.f32 0.0, %v819
        %821 = vmatprep.mubr.bf16.mxu0 %v582
        %822 = vmatmul.mubr.bf16.gmra.mxu0 %v581
        %v823 = vpop.f32.mrf.mxu0
        %v824 = vadd.f32 0.0, %v823
        %v825 = vpop.f32.mrf.mxu0
        %v826 = vadd.f32 0.0, %v825
        %v827 = vpop.f32.mrf.mxu0
        %v828 = vadd.f32 0.0, %v827
        %v829 = vpop.f32.mrf.mxu0
        %v830 = vadd.f32 0.0, %v829
        %831 = vmatprep.mubr.bf16.mxu0 %v584
        %832 = vmatmul.mubr.bf16.gmra.mxu0 %v583
        %v833 = vpop.f32.mrf.mxu0
        %v834 = vadd.f32 0.0, %v833
        %v835 = vpop.f32.mrf.mxu0
        %v836 = vadd.f32 0.0, %v835
        %v837 = vpop.f32.mrf.mxu0
        %v838 = vadd.f32 0.0, %v837
        %v839 = vpop.f32.mrf.mxu0
        %v840 = vadd.f32 0.0, %v839
        %841 = vmatprep.mubr.bf16.mxu0 %v586
        %842 = vmatmul.mubr.bf16.gmra.mxu0 %v585
        %v843 = vpop.f32.mrf.mxu0
        %v844 = vadd.f32 0.0, %v843
        %v845 = vpop.f32.mrf.mxu0
        %v846 = vadd.f32 0.0, %v845
        %v847 = vpop.f32.mrf.mxu0
        %v848 = vadd.f32 0.0, %v847
        %v849 = vpop.f32.mrf.mxu0
        %v850 = vadd.f32 0.0, %v849
        %851 = vmatprep.mubr.bf16.mxu0 %v588
        %852 = vmatmul.mubr.bf16.gmra.mxu0 %v587
        %v853 = vpop.f32.mrf.mxu0
        %v854 = vadd.f32 0.0, %v853
        %v855 = vpop.f32.mrf.mxu0
        %v856 = vadd.f32 0.0, %v855
        %v857 = vpop.f32.mrf.mxu0
        %v858 = vadd.f32 0.0, %v857
        %v859 = vpop.f32.mrf.mxu0
        %v860 = vadd.f32 0.0, %v859
        %861 = vmatprep.mubr.bf16.mxu0 %v590
        %862 = vmatmul.mubr.bf16.gmra.mxu0 %v589
        %v863 = vpop.f32.mrf.mxu0
        %v864 = vadd.f32 0.0, %v863
        %v865 = vpop.f32.mrf.mxu0
        %v866 = vadd.f32 0.0, %v865
        %v867 = vpop.f32.mrf.mxu0
        %v868 = vadd.f32 0.0, %v867
        %v869 = vpop.f32.mrf.mxu0
        %v870 = vadd.f32 0.0, %v869
        %871 = vmatprep.mubr.bf16.mxu0 %v592
        %872 = vmatmul.mubr.bf16.gmra.mxu0 %v591
        %v873 = vpop.f32.mrf.mxu0
        %v874 = vadd.f32 0.0, %v873
        %v875 = vpop.f32.mrf.mxu0
        %v876 = vadd.f32 0.0, %v875
        %v877 = vpop.f32.mrf.mxu0
        %v878 = vadd.f32 0.0, %v877
        %v879 = vpop.f32.mrf.mxu0
        %v880 = vadd.f32 0.0, %v879
        %881 = vdwg.mxu0
        %v882 = vadd.f32 %v449, %v804
        %v883 = vadd.f32 %v450, %v806
        %v884 = vadd.f32 %v451, %v808
        %v885 = vadd.f32 %v452, %v810
        %v886 = vadd.f32 %v453, %v814
        %v887 = vadd.f32 %v454, %v816
        %v888 = vadd.f32 %v455, %v818
        %v889 = vadd.f32 %v456, %v820
        %v890 = vadd.f32 %v457, %v824
        %v891 = vadd.f32 %v458, %v826
        %v892 = vadd.f32 %v459, %v828
        %v893 = vadd.f32 %v460, %v830
        %v894 = vadd.f32 %v461, %v834
        %v895 = vadd.f32 %v462, %v836
        %v896 = vadd.f32 %v463, %v838
        %v897 = vadd.f32 %v464, %v840
        %v898 = vadd.f32 %v465, %v844
        %v899 = vadd.f32 %v466, %v846
        %v900 = vadd.f32 %v467, %v848
        %v901 = vadd.f32 %v468, %v850
        %v902 = vadd.f32 %v469, %v854
        %v903 = vadd.f32 %v470, %v856
        %v904 = vadd.f32 %v471, %v858
        %v905 = vadd.f32 %v472, %v860
        %v906 = vadd.f32 %v473, %v864
        %v907 = vadd.f32 %v474, %v866
        %v908 = vadd.f32 %v475, %v868
        %v909 = vadd.f32 %v476, %v870
        %v910 = vadd.f32 %v477, %v874
        %v911 = vadd.f32 %v478, %v876
        %v912 = vadd.f32 %v479, %v878
        %v913 = vadd.f32 %v480, %v880
        %914 = vst [vmem:[#allocation2] sm:$0xff] %v882
        %915 = vst [vmem:[#allocation2 + $0x8] sm:$0xff] %v883
        %916 = vst [vmem:[#allocation2 + $0x10] sm:$0xff] %v884
        %917 = vst [vmem:[#allocation2 + $0x18] sm:$0xff] %v885
        %918 = vst [vmem:[#allocation2 + $0x20] sm:$0xff] %v886
        %919 = vst [vmem:[#allocation2 + $0x28] sm:$0xff] %v887
        %920 = vst [vmem:[#allocation2 + $0x30] sm:$0xff] %v888
        %921 = vst [vmem:[#allocation2 + $0x38] sm:$0xff] %v889
        %922 = vst [vmem:[#allocation2 + $0x40] sm:$0xff] %v890
        %923 = vst [vmem:[#allocation2 + $0x48] sm:$0xff] %v891
        %924 = vst [vmem:[#allocation2 + $0x50] sm:$0xff] %v892
        %925 = vst [vmem:[#allocation2 + $0x58] sm:$0xff] %v893
        %926 = vst [vmem:[#allocation2 + $0x60] sm:$0xff] %v894
        %927 = vst [vmem:[#allocation2 + $0x68] sm:$0xff] %v895
        %928 = vst [vmem:[#allocation2 + $0x70] sm:$0xff] %v896
        %929 = vst [vmem:[#allocation2 + $0x78] sm:$0xff] %v897
        %930 = vst [vmem:[#allocation2 + $0x80] sm:$0xff] %v898
        %931 = vst [vmem:[#allocation2 + $0x88] sm:$0xff] %v899
        %932 = vst [vmem:[#allocation2 + $0x90] sm:$0xff] %v900
        %933 = vst [vmem:[#allocation2 + $0x98] sm:$0xff] %v901
        %934 = vst [vmem:[#allocation2 + $0xa0] sm:$0xff] %v902
        %935 = vst [vmem:[#allocation2 + $0xa8] sm:$0xff] %v903
        %936 = vst [vmem:[#allocation2 + $0xb0] sm:$0xff] %v904
        %937 = vst [vmem:[#allocation2 + $0xb8] sm:$0xff] %v905
        %938 = vst [vmem:[#allocation2 + $0xc0] sm:$0xff] %v906
        %939 = vst [vmem:[#allocation2 + $0xc8] sm:$0xff] %v907
        %940 = vst [vmem:[#allocation2 + $0xd0] sm:$0xff] %v908
        %941 = vst [vmem:[#allocation2 + $0xd8] sm:$0xff] %v909
        %942 = vst [vmem:[#allocation2 + $0xe0] sm:$0xff] %v910
        %943 = vst [vmem:[#allocation2 + $0xe8] sm:$0xff] %v911
        %944 = vst [vmem:[#allocation2 + $0xf0] sm:$0xff] %v912
        %945 = vst [vmem:[#allocation2 + $0xf8] sm:$0xff] %v913
        %p946 = scmp.eq.s32.totalorder %s22, 1
        // Predicated region
        $region79: #{res_cnn_forward.46} parent=69 // pred_check
          %p947 = pneg %p946
        $region80: #{res_cnn_forward.46} parent=69 // pred_check_branch
          %949 = sbr.rel (%p947) target = $region82
        $region81: #{res_cnn_forward.46} parent=69 // pred_region
          %v950 = vld [vmem:[#allocation2] sm:$0xff]
          %v951 = vld [vmem:[#allocation2 + $0x8] sm:$0xff]
          %v952 = vld [vmem:[#allocation2 + $0x10] sm:$0xff]
          %v953 = vld [vmem:[#allocation2 + $0x18] sm:$0xff]
          %v954 = vld [vmem:[#allocation2 + $0x20] sm:$0xff]
          %v955 = vld [vmem:[#allocation2 + $0x28] sm:$0xff]
          %v956 = vld [vmem:[#allocation2 + $0x30] sm:$0xff]
          %v957 = vld [vmem:[#allocation2 + $0x38] sm:$0xff]
          %v958 = vld [vmem:[#allocation2 + $0x40] sm:$0xff]
          %v959 = vld [vmem:[#allocation2 + $0x48] sm:$0xff]
          %v960 = vld [vmem:[#allocation2 + $0x50] sm:$0xff]
          %v961 = vld [vmem:[#allocation2 + $0x58] sm:$0xff]
          %v962 = vld [vmem:[#allocation2 + $0x60] sm:$0xff]
          %v963 = vld [vmem:[#allocation2 + $0x68] sm:$0xff]
          %v964 = vld [vmem:[#allocation2 + $0x70] sm:$0xff]
          %v965 = vld [vmem:[#allocation2 + $0x78] sm:$0xff]
          %v966 = vld [vmem:[#allocation2 + $0x80] sm:$0xff]
          %v967 = vld [vmem:[#allocation2 + $0x88] sm:$0xff]
          %v968 = vld [vmem:[#allocation2 + $0x90] sm:$0xff]
          %v969 = vld [vmem:[#allocation2 + $0x98] sm:$0xff]
          %v970 = vld [vmem:[#allocation2 + $0xa0] sm:$0xff]
          %v971 = vld [vmem:[#allocation2 + $0xa8] sm:$0xff]
          %v972 = vld [vmem:[#allocation2 + $0xb0] sm:$0xff]
          %v973 = vld [vmem:[#allocation2 + $0xb8] sm:$0xff]
          %v974 = vld [vmem:[#allocation2 + $0xc0] sm:$0xff]
          %v975 = vld [vmem:[#allocation2 + $0xc8] sm:$0xff]
          %v976 = vld [vmem:[#allocation2 + $0xd0] sm:$0xff]
          %v977 = vld [vmem:[#allocation2 + $0xd8] sm:$0xff]
          %v978 = vld [vmem:[#allocation2 + $0xe0] sm:$0xff]
          %v979 = vld [vmem:[#allocation2 + $0xe8] sm:$0xff]
          %v980 = vld [vmem:[#allocation2 + $0xf0] sm:$0xff]
          %v981 = vld [vmem:[#allocation2 + $0xf8] sm:$0xff]
          %v982 = vld [vmem:[%s394] sm:$0x3]
          %v984 = vlaneseq
          %v985 = vshrl.u32 %v984, 7
          %v986 = vsub.s32 0, %v985
          %v987 = vrot.slane %v982, %v986
          %v988 = vlaneseq
          %v989 = vshrl.u32 %v988, 7
          %v990 = vsub.s32 1, %v989
          %v991 = vrot.slane %v982, %v990
          %v994 = vmul.f32 %v950, %v987
          %v995 = vmul.f32 %v951, %v991
          %v996 = vmul.f32 %v952, %v987
          %v997 = vmul.f32 %v953, %v991
          %v998 = vmul.f32 %v954, %v987
          %v999 = vmul.f32 %v955, %v991
          %v1000 = vmul.f32 %v956, %v987
          %v1001 = vmul.f32 %v957, %v991
          %v1002 = vmul.f32 %v958, %v987
          %v1003 = vmul.f32 %v959, %v991
          %v1004 = vmul.f32 %v960, %v987
          %v1005 = vmul.f32 %v961, %v991
          %v1006 = vmul.f32 %v962, %v987
          %v1007 = vmul.f32 %v963, %v991
          %v1008 = vmul.f32 %v964, %v987
          %v1009 = vmul.f32 %v965, %v991
          %v1010 = vmul.f32 %v966, %v987
          %v1011 = vmul.f32 %v967, %v991
          %v1012 = vmul.f32 %v968, %v987
          %v1013 = vmul.f32 %v969, %v991
          %v1014 = vmul.f32 %v970, %v987
          %v1015 = vmul.f32 %v971, %v991
          %v1016 = vmul.f32 %v972, %v987
          %v1017 = vmul.f32 %v973, %v991
          %v1018 = vmul.f32 %v974, %v987
          %v1019 = vmul.f32 %v975, %v991
          %v1020 = vmul.f32 %v976, %v987
          %v1021 = vmul.f32 %v977, %v991
          %v1022 = vmul.f32 %v978, %v987
          %v1023 = vmul.f32 %v979, %v991
          %v1024 = vmul.f32 %v980, %v987
          %v1025 = vmul.f32 %v981, %v991
          %v1026 = vld [vmem:[%s399] sm:$0x3]
          %v1028 = vlaneseq
          %v1029 = vshrl.u32 %v1028, 7
          %v1030 = vsub.s32 0, %v1029
          %v1031 = vrot.slane %v1026, %v1030
          %v1032 = vlaneseq
          %v1033 = vshrl.u32 %v1032, 7
          %v1034 = vsub.s32 1, %v1033
          %v1035 = vrot.slane %v1026, %v1034
          %v1038 = vadd.f32 %v994, %v1031
          %v1039 = vadd.f32 %v995, %v1035
          %v1040 = vadd.f32 %v996, %v1031
          %v1041 = vadd.f32 %v997, %v1035
          %v1042 = vadd.f32 %v998, %v1031
          %v1043 = vadd.f32 %v999, %v1035
          %v1044 = vadd.f32 %v1000, %v1031
          %v1045 = vadd.f32 %v1001, %v1035
          %v1046 = vadd.f32 %v1002, %v1031
          %v1047 = vadd.f32 %v1003, %v1035
          %v1048 = vadd.f32 %v1004, %v1031
          %v1049 = vadd.f32 %v1005, %v1035
          %v1050 = vadd.f32 %v1006, %v1031
          %v1051 = vadd.f32 %v1007, %v1035
          %v1052 = vadd.f32 %v1008, %v1031
          %v1053 = vadd.f32 %v1009, %v1035
          %v1054 = vadd.f32 %v1010, %v1031
          %v1055 = vadd.f32 %v1011, %v1035
          %v1056 = vadd.f32 %v1012, %v1031
          %v1057 = vadd.f32 %v1013, %v1035
          %v1058 = vadd.f32 %v1014, %v1031
          %v1059 = vadd.f32 %v1015, %v1035
          %v1060 = vadd.f32 %v1016, %v1031
          %v1061 = vadd.f32 %v1017, %v1035
          %v1062 = vadd.f32 %v1018, %v1031
          %v1063 = vadd.f32 %v1019, %v1035
          %v1064 = vadd.f32 %v1020, %v1031
          %v1065 = vadd.f32 %v1021, %v1035
          %v1066 = vadd.f32 %v1022, %v1031
          %v1067 = vadd.f32 %v1023, %v1035
          %v1068 = vadd.f32 %v1024, %v1031
          %v1069 = vadd.f32 %v1025, %v1035
          %v1070 = vmax.f32 %v1038, 0.0
          %v1071 = vmax.f32 %v1039, 0.0
          %v1072 = vmax.f32 %v1040, 0.0
          %v1073 = vmax.f32 %v1041, 0.0
          %v1074 = vmax.f32 %v1042, 0.0
          %v1075 = vmax.f32 %v1043, 0.0
          %v1076 = vmax.f32 %v1044, 0.0
          %v1077 = vmax.f32 %v1045, 0.0
          %v1078 = vmax.f32 %v1046, 0.0
          %v1079 = vmax.f32 %v1047, 0.0
          %v1080 = vmax.f32 %v1048, 0.0
          %v1081 = vmax.f32 %v1049, 0.0
          %v1082 = vmax.f32 %v1050, 0.0
          %v1083 = vmax.f32 %v1051, 0.0
          %v1084 = vmax.f32 %v1052, 0.0
          %v1085 = vmax.f32 %v1053, 0.0
          %v1086 = vmax.f32 %v1054, 0.0
          %v1087 = vmax.f32 %v1055, 0.0
          %v1088 = vmax.f32 %v1056, 0.0
          %v1089 = vmax.f32 %v1057, 0.0
          %v1090 = vmax.f32 %v1058, 0.0
          %v1091 = vmax.f32 %v1059, 0.0
          %v1092 = vmax.f32 %v1060, 0.0
          %v1093 = vmax.f32 %v1061, 0.0
          %v1094 = vmax.f32 %v1062, 0.0
          %v1095 = vmax.f32 %v1063, 0.0
          %v1096 = vmax.f32 %v1064, 0.0
          %v1097 = vmax.f32 %v1065, 0.0
          %v1098 = vmax.f32 %v1066, 0.0
          %v1099 = vmax.f32 %v1067, 0.0
          %v1100 = vmax.f32 %v1068, 0.0
          %v1101 = vmax.f32 %v1069, 0.0
          %v1102 = vpack.c.bf16 %v1072, %v1070
          %v1103 = vpack.c.bf16 %v1073, %v1071
          %v1104 = vpack.c.bf16 %v1076, %v1074
          %v1105 = vpack.c.bf16 %v1077, %v1075
          %v1106 = vpack.c.bf16 %v1080, %v1078
          %v1107 = vpack.c.bf16 %v1081, %v1079
          %v1108 = vpack.c.bf16 %v1084, %v1082
          %v1109 = vpack.c.bf16 %v1085, %v1083
          %v1110 = vpack.c.bf16 %v1088, %v1086
          %v1111 = vpack.c.bf16 %v1089, %v1087
          %v1112 = vpack.c.bf16 %v1092, %v1090
          %v1113 = vpack.c.bf16 %v1093, %v1091
          %v1114 = vpack.c.bf16 %v1096, %v1094
          %v1115 = vpack.c.bf16 %v1097, %v1095
          %v1116 = vpack.c.bf16 %v1100, %v1098
          %v1117 = vpack.c.bf16 %v1101, %v1099
          %v1134 = vunpack.c.l.b16 %v1102
          %v1135 = vunpack.c.l.b16 %v1103
          %v1136 = vunpack.c.h.b16 %v1102
          %v1137 = vunpack.c.h.b16 %v1103
          %v1138 = vunpack.c.l.b16 %v1104
          %v1139 = vunpack.c.l.b16 %v1105
          %v1140 = vunpack.c.h.b16 %v1104
          %v1141 = vunpack.c.h.b16 %v1105
          %v1142 = vunpack.c.l.b16 %v1106
          %v1143 = vunpack.c.l.b16 %v1107
          %v1144 = vunpack.c.h.b16 %v1106
          %v1145 = vunpack.c.h.b16 %v1107
          %v1146 = vunpack.c.l.b16 %v1108
          %v1147 = vunpack.c.l.b16 %v1109
          %v1148 = vunpack.c.h.b16 %v1108
          %v1149 = vunpack.c.h.b16 %v1109
          %v1150 = vunpack.c.l.b16 %v1110
          %v1151 = vunpack.c.l.b16 %v1111
          %v1152 = vunpack.c.h.b16 %v1110
          %v1153 = vunpack.c.h.b16 %v1111
          %v1154 = vunpack.c.l.b16 %v1112
          %v1155 = vunpack.c.l.b16 %v1113
          %v1156 = vunpack.c.h.b16 %v1112
          %v1157 = vunpack.c.h.b16 %v1113
          %v1158 = vunpack.c.l.b16 %v1114
          %v1159 = vunpack.c.l.b16 %v1115
          %v1160 = vunpack.c.h.b16 %v1114
          %v1161 = vunpack.c.h.b16 %v1115
          %v1162 = vunpack.c.l.b16 %v1116
          %v1163 = vunpack.c.l.b16 %v1117
          %v1164 = vunpack.c.h.b16 %v1116
          %v1165 = vunpack.c.h.b16 %v1117
          %v1166 = vpack.c.b16 %v1135, %v1134
          %v1167 = vpack.c.b16 %v1137, %v1136
          %v1168 = vpack.c.b16 %v1139, %v1138
          %v1169 = vpack.c.b16 %v1141, %v1140
          %v1170 = vpack.c.b16 %v1143, %v1142
          %v1171 = vpack.c.b16 %v1145, %v1144
          %v1172 = vpack.c.b16 %v1147, %v1146
          %v1173 = vpack.c.b16 %v1149, %v1148
          %v1174 = vpack.c.b16 %v1151, %v1150
          %v1175 = vpack.c.b16 %v1153, %v1152
          %v1176 = vpack.c.b16 %v1155, %v1154
          %v1177 = vpack.c.b16 %v1157, %v1156
          %v1178 = vpack.c.b16 %v1159, %v1158
          %v1179 = vpack.c.b16 %v1161, %v1160
          %v1180 = vpack.c.b16 %v1163, %v1162
          %v1181 = vpack.c.b16 %v1165, %v1164
          %1198 = vst [vmem:[%s410] sm:$0xff] %v1166
          %1199 = vst [vmem:[%s410 + $0x8] sm:$0xff] %v1167
          %1200 = vst [vmem:[%s410 + $0x10] sm:$0xff] %v1168
          %1201 = vst [vmem:[%s410 + $0x18] sm:$0xff] %v1169
          %1202 = vst [vmem:[%s410 + $0x20] sm:$0xff] %v1170
          %1203 = vst [vmem:[%s410 + $0x28] sm:$0xff] %v1171
          %1204 = vst [vmem:[%s410 + $0x30] sm:$0xff] %v1172
          %1205 = vst [vmem:[%s410 + $0x38] sm:$0xff] %v1173
          %1206 = vst [vmem:[%s410 + $0x40] sm:$0xff] %v1174
          %1207 = vst [vmem:[%s410 + $0x48] sm:$0xff] %v1175
          %1208 = vst [vmem:[%s410 + $0x50] sm:$0xff] %v1176
          %1209 = vst [vmem:[%s410 + $0x58] sm:$0xff] %v1177
          %1210 = vst [vmem:[%s410 + $0x60] sm:$0xff] %v1178
          %1211 = vst [vmem:[%s410 + $0x68] sm:$0xff] %v1179
          %1212 = vst [vmem:[%s410 + $0x70] sm:$0xff] %v1180
          %1213 = vst [vmem:[%s410 + $0x78] sm:$0xff] %v1181
        $region82: #{res_cnn_forward.46} parent=69 // pred_fallthru
          _
        %s1214 = smul.u32 16, %s20
        %s1215 = smul.u32 2, %s21
        %p1216 = scmp.lt.s32.totalorder %s1214, 15
        %s1217 = scalar_select %p1216, %s1214, 15
        %p1218 = scmp.lt.s32.totalorder %s1215, 1
        %s1219 = scalar_select %p1218, %s1215, 1
        %s1220 = smul.addr %s1217, 2
        %s1221 = sadd.s32 %s1219, %s1220
        %s1222 = smul.addr %s1221, 4
        %s1223 = scalar_lea.vmem %s4, %s1222
        // Predicated region
        $region83: #{res_cnn_forward.46} parent=69 // pred_check
          %p1224 = pneg %p162
        $region84: #{res_cnn_forward.46} parent=69 // pred_check_branch
          %1226 = sbr.rel (%p1224) target = $region86
        $region85: #{res_cnn_forward.46} parent=69 // pred_region
          %s1227 = smul.u32 16, %s20
          %s1228 = smul.u32 2, %s21
        $region86: #{res_cnn_forward.46} parent=69 // pred_fallthru
          _
        // Predicated region
        $region87: #{res_cnn_forward.46} parent=69 // pred_check
          %p1229 = pneg %p162
        $region88: #{res_cnn_forward.46} parent=69 // pred_check_branch
          %1231 = sbr.rel (%p1229) target = $region90
        $region89: #{res_cnn_forward.46} parent=69 // pred_region
          %s1232 = smul.u32 16, %s20
          %s1233 = smul.u32 2, %s21
          %p1234 = scmp.lt.s32.totalorder %s1232, 15
          %s1235 = scalar_select %p1234, %s1232, 15
          %p1236 = scmp.lt.s32.totalorder %s1233, 1
          %s1237 = scalar_select %p1236, %s1233, 1
          %s1238 = smul.addr %s1235, 2
          %s1239 = sadd.s32 %s1237, %s1238
          %s1240 = smul.addr %s1239, 4
          %s1241 = scalar_lea.vmem %s4, %s1240
        $region90: #{res_cnn_forward.46} parent=69 // pred_fallthru
          _
      $region70: #{res_cnn_forward.46} parent=5 // pred_fallthru
        _
      %p1242 = scmp.le.s32.totalorder 2, %s10
      // Predicated region
      $region91: #{res_cnn_forward.46} parent=5 // pred_check
        %p1243 = pneg %p1242
      $region92: #{res_cnn_forward.46} parent=5 // pred_check_branch
        %1245 = sbr.rel (%p1243) target = $region94
      $region93: #{res_cnn_forward.46} parent=5 // pred_region
        %s1246 = ssub.s32 %s10, 2
      $region94: #{res_cnn_forward.46} parent=5 // pred_fallthru
        _
    $region6: #{res_cnn_forward.46} parent=1 // loop_footer
      %s14 = sadd.s32 1, %s10
    $region7: #{res_cnn_forward.46} parent=1 // loop_footer_branch
      %9 = sbr.rel target = $region3
    $region8: #{res_cnn_forward.46} parent=1 // loop_exit
      _

// kernel: res_cnn_forward.47
$region0: #{res_cnn_forward.47}
  #allocation0 [shape = 'u32[]', space=smem, size = 0x4, offset = 0x4, fixed_abs, tag = 'smem constant byte address 0x4 - core index']
  #allocation1 [shape = 'u32[144,128]{1,0:T(1,128)}', space=vmem, size = 0x12000, scoped, tag = 'internal scratch']
  #allocation2 [shape = 'f32[512,128]{1,0:T(8,128)}', space=vmem, size = 0x40000, scoped, tag = 'scratch operand']
  %s0 = inlined_call_operand.vmem [shape: bf16[512,3328], index: 0, kind: input, shape index: {}]
  %s1 = inlined_call_operand.vmem [shape: bf16[3328,128], index: 1, kind: input, shape index: {}]
  %s2 = inlined_call_operand.vmem [shape: f32[1,128], index: 2, kind: input, shape index: {}]
  %s3 = inlined_call_operand.vmem [shape: f32[1,128], index: 3, kind: input, shape index: {}]
  %s4 = inlined_call_operand.vmem [shape: f32[512,128], index: 4, kind: output, shape index: {}]
  %s5 = sld [smem:[#allocation0]]
  $region95: #{res_cnn_forward.47} parent=0
    _
  %s7 = ssub.s32 1, %s5
  %s8 = scalar_select 0, %s7, %s5
  $region1: #{res_cnn_forward.47} parent=0
    #allocation3 [shape = 'u8[524288]{0}', space=vmem, size = 0x80000, scoped, tag = 'input window, operand 0']
    loop: start=0, step=1, limit=15
    $region2: #{res_cnn_forward.47} parent=1 // loop_pre_header
      _
    $region3: #{res_cnn_forward.47} parent=1 // loop_header
      %s10 = sphi 0, %s14
      %p11 = scmp.ge.s32.totalorder %s10, 15
      %s17 = sphi 0, %s36
      %s18 = sphi 0, %s32
      %s19 = sphi 0, %s28
      %s20 = sphi 0, %s17
      %s21 = sphi 0, %s18
      %s22 = sphi 0, %s19
      %s23 = sphi 0, %s20
      %s24 = sphi 0, %s21
      %s25 = sphi 0, %s22
      %s41 = sphi 0, %s43
      %s44 = sphi 0, %s41
      %s45 = sphi 0, %s44
      %s61 = sphi 0, %s45
      %s69 = sphi 0, %s71
      %s72 = sphi 0, %s69
      %s73 = sphi 0, %s72
      %s89 = sphi 0, %s73
      %s95 = sphi 0, %s97
      %s98 = sphi 0, %s95
      %s99 = sphi 0, %s98
      %s115 = sphi 0, %s99
      %s121 = sphi 0, %s123
      %s124 = sphi 0, %s121
      %s125 = sphi 0, %s124
      %s141 = sphi 0, %s125
      %s149 = sphi 0, %s151
      %s152 = sphi 0, %s149
      %s153 = sphi 0, %s152
      %s169 = sphi 0, %s153
    $region4: #{res_cnn_forward.47} parent=1 // loop_header_branch
      %13 = sbr.rel (%p11) target = $region8
    $region5: #{res_cnn_forward.47} parent=1 // loop_body
      %s15 = ssub.s32 %s10, 1
      %s16 = ssub.s32 %s10, 2
      %s26 = sadd.s32 1, %s19
      %p27 = scmp.ge.s32.totalorder %s26, 13
      %s28 = scalar_select %p27, 0, %s26
      %s29 = sadd.s32 1, %s18
      %s30 = scalar_select %p27, %s29, %s18
      %p31 = scmp.ge.s32.totalorder %s30, 1
      %s32 = scalar_select %p31, 0, %s30
      %s33 = sadd.s32 1, %s17
      %s34 = scalar_select %p31, %s33, %s17
      %p35 = scmp.ge.s32.totalorder %s34, 1
      %s36 = scalar_select %p35, 0, %s34
      %s37 = ssub.s32 %s17, %s36
      %s38 = ssub.s32 %s19, %s28
      %s39 = sor.u32 %s37, %s38
      %p40 = scmp.eq.s32.totalorder %s39, 0
      %s42 = sadd.s32 %s41, 1
      %s43 = scalar_select %p40, %s41, %s42
      %p46 = pneg %p40
      %p47 = scmp.eq.s32.totalorder %s10, 12
      %p48 = por %p46, %p47
      %p49 = scmp.ne.s32.totalorder %s41, %s44
      %p50 = scmp.eq.s32.totalorder %s10, 0
      %p51 = por %p49, %p50
      %p52 = scmp.ne.s32.totalorder %s41, %s44
      %p53 = scmp.eq.s32.totalorder %s15, 12
      %p54 = por %p52, %p53
      %p55 = scmp.ne.s32.totalorder %s44, %s45
      %p56 = scmp.eq.s32.totalorder %s15, 0
      %p57 = por %p55, %p56
      %p58 = scmp.ne.s32.totalorder %s44, %s45
      %p59 = scmp.eq.s32.totalorder %s16, 12
      %p60 = por %p58, %p59
      %p62 = scmp.ne.s32.totalorder %s45, %s61
      %p63 = scmp.eq.s32.totalorder %s16, 0
      %p64 = por %p62, %p63
      %s65 = ssub.s32 %s19, %s28
      %s66 = ssub.s32 %s18, %s32
      %s67 = sor.u32 %s65, %s66
      %p68 = scmp.eq.s32.totalorder %s67, 0
      %s70 = sadd.s32 %s69, 1
      %s71 = scalar_select %p68, %s69, %s70
      %p74 = pneg %p68
      %p75 = scmp.eq.s32.totalorder %s10, 12
      %p76 = por %p74, %p75
      %p77 = scmp.ne.s32.totalorder %s69, %s72
      %p78 = scmp.eq.s32.totalorder %s10, 0
      %p79 = por %p77, %p78
      %p80 = scmp.ne.s32.totalorder %s69, %s72
      %p81 = scmp.eq.s32.totalorder %s15, 12
      %p82 = por %p80, %p81
      %p83 = scmp.ne.s32.totalorder %s72, %s73
      %p84 = scmp.eq.s32.totalorder %s15, 0
      %p85 = por %p83, %p84
      %p86 = scmp.ne.s32.totalorder %s72, %s73
      %p87 = scmp.eq.s32.totalorder %s16, 12
      %p88 = por %p86, %p87
      %p90 = scmp.ne.s32.totalorder %s73, %s89
      %p91 = scmp.eq.s32.totalorder %s16, 0
      %p92 = por %p90, %p91
      %s93 = ssub.s32 %s18, %s32
      %p94 = scmp.eq.s32.totalorder %s93, 0
      %s96 = sadd.s32 %s95, 1
      %s97 = scalar_select %p94, %s95, %s96
      %p100 = pneg %p94
      %p101 = scmp.eq.s32.totalorder %s10, 12
      %p102 = por %p100, %p101
      %p103 = scmp.ne.s32.totalorder %s95, %s98
      %p104 = scmp.eq.s32.totalorder %s10, 0
      %p105 = por %p103, %p104
      %p106 = scmp.ne.s32.totalorder %s95, %s98
      %p107 = scmp.eq.s32.totalorder %s15, 12
      %p108 = por %p106, %p107
      %p109 = scmp.ne.s32.totalorder %s98, %s99
      %p110 = scmp.eq.s32.totalorder %s15, 0
      %p111 = por %p109, %p110
      %p112 = scmp.ne.s32.totalorder %s98, %s99
      %p113 = scmp.eq.s32.totalorder %s16, 12
      %p114 = por %p112, %p113
      %p116 = scmp.ne.s32.totalorder %s99, %s115
      %p117 = scmp.eq.s32.totalorder %s16, 0
      %p118 = por %p116, %p117
      %s119 = ssub.s32 %s18, %s32
      %p120 = scmp.eq.s32.totalorder %s119, 0
      %s122 = sadd.s32 %s121, 1
      %s123 = scalar_select %p120, %s121, %s122
      %p126 = pneg %p120
      %p127 = scmp.eq.s32.totalorder %s10, 12
      %p128 = por %p126, %p127
      %p129 = scmp.ne.s32.totalorder %s121, %s124
      %p130 = scmp.eq.s32.totalorder %s10, 0
      %p131 = por %p129, %p130
      %p132 = scmp.ne.s32.totalorder %s121, %s124
      %p133 = scmp.eq.s32.totalorder %s15, 12
      %p134 = por %p132, %p133
      %p135 = scmp.ne.s32.totalorder %s124, %s125
      %p136 = scmp.eq.s32.totalorder %s15, 0
      %p137 = por %p135, %p136
      %p138 = scmp.ne.s32.totalorder %s124, %s125
      %p139 = scmp.eq.s32.totalorder %s16, 12
      %p140 = por %p138, %p139
      %p142 = scmp.ne.s32.totalorder %s125, %s141
      %p143 = scmp.eq.s32.totalorder %s16, 0
      %p144 = por %p142, %p143
      %s145 = ssub.s32 %s17, %s36
      %s146 = ssub.s32 %s18, %s32
      %s147 = sor.u32 %s145, %s146
      %p148 = scmp.eq.s32.totalorder %s147, 0
      %s150 = sadd.s32 %s149, 1
      %s151 = scalar_select %p148, %s149, %s150
      %p154 = pneg %p148
      %p155 = scmp.eq.s32.totalorder %s10, 12
      %p156 = por %p154, %p155
      %p157 = scmp.ne.s32.totalorder %s149, %s152
      %p158 = scmp.eq.s32.totalorder %s10, 0
      %p159 = por %p157, %p158
      %p160 = scmp.ne.s32.totalorder %s149, %s152
      %p161 = scmp.eq.s32.totalorder %s15, 12
      %p162 = por %p160, %p161
      %p163 = scmp.ne.s32.totalorder %s152, %s153
      %p164 = scmp.eq.s32.totalorder %s15, 0
      %p165 = por %p163, %p164
      %p166 = scmp.ne.s32.totalorder %s152, %s153
      %p167 = scmp.eq.s32.totalorder %s16, 12
      %p168 = por %p166, %p167
      %p170 = scmp.ne.s32.totalorder %s153, %s169
      %p171 = scmp.eq.s32.totalorder %s16, 0
      %p172 = por %p170, %p171
      %p173 = scmp.le.s32.totalorder 1, %s10
      %p174 = scmp.lt.s32.totalorder %s10, 14
      %p175 = pnand %p173, %p174
      %p176 = pneg %p175
      // Predicated region
      $region9: #{res_cnn_forward.47} parent=5 // pred_check
        _
      $region10: #{res_cnn_forward.47} parent=5 // pred_check_branch
        %178 = sbr.rel (%p175) target = $region12
      $region11: #{res_cnn_forward.47} parent=5 // pred_region
        %s179 = ssub.s32 %s10, 1
        // Predicated region
        $region13: #{res_cnn_forward.47} parent=11 // pred_check
          %p180 = pneg %p111
        $region14: #{res_cnn_forward.47} parent=11 // pred_check_branch
          %182 = sbr.rel (%p180) target = $region16
        $region15: #{res_cnn_forward.47} parent=11 // pred_region
          %p183 = scmp.lt.s32.totalorder %s21, 0
          %s184 = scalar_select %p183, %s21, 0
          %s185 = scalar_lea.vmem %s2, %s184
        $region16: #{res_cnn_forward.47} parent=11 // pred_fallthru
          _
        // Predicated region
        $region17: #{res_cnn_forward.47} parent=11 // pred_check
          %p186 = pneg %p137
        $region18: #{res_cnn_forward.47} parent=11 // pred_check_branch
          %188 = sbr.rel (%p186) target = $region20
        $region19: #{res_cnn_forward.47} parent=11 // pred_region
          %p189 = scmp.lt.s32.totalorder %s21, 0
          %s190 = scalar_select %p189, %s21, 0
          %s191 = scalar_lea.vmem %s3, %s190
        $region20: #{res_cnn_forward.47} parent=11 // pred_fallthru
          _
      $region12: #{res_cnn_forward.47} parent=5 // pred_fallthru
        _
      %p192 = scmp.lt.s32.totalorder %s10, 13
      // Predicated region
      $region21: #{res_cnn_forward.47} parent=5 // pred_check
        %p193 = pneg %p192
      $region22: #{res_cnn_forward.47} parent=5 // pred_check_branch
        %195 = sbr.rel (%p193) target = $region24
      $region23: #{res_cnn_forward.47} parent=5 // pred_region
        // Predicated region
        $region25: #{res_cnn_forward.47} parent=23 // pred_check
          %p196 = pneg %p51
        $region26: #{res_cnn_forward.47} parent=23 // pred_check_branch
          %198 = sbr.rel (%p196) target = $region28
        $region27: #{res_cnn_forward.47} parent=23 // pred_region
          %s199 = sand.u32 %s41, 1
          %s200 = sand.u32 %s41, 1
          %s201 = smul.addr %s200, 512
          %s202 = scalar_lea.vmem [#allocation3], %s201
          %s203 = smul.u32 64, %s17
          %s204 = smul.u32 2, %s19
          %s205 = smul.addr %s203, 26
          %s206 = sadd.s32 %s204, %s205
          %s207 = smul.addr %s206, 4
          %s208 = scalar_lea.vmem %s0, %s207
          // Predicated region
          $region29: #{res_cnn_forward.47} parent=27 // pred_check
            _
          $region30: #{res_cnn_forward.47} parent=27 // pred_check_branch
            %210 = sbr.rel (0) target = $region32
          $region31: #{res_cnn_forward.47} parent=27 // pred_region
            // Predicated region
            $region33: #{res_cnn_forward.47} parent=31 // pred_check
              _
            $region34: #{res_cnn_forward.47} parent=31 // pred_check_branch
              %212 = sbr.rel (0) target = $region36
            $region35: #{res_cnn_forward.47} parent=31 // pred_region
              // Predicated region
              $region48: #{res_cnn_forward.47} parent=35 // pred_check
                _
              $region49: #{res_cnn_forward.47} parent=35 // pred_check_branch
                %354 = sbr.rel (0) target = $region51
              $region50: #{res_cnn_forward.47} parent=35 // pred_region
                loop: start=0, step=1, limit=1
                $region52: #{res_cnn_forward.47} parent=50 // loop_pre_header
                  _
                $region53: #{res_cnn_forward.47} parent=50 // loop_header
                  %s356 = sphi 0, %s360
                  %p357 = scmp.ge.s32.totalorder %s356, 1
                  %s361 = sphi %s208, %s208
                  %s362 = sphi %s202, %s202
                $region54: #{res_cnn_forward.47} parent=50 // loop_header_branch
                  %359 = sbr.rel (%p357) target = $region58
                $region55: #{res_cnn_forward.47} parent=50 // loop_body
                  %v363 = vld [vmem:[%s361] sm:$0xff]
                  %364 = vst [vmem:[%s362] sm:$0xff] %v363
                  %v365 = vld [vmem:[%s361 + $0x68] sm:$0xff]
                  %366 = vst [vmem:[%s362 + $0x8] sm:$0xff] %v365
                  %v367 = vld [vmem:[%s361 + $0xd0] sm:$0xff]
                  %368 = vst [vmem:[%s362 + $0x10] sm:$0xff] %v367
                  %v369 = vld [vmem:[%s361 + $0x138] sm:$0xff]
                  %370 = vst [vmem:[%s362 + $0x18] sm:$0xff] %v369
                  %v371 = vld [vmem:[%s361 + $0x1a0] sm:$0xff]
                  %372 = vst [vmem:[%s362 + $0x20] sm:$0xff] %v371
                  %v373 = vld [vmem:[%s361 + $0x208] sm:$0xff]
                  %374 = vst [vmem:[%s362 + $0x28] sm:$0xff] %v373
                  %v375 = vld [vmem:[%s361 + $0x270] sm:$0xff]
                  %376 = vst [vmem:[%s362 + $0x30] sm:$0xff] %v375
                  %v377 = vld [vmem:[%s361 + $0x2d8] sm:$0xff]
                  %378 = vst [vmem:[%s362 + $0x38] sm:$0xff] %v377
                  %v379 = vld [vmem:[%s361 + $0x340] sm:$0xff]
                  %380 = vst [vmem:[%s362 + $0x40] sm:$0xff] %v379
                  %v381 = vld [vmem:[%s361 + $0x3a8] sm:$0xff]
                  %382 = vst [vmem:[%s362 + $0x48] sm:$0xff] %v381
                  %v383 = vld [vmem:[%s361 + $0x410] sm:$0xff]
                  %384 = vst [vmem:[%s362 + $0x50] sm:$0xff] %v383
                  %v385 = vld [vmem:[%s361 + $0x478] sm:$0xff]
                  %386 = vst [vmem:[%s362 + $0x58] sm:$0xff] %v385
                  %v387 = vld [vmem:[%s361 + $0x4e0] sm:$0xff]
                  %388 = vst [vmem:[%s362 + $0x60] sm:$0xff] %v387
                  %v389 = vld [vmem:[%s361 + $0x548] sm:$0xff]
                  %390 = vst [vmem:[%s362 + $0x68] sm:$0xff] %v389
                  %v391 = vld [vmem:[%s361 + $0x5b0] sm:$0xff]
                  %392 = vst [vmem:[%s362 + $0x70] sm:$0xff] %v391
                  %v393 = vld [vmem:[%s361 + $0x618] sm:$0xff]
                  %394 = vst [vmem:[%s362 + $0x78] sm:$0xff] %v393
                  %v395 = vld [vmem:[%s361 + $0x680] sm:$0xff]
                  %396 = vst [vmem:[%s362 + $0x80] sm:$0xff] %v395
                  %v397 = vld [vmem:[%s361 + $0x6e8] sm:$0xff]
                  %398 = vst [vmem:[%s362 + $0x88] sm:$0xff] %v397
                  %v399 = vld [vmem:[%s361 + $0x750] sm:$0xff]
                  %400 = vst [vmem:[%s362 + $0x90] sm:$0xff] %v399
                  %v401 = vld [vmem:[%s361 + $0x7b8] sm:$0xff]
                  %402 = vst [vmem:[%s362 + $0x98] sm:$0xff] %v401
                  %v403 = vld [vmem:[%s361 + $0x820] sm:$0xff]
                  %404 = vst [vmem:[%s362 + $0xa0] sm:$0xff] %v403
                  %v405 = vld [vmem:[%s361 + $0x888] sm:$0xff]
                  %406 = vst [vmem:[%s362 + $0xa8] sm:$0xff] %v405
                  %v407 = vld [vmem:[%s361 + $0x8f0] sm:$0xff]
                  %408 = vst [vmem:[%s362 + $0xb0] sm:$0xff] %v407
                  %v409 = vld [vmem:[%s361 + $0x958] sm:$0xff]
                  %410 = vst [vmem:[%s362 + $0xb8] sm:$0xff] %v409
                  %v411 = vld [vmem:[%s361 + $0x9c0] sm:$0xff]
                  %412 = vst [vmem:[%s362 + $0xc0] sm:$0xff] %v411
                  %v413 = vld [vmem:[%s361 + $0xa28] sm:$0xff]
                  %414 = vst [vmem:[%s362 + $0xc8] sm:$0xff] %v413
                  %v415 = vld [vmem:[%s361 + $0xa90] sm:$0xff]
                  %416 = vst [vmem:[%s362 + $0xd0] sm:$0xff] %v415
                  %v417 = vld [vmem:[%s361 + $0xaf8] sm:$0xff]
                  %418 = vst [vmem:[%s362 + $0xd8] sm:$0xff] %v417
                  %v419 = vld [vmem:[%s361 + $0xb60] sm:$0xff]
                  %420 = vst [vmem:[%s362 + $0xe0] sm:$0xff] %v419
                  %v421 = vld [vmem:[%s361 + $0xbc8] sm:$0xff]
                  %422 = vst [vmem:[%s362 + $0xe8] sm:$0xff] %v421
                  %v423 = vld [vmem:[%s361 + $0xc30] sm:$0xff]
                  %424 = vst [vmem:[%s362 + $0xf0] sm:$0xff] %v423
                  %v425 = vld [vmem:[%s361 + $0xc98] sm:$0xff]
                  %426 = vst [vmem:[%s362 + $0xf8] sm:$0xff] %v425
                  %v427 = vld [vmem:[%s361 + $0xd00] sm:$0xff]
                  %428 = vst [vmem:[%s362 + $0x100] sm:$0xff] %v427
                  %v429 = vld [vmem:[%s361 + $0xd68] sm:$0xff]
                  %430 = vst [vmem:[%s362 + $0x108] sm:$0xff] %v429
                  %v431 = vld [vmem:[%s361 + $0xdd0] sm:$0xff]
                  %432 = vst [vmem:[%s362 + $0x110] sm:$0xff] %v431
                  %v433 = vld [vmem:[%s361 + $0xe38] sm:$0xff]
                  %434 = vst [vmem:[%s362 + $0x118] sm:$0xff] %v433
                  %v435 = vld [vmem:[%s361 + $0xea0] sm:$0xff]
                  %436 = vst [vmem:[%s362 + $0x120] sm:$0xff] %v435
                  %v437 = vld [vmem:[%s361 + $0xf08] sm:$0xff]
                  %438 = vst [vmem:[%s362 + $0x128] sm:$0xff] %v437
                  %v439 = vld [vmem:[%s361 + $0xf70] sm:$0xff]
                  %440 = vst [vmem:[%s362 + $0x130] sm:$0xff] %v439
                  %v441 = vld [vmem:[%s361 + $0xfd8] sm:$0xff]
                  %442 = vst [vmem:[%s362 + $0x138] sm:$0xff] %v441
                  %v443 = vld [vmem:[%s361 + $0x1040] sm:$0xff]
                  %444 = vst [vmem:[%s362 + $0x140] sm:$0xff] %v443
                  %v445 = vld [vmem:[%s361 + $0x10a8] sm:$0xff]
                  %446 = vst [vmem:[%s362 + $0x148] sm:$0xff] %v445
                  %v447 = vld [vmem:[%s361 + $0x1110] sm:$0xff]
                  %448 = vst [vmem:[%s362 + $0x150] sm:$0xff] %v447
                  %v449 = vld [vmem:[%s361 + $0x1178] sm:$0xff]
                  %450 = vst [vmem:[%s362 + $0x158] sm:$0xff] %v449
                  %v451 = vld [vmem:[%s361 + $0x11e0] sm:$0xff]
                  %452 = vst [vmem:[%s362 + $0x160] sm:$0xff] %v451
                  %v453 = vld [vmem:[%s361 + $0x1248] sm:$0xff]
                  %454 = vst [vmem:[%s362 + $0x168] sm:$0xff] %v453
                  %v455 = vld [vmem:[%s361 + $0x12b0] sm:$0xff]
                  %456 = vst [vmem:[%s362 + $0x170] sm:$0xff] %v455
                  %v457 = vld [vmem:[%s361 + $0x1318] sm:$0xff]
                  %458 = vst [vmem:[%s362 + $0x178] sm:$0xff] %v457
                  %v459 = vld [vmem:[%s361 + $0x1380] sm:$0xff]
                  %460 = vst [vmem:[%s362 + $0x180] sm:$0xff] %v459
                  %v461 = vld [vmem:[%s361 + $0x13e8] sm:$0xff]
                  %462 = vst [vmem:[%s362 + $0x188] sm:$0xff] %v461
                  %v463 = vld [vmem:[%s361 + $0x1450] sm:$0xff]
                  %464 = vst [vmem:[%s362 + $0x190] sm:$0xff] %v463
                  %v465 = vld [vmem:[%s361 + $0x14b8] sm:$0xff]
                  %466 = vst [vmem:[%s362 + $0x198] sm:$0xff] %v465
                  %v467 = vld [vmem:[%s361 + $0x1520] sm:$0xff]
                  %468 = vst [vmem:[%s362 + $0x1a0] sm:$0xff] %v467
                  %v469 = vld [vmem:[%s361 + $0x1588] sm:$0xff]
                  %470 = vst [vmem:[%s362 + $0x1a8] sm:$0xff] %v469
                  %v471 = vld [vmem:[%s361 + $0x15f0] sm:$0xff]
                  %472 = vst [vmem:[%s362 + $0x1b0] sm:$0xff] %v471
                  %v473 = vld [vmem:[%s361 + $0x1658] sm:$0xff]
                  %474 = vst [vmem:[%s362 + $0x1b8] sm:$0xff] %v473
                  %v475 = vld [vmem:[%s361 + $0x16c0] sm:$0xff]
                  %476 = vst [vmem:[%s362 + $0x1c0] sm:$0xff] %v475
                  %v477 = vld [vmem:[%s361 + $0x1728] sm:$0xff]
                  %478 = vst [vmem:[%s362 + $0x1c8] sm:$0xff] %v477
                  %v479 = vld [vmem:[%s361 + $0x1790] sm:$0xff]
                  %480 = vst [vmem:[%s362 + $0x1d0] sm:$0xff] %v479
                  %v481 = vld [vmem:[%s361 + $0x17f8] sm:$0xff]
                  %482 = vst [vmem:[%s362 + $0x1d8] sm:$0xff] %v481
                  %v483 = vld [vmem:[%s361 + $0x1860] sm:$0xff]
                  %484 = vst [vmem:[%s362 + $0x1e0] sm:$0xff] %v483
                  %v485 = vld [vmem:[%s361 + $0x18c8] sm:$0xff]
                  %486 = vst [vmem:[%s362 + $0x1e8] sm:$0xff] %v485
                  %v487 = vld [vmem:[%s361 + $0x1930] sm:$0xff]
                  %488 = vst [vmem:[%s362 + $0x1f0] sm:$0xff] %v487
                  %v489 = vld [vmem:[%s361 + $0x1998] sm:$0xff]
                  %490 = vst [vmem:[%s362 + $0x1f8] sm:$0xff] %v489
                $region56: #{res_cnn_forward.47} parent=50 // loop_footer
                  %s360 = sadd.s32 1, %s356
                $region57: #{res_cnn_forward.47} parent=50 // loop_footer_branch
                  %355 = sbr.rel target = $region53
                $region58: #{res_cnn_forward.47} parent=50 // loop_exit
                  _
              $region51: #{res_cnn_forward.47} parent=35 // pred_fallthru
                _
              // Predicated region
              $region59: #{res_cnn_forward.47} parent=35 // pred_check
                _
              $region60: #{res_cnn_forward.47} parent=35 // pred_check_branch
                %492 = sbr.rel target = $region62
              $region61: #{res_cnn_forward.47} parent=35 // pred_region
                _
              $region62: #{res_cnn_forward.47} parent=35 // pred_fallthru
                _
            $region36: #{res_cnn_forward.47} parent=31 // pred_fallthru
              _
            // Predicated region
            $region37: #{res_cnn_forward.47} parent=31 // pred_check
              _
            $region38: #{res_cnn_forward.47} parent=31 // pred_check_branch
              %214 = sbr.rel target = $region40
            $region39: #{res_cnn_forward.47} parent=31 // pred_region
              %s216 = ssub.s32 256, 1
              loop: start=0, step=1, limit=1
              $region41: #{res_cnn_forward.47} parent=39 // loop_pre_header
                _
              $region42: #{res_cnn_forward.47} parent=39 // loop_header
                %s218 = sphi 0, %s222
                %p219 = scmp.ge.s32.totalorder %s218, 1
                %s223 = sphi %s208, %s208
                %s224 = sphi %s202, %s202
              $region43: #{res_cnn_forward.47} parent=39 // loop_header_branch
                %221 = sbr.rel (%p219) target = $region47
              $region44: #{res_cnn_forward.47} parent=39 // loop_body
                %v225 = vld [vmem:[%s223] sm:%s216]
                %226 = vst [vmem:[%s224] sm:%s216] %v225
                %v227 = vld [vmem:[%s223 + $0x68] sm:%s216]
                %228 = vst [vmem:[%s224 + $0x8] sm:%s216] %v227
                %v229 = vld [vmem:[%s223 + $0xd0] sm:%s216]
                %230 = vst [vmem:[%s224 + $0x10] sm:%s216] %v229
                %v231 = vld [vmem:[%s223 + $0x138] sm:%s216]
                %232 = vst [vmem:[%s224 + $0x18] sm:%s216] %v231
                %v233 = vld [vmem:[%s223 + $0x1a0] sm:%s216]
                %234 = vst [vmem:[%s224 + $0x20] sm:%s216] %v233
                %v235 = vld [vmem:[%s223 + $0x208] sm:%s216]
                %236 = vst [vmem:[%s224 + $0x28] sm:%s216] %v235
                %v237 = vld [vmem:[%s223 + $0x270] sm:%s216]
                %238 = vst [vmem:[%s224 + $0x30] sm:%s216] %v237
                %v239 = vld [vmem:[%s223 + $0x2d8] sm:%s216]
                %240 = vst [vmem:[%s224 + $0x38] sm:%s216] %v239
                %v241 = vld [vmem:[%s223 + $0x340] sm:%s216]
                %242 = vst [vmem:[%s224 + $0x40] sm:%s216] %v241
                %v243 = vld [vmem:[%s223 + $0x3a8] sm:%s216]
                %244 = vst [vmem:[%s224 + $0x48] sm:%s216] %v243
                %v245 = vld [vmem:[%s223 + $0x410] sm:%s216]
                %246 = vst [vmem:[%s224 + $0x50] sm:%s216] %v245
                %v247 = vld [vmem:[%s223 + $0x478] sm:%s216]
                %248 = vst [vmem:[%s224 + $0x58] sm:%s216] %v247
                %v249 = vld [vmem:[%s223 + $0x4e0] sm:%s216]
                %250 = vst [vmem:[%s224 + $0x60] sm:%s216] %v249
                %v251 = vld [vmem:[%s223 + $0x548] sm:%s216]
                %252 = vst [vmem:[%s224 + $0x68] sm:%s216] %v251
                %v253 = vld [vmem:[%s223 + $0x5b0] sm:%s216]
                %254 = vst [vmem:[%s224 + $0x70] sm:%s216] %v253
                %v255 = vld [vmem:[%s223 + $0x618] sm:%s216]
                %256 = vst [vmem:[%s224 + $0x78] sm:%s216] %v255
                %v257 = vld [vmem:[%s223 + $0x680] sm:%s216]
                %258 = vst [vmem:[%s224 + $0x80] sm:%s216] %v257
                %v259 = vld [vmem:[%s223 + $0x6e8] sm:%s216]
                %260 = vst [vmem:[%s224 + $0x88] sm:%s216] %v259
                %v261 = vld [vmem:[%s223 + $0x750] sm:%s216]
                %262 = vst [vmem:[%s224 + $0x90] sm:%s216] %v261
                %v263 = vld [vmem:[%s223 + $0x7b8] sm:%s216]
                %264 = vst [vmem:[%s224 + $0x98] sm:%s216] %v263
                %v265 = vld [vmem:[%s223 + $0x820] sm:%s216]
                %266 = vst [vmem:[%s224 + $0xa0] sm:%s216] %v265
                %v267 = vld [vmem:[%s223 + $0x888] sm:%s216]
                %268 = vst [vmem:[%s224 + $0xa8] sm:%s216] %v267
                %v269 = vld [vmem:[%s223 + $0x8f0] sm:%s216]
                %270 = vst [vmem:[%s224 + $0xb0] sm:%s216] %v269
                %v271 = vld [vmem:[%s223 + $0x958] sm:%s216]
                %272 = vst [vmem:[%s224 + $0xb8] sm:%s216] %v271
                %v273 = vld [vmem:[%s223 + $0x9c0] sm:%s216]
                %274 = vst [vmem:[%s224 + $0xc0] sm:%s216] %v273
                %v275 = vld [vmem:[%s223 + $0xa28] sm:%s216]
                %276 = vst [vmem:[%s224 + $0xc8] sm:%s216] %v275
                %v277 = vld [vmem:[%s223 + $0xa90] sm:%s216]
                %278 = vst [vmem:[%s224 + $0xd0] sm:%s216] %v277
                %v279 = vld [vmem:[%s223 + $0xaf8] sm:%s216]
                %280 = vst [vmem:[%s224 + $0xd8] sm:%s216] %v279
                %v281 = vld [vmem:[%s223 + $0xb60] sm:%s216]
                %282 = vst [vmem:[%s224 + $0xe0] sm:%s216] %v281
                %v283 = vld [vmem:[%s223 + $0xbc8] sm:%s216]
                %284 = vst [vmem:[%s224 + $0xe8] sm:%s216] %v283
                %v285 = vld [vmem:[%s223 + $0xc30] sm:%s216]
                %286 = vst [vmem:[%s224 + $0xf0] sm:%s216] %v285
                %v287 = vld [vmem:[%s223 + $0xc98] sm:%s216]
                %288 = vst [vmem:[%s224 + $0xf8] sm:%s216] %v287
                %v289 = vld [vmem:[%s223 + $0xd00] sm:%s216]
                %290 = vst [vmem:[%s224 + $0x100] sm:%s216] %v289
                %v291 = vld [vmem:[%s223 + $0xd68] sm:%s216]
                %292 = vst [vmem:[%s224 + $0x108] sm:%s216] %v291
                %v293 = vld [vmem:[%s223 + $0xdd0] sm:%s216]
                %294 = vst [vmem:[%s224 + $0x110] sm:%s216] %v293
                %v295 = vld [vmem:[%s223 + $0xe38] sm:%s216]
                %296 = vst [vmem:[%s224 + $0x118] sm:%s216] %v295
                %v297 = vld [vmem:[%s223 + $0xea0] sm:%s216]
                %298 = vst [vmem:[%s224 + $0x120] sm:%s216] %v297
                %v299 = vld [vmem:[%s223 + $0xf08] sm:%s216]
                %300 = vst [vmem:[%s224 + $0x128] sm:%s216] %v299
                %v301 = vld [vmem:[%s223 + $0xf70] sm:%s216]
                %302 = vst [vmem:[%s224 + $0x130] sm:%s216] %v301
                %v303 = vld [vmem:[%s223 + $0xfd8] sm:%s216]
                %304 = vst [vmem:[%s224 + $0x138] sm:%s216] %v303
                %v305 = vld [vmem:[%s223 + $0x1040] sm:%s216]
                %306 = vst [vmem:[%s224 + $0x140] sm:%s216] %v305
                %v307 = vld [vmem:[%s223 + $0x10a8] sm:%s216]
                %308 = vst [vmem:[%s224 + $0x148] sm:%s216] %v307
                %v309 = vld [vmem:[%s223 + $0x1110] sm:%s216]
                %310 = vst [vmem:[%s224 + $0x150] sm:%s216] %v309
                %v311 = vld [vmem:[%s223 + $0x1178] sm:%s216]
                %312 = vst [vmem:[%s224 + $0x158] sm:%s216] %v311
                %v313 = vld [vmem:[%s223 + $0x11e0] sm:%s216]
                %314 = vst [vmem:[%s224 + $0x160] sm:%s216] %v313
                %v315 = vld [vmem:[%s223 + $0x1248] sm:%s216]
                %316 = vst [vmem:[%s224 + $0x168] sm:%s216] %v315
                %v317 = vld [vmem:[%s223 + $0x12b0] sm:%s216]
                %318 = vst [vmem:[%s224 + $0x170] sm:%s216] %v317
                %v319 = vld [vmem:[%s223 + $0x1318] sm:%s216]
                %320 = vst [vmem:[%s224 + $0x178] sm:%s216] %v319
                %v321 = vld [vmem:[%s223 + $0x1380] sm:%s216]
                %322 = vst [vmem:[%s224 + $0x180] sm:%s216] %v321
                %v323 = vld [vmem:[%s223 + $0x13e8] sm:%s216]
                %324 = vst [vmem:[%s224 + $0x188] sm:%s216] %v323
                %v325 = vld [vmem:[%s223 + $0x1450] sm:%s216]
                %326 = vst [vmem:[%s224 + $0x190] sm:%s216] %v325
                %v327 = vld [vmem:[%s223 + $0x14b8] sm:%s216]
                %328 = vst [vmem:[%s224 + $0x198] sm:%s216] %v327
                %v329 = vld [vmem:[%s223 + $0x1520] sm:%s216]
                %330 = vst [vmem:[%s224 + $0x1a0] sm:%s216] %v329
                %v331 = vld [vmem:[%s223 + $0x1588] sm:%s216]
                %332 = vst [vmem:[%s224 + $0x1a8] sm:%s216] %v331
                %v333 = vld [vmem:[%s223 + $0x15f0] sm:%s216]
                %334 = vst [vmem:[%s224 + $0x1b0] sm:%s216] %v333
                %v335 = vld [vmem:[%s223 + $0x1658] sm:%s216]
                %336 = vst [vmem:[%s224 + $0x1b8] sm:%s216] %v335
                %v337 = vld [vmem:[%s223 + $0x16c0] sm:%s216]
                %338 = vst [vmem:[%s224 + $0x1c0] sm:%s216] %v337
                %v339 = vld [vmem:[%s223 + $0x1728] sm:%s216]
                %340 = vst [vmem:[%s224 + $0x1c8] sm:%s216] %v339
                %v341 = vld [vmem:[%s223 + $0x1790] sm:%s216]
                %342 = vst [vmem:[%s224 + $0x1d0] sm:%s216] %v341
                %v343 = vld [vmem:[%s223 + $0x17f8] sm:%s216]
                %344 = vst [vmem:[%s224 + $0x1d8] sm:%s216] %v343
                %v345 = vld [vmem:[%s223 + $0x1860] sm:%s216]
                %346 = vst [vmem:[%s224 + $0x1e0] sm:%s216] %v345
                %v347 = vld [vmem:[%s223 + $0x18c8] sm:%s216]
                %348 = vst [vmem:[%s224 + $0x1e8] sm:%s216] %v347
                %v349 = vld [vmem:[%s223 + $0x1930] sm:%s216]
                %350 = vst [vmem:[%s224 + $0x1f0] sm:%s216] %v349
                %v351 = vld [vmem:[%s223 + $0x1998] sm:%s216]
                %352 = vst [vmem:[%s224 + $0x1f8] sm:%s216] %v351
              $region45: #{res_cnn_forward.47} parent=39 // loop_footer
                %s222 = sadd.s32 1, %s218
              $region46: #{res_cnn_forward.47} parent=39 // loop_footer_branch
                %217 = sbr.rel target = $region42
              $region47: #{res_cnn_forward.47} parent=39 // loop_exit
                _
            $region40: #{res_cnn_forward.47} parent=31 // pred_fallthru
              _
          $region32: #{res_cnn_forward.47} parent=27 // pred_fallthru
            _
          %493 = vnop
        $region28: #{res_cnn_forward.47} parent=23 // pred_fallthru
          _
        // Predicated region
        $region63: #{res_cnn_forward.47} parent=23 // pred_check
          %p494 = pneg %p79
        $region64: #{res_cnn_forward.47} parent=23 // pred_check_branch
          %496 = sbr.rel (%p494) target = $region66
        $region65: #{res_cnn_forward.47} parent=23 // pred_region
          %s497 = smul.u32 32, %s19
          %p498 = scmp.lt.s32.totalorder %s497, 415
          %s499 = scalar_select %p498, %s497, 415
          %p500 = scmp.lt.s32.totalorder %s18, 0
          %s501 = scalar_select %p500, %s18, 0
          %s502 = sadd.s32 %s501, %s499
          %s503 = smul.addr %s502, 4
          %s504 = scalar_lea.vmem %s1, %s503
          %s505 = smul.u32 32, %s19
        $region66: #{res_cnn_forward.47} parent=23 // pred_fallthru
          _
      $region24: #{res_cnn_forward.47} parent=5 // pred_fallthru
        _
      %p506 = scmp.le.s32.totalorder 1, %s10
      %p507 = scmp.lt.s32.totalorder %s10, 14
      %p508 = pnand %p506, %p507
      %p509 = pneg %p508
      // Predicated region
      $region67: #{res_cnn_forward.47} parent=5 // pred_check
        _
      $region68: #{res_cnn_forward.47} parent=5 // pred_check_branch
        %511 = sbr.rel (%p508) target = $region70
      $region69: #{res_cnn_forward.47} parent=5 // pred_region
        %s512 = ssub.s32 %s10, 1
        %s513 = sand.u32 %s44, 1
        %s514 = sand.u32 %s44, 1
        %s515 = smul.addr %s514, 512
        %s516 = scalar_lea.vmem [#allocation3], %s515
        // Predicated region
        $region71: #{res_cnn_forward.47} parent=69 // pred_check
          %p517 = pneg %p57
        $region72: #{res_cnn_forward.47} parent=69 // pred_check_branch
          %519 = sbr.rel (%p517) target = $region74
        $region73: #{res_cnn_forward.47} parent=69 // pred_region
          _
        $region74: #{res_cnn_forward.47} parent=69 // pred_fallthru
          _
        %s520 = sand.u32 %s44, 1
        %s521 = sand.u32 %s44, 1
        %s522 = smul.addr %s521, 512
        %s523 = scalar_lea.vmem [#allocation3], %s522
        %p524 = pneg %p57
        %p525 = pneg %p54
        %s526 = smul.u32 32, %s22
        %p527 = scmp.lt.s32.totalorder %s526, 415
        %s528 = scalar_select %p527, %s526, 415
        %p529 = scmp.lt.s32.totalorder %s21, 0
        %s530 = scalar_select %p529, %s21, 0
        %s531 = sadd.s32 %s530, %s528
        %s532 = smul.addr %s531, 4
        %s533 = scalar_lea.vmem %s1, %s532
        %p534 = pneg %p85
        %p535 = pneg %p82
        %p536 = scmp.lt.s32.totalorder %s21, 0
        %s537 = scalar_select %p536, %s21, 0
        %s538 = scalar_lea.vmem %s2, %s537
        %p539 = pneg %p111
        %p540 = pneg %p108
        %p541 = scmp.lt.s32.totalorder %s21, 0
        %s542 = scalar_select %p541, %s21, 0
        %s543 = scalar_lea.vmem %s3, %s542
        %p544 = pneg %p137
        %p545 = pneg %p134
        %p546 = pneg %p165
        %p547 = pneg %p162
        %s548 = smul.u32 64, %s20
        %p549 = scmp.lt.s32.totalorder %s548, 63
        %s550 = scalar_select %p549, %s548, 63
        %p551 = scmp.lt.s32.totalorder %s21, 0
        %s552 = scalar_select %p551, %s21, 0
        %s553 = sadd.s32 %s552, %s550
        %s554 = smul.addr %s553, 8
        %s555 = scalar_lea.vmem %s4, %s554
        %s556 = smul.u32 64, %s20
        %s557 = smul.u32 2, %s22
        %s558 = smul.u32 32, %s22
        %p559 = scmp.lt.s32.totalorder %s558, 415
        %s560 = scalar_select %p559, %s558, 415
        %p561 = scmp.lt.s32.totalorder %s21, 0
        %s562 = scalar_select %p561, %s21, 0
        %s563 = sadd.s32 %s562, %s560
        %s564 = smul.addr %s563, 4
        %s565 = scalar_lea.vmem %s1, %s564
        %s566 = smul.u32 32, %s22
        %p567 = scmp.lt.s32.totalorder %s21, 0
        %s568 = scalar_select %p567, %s21, 0
        %s569 = scalar_lea.vmem %s2, %s568
        %p570 = scmp.lt.s32.totalorder %s21, 0
        %s571 = scalar_select %p570, %s21, 0
        %s572 = scalar_lea.vmem %s3, %s571
        %s573 = smul.u32 64, %s20
        %p574 = scmp.lt.s32.totalorder %s573, 63
        %s575 = scalar_select %p574, %s573, 63
        %p576 = scmp.lt.s32.totalorder %s21, 0
        %s577 = scalar_select %p576, %s21, 0
        %s578 = sadd.s32 %s577, %s575
        %s579 = smul.addr %s578, 8
        %s580 = scalar_lea.vmem %s4, %s579
        %s581 = smul.u32 64, %s20
        %p583 = scmp.eq.s32.totalorder %s22, 0
        // Predicated region
        $region75: #{res_cnn_forward.47} parent=69 // pred_check
          %p584 = pneg %p583
        $region76: #{res_cnn_forward.47} parent=69 // pred_check_branch
          %586 = sbr.rel (%p584) target = $region78
        $region77: #{res_cnn_forward.47} parent=69 // pred_region
          %587 = vst [vmem:[#allocation2] sm:$0xff] 0.0
          %588 = vst [vmem:[#allocation2 + $0x8] sm:$0xff] 0.0
          %589 = vst [vmem:[#allocation2 + $0x10] sm:$0xff] 0.0
          %590 = vst [vmem:[#allocation2 + $0x18] sm:$0xff] 0.0
          %591 = vst [vmem:[#allocation2 + $0x20] sm:$0xff] 0.0
          %592 = vst [vmem:[#allocation2 + $0x28] sm:$0xff] 0.0
          %593 = vst [vmem:[#allocation2 + $0x30] sm:$0xff] 0.0
          %594 = vst [vmem:[#allocation2 + $0x38] sm:$0xff] 0.0
          %595 = vst [vmem:[#allocation2 + $0x40] sm:$0xff] 0.0
          %596 = vst [vmem:[#allocation2 + $0x48] sm:$0xff] 0.0
          %597 = vst [vmem:[#allocation2 + $0x50] sm:$0xff] 0.0
          %598 = vst [vmem:[#allocation2 + $0x58] sm:$0xff] 0.0
          %599 = vst [vmem:[#allocation2 + $0x60] sm:$0xff] 0.0
          %600 = vst [vmem:[#allocation2 + $0x68] sm:$0xff] 0.0
          %601 = vst [vmem:[#allocation2 + $0x70] sm:$0xff] 0.0
          %602 = vst [vmem:[#allocation2 + $0x78] sm:$0xff] 0.0
          %603 = vst [vmem:[#allocation2 + $0x80] sm:$0xff] 0.0
          %604 = vst [vmem:[#allocation2 + $0x88] sm:$0xff] 0.0
          %605 = vst [vmem:[#allocation2 + $0x90] sm:$0xff] 0.0
          %606 = vst [vmem:[#allocation2 + $0x98] sm:$0xff] 0.0
          %607 = vst [vmem:[#allocation2 + $0xa0] sm:$0xff] 0.0
          %608 = vst [vmem:[#allocation2 + $0xa8] sm:$0xff] 0.0
          %609 = vst [vmem:[#allocation2 + $0xb0] sm:$0xff] 0.0
          %610 = vst [vmem:[#allocation2 + $0xb8] sm:$0xff] 0.0
          %611 = vst [vmem:[#allocation2 + $0xc0] sm:$0xff] 0.0
          %612 = vst [vmem:[#allocation2 + $0xc8] sm:$0xff] 0.0
          %613 = vst [vmem:[#allocation2 + $0xd0] sm:$0xff] 0.0
          %614 = vst [vmem:[#allocation2 + $0xd8] sm:$0xff] 0.0
          %615 = vst [vmem:[#allocation2 + $0xe0] sm:$0xff] 0.0
          %616 = vst [vmem:[#allocation2 + $0xe8] sm:$0xff] 0.0
          %617 = vst [vmem:[#allocation2 + $0xf0] sm:$0xff] 0.0
          %618 = vst [vmem:[#allocation2 + $0xf8] sm:$0xff] 0.0
          %619 = vst [vmem:[#allocation2 + $0x100] sm:$0xff] 0.0
          %620 = vst [vmem:[#allocation2 + $0x108] sm:$0xff] 0.0
          %621 = vst [vmem:[#allocation2 + $0x110] sm:$0xff] 0.0
          %622 = vst [vmem:[#allocation2 + $0x118] sm:$0xff] 0.0
          %623 = vst [vmem:[#allocation2 + $0x120] sm:$0xff] 0.0
          %624 = vst [vmem:[#allocation2 + $0x128] sm:$0xff] 0.0
          %625 = vst [vmem:[#allocation2 + $0x130] sm:$0xff] 0.0
          %626 = vst [vmem:[#allocation2 + $0x138] sm:$0xff] 0.0
          %627 = vst [vmem:[#allocation2 + $0x140] sm:$0xff] 0.0
          %628 = vst [vmem:[#allocation2 + $0x148] sm:$0xff] 0.0
          %629 = vst [vmem:[#allocation2 + $0x150] sm:$0xff] 0.0
          %630 = vst [vmem:[#allocation2 + $0x158] sm:$0xff] 0.0
          %631 = vst [vmem:[#allocation2 + $0x160] sm:$0xff] 0.0
          %632 = vst [vmem:[#allocation2 + $0x168] sm:$0xff] 0.0
          %633 = vst [vmem:[#allocation2 + $0x170] sm:$0xff] 0.0
          %634 = vst [vmem:[#allocation2 + $0x178] sm:$0xff] 0.0
          %635 = vst [vmem:[#allocation2 + $0x180] sm:$0xff] 0.0
          %636 = vst [vmem:[#allocation2 + $0x188] sm:$0xff] 0.0
          %637 = vst [vmem:[#allocation2 + $0x190] sm:$0xff] 0.0
          %638 = vst [vmem:[#allocation2 + $0x198] sm:$0xff] 0.0
          %639 = vst [vmem:[#allocation2 + $0x1a0] sm:$0xff] 0.0
          %640 = vst [vmem:[#allocation2 + $0x1a8] sm:$0xff] 0.0
          %641 = vst [vmem:[#allocation2 + $0x1b0] sm:$0xff] 0.0
          %642 = vst [vmem:[#allocation2 + $0x1b8] sm:$0xff] 0.0
          %643 = vst [vmem:[#allocation2 + $0x1c0] sm:$0xff] 0.0
          %644 = vst [vmem:[#allocation2 + $0x1c8] sm:$0xff] 0.0
          %645 = vst [vmem:[#allocation2 + $0x1d0] sm:$0xff] 0.0
          %646 = vst [vmem:[#allocation2 + $0x1d8] sm:$0xff] 0.0
          %647 = vst [vmem:[#allocation2 + $0x1e0] sm:$0xff] 0.0
          %648 = vst [vmem:[#allocation2 + $0x1e8] sm:$0xff] 0.0
          %649 = vst [vmem:[#allocation2 + $0x1f0] sm:$0xff] 0.0
          %650 = vst [vmem:[#allocation2 + $0x1f8] sm:$0xff] 0.0
        $region78: #{res_cnn_forward.47} parent=69 // pred_fallthru
          _
        %v651 = vld [vmem:[#allocation2] sm:$0xff]
        %v652 = vld [vmem:[#allocation2 + $0x8] sm:$0xff]
        %v653 = vld [vmem:[#allocation2 + $0x10] sm:$0xff]
        %v654 = vld [vmem:[#allocation2 + $0x18] sm:$0xff]
        %v655 = vld [vmem:[#allocation2 + $0x20] sm:$0xff]
        %v656 = vld [vmem:[#allocation2 + $0x28] sm:$0xff]
        %v657 = vld [vmem:[#allocation2 + $0x30] sm:$0xff]
        %v658 = vld [vmem:[#allocation2 + $0x38] sm:$0xff]
        %v659 = vld [vmem:[#allocation2 + $0x40] sm:$0xff]
        %v660 = vld [vmem:[#allocation2 + $0x48] sm:$0xff]
        %v661 = vld [vmem:[#allocation2 + $0x50] sm:$0xff]
        %v662 = vld [vmem:[#allocation2 + $0x58] sm:$0xff]
        %v663 = vld [vmem:[#allocation2 + $0x60] sm:$0xff]
        %v664 = vld [vmem:[#allocation2 + $0x68] sm:$0xff]
        %v665 = vld [vmem:[#allocation2 + $0x70] sm:$0xff]
        %v666 = vld [vmem:[#allocation2 + $0x78] sm:$0xff]
        %v667 = vld [vmem:[#allocation2 + $0x80] sm:$0xff]
        %v668 = vld [vmem:[#allocation2 + $0x88] sm:$0xff]
        %v669 = vld [vmem:[#allocation2 + $0x90] sm:$0xff]
        %v670 = vld [vmem:[#allocation2 + $0x98] sm:$0xff]
        %v671 = vld [vmem:[#allocation2 + $0xa0] sm:$0xff]
        %v672 = vld [vmem:[#allocation2 + $0xa8] sm:$0xff]
        %v673 = vld [vmem:[#allocation2 + $0xb0] sm:$0xff]
        %v674 = vld [vmem:[#allocation2 + $0xb8] sm:$0xff]
        %v675 = vld [vmem:[#allocation2 + $0xc0] sm:$0xff]
        %v676 = vld [vmem:[#allocation2 + $0xc8] sm:$0xff]
        %v677 = vld [vmem:[#allocation2 + $0xd0] sm:$0xff]
        %v678 = vld [vmem:[#allocation2 + $0xd8] sm:$0xff]
        %v679 = vld [vmem:[#allocation2 + $0xe0] sm:$0xff]
        %v680 = vld [vmem:[#allocation2 + $0xe8] sm:$0xff]
        %v681 = vld [vmem:[#allocation2 + $0xf0] sm:$0xff]
        %v682 = vld [vmem:[#allocation2 + $0xf8] sm:$0xff]
        %v683 = vld [vmem:[#allocation2 + $0x100] sm:$0xff]
        %v684 = vld [vmem:[#allocation2 + $0x108] sm:$0xff]
        %v685 = vld [vmem:[#allocation2 + $0x110] sm:$0xff]
        %v686 = vld [vmem:[#allocation2 + $0x118] sm:$0xff]
        %v687 = vld [vmem:[#allocation2 + $0x120] sm:$0xff]
        %v688 = vld [vmem:[#allocation2 + $0x128] sm:$0xff]
        %v689 = vld [vmem:[#allocation2 + $0x130] sm:$0xff]
        %v690 = vld [vmem:[#allocation2 + $0x138] sm:$0xff]
        %v691 = vld [vmem:[#allocation2 + $0x140] sm:$0xff]
        %v692 = vld [vmem:[#allocation2 + $0x148] sm:$0xff]
        %v693 = vld [vmem:[#allocation2 + $0x150] sm:$0xff]
        %v694 = vld [vmem:[#allocation2 + $0x158] sm:$0xff]
        %v695 = vld [vmem:[#allocation2 + $0x160] sm:$0xff]
        %v696 = vld [vmem:[#allocation2 + $0x168] sm:$0xff]
        %v697 = vld [vmem:[#allocation2 + $0x170] sm:$0xff]
        %v698 = vld [vmem:[#allocation2 + $0x178] sm:$0xff]
        %v699 = vld [vmem:[#allocation2 + $0x180] sm:$0xff]
        %v700 = vld [vmem:[#allocation2 + $0x188] sm:$0xff]
        %v701 = vld [vmem:[#allocation2 + $0x190] sm:$0xff]
        %v702 = vld [vmem:[#allocation2 + $0x198] sm:$0xff]
        %v703 = vld [vmem:[#allocation2 + $0x1a0] sm:$0xff]
        %v704 = vld [vmem:[#allocation2 + $0x1a8] sm:$0xff]
        %v705 = vld [vmem:[#allocation2 + $0x1b0] sm:$0xff]
        %v706 = vld [vmem:[#allocation2 + $0x1b8] sm:$0xff]
        %v707 = vld [vmem:[#allocation2 + $0x1c0] sm:$0xff]
        %v708 = vld [vmem:[#allocation2 + $0x1c8] sm:$0xff]
        %v709 = vld [vmem:[#allocation2 + $0x1d0] sm:$0xff]
        %v710 = vld [vmem:[#allocation2 + $0x1d8] sm:$0xff]
        %v711 = vld [vmem:[#allocation2 + $0x1e0] sm:$0xff]
        %v712 = vld [vmem:[#allocation2 + $0x1e8] sm:$0xff]
        %v713 = vld [vmem:[#allocation2 + $0x1f0] sm:$0xff]
        %v714 = vld [vmem:[#allocation2 + $0x1f8] sm:$0xff]
        %v715 = vld [vmem:[%s516] sm:$0xff]
        %v716 = vld [vmem:[%s516 + $0x8] sm:$0xff]
        %v717 = vld [vmem:[%s516 + $0x10] sm:$0xff]
        %v718 = vld [vmem:[%s516 + $0x18] sm:$0xff]
        %v719 = vld [vmem:[%s516 + $0x20] sm:$0xff]
        %v720 = vld [vmem:[%s516 + $0x28] sm:$0xff]
        %v721 = vld [vmem:[%s516 + $0x30] sm:$0xff]
        %v722 = vld [vmem:[%s516 + $0x38] sm:$0xff]
        %v723 = vld [vmem:[%s516 + $0x40] sm:$0xff]
        %v724 = vld [vmem:[%s516 + $0x48] sm:$0xff]
        %v725 = vld [vmem:[%s516 + $0x50] sm:$0xff]
        %v726 = vld [vmem:[%s516 + $0x58] sm:$0xff]
        %v727 = vld [vmem:[%s516 + $0x60] sm:$0xff]
        %v728 = vld [vmem:[%s516 + $0x68] sm:$0xff]
        %v729 = vld [vmem:[%s516 + $0x70] sm:$0xff]
        %v730 = vld [vmem:[%s516 + $0x78] sm:$0xff]
        %v731 = vld [vmem:[%s516 + $0x80] sm:$0xff]
        %v732 = vld [vmem:[%s516 + $0x88] sm:$0xff]
        %v733 = vld [vmem:[%s516 + $0x90] sm:$0xff]
        %v734 = vld [vmem:[%s516 + $0x98] sm:$0xff]
        %v735 = vld [vmem:[%s516 + $0xa0] sm:$0xff]
        %v736 = vld [vmem:[%s516 + $0xa8] sm:$0xff]
        %v737 = vld [vmem:[%s516 + $0xb0] sm:$0xff]
        %v738 = vld [vmem:[%s516 + $0xb8] sm:$0xff]
        %v739 = vld [vmem:[%s516 + $0xc0] sm:$0xff]
        %v740 = vld [vmem:[%s516 + $0xc8] sm:$0xff]
        %v741 = vld [vmem:[%s516 + $0xd0] sm:$0xff]
        %v742 = vld [vmem:[%s516 + $0xd8] sm:$0xff]
        %v743 = vld [vmem:[%s516 + $0xe0] sm:$0xff]
        %v744 = vld [vmem:[%s516 + $0xe8] sm:$0xff]
        %v745 = vld [vmem:[%s516 + $0xf0] sm:$0xff]
        %v746 = vld [vmem:[%s516 + $0xf8] sm:$0xff]
        %v747 = vld [vmem:[%s516 + $0x100] sm:$0xff]
        %v748 = vld [vmem:[%s516 + $0x108] sm:$0xff]
        %v749 = vld [vmem:[%s516 + $0x110] sm:$0xff]
        %v750 = vld [vmem:[%s516 + $0x118] sm:$0xff]
        %v751 = vld [vmem:[%s516 + $0x120] sm:$0xff]
        %v752 = vld [vmem:[%s516 + $0x128] sm:$0xff]
        %v753 = vld [vmem:[%s516 + $0x130] sm:$0xff]
        %v754 = vld [vmem:[%s516 + $0x138] sm:$0xff]
        %v755 = vld [vmem:[%s516 + $0x140] sm:$0xff]
        %v756 = vld [vmem:[%s516 + $0x148] sm:$0xff]
        %v757 = vld [vmem:[%s516 + $0x150] sm:$0xff]
        %v758 = vld [vmem:[%s516 + $0x158] sm:$0xff]
        %v759 = vld [vmem:[%s516 + $0x160] sm:$0xff]
        %v760 = vld [vmem:[%s516 + $0x168] sm:$0xff]
        %v761 = vld [vmem:[%s516 + $0x170] sm:$0xff]
        %v762 = vld [vmem:[%s516 + $0x178] sm:$0xff]
        %v763 = vld [vmem:[%s516 + $0x180] sm:$0xff]
        %v764 = vld [vmem:[%s516 + $0x188] sm:$0xff]
        %v765 = vld [vmem:[%s516 + $0x190] sm:$0xff]
        %v766 = vld [vmem:[%s516 + $0x198] sm:$0xff]
        %v767 = vld [vmem:[%s516 + $0x1a0] sm:$0xff]
        %v768 = vld [vmem:[%s516 + $0x1a8] sm:$0xff]
        %v769 = vld [vmem:[%s516 + $0x1b0] sm:$0xff]
        %v770 = vld [vmem:[%s516 + $0x1b8] sm:$0xff]
        %v771 = vld [vmem:[%s516 + $0x1c0] sm:$0xff]
        %v772 = vld [vmem:[%s516 + $0x1c8] sm:$0xff]
        %v773 = vld [vmem:[%s516 + $0x1d0] sm:$0xff]
        %v774 = vld [vmem:[%s516 + $0x1d8] sm:$0xff]
        %v775 = vld [vmem:[%s516 + $0x1e0] sm:$0xff]
        %v776 = vld [vmem:[%s516 + $0x1e8] sm:$0xff]
        %v777 = vld [vmem:[%s516 + $0x1f0] sm:$0xff]
        %v778 = vld [vmem:[%s516 + $0x1f8] sm:$0xff]
        %v779 = vld [vmem:[%s565] sm:$0xf]
        %v780 = vld [vmem:[%s565 + $0x4] sm:$0xf]
        %v781 = vld [vmem:[%s565 + $0x8] sm:$0xf]
        %v782 = vld [vmem:[%s565 + $0xc] sm:$0xf]
        %v783 = vld [vmem:[%s565 + $0x10] sm:$0xf]
        %v784 = vld [vmem:[%s565 + $0x14] sm:$0xf]
        %v785 = vld [vmem:[%s565 + $0x18] sm:$0xf]
        %v786 = vld [vmem:[%s565 + $0x1c] sm:$0xf]
        %v787 = vld [vmem:[%s565 + $0x20] sm:$0xf]
        %v788 = vld [vmem:[%s565 + $0x24] sm:$0xf]
        %v789 = vld [vmem:[%s565 + $0x28] sm:$0xf]
        %v790 = vld [vmem:[%s565 + $0x2c] sm:$0xf]
        %v791 = vld [vmem:[%s565 + $0x30] sm:$0xf]
        %v792 = vld [vmem:[%s565 + $0x34] sm:$0xf]
        %v793 = vld [vmem:[%s565 + $0x38] sm:$0xf]
        %v794 = vld [vmem:[%s565 + $0x3c] sm:$0xf]
        %v795 = vld [vmem:[%s565 + $0x40] sm:$0xf]
        %v796 = vld [vmem:[%s565 + $0x44] sm:$0xf]
        %v797 = vld [vmem:[%s565 + $0x48] sm:$0xf]
        %v798 = vld [vmem:[%s565 + $0x4c] sm:$0xf]
        %v799 = vld [vmem:[%s565 + $0x50] sm:$0xf]
        %v800 = vld [vmem:[%s565 + $0x54] sm:$0xf]
        %v801 = vld [vmem:[%s565 + $0x58] sm:$0xf]
        %v802 = vld [vmem:[%s565 + $0x5c] sm:$0xf]
        %v803 = vld [vmem:[%s565 + $0x60] sm:$0xf]
        %v804 = vld [vmem:[%s565 + $0x64] sm:$0xf]
        %v805 = vld [vmem:[%s565 + $0x68] sm:$0xf]
        %v806 = vld [vmem:[%s565 + $0x6c] sm:$0xf]
        %v807 = vld [vmem:[%s565 + $0x70] sm:$0xf]
        %v808 = vld [vmem:[%s565 + $0x74] sm:$0xf]
        %v809 = vld [vmem:[%s565 + $0x78] sm:$0xf]
        %v810 = vld [vmem:[%s565 + $0x7c] sm:$0xf]
        %v875 = vunpack.c.l.b16 %v715
        %v876 = vunpack.c.h.b16 %v715
        %v877 = vunpack.c.l.b16 %v716
        %v878 = vunpack.c.h.b16 %v716
        %v879 = vunpack.c.l.b16 %v717
        %v880 = vunpack.c.h.b16 %v717
        %v881 = vunpack.c.l.b16 %v718
        %v882 = vunpack.c.h.b16 %v718
        %v883 = vunpack.c.l.b16 %v719
        %v884 = vunpack.c.h.b16 %v719
        %v885 = vunpack.c.l.b16 %v720
        %v886 = vunpack.c.h.b16 %v720
        %v887 = vunpack.c.l.b16 %v721
        %v888 = vunpack.c.h.b16 %v721
        %v889 = vunpack.c.l.b16 %v722
        %v890 = vunpack.c.h.b16 %v722
        %v891 = vunpack.c.l.b16 %v723
        %v892 = vunpack.c.h.b16 %v723
        %v893 = vunpack.c.l.b16 %v724
        %v894 = vunpack.c.h.b16 %v724
        %v895 = vunpack.c.l.b16 %v725
        %v896 = vunpack.c.h.b16 %v725
        %v897 = vunpack.c.l.b16 %v726
        %v898 = vunpack.c.h.b16 %v726
        %v899 = vunpack.c.l.b16 %v727
        %v900 = vunpack.c.h.b16 %v727
        %v901 = vunpack.c.l.b16 %v728
        %v902 = vunpack.c.h.b16 %v728
        %v903 = vunpack.c.l.b16 %v729
        %v904 = vunpack.c.h.b16 %v729
        %v905 = vunpack.c.l.b16 %v730
        %v906 = vunpack.c.h.b16 %v730
        %v907 = vunpack.c.l.b16 %v731
        %v908 = vunpack.c.h.b16 %v731
        %v909 = vunpack.c.l.b16 %v732
        %v910 = vunpack.c.h.b16 %v732
        %v911 = vunpack.c.l.b16 %v733
        %v912 = vunpack.c.h.b16 %v733
        %v913 = vunpack.c.l.b16 %v734
        %v914 = vunpack.c.h.b16 %v734
        %v915 = vunpack.c.l.b16 %v735
        %v916 = vunpack.c.h.b16 %v735
        %v917 = vunpack.c.l.b16 %v736
        %v918 = vunpack.c.h.b16 %v736
        %v919 = vunpack.c.l.b16 %v737
        %v920 = vunpack.c.h.b16 %v737
        %v921 = vunpack.c.l.b16 %v738
        %v922 = vunpack.c.h.b16 %v738
        %v923 = vunpack.c.l.b16 %v739
        %v924 = vunpack.c.h.b16 %v739
        %v925 = vunpack.c.l.b16 %v740
        %v926 = vunpack.c.h.b16 %v740
        %v927 = vunpack.c.l.b16 %v741
        %v928 = vunpack.c.h.b16 %v741
        %v929 = vunpack.c.l.b16 %v742
        %v930 = vunpack.c.h.b16 %v742
        %v931 = vunpack.c.l.b16 %v743
        %v932 = vunpack.c.h.b16 %v743
        %v933 = vunpack.c.l.b16 %v744
        %v934 = vunpack.c.h.b16 %v744
        %v935 = vunpack.c.l.b16 %v745
        %v936 = vunpack.c.h.b16 %v745
        %v937 = vunpack.c.l.b16 %v746
        %v938 = vunpack.c.h.b16 %v746
        %v939 = vunpack.c.l.b16 %v747
        %v940 = vunpack.c.h.b16 %v747
        %v941 = vunpack.c.l.b16 %v748
        %v942 = vunpack.c.h.b16 %v748
        %v943 = vunpack.c.l.b16 %v749
        %v944 = vunpack.c.h.b16 %v749
        %v945 = vunpack.c.l.b16 %v750
        %v946 = vunpack.c.h.b16 %v750
        %v947 = vunpack.c.l.b16 %v751
        %v948 = vunpack.c.h.b16 %v751
        %v949 = vunpack.c.l.b16 %v752
        %v950 = vunpack.c.h.b16 %v752
        %v951 = vunpack.c.l.b16 %v753
        %v952 = vunpack.c.h.b16 %v753
        %v953 = vunpack.c.l.b16 %v754
        %v954 = vunpack.c.h.b16 %v754
        %v955 = vunpack.c.l.b16 %v755
        %v956 = vunpack.c.h.b16 %v755
        %v957 = vunpack.c.l.b16 %v756
        %v958 = vunpack.c.h.b16 %v756
        %v959 = vunpack.c.l.b16 %v757
        %v960 = vunpack.c.h.b16 %v757
        %v961 = vunpack.c.l.b16 %v758
        %v962 = vunpack.c.h.b16 %v758
        %v963 = vunpack.c.l.b16 %v759
        %v964 = vunpack.c.h.b16 %v759
        %v965 = vunpack.c.l.b16 %v760
        %v966 = vunpack.c.h.b16 %v760
        %v967 = vunpack.c.l.b16 %v761
        %v968 = vunpack.c.h.b16 %v761
        %v969 = vunpack.c.l.b16 %v762
        %v970 = vunpack.c.h.b16 %v762
        %v971 = vunpack.c.l.b16 %v763
        %v972 = vunpack.c.h.b16 %v763
        %v973 = vunpack.c.l.b16 %v764
        %v974 = vunpack.c.h.b16 %v764
        %v975 = vunpack.c.l.b16 %v765
        %v976 = vunpack.c.h.b16 %v765
        %v977 = vunpack.c.l.b16 %v766
        %v978 = vunpack.c.h.b16 %v766
        %v979 = vunpack.c.l.b16 %v767
        %v980 = vunpack.c.h.b16 %v767
        %v981 = vunpack.c.l.b16 %v768
        %v982 = vunpack.c.h.b16 %v768
        %v983 = vunpack.c.l.b16 %v769
        %v984 = vunpack.c.h.b16 %v769
        %v985 = vunpack.c.l.b16 %v770
        %v986 = vunpack.c.h.b16 %v770
        %v987 = vunpack.c.l.b16 %v771
        %v988 = vunpack.c.h.b16 %v771
        %v989 = vunpack.c.l.b16 %v772
        %v990 = vunpack.c.h.b16 %v772
        %v991 = vunpack.c.l.b16 %v773
        %v992 = vunpack.c.h.b16 %v773
        %v993 = vunpack.c.l.b16 %v774
        %v994 = vunpack.c.h.b16 %v774
        %v995 = vunpack.c.l.b16 %v775
        %v996 = vunpack.c.h.b16 %v775
        %v997 = vunpack.c.l.b16 %v776
        %v998 = vunpack.c.h.b16 %v776
        %v999 = vunpack.c.l.b16 %v777
        %v1000 = vunpack.c.h.b16 %v777
        %v1001 = vunpack.c.l.b16 %v778
        %v1002 = vunpack.c.h.b16 %v778
        %v1003 = vpack.c.b16 %v877, %v875
        %v1004 = vpack.c.b16 %v878, %v876
        %v1005 = vpack.c.b16 %v881, %v879
        %v1006 = vpack.c.b16 %v882, %v880
        %v1007 = vpack.c.b16 %v885, %v883
        %v1008 = vpack.c.b16 %v886, %v884
        %v1009 = vpack.c.b16 %v889, %v887
        %v1010 = vpack.c.b16 %v890, %v888
        %v1011 = vpack.c.b16 %v893, %v891
        %v1012 = vpack.c.b16 %v894, %v892
        %v1013 = vpack.c.b16 %v897, %v895
        %v1014 = vpack.c.b16 %v898, %v896
        %v1015 = vpack.c.b16 %v901, %v899
        %v1016 = vpack.c.b16 %v902, %v900
        %v1017 = vpack.c.b16 %v905, %v903
        %v1018 = vpack.c.b16 %v906, %v904
        %v1019 = vpack.c.b16 %v909, %v907
        %v1020 = vpack.c.b16 %v910, %v908
        %v1021 = vpack.c.b16 %v913, %v911
        %v1022 = vpack.c.b16 %v914, %v912
        %v1023 = vpack.c.b16 %v917, %v915
        %v1024 = vpack.c.b16 %v918, %v916
        %v1025 = vpack.c.b16 %v921, %v919
        %v1026 = vpack.c.b16 %v922, %v920
        %v1027 = vpack.c.b16 %v925, %v923
        %v1028 = vpack.c.b16 %v926, %v924
        %v1029 = vpack.c.b16 %v929, %v927
        %v1030 = vpack.c.b16 %v930, %v928
        %v1031 = vpack.c.b16 %v933, %v931
        %v1032 = vpack.c.b16 %v934, %v932
        %v1033 = vpack.c.b16 %v937, %v935
        %v1034 = vpack.c.b16 %v938, %v936
        %v1035 = vpack.c.b16 %v941, %v939
        %v1036 = vpack.c.b16 %v942, %v940
        %v1037 = vpack.c.b16 %v945, %v943
        %v1038 = vpack.c.b16 %v946, %v944
        %v1039 = vpack.c.b16 %v949, %v947
        %v1040 = vpack.c.b16 %v950, %v948
        %v1041 = vpack.c.b16 %v953, %v951
        %v1042 = vpack.c.b16 %v954, %v952
        %v1043 = vpack.c.b16 %v957, %v955
        %v1044 = vpack.c.b16 %v958, %v956
        %v1045 = vpack.c.b16 %v961, %v959
        %v1046 = vpack.c.b16 %v962, %v960
        %v1047 = vpack.c.b16 %v965, %v963
        %v1048 = vpack.c.b16 %v966, %v964
        %v1049 = vpack.c.b16 %v969, %v967
        %v1050 = vpack.c.b16 %v970, %v968
        %v1051 = vpack.c.b16 %v973, %v971
        %v1052 = vpack.c.b16 %v974, %v972
        %v1053 = vpack.c.b16 %v977, %v975
        %v1054 = vpack.c.b16 %v978, %v976
        %v1055 = vpack.c.b16 %v981, %v979
        %v1056 = vpack.c.b16 %v982, %v980
        %v1057 = vpack.c.b16 %v985, %v983
        %v1058 = vpack.c.b16 %v986, %v984
        %v1059 = vpack.c.b16 %v989, %v987
        %v1060 = vpack.c.b16 %v990, %v988
        %v1061 = vpack.c.b16 %v993, %v991
        %v1062 = vpack.c.b16 %v994, %v992
        %v1063 = vpack.c.b16 %v997, %v995
        %v1064 = vpack.c.b16 %v998, %v996
        %v1065 = vpack.c.b16 %v1001, %v999
        %v1066 = vpack.c.b16 %v1002, %v1000
        %v1163 = vunpack.c.l.b16 %v779
        %v1164 = vunpack.c.l.b16 %v780
        %v1165 = vunpack.c.l.b16 %v781
        %v1166 = vunpack.c.l.b16 %v782
        %v1167 = vunpack.c.l.b16 %v783
        %v1168 = vunpack.c.l.b16 %v784
        %v1169 = vunpack.c.l.b16 %v785
        %v1170 = vunpack.c.l.b16 %v786
        %v1171 = vunpack.c.l.b16 %v787
        %v1172 = vunpack.c.l.b16 %v788
        %v1173 = vunpack.c.l.b16 %v789
        %v1174 = vunpack.c.l.b16 %v790
        %v1175 = vunpack.c.l.b16 %v791
        %v1176 = vunpack.c.l.b16 %v792
        %v1177 = vunpack.c.l.b16 %v793
        %v1178 = vunpack.c.l.b16 %v794
        %v1179 = vunpack.c.l.b16 %v795
        %v1180 = vunpack.c.l.b16 %v796
        %v1181 = vunpack.c.l.b16 %v797
        %v1182 = vunpack.c.l.b16 %v798
        %v1183 = vunpack.c.l.b16 %v799
        %v1184 = vunpack.c.l.b16 %v800
        %v1185 = vunpack.c.l.b16 %v801
        %v1186 = vunpack.c.l.b16 %v802
        %v1187 = vunpack.c.l.b16 %v803
        %v1188 = vunpack.c.l.b16 %v804
        %v1189 = vunpack.c.l.b16 %v805
        %v1190 = vunpack.c.l.b16 %v806
        %v1191 = vunpack.c.l.b16 %v807
        %v1192 = vunpack.c.l.b16 %v808
        %v1193 = vunpack.c.l.b16 %v809
        %v1194 = vunpack.c.l.b16 %v810
        %v1195 = vpack.c.b16 %v1164, %v1163
        %v1196 = vpack.c.b16 %v1166, %v1165
        %v1197 = vpack.c.b16 %v1168, %v1167
        %v1198 = vpack.c.b16 %v1170, %v1169
        %v1199 = vpack.c.b16 %v1172, %v1171
        %v1200 = vpack.c.b16 %v1174, %v1173
        %v1201 = vpack.c.b16 %v1176, %v1175
        %v1202 = vpack.c.b16 %v1178, %v1177
        %v1203 = vpack.c.b16 %v1180, %v1179
        %v1204 = vpack.c.b16 %v1182, %v1181
        %v1205 = vpack.c.b16 %v1184, %v1183
        %v1206 = vpack.c.b16 %v1186, %v1185
        %v1207 = vpack.c.b16 %v1188, %v1187
        %v1208 = vpack.c.b16 %v1190, %v1189
        %v1209 = vpack.c.b16 %v1192, %v1191
        %v1210 = vpack.c.b16 %v1194, %v1193
        %1227 = vmatprep.subr.bf16.mxu0 0
        %1228 = vmatpush1.bf16.msra.mxu0 %v1202
        %1229 = vmatprep.subr.bf16.mxu0 0
        %1230 = vmatpush1.bf16.msra.mxu0 %v1201
        %1231 = vmatprep.subr.bf16.mxu0 0
        %1232 = vmatpush1.bf16.msra.mxu0 %v1200
        %1233 = vmatprep.subr.bf16.mxu0 0
        %1234 = vmatpush1.bf16.msra.mxu0 %v1199
        %1235 = vmatprep.subr.bf16.mxu0 0
        %1236 = vmatpush1.bf16.msra.mxu0 %v1198
        %1237 = vmatprep.subr.bf16.mxu0 0
        %1238 = vmatpush1.bf16.msra.mxu0 %v1197
        %1239 = vmatprep.subr.bf16.mxu0 0
        %1240 = vmatpush1.bf16.msra.mxu0 %v1196
        %1241 = vmatprep.subr.bf16.mxu0 0
        %1242 = vmatpush1.bf16.msra.mxu0 %v1195
        %1243 = vmatprep.subr.bf16.mxu0 0
        %1244 = vmatpush2.bf16.msra.mxu0 %v1210
        %1245 = vmatprep.subr.bf16.mxu0 0
        %1246 = vmatpush2.bf16.msra.mxu0 %v1209
        %1247 = vmatprep.subr.bf16.mxu0 0
        %1248 = vmatpush2.bf16.msra.mxu0 %v1208
        %1249 = vmatprep.subr.bf16.mxu0 0
        %1250 = vmatpush2.bf16.msra.mxu0 %v1207
        %1251 = vmatprep.subr.bf16.mxu0 0
        %1252 = vmatpush2.bf16.msra.mxu0 %v1206
        %1253 = vmatprep.subr.bf16.mxu0 0
        %1254 = vmatpush2.bf16.msra.mxu0 %v1205
        %1255 = vmatprep.subr.bf16.mxu0 0
        %1256 = vmatpush2.bf16.msra.mxu0 %v1204
        %1257 = vmatprep.subr.bf16.mxu0 0
        %1258 = vmatpush2.bf16.msra.mxu0 %v1203
        %1259 = vmatprep.mubr.bf16.mxu0 %v1004
        %1260 = vmatmul.mubr.bf16.gmra.mxu0 %v1003
        %v1261 = vpop.f32.mrf.mxu0
        %v1262 = vadd.f32 0.0, %v1261
        %v1263 = vpop.f32.mrf.mxu0
        %v1264 = vpop.f32.mrf.mxu0
        %v1265 = vadd.f32 0.0, %v1264
        %v1266 = vpop.f32.mrf.mxu0
        %1267 = vmatprep.mubr.bf16.mxu0 %v1006
        %1268 = vmatmul.mubr.bf16.gmra.mxu0 %v1005
        %v1269 = vpop.f32.mrf.mxu0
        %v1270 = vadd.f32 0.0, %v1269
        %v1271 = vpop.f32.mrf.mxu0
        %v1272 = vpop.f32.mrf.mxu0
        %v1273 = vadd.f32 0.0, %v1272
        %v1274 = vpop.f32.mrf.mxu0
        %1275 = vmatprep.mubr.bf16.mxu0 %v1008
        %1276 = vmatmul.mubr.bf16.gmra.mxu0 %v1007
        %v1277 = vpop.f32.mrf.mxu0
        %v1278 = vadd.f32 0.0, %v1277
        %v1279 = vpop.f32.mrf.mxu0
        %v1280 = vpop.f32.mrf.mxu0
        %v1281 = vadd.f32 0.0, %v1280
        %v1282 = vpop.f32.mrf.mxu0
        %1283 = vmatprep.mubr.bf16.mxu0 %v1010
        %1284 = vmatmul.mubr.bf16.gmra.mxu0 %v1009
        %v1285 = vpop.f32.mrf.mxu0
        %v1286 = vadd.f32 0.0, %v1285
        %v1287 = vpop.f32.mrf.mxu0
        %v1288 = vpop.f32.mrf.mxu0
        %v1289 = vadd.f32 0.0, %v1288
        %v1290 = vpop.f32.mrf.mxu0
        %1291 = vmatprep.mubr.bf16.mxu0 %v1012
        %1292 = vmatmul.mubr.bf16.gmra.mxu0 %v1011
        %v1293 = vpop.f32.mrf.mxu0
        %v1294 = vadd.f32 0.0, %v1293
        %v1295 = vpop.f32.mrf.mxu0
        %v1296 = vpop.f32.mrf.mxu0
        %v1297 = vadd.f32 0.0, %v1296
        %v1298 = vpop.f32.mrf.mxu0
        %1299 = vmatprep.mubr.bf16.mxu0 %v1014
        %1300 = vmatmul.mubr.bf16.gmra.mxu0 %v1013
        %v1301 = vpop.f32.mrf.mxu0
        %v1302 = vadd.f32 0.0, %v1301
        %v1303 = vpop.f32.mrf.mxu0
        %v1304 = vpop.f32.mrf.mxu0
        %v1305 = vadd.f32 0.0, %v1304
        %v1306 = vpop.f32.mrf.mxu0
        %1307 = vmatprep.mubr.bf16.mxu0 %v1016
        %1308 = vmatmul.mubr.bf16.gmra.mxu0 %v1015
        %v1309 = vpop.f32.mrf.mxu0
        %v1310 = vadd.f32 0.0, %v1309
        %v1311 = vpop.f32.mrf.mxu0
        %v1312 = vpop.f32.mrf.mxu0
        %v1313 = vadd.f32 0.0, %v1312
        %v1314 = vpop.f32.mrf.mxu0
        %1315 = vmatprep.mubr.bf16.mxu0 %v1018
        %1316 = vmatmul.mubr.bf16.gmra.mxu0 %v1017
        %v1317 = vpop.f32.mrf.mxu0
        %v1318 = vadd.f32 0.0, %v1317
        %v1319 = vpop.f32.mrf.mxu0
        %v1320 = vpop.f32.mrf.mxu0
        %v1321 = vadd.f32 0.0, %v1320
        %v1322 = vpop.f32.mrf.mxu0
        %1323 = vmatprep.mubr.bf16.mxu0 %v1020
        %1324 = vmatmul.mubr.bf16.gmra.mxu0 %v1019
        %v1325 = vpop.f32.mrf.mxu0
        %v1326 = vadd.f32 0.0, %v1325
        %v1327 = vpop.f32.mrf.mxu0
        %v1328 = vpop.f32.mrf.mxu0
        %v1329 = vadd.f32 0.0, %v1328
        %v1330 = vpop.f32.mrf.mxu0
        %1331 = vmatprep.mubr.bf16.mxu0 %v1022
        %1332 = vmatmul.mubr.bf16.gmra.mxu0 %v1021
        %v1333 = vpop.f32.mrf.mxu0
        %v1334 = vadd.f32 0.0, %v1333
        %v1335 = vpop.f32.mrf.mxu0
        %v1336 = vpop.f32.mrf.mxu0
        %v1337 = vadd.f32 0.0, %v1336
        %v1338 = vpop.f32.mrf.mxu0
        %1339 = vmatprep.mubr.bf16.mxu0 %v1024
        %1340 = vmatmul.mubr.bf16.gmra.mxu0 %v1023
        %v1341 = vpop.f32.mrf.mxu0
        %v1342 = vadd.f32 0.0, %v1341
        %v1343 = vpop.f32.mrf.mxu0
        %v1344 = vpop.f32.mrf.mxu0
        %v1345 = vadd.f32 0.0, %v1344
        %v1346 = vpop.f32.mrf.mxu0
        %1347 = vmatprep.mubr.bf16.mxu0 %v1026
        %1348 = vmatmul.mubr.bf16.gmra.mxu0 %v1025
        %v1349 = vpop.f32.mrf.mxu0
        %v1350 = vadd.f32 0.0, %v1349
        %v1351 = vpop.f32.mrf.mxu0
        %v1352 = vpop.f32.mrf.mxu0
        %v1353 = vadd.f32 0.0, %v1352
        %v1354 = vpop.f32.mrf.mxu0
        %1355 = vmatprep.mubr.bf16.mxu0 %v1028
        %1356 = vmatmul.mubr.bf16.gmra.mxu0 %v1027
        %v1357 = vpop.f32.mrf.mxu0
        %v1358 = vadd.f32 0.0, %v1357
        %v1359 = vpop.f32.mrf.mxu0
        %v1360 = vpop.f32.mrf.mxu0
        %v1361 = vadd.f32 0.0, %v1360
        %v1362 = vpop.f32.mrf.mxu0
        %1363 = vmatprep.mubr.bf16.mxu0 %v1030
        %1364 = vmatmul.mubr.bf16.gmra.mxu0 %v1029
        %v1365 = vpop.f32.mrf.mxu0
        %v1366 = vadd.f32 0.0, %v1365
        %v1367 = vpop.f32.mrf.mxu0
        %v1368 = vpop.f32.mrf.mxu0
        %v1369 = vadd.f32 0.0, %v1368
        %v1370 = vpop.f32.mrf.mxu0
        %1371 = vmatprep.mubr.bf16.mxu0 %v1032
        %1372 = vmatmul.mubr.bf16.gmra.mxu0 %v1031
        %v1373 = vpop.f32.mrf.mxu0
        %v1374 = vadd.f32 0.0, %v1373
        %v1375 = vpop.f32.mrf.mxu0
        %v1376 = vpop.f32.mrf.mxu0
        %v1377 = vadd.f32 0.0, %v1376
        %v1378 = vpop.f32.mrf.mxu0
        %1379 = vmatprep.mubr.bf16.mxu0 %v1034
        %1380 = vmatmul.mubr.bf16.gmra.mxu0 %v1033
        %v1381 = vpop.f32.mrf.mxu0
        %v1382 = vadd.f32 0.0, %v1381
        %v1383 = vpop.f32.mrf.mxu0
        %v1384 = vpop.f32.mrf.mxu0
        %v1385 = vadd.f32 0.0, %v1384
        %v1386 = vpop.f32.mrf.mxu0
        %1387 = vmatprep.mubr.bf16.mxu0 %v1036
        %1388 = vmatmul.mubr.bf16.gmra.mxu0 %v1035
        %v1389 = vpop.f32.mrf.mxu0
        %v1390 = vadd.f32 0.0, %v1389
        %v1391 = vpop.f32.mrf.mxu0
        %v1392 = vpop.f32.mrf.mxu0
        %v1393 = vadd.f32 0.0, %v1392
        %v1394 = vpop.f32.mrf.mxu0
        %1395 = vmatprep.mubr.bf16.mxu0 %v1038
        %1396 = vmatmul.mubr.bf16.gmra.mxu0 %v1037
        %v1397 = vpop.f32.mrf.mxu0
        %v1398 = vadd.f32 0.0, %v1397
        %v1399 = vpop.f32.mrf.mxu0
        %v1400 = vpop.f32.mrf.mxu0
        %v1401 = vadd.f32 0.0, %v1400
        %v1402 = vpop.f32.mrf.mxu0
        %1403 = vmatprep.mubr.bf16.mxu0 %v1040
        %1404 = vmatmul.mubr.bf16.gmra.mxu0 %v1039
        %v1405 = vpop.f32.mrf.mxu0
        %v1406 = vadd.f32 0.0, %v1405
        %v1407 = vpop.f32.mrf.mxu0
        %v1408 = vpop.f32.mrf.mxu0
        %v1409 = vadd.f32 0.0, %v1408
        %v1410 = vpop.f32.mrf.mxu0
        %1411 = vmatprep.mubr.bf16.mxu0 %v1042
        %1412 = vmatmul.mubr.bf16.gmra.mxu0 %v1041
        %v1413 = vpop.f32.mrf.mxu0
        %v1414 = vadd.f32 0.0, %v1413
        %v1415 = vpop.f32.mrf.mxu0
        %v1416 = vpop.f32.mrf.mxu0
        %v1417 = vadd.f32 0.0, %v1416
        %v1418 = vpop.f32.mrf.mxu0
        %1419 = vmatprep.mubr.bf16.mxu0 %v1044
        %1420 = vmatmul.mubr.bf16.gmra.mxu0 %v1043
        %v1421 = vpop.f32.mrf.mxu0
        %v1422 = vadd.f32 0.0, %v1421
        %v1423 = vpop.f32.mrf.mxu0
        %v1424 = vpop.f32.mrf.mxu0
        %v1425 = vadd.f32 0.0, %v1424
        %v1426 = vpop.f32.mrf.mxu0
        %1427 = vmatprep.mubr.bf16.mxu0 %v1046
        %1428 = vmatmul.mubr.bf16.gmra.mxu0 %v1045
        %v1429 = vpop.f32.mrf.mxu0
        %v1430 = vadd.f32 0.0, %v1429
        %v1431 = vpop.f32.mrf.mxu0
        %v1432 = vpop.f32.mrf.mxu0
        %v1433 = vadd.f32 0.0, %v1432
        %v1434 = vpop.f32.mrf.mxu0
        %1435 = vmatprep.mubr.bf16.mxu0 %v1048
        %1436 = vmatmul.mubr.bf16.gmra.mxu0 %v1047
        %v1437 = vpop.f32.mrf.mxu0
        %v1438 = vadd.f32 0.0, %v1437
        %v1439 = vpop.f32.mrf.mxu0
        %v1440 = vpop.f32.mrf.mxu0
        %v1441 = vadd.f32 0.0, %v1440
        %v1442 = vpop.f32.mrf.mxu0
        %1443 = vmatprep.mubr.bf16.mxu0 %v1050
        %1444 = vmatmul.mubr.bf16.gmra.mxu0 %v1049
        %v1445 = vpop.f32.mrf.mxu0
        %v1446 = vadd.f32 0.0, %v1445
        %v1447 = vpop.f32.mrf.mxu0
        %v1448 = vpop.f32.mrf.mxu0
        %v1449 = vadd.f32 0.0, %v1448
        %v1450 = vpop.f32.mrf.mxu0
        %1451 = vmatprep.mubr.bf16.mxu0 %v1052
        %1452 = vmatmul.mubr.bf16.gmra.mxu0 %v1051
        %v1453 = vpop.f32.mrf.mxu0
        %v1454 = vadd.f32 0.0, %v1453
        %v1455 = vpop.f32.mrf.mxu0
        %v1456 = vpop.f32.mrf.mxu0
        %v1457 = vadd.f32 0.0, %v1456
        %v1458 = vpop.f32.mrf.mxu0
        %1459 = vmatprep.mubr.bf16.mxu0 %v1054
        %1460 = vmatmul.mubr.bf16.gmra.mxu0 %v1053
        %v1461 = vpop.f32.mrf.mxu0
        %v1462 = vadd.f32 0.0, %v1461
        %v1463 = vpop.f32.mrf.mxu0
        %v1464 = vpop.f32.mrf.mxu0
        %v1465 = vadd.f32 0.0, %v1464
        %v1466 = vpop.f32.mrf.mxu0
        %1467 = vmatprep.mubr.bf16.mxu0 %v1056
        %1468 = vmatmul.mubr.bf16.gmra.mxu0 %v1055
        %v1469 = vpop.f32.mrf.mxu0
        %v1470 = vadd.f32 0.0, %v1469
        %v1471 = vpop.f32.mrf.mxu0
        %v1472 = vpop.f32.mrf.mxu0
        %v1473 = vadd.f32 0.0, %v1472
        %v1474 = vpop.f32.mrf.mxu0
        %1475 = vmatprep.mubr.bf16.mxu0 %v1058
        %1476 = vmatmul.mubr.bf16.gmra.mxu0 %v1057
        %v1477 = vpop.f32.mrf.mxu0
        %v1478 = vadd.f32 0.0, %v1477
        %v1479 = vpop.f32.mrf.mxu0
        %v1480 = vpop.f32.mrf.mxu0
        %v1481 = vadd.f32 0.0, %v1480
        %v1482 = vpop.f32.mrf.mxu0
        %1483 = vmatprep.mubr.bf16.mxu0 %v1060
        %1484 = vmatmul.mubr.bf16.gmra.mxu0 %v1059
        %v1485 = vpop.f32.mrf.mxu0
        %v1486 = vadd.f32 0.0, %v1485
        %v1487 = vpop.f32.mrf.mxu0
        %v1488 = vpop.f32.mrf.mxu0
        %v1489 = vadd.f32 0.0, %v1488
        %v1490 = vpop.f32.mrf.mxu0
        %1491 = vmatprep.mubr.bf16.mxu0 %v1062
        %1492 = vmatmul.mubr.bf16.gmra.mxu0 %v1061
        %v1493 = vpop.f32.mrf.mxu0
        %v1494 = vadd.f32 0.0, %v1493
        %v1495 = vpop.f32.mrf.mxu0
        %v1496 = vpop.f32.mrf.mxu0
        %v1497 = vadd.f32 0.0, %v1496
        %v1498 = vpop.f32.mrf.mxu0
        %1499 = vmatprep.mubr.bf16.mxu0 %v1064
        %1500 = vmatmul.mubr.bf16.gmra.mxu0 %v1063
        %v1501 = vpop.f32.mrf.mxu0
        %v1502 = vadd.f32 0.0, %v1501
        %v1503 = vpop.f32.mrf.mxu0
        %v1504 = vpop.f32.mrf.mxu0
        %v1505 = vadd.f32 0.0, %v1504
        %v1506 = vpop.f32.mrf.mxu0
        %1507 = vmatprep.mubr.bf16.mxu0 %v1066
        %1508 = vmatmul.mubr.bf16.gmra.mxu0 %v1065
        %v1509 = vpop.f32.mrf.mxu0
        %v1510 = vadd.f32 0.0, %v1509
        %v1511 = vpop.f32.mrf.mxu0
        %v1512 = vpop.f32.mrf.mxu0
        %v1513 = vadd.f32 0.0, %v1512
        %v1514 = vpop.f32.mrf.mxu0
        %1515 = vdwg.mxu0
        %v1516 = vadd.f32 %v651, %v1262
        %v1517 = vadd.f32 %v652, %v1265
        %v1518 = vadd.f32 %v653, %v1270
        %v1519 = vadd.f32 %v654, %v1273
        %v1520 = vadd.f32 %v655, %v1278
        %v1521 = vadd.f32 %v656, %v1281
        %v1522 = vadd.f32 %v657, %v1286
        %v1523 = vadd.f32 %v658, %v1289
        %v1524 = vadd.f32 %v659, %v1294
        %v1525 = vadd.f32 %v660, %v1297
        %v1526 = vadd.f32 %v661, %v1302
        %v1527 = vadd.f32 %v662, %v1305
        %v1528 = vadd.f32 %v663, %v1310
        %v1529 = vadd.f32 %v664, %v1313
        %v1530 = vadd.f32 %v665, %v1318
        %v1531 = vadd.f32 %v666, %v1321
        %v1532 = vadd.f32 %v667, %v1326
        %v1533 = vadd.f32 %v668, %v1329
        %v1534 = vadd.f32 %v669, %v1334
        %v1535 = vadd.f32 %v670, %v1337
        %v1536 = vadd.f32 %v671, %v1342
        %v1537 = vadd.f32 %v672, %v1345
        %v1538 = vadd.f32 %v673, %v1350
        %v1539 = vadd.f32 %v674, %v1353
        %v1540 = vadd.f32 %v675, %v1358
        %v1541 = vadd.f32 %v676, %v1361
        %v1542 = vadd.f32 %v677, %v1366
        %v1543 = vadd.f32 %v678, %v1369
        %v1544 = vadd.f32 %v679, %v1374
        %v1545 = vadd.f32 %v680, %v1377
        %v1546 = vadd.f32 %v681, %v1382
        %v1547 = vadd.f32 %v682, %v1385
        %v1548 = vadd.f32 %v683, %v1390
        %v1549 = vadd.f32 %v684, %v1393
        %v1550 = vadd.f32 %v685, %v1398
        %v1551 = vadd.f32 %v686, %v1401
        %v1552 = vadd.f32 %v687, %v1406
        %v1553 = vadd.f32 %v688, %v1409
        %v1554 = vadd.f32 %v689, %v1414
        %v1555 = vadd.f32 %v690, %v1417
        %v1556 = vadd.f32 %v691, %v1422
        %v1557 = vadd.f32 %v692, %v1425
        %v1558 = vadd.f32 %v693, %v1430
        %v1559 = vadd.f32 %v694, %v1433
        %v1560 = vadd.f32 %v695, %v1438
        %v1561 = vadd.f32 %v696, %v1441
        %v1562 = vadd.f32 %v697, %v1446
        %v1563 = vadd.f32 %v698, %v1449
        %v1564 = vadd.f32 %v699, %v1454
        %v1565 = vadd.f32 %v700, %v1457
        %v1566 = vadd.f32 %v701, %v1462
        %v1567 = vadd.f32 %v702, %v1465
        %v1568 = vadd.f32 %v703, %v1470
        %v1569 = vadd.f32 %v704, %v1473
        %v1570 = vadd.f32 %v705, %v1478
        %v1571 = vadd.f32 %v706, %v1481
        %v1572 = vadd.f32 %v707, %v1486
        %v1573 = vadd.f32 %v708, %v1489
        %v1574 = vadd.f32 %v709, %v1494
        %v1575 = vadd.f32 %v710, %v1497
        %v1576 = vadd.f32 %v711, %v1502
        %v1577 = vadd.f32 %v712, %v1505
        %v1578 = vadd.f32 %v713, %v1510
        %v1579 = vadd.f32 %v714, %v1513
        %1580 = vst [vmem:[#allocation2] sm:$0xff] %v1516
        %1581 = vst [vmem:[#allocation2 + $0x8] sm:$0xff] %v1517
        %1582 = vst [vmem:[#allocation2 + $0x10] sm:$0xff] %v1518
        %1583 = vst [vmem:[#allocation2 + $0x18] sm:$0xff] %v1519
        %1584 = vst [vmem:[#allocation2 + $0x20] sm:$0xff] %v1520
        %1585 = vst [vmem:[#allocation2 + $0x28] sm:$0xff] %v1521
        %1586 = vst [vmem:[#allocation2 + $0x30] sm:$0xff] %v1522
        %1587 = vst [vmem:[#allocation2 + $0x38] sm:$0xff] %v1523
        %1588 = vst [vmem:[#allocation2 + $0x40] sm:$0xff] %v1524
        %1589 = vst [vmem:[#allocation2 + $0x48] sm:$0xff] %v1525
        %1590 = vst [vmem:[#allocation2 + $0x50] sm:$0xff] %v1526
        %1591 = vst [vmem:[#allocation2 + $0x58] sm:$0xff] %v1527
        %1592 = vst [vmem:[#allocation2 + $0x60] sm:$0xff] %v1528
        %1593 = vst [vmem:[#allocation2 + $0x68] sm:$0xff] %v1529
        %1594 = vst [vmem:[#allocation2 + $0x70] sm:$0xff] %v1530
        %1595 = vst [vmem:[#allocation2 + $0x78] sm:$0xff] %v1531
        %1596 = vst [vmem:[#allocation2 + $0x80] sm:$0xff] %v1532
        %1597 = vst [vmem:[#allocation2 + $0x88] sm:$0xff] %v1533
        %1598 = vst [vmem:[#allocation2 + $0x90] sm:$0xff] %v1534
        %1599 = vst [vmem:[#allocation2 + $0x98] sm:$0xff] %v1535
        %1600 = vst [vmem:[#allocation2 + $0xa0] sm:$0xff] %v1536
        %1601 = vst [vmem:[#allocation2 + $0xa8] sm:$0xff] %v1537
        %1602 = vst [vmem:[#allocation2 + $0xb0] sm:$0xff] %v1538
        %1603 = vst [vmem:[#allocation2 + $0xb8] sm:$0xff] %v1539
        %1604 = vst [vmem:[#allocation2 + $0xc0] sm:$0xff] %v1540
        %1605 = vst [vmem:[#allocation2 + $0xc8] sm:$0xff] %v1541
        %1606 = vst [vmem:[#allocation2 + $0xd0] sm:$0xff] %v1542
        %1607 = vst [vmem:[#allocation2 + $0xd8] sm:$0xff] %v1543
        %1608 = vst [vmem:[#allocation2 + $0xe0] sm:$0xff] %v1544
        %1609 = vst [vmem:[#allocation2 + $0xe8] sm:$0xff] %v1545
        %1610 = vst [vmem:[#allocation2 + $0xf0] sm:$0xff] %v1546
        %1611 = vst [vmem:[#allocation2 + $0xf8] sm:$0xff] %v1547
        %1612 = vst [vmem:[#allocation2 + $0x100] sm:$0xff] %v1548
        %1613 = vst [vmem:[#allocation2 + $0x108] sm:$0xff] %v1549
        %1614 = vst [vmem:[#allocation2 + $0x110] sm:$0xff] %v1550
        %1615 = vst [vmem:[#allocation2 + $0x118] sm:$0xff] %v1551
        %1616 = vst [vmem:[#allocation2 + $0x120] sm:$0xff] %v1552
        %1617 = vst [vmem:[#allocation2 + $0x128] sm:$0xff] %v1553
        %1618 = vst [vmem:[#allocation2 + $0x130] sm:$0xff] %v1554
        %1619 = vst [vmem:[#allocation2 + $0x138] sm:$0xff] %v1555
        %1620 = vst [vmem:[#allocation2 + $0x140] sm:$0xff] %v1556
        %1621 = vst [vmem:[#allocation2 + $0x148] sm:$0xff] %v1557
        %1622 = vst [vmem:[#allocation2 + $0x150] sm:$0xff] %v1558
        %1623 = vst [vmem:[#allocation2 + $0x158] sm:$0xff] %v1559
        %1624 = vst [vmem:[#allocation2 + $0x160] sm:$0xff] %v1560
        %1625 = vst [vmem:[#allocation2 + $0x168] sm:$0xff] %v1561
        %1626 = vst [vmem:[#allocation2 + $0x170] sm:$0xff] %v1562
        %1627 = vst [vmem:[#allocation2 + $0x178] sm:$0xff] %v1563
        %1628 = vst [vmem:[#allocation2 + $0x180] sm:$0xff] %v1564
        %1629 = vst [vmem:[#allocation2 + $0x188] sm:$0xff] %v1565
        %1630 = vst [vmem:[#allocation2 + $0x190] sm:$0xff] %v1566
        %1631 = vst [vmem:[#allocation2 + $0x198] sm:$0xff] %v1567
        %1632 = vst [vmem:[#allocation2 + $0x1a0] sm:$0xff] %v1568
        %1633 = vst [vmem:[#allocation2 + $0x1a8] sm:$0xff] %v1569
        %1634 = vst [vmem:[#allocation2 + $0x1b0] sm:$0xff] %v1570
        %1635 = vst [vmem:[#allocation2 + $0x1b8] sm:$0xff] %v1571
        %1636 = vst [vmem:[#allocation2 + $0x1c0] sm:$0xff] %v1572
        %1637 = vst [vmem:[#allocation2 + $0x1c8] sm:$0xff] %v1573
        %1638 = vst [vmem:[#allocation2 + $0x1d0] sm:$0xff] %v1574
        %1639 = vst [vmem:[#allocation2 + $0x1d8] sm:$0xff] %v1575
        %1640 = vst [vmem:[#allocation2 + $0x1e0] sm:$0xff] %v1576
        %1641 = vst [vmem:[#allocation2 + $0x1e8] sm:$0xff] %v1577
        %1642 = vst [vmem:[#allocation2 + $0x1f0] sm:$0xff] %v1578
        %1643 = vst [vmem:[#allocation2 + $0x1f8] sm:$0xff] %v1579
        %p1644 = scmp.eq.s32.totalorder %s22, 12
        // Predicated region
        $region79: #{res_cnn_forward.47} parent=69 // pred_check
          %p1645 = pneg %p1644
        $region80: #{res_cnn_forward.47} parent=69 // pred_check_branch
          %1647 = sbr.rel (%p1645) target = $region82
        $region81: #{res_cnn_forward.47} parent=69 // pred_region
          %v1648 = vld [vmem:[#allocation2] sm:$0xff]
          %v1649 = vld [vmem:[#allocation2 + $0x8] sm:$0xff]
          %v1650 = vld [vmem:[#allocation2 + $0x10] sm:$0xff]
          %v1651 = vld [vmem:[#allocation2 + $0x18] sm:$0xff]
          %v1652 = vld [vmem:[#allocation2 + $0x20] sm:$0xff]
          %v1653 = vld [vmem:[#allocation2 + $0x28] sm:$0xff]
          %v1654 = vld [vmem:[#allocation2 + $0x30] sm:$0xff]
          %v1655 = vld [vmem:[#allocation2 + $0x38] sm:$0xff]
          %v1656 = vld [vmem:[#allocation2 + $0x40] sm:$0xff]
          %v1657 = vld [vmem:[#allocation2 + $0x48] sm:$0xff]
          %v1658 = vld [vmem:[#allocation2 + $0x50] sm:$0xff]
          %v1659 = vld [vmem:[#allocation2 + $0x58] sm:$0xff]
          %v1660 = vld [vmem:[#allocation2 + $0x60] sm:$0xff]
          %v1661 = vld [vmem:[#allocation2 + $0x68] sm:$0xff]
          %v1662 = vld [vmem:[#allocation2 + $0x70] sm:$0xff]
          %v1663 = vld [vmem:[#allocation2 + $0x78] sm:$0xff]
          %v1664 = vld [vmem:[#allocation2 + $0x80] sm:$0xff]
          %v1665 = vld [vmem:[#allocation2 + $0x88] sm:$0xff]
          %v1666 = vld [vmem:[#allocation2 + $0x90] sm:$0xff]
          %v1667 = vld [vmem:[#allocation2 + $0x98] sm:$0xff]
          %v1668 = vld [vmem:[#allocation2 + $0xa0] sm:$0xff]
          %v1669 = vld [vmem:[#allocation2 + $0xa8] sm:$0xff]
          %v1670 = vld [vmem:[#allocation2 + $0xb0] sm:$0xff]
          %v1671 = vld [vmem:[#allocation2 + $0xb8] sm:$0xff]
          %v1672 = vld [vmem:[#allocation2 + $0xc0] sm:$0xff]
          %v1673 = vld [vmem:[#allocation2 + $0xc8] sm:$0xff]
          %v1674 = vld [vmem:[#allocation2 + $0xd0] sm:$0xff]
          %v1675 = vld [vmem:[#allocation2 + $0xd8] sm:$0xff]
          %v1676 = vld [vmem:[#allocation2 + $0xe0] sm:$0xff]
          %v1677 = vld [vmem:[#allocation2 + $0xe8] sm:$0xff]
          %v1678 = vld [vmem:[#allocation2 + $0xf0] sm:$0xff]
          %v1679 = vld [vmem:[#allocation2 + $0xf8] sm:$0xff]
          %v1680 = vld [vmem:[#allocation2 + $0x100] sm:$0xff]
          %v1681 = vld [vmem:[#allocation2 + $0x108] sm:$0xff]
          %v1682 = vld [vmem:[#allocation2 + $0x110] sm:$0xff]
          %v1683 = vld [vmem:[#allocation2 + $0x118] sm:$0xff]
          %v1684 = vld [vmem:[#allocation2 + $0x120] sm:$0xff]
          %v1685 = vld [vmem:[#allocation2 + $0x128] sm:$0xff]
          %v1686 = vld [vmem:[#allocation2 + $0x130] sm:$0xff]
          %v1687 = vld [vmem:[#allocation2 + $0x138] sm:$0xff]
          %v1688 = vld [vmem:[#allocation2 + $0x140] sm:$0xff]
          %v1689 = vld [vmem:[#allocation2 + $0x148] sm:$0xff]
          %v1690 = vld [vmem:[#allocation2 + $0x150] sm:$0xff]
          %v1691 = vld [vmem:[#allocation2 + $0x158] sm:$0xff]
          %v1692 = vld [vmem:[#allocation2 + $0x160] sm:$0xff]
          %v1693 = vld [vmem:[#allocation2 + $0x168] sm:$0xff]
          %v1694 = vld [vmem:[#allocation2 + $0x170] sm:$0xff]
          %v1695 = vld [vmem:[#allocation2 + $0x178] sm:$0xff]
          %v1696 = vld [vmem:[#allocation2 + $0x180] sm:$0xff]
          %v1697 = vld [vmem:[#allocation2 + $0x188] sm:$0xff]
          %v1698 = vld [vmem:[#allocation2 + $0x190] sm:$0xff]
          %v1699 = vld [vmem:[#allocation2 + $0x198] sm:$0xff]
          %v1700 = vld [vmem:[#allocation2 + $0x1a0] sm:$0xff]
          %v1701 = vld [vmem:[#allocation2 + $0x1a8] sm:$0xff]
          %v1702 = vld [vmem:[#allocation2 + $0x1b0] sm:$0xff]
          %v1703 = vld [vmem:[#allocation2 + $0x1b8] sm:$0xff]
          %v1704 = vld [vmem:[#allocation2 + $0x1c0] sm:$0xff]
          %v1705 = vld [vmem:[#allocation2 + $0x1c8] sm:$0xff]
          %v1706 = vld [vmem:[#allocation2 + $0x1d0] sm:$0xff]
          %v1707 = vld [vmem:[#allocation2 + $0x1d8] sm:$0xff]
          %v1708 = vld [vmem:[#allocation2 + $0x1e0] sm:$0xff]
          %v1709 = vld [vmem:[#allocation2 + $0x1e8] sm:$0xff]
          %v1710 = vld [vmem:[#allocation2 + $0x1f0] sm:$0xff]
          %v1711 = vld [vmem:[#allocation2 + $0x1f8] sm:$0xff]
          %v1712 = vld [vmem:[%s569] sm:$0x1]
          %v1714 = vlaneseq
          %v1715 = vshrl.u32 %v1714, 7
          %v1716 = vsub.s32 0, %v1715
          %v1717 = vrot.slane %v1712, %v1716
          %v1719 = vmul.f32 %v1648, %v1717
          %v1720 = vmul.f32 %v1649, %v1717
          %v1721 = vmul.f32 %v1650, %v1717
          %v1722 = vmul.f32 %v1651, %v1717
          %v1723 = vmul.f32 %v1652, %v1717
          %v1724 = vmul.f32 %v1653, %v1717
          %v1725 = vmul.f32 %v1654, %v1717
          %v1726 = vmul.f32 %v1655, %v1717
          %v1727 = vmul.f32 %v1656, %v1717
          %v1728 = vmul.f32 %v1657, %v1717
          %v1729 = vmul.f32 %v1658, %v1717
          %v1730 = vmul.f32 %v1659, %v1717
          %v1731 = vmul.f32 %v1660, %v1717
          %v1732 = vmul.f32 %v1661, %v1717
          %v1733 = vmul.f32 %v1662, %v1717
          %v1734 = vmul.f32 %v1663, %v1717
          %v1735 = vmul.f32 %v1664, %v1717
          %v1736 = vmul.f32 %v1665, %v1717
          %v1737 = vmul.f32 %v1666, %v1717
          %v1738 = vmul.f32 %v1667, %v1717
          %v1739 = vmul.f32 %v1668, %v1717
          %v1740 = vmul.f32 %v1669, %v1717
          %v1741 = vmul.f32 %v1670, %v1717
          %v1742 = vmul.f32 %v1671, %v1717
          %v1743 = vmul.f32 %v1672, %v1717
          %v1744 = vmul.f32 %v1673, %v1717
          %v1745 = vmul.f32 %v1674, %v1717
          %v1746 = vmul.f32 %v1675, %v1717
          %v1747 = vmul.f32 %v1676, %v1717
          %v1748 = vmul.f32 %v1677, %v1717
          %v1749 = vmul.f32 %v1678, %v1717
          %v1750 = vmul.f32 %v1679, %v1717
          %v1751 = vmul.f32 %v1680, %v1717
          %v1752 = vmul.f32 %v1681, %v1717
          %v1753 = vmul.f32 %v1682, %v1717
          %v1754 = vmul.f32 %v1683, %v1717
          %v1755 = vmul.f32 %v1684, %v1717
          %v1756 = vmul.f32 %v1685, %v1717
          %v1757 = vmul.f32 %v1686, %v1717
          %v1758 = vmul.f32 %v1687, %v1717
          %v1759 = vmul.f32 %v1688, %v1717
          %v1760 = vmul.f32 %v1689, %v1717
          %v1761 = vmul.f32 %v1690, %v1717
          %v1762 = vmul.f32 %v1691, %v1717
          %v1763 = vmul.f32 %v1692, %v1717
          %v1764 = vmul.f32 %v1693, %v1717
          %v1765 = vmul.f32 %v1694, %v1717
          %v1766 = vmul.f32 %v1695, %v1717
          %v1767 = vmul.f32 %v1696, %v1717
          %v1768 = vmul.f32 %v1697, %v1717
          %v1769 = vmul.f32 %v1698, %v1717
          %v1770 = vmul.f32 %v1699, %v1717
          %v1771 = vmul.f32 %v1700, %v1717
          %v1772 = vmul.f32 %v1701, %v1717
          %v1773 = vmul.f32 %v1702, %v1717
          %v1774 = vmul.f32 %v1703, %v1717
          %v1775 = vmul.f32 %v1704, %v1717
          %v1776 = vmul.f32 %v1705, %v1717
          %v1777 = vmul.f32 %v1706, %v1717
          %v1778 = vmul.f32 %v1707, %v1717
          %v1779 = vmul.f32 %v1708, %v1717
          %v1780 = vmul.f32 %v1709, %v1717
          %v1781 = vmul.f32 %v1710, %v1717
          %v1782 = vmul.f32 %v1711, %v1717
          %v1783 = vld [vmem:[%s572] sm:$0x1]
          %v1785 = vlaneseq
          %v1786 = vshrl.u32 %v1785, 7
          %v1787 = vsub.s32 0, %v1786
          %v1788 = vrot.slane %v1783, %v1787
          %v1790 = vadd.f32 %v1719, %v1788
          %v1791 = vadd.f32 %v1720, %v1788
          %v1792 = vadd.f32 %v1721, %v1788
          %v1793 = vadd.f32 %v1722, %v1788
          %v1794 = vadd.f32 %v1723, %v1788
          %v1795 = vadd.f32 %v1724, %v1788
          %v1796 = vadd.f32 %v1725, %v1788
          %v1797 = vadd.f32 %v1726, %v1788
          %v1798 = vadd.f32 %v1727, %v1788
          %v1799 = vadd.f32 %v1728, %v1788
          %v1800 = vadd.f32 %v1729, %v1788
          %v1801 = vadd.f32 %v1730, %v1788
          %v1802 = vadd.f32 %v1731, %v1788
          %v1803 = vadd.f32 %v1732, %v1788
          %v1804 = vadd.f32 %v1733, %v1788
          %v1805 = vadd.f32 %v1734, %v1788
          %v1806 = vadd.f32 %v1735, %v1788
          %v1807 = vadd.f32 %v1736, %v1788
          %v1808 = vadd.f32 %v1737, %v1788
          %v1809 = vadd.f32 %v1738, %v1788
          %v1810 = vadd.f32 %v1739, %v1788
          %v1811 = vadd.f32 %v1740, %v1788
          %v1812 = vadd.f32 %v1741, %v1788
          %v1813 = vadd.f32 %v1742, %v1788
          %v1814 = vadd.f32 %v1743, %v1788
          %v1815 = vadd.f32 %v1744, %v1788
          %v1816 = vadd.f32 %v1745, %v1788
          %v1817 = vadd.f32 %v1746, %v1788
          %v1818 = vadd.f32 %v1747, %v1788
          %v1819 = vadd.f32 %v1748, %v1788
          %v1820 = vadd.f32 %v1749, %v1788
          %v1821 = vadd.f32 %v1750, %v1788
          %v1822 = vadd.f32 %v1751, %v1788
          %v1823 = vadd.f32 %v1752, %v1788
          %v1824 = vadd.f32 %v1753, %v1788
          %v1825 = vadd.f32 %v1754, %v1788
          %v1826 = vadd.f32 %v1755, %v1788
          %v1827 = vadd.f32 %v1756, %v1788
          %v1828 = vadd.f32 %v1757, %v1788
          %v1829 = vadd.f32 %v1758, %v1788
          %v1830 = vadd.f32 %v1759, %v1788
          %v1831 = vadd.f32 %v1760, %v1788
          %v1832 = vadd.f32 %v1761, %v1788
          %v1833 = vadd.f32 %v1762, %v1788
          %v1834 = vadd.f32 %v1763, %v1788
          %v1835 = vadd.f32 %v1764, %v1788
          %v1836 = vadd.f32 %v1765, %v1788
          %v1837 = vadd.f32 %v1766, %v1788
          %v1838 = vadd.f32 %v1767, %v1788
          %v1839 = vadd.f32 %v1768, %v1788
          %v1840 = vadd.f32 %v1769, %v1788
          %v1841 = vadd.f32 %v1770, %v1788
          %v1842 = vadd.f32 %v1771, %v1788
          %v1843 = vadd.f32 %v1772, %v1788
          %v1844 = vadd.f32 %v1773, %v1788
          %v1845 = vadd.f32 %v1774, %v1788
          %v1846 = vadd.f32 %v1775, %v1788
          %v1847 = vadd.f32 %v1776, %v1788
          %v1848 = vadd.f32 %v1777, %v1788
          %v1849 = vadd.f32 %v1778, %v1788
          %v1850 = vadd.f32 %v1779, %v1788
          %v1851 = vadd.f32 %v1780, %v1788
          %v1852 = vadd.f32 %v1781, %v1788
          %v1853 = vadd.f32 %v1782, %v1788
          %v1854 = vtanh.pop %v1790
          %v1855 = vtanh.pop %v1791
          %v1856 = vtanh.pop %v1792
          %v1857 = vtanh.pop %v1793
          %v1858 = vtanh.pop %v1794
          %v1859 = vtanh.pop %v1795
          %v1860 = vtanh.pop %v1796
          %v1861 = vtanh.pop %v1797
          %v1862 = vtanh.pop %v1798
          %v1863 = vtanh.pop %v1799
          %v1864 = vtanh.pop %v1800
          %v1865 = vtanh.pop %v1801
          %v1866 = vtanh.pop %v1802
          %v1867 = vtanh.pop %v1803
          %v1868 = vtanh.pop %v1804
          %v1869 = vtanh.pop %v1805
          %v1870 = vtanh.pop %v1806
          %v1871 = vtanh.pop %v1807
          %v1872 = vtanh.pop %v1808
          %v1873 = vtanh.pop %v1809
          %v1874 = vtanh.pop %v1810
          %v1875 = vtanh.pop %v1811
          %v1876 = vtanh.pop %v1812
          %v1877 = vtanh.pop %v1813
          %v1878 = vtanh.pop %v1814
          %v1879 = vtanh.pop %v1815
          %v1880 = vtanh.pop %v1816
          %v1881 = vtanh.pop %v1817
          %v1882 = vtanh.pop %v1818
          %v1883 = vtanh.pop %v1819
          %v1884 = vtanh.pop %v1820
          %v1885 = vtanh.pop %v1821
          %v1886 = vtanh.pop %v1822
          %v1887 = vtanh.pop %v1823
          %v1888 = vtanh.pop %v1824
          %v1889 = vtanh.pop %v1825
          %v1890 = vtanh.pop %v1826
          %v1891 = vtanh.pop %v1827
          %v1892 = vtanh.pop %v1828
          %v1893 = vtanh.pop %v1829
          %v1894 = vtanh.pop %v1830
          %v1895 = vtanh.pop %v1831
          %v1896 = vtanh.pop %v1832
          %v1897 = vtanh.pop %v1833
          %v1898 = vtanh.pop %v1834
          %v1899 = vtanh.pop %v1835
          %v1900 = vtanh.pop %v1836
          %v1901 = vtanh.pop %v1837
          %v1902 = vtanh.pop %v1838
          %v1903 = vtanh.pop %v1839
          %v1904 = vtanh.pop %v1840
          %v1905 = vtanh.pop %v1841
          %v1906 = vtanh.pop %v1842
          %v1907 = vtanh.pop %v1843
          %v1908 = vtanh.pop %v1844
          %v1909 = vtanh.pop %v1845
          %v1910 = vtanh.pop %v1846
          %v1911 = vtanh.pop %v1847
          %v1912 = vtanh.pop %v1848
          %v1913 = vtanh.pop %v1849
          %v1914 = vtanh.pop %v1850
          %v1915 = vtanh.pop %v1851
          %v1916 = vtanh.pop %v1852
          %v1917 = vtanh.pop %v1853
          %1918 = vst [vmem:[%s580] sm:$0xff] %v1854
          %1919 = vst [vmem:[%s580 + $0x8] sm:$0xff] %v1855
          %1920 = vst [vmem:[%s580 + $0x10] sm:$0xff] %v1856
          %1921 = vst [vmem:[%s580 + $0x18] sm:$0xff] %v1857
          %1922 = vst [vmem:[%s580 + $0x20] sm:$0xff] %v1858
          %1923 = vst [vmem:[%s580 + $0x28] sm:$0xff] %v1859
          %1924 = vst [vmem:[%s580 + $0x30] sm:$0xff] %v1860
          %1925 = vst [vmem:[%s580 + $0x38] sm:$0xff] %v1861
          %1926 = vst [vmem:[%s580 + $0x40] sm:$0xff] %v1862
          %1927 = vst [vmem:[%s580 + $0x48] sm:$0xff] %v1863
          %1928 = vst [vmem:[%s580 + $0x50] sm:$0xff] %v1864
          %1929 = vst [vmem:[%s580 + $0x58] sm:$0xff] %v1865
          %1930 = vst [vmem:[%s580 + $0x60] sm:$0xff] %v1866
          %1931 = vst [vmem:[%s580 + $0x68] sm:$0xff] %v1867
          %1932 = vst [vmem:[%s580 + $0x70] sm:$0xff] %v1868
          %1933 = vst [vmem:[%s580 + $0x78] sm:$0xff] %v1869
          %1934 = vst [vmem:[%s580 + $0x80] sm:$0xff] %v1870
          %1935 = vst [vmem:[%s580 + $0x88] sm:$0xff] %v1871
          %1936 = vst [vmem:[%s580 + $0x90] sm:$0xff] %v1872
          %1937 = vst [vmem:[%s580 + $0x98] sm:$0xff] %v1873
          %1938 = vst [vmem:[%s580 + $0xa0] sm:$0xff] %v1874
          %1939 = vst [vmem:[%s580 + $0xa8] sm:$0xff] %v1875
          %1940 = vst [vmem:[%s580 + $0xb0] sm:$0xff] %v1876
          %1941 = vst [vmem:[%s580 + $0xb8] sm:$0xff] %v1877
          %1942 = vst [vmem:[%s580 + $0xc0] sm:$0xff] %v1878
          %1943 = vst [vmem:[%s580 + $0xc8] sm:$0xff] %v1879
          %1944 = vst [vmem:[%s580 + $0xd0] sm:$0xff] %v1880
          %1945 = vst [vmem:[%s580 + $0xd8] sm:$0xff] %v1881
          %1946 = vst [vmem:[%s580 + $0xe0] sm:$0xff] %v1882
          %1947 = vst [vmem:[%s580 + $0xe8] sm:$0xff] %v1883
          %1948 = vst [vmem:[%s580 + $0xf0] sm:$0xff] %v1884
          %1949 = vst [vmem:[%s580 + $0xf8] sm:$0xff] %v1885
          %1950 = vst [vmem:[%s580 + $0x100] sm:$0xff] %v1886
          %1951 = vst [vmem:[%s580 + $0x108] sm:$0xff] %v1887
          %1952 = vst [vmem:[%s580 + $0x110] sm:$0xff] %v1888
          %1953 = vst [vmem:[%s580 + $0x118] sm:$0xff] %v1889
          %1954 = vst [vmem:[%s580 + $0x120] sm:$0xff] %v1890
          %1955 = vst [vmem:[%s580 + $0x128] sm:$0xff] %v1891
          %1956 = vst [vmem:[%s580 + $0x130] sm:$0xff] %v1892
          %1957 = vst [vmem:[%s580 + $0x138] sm:$0xff] %v1893
          %1958 = vst [vmem:[%s580 + $0x140] sm:$0xff] %v1894
          %1959 = vst [vmem:[%s580 + $0x148] sm:$0xff] %v1895
          %1960 = vst [vmem:[%s580 + $0x150] sm:$0xff] %v1896
          %1961 = vst [vmem:[%s580 + $0x158] sm:$0xff] %v1897
          %1962 = vst [vmem:[%s580 + $0x160] sm:$0xff] %v1898
          %1963 = vst [vmem:[%s580 + $0x168] sm:$0xff] %v1899
          %1964 = vst [vmem:[%s580 + $0x170] sm:$0xff] %v1900
          %1965 = vst [vmem:[%s580 + $0x178] sm:$0xff] %v1901
          %1966 = vst [vmem:[%s580 + $0x180] sm:$0xff] %v1902
          %1967 = vst [vmem:[%s580 + $0x188] sm:$0xff] %v1903
          %1968 = vst [vmem:[%s580 + $0x190] sm:$0xff] %v1904
          %1969 = vst [vmem:[%s580 + $0x198] sm:$0xff] %v1905
          %1970 = vst [vmem:[%s580 + $0x1a0] sm:$0xff] %v1906
          %1971 = vst [vmem:[%s580 + $0x1a8] sm:$0xff] %v1907
          %1972 = vst [vmem:[%s580 + $0x1b0] sm:$0xff] %v1908
          %1973 = vst [vmem:[%s580 + $0x1b8] sm:$0xff] %v1909
          %1974 = vst [vmem:[%s580 + $0x1c0] sm:$0xff] %v1910
          %1975 = vst [vmem:[%s580 + $0x1c8] sm:$0xff] %v1911
          %1976 = vst [vmem:[%s580 + $0x1d0] sm:$0xff] %v1912
          %1977 = vst [vmem:[%s580 + $0x1d8] sm:$0xff] %v1913
          %1978 = vst [vmem:[%s580 + $0x1e0] sm:$0xff] %v1914
          %1979 = vst [vmem:[%s580 + $0x1e8] sm:$0xff] %v1915
          %1980 = vst [vmem:[%s580 + $0x1f0] sm:$0xff] %v1916
          %1981 = vst [vmem:[%s580 + $0x1f8] sm:$0xff] %v1917
        $region82: #{res_cnn_forward.47} parent=69 // pred_fallthru
          _
        %s1982 = smul.u32 64, %s20
        %p1983 = scmp.lt.s32.totalorder %s1982, 63
        %s1984 = scalar_select %p1983, %s1982, 63
        %p1985 = scmp.lt.s32.totalorder %s21, 0
        %s1986 = scalar_select %p1985, %s21, 0
        %s1987 = sadd.s32 %s1986, %s1984
        %s1988 = smul.addr %s1987, 8
        %s1989 = scalar_lea.vmem %s4, %s1988
        // Predicated region
        $region83: #{res_cnn_forward.47} parent=69 // pred_check
          %p1990 = pneg %p162
        $region84: #{res_cnn_forward.47} parent=69 // pred_check_branch
          %1992 = sbr.rel (%p1990) target = $region86
        $region85: #{res_cnn_forward.47} parent=69 // pred_region
          %s1993 = smul.u32 64, %s20
        $region86: #{res_cnn_forward.47} parent=69 // pred_fallthru
          _
        // Predicated region
        $region87: #{res_cnn_forward.47} parent=69 // pred_check
          %p1994 = pneg %p162
        $region88: #{res_cnn_forward.47} parent=69 // pred_check_branch
          %1996 = sbr.rel (%p1994) target = $region90
        $region89: #{res_cnn_forward.47} parent=69 // pred_region
          %s1997 = smul.u32 64, %s20
          %p1998 = scmp.lt.s32.totalorder %s1997, 63
          %s1999 = scalar_select %p1998, %s1997, 63
          %p2000 = scmp.lt.s32.totalorder %s21, 0
          %s2001 = scalar_select %p2000, %s21, 0
          %s2002 = sadd.s32 %s2001, %s1999
          %s2003 = smul.addr %s2002, 8
          %s2004 = scalar_lea.vmem %s4, %s2003
        $region90: #{res_cnn_forward.47} parent=69 // pred_fallthru
          _
      $region70: #{res_cnn_forward.47} parent=5 // pred_fallthru
        _
      %p2005 = scmp.le.s32.totalorder 2, %s10
      // Predicated region
      $region91: #{res_cnn_forward.47} parent=5 // pred_check
        %p2006 = pneg %p2005
      $region92: #{res_cnn_forward.47} parent=5 // pred_check_branch
        %2008 = sbr.rel (%p2006) target = $region94
      $region93: #{res_cnn_forward.47} parent=5 // pred_region
        %s2009 = ssub.s32 %s10, 2
      $region94: #{res_cnn_forward.47} parent=5 // pred_fallthru
        _
    $region6: #{res_cnn_forward.47} parent=1 // loop_footer
      %s14 = sadd.s32 1, %s10
    $region7: #{res_cnn_forward.47} parent=1 // loop_footer_branch
      %9 = sbr.rel target = $region3
    $region8: #{res_cnn_forward.47} parent=1 // loop_exit
      _

</llo_original>
